<compile_context>
chip_gen: v7x
topology: tpu7x:2x2x1
jax: 0.10.0
libtpu: 0.0.40
codegen_flags: <defaults>
</compile_context>

<pallas_src>
import functools

import jax
import jax.numpy as jnp
import numpy as np
from jax.experimental import pallas as pl
from jax.experimental.pallas import tpu as pltpu


def _classnet_level_kernel(num_layers, H, W, TH, CP, AKP,
                           x_ref, wf_ref, bf_ref, hw_ref, hb_ref,
                           out_ref, pad_ref):
    """Grid = (N, H//TH).

    x_ref  : (1, H, W, CP)     lane-padded input feature (NHWC, f32)
    wf_ref : (L, 9*CP, CP)     folded depthwise*pointwise*BN weights (bf16)
    bf_ref : (L, 1, CP)        folded bias (pwb*bn_scale + bn_shift) (f32)
    hw_ref : (9*CP, AKP)       header weights, im2col layout, lane-padded (bf16)
    hb_ref : (1, AKP)          header bias, lane-padded (f32)
    out_ref: (1, TH, W, AKP)   sigmoid(class logits) for this row tile (bf16)
    pad_ref: (H+2, W+2, CP)    zero-bordered running feature (f32, persistent)
    """
    f32 = jnp.float32
    bf16 = jnp.bfloat16
    r = pl.program_id(1)

    def im2col(row0, rows):
        # (rows*W, 9*CP): window-major, channel-minor — matches the weight
        # fold.  CP is a multiple of 128 so every slice / concat block is
        # lane-dense; cast per-slice so the concatenated temp is bf16.
        cols = [
            pad_ref[pl.ds(row0 + dy, rows), dx:dx + W, :]
            .reshape(rows * W, CP).astype(bf16)
            for dy in range(3) for dx in range(3)
        ]
        return jnp.concatenate(cols, axis=-1)

    @pl.when(r == 0)
    def _():
        # Zero only the 1-pixel border; the interior is (re)written every layer.
        pad_ref[0:1, :, :] = jnp.zeros((1, W + 2, CP), f32)
        pad_ref[H + 1:H + 2, :, :] = jnp.zeros((1, W + 2, CP), f32)
        pad_ref[:, 0:1, :] = jnp.zeros((H + 2, 1, CP), f32)
        pad_ref[:, W + 1:W + 2, :] = jnp.zeros((H + 2, 1, CP), f32)

        # Seed the interior with the (lane-padded) input feature.
        pad_ref[1:H + 1, 1:W + 1, :] = x_ref[0]

        # num_layers x SeparableConvBlock, each as ONE K=9*CP MXU matmul with
        # bf16 operands and f32 accumulation.  Padded channels have zero
        # weights/bias, so Swish keeps them exactly zero.
        for l in range(num_layers):
            y = jnp.dot(im2col(0, H), wf_ref[l], preferred_element_type=f32)
            y = y + bf_ref[l]
            y = y * jax.nn.sigmoid(y)                      # Swish
            pad_ref[1:H + 1, 1:W + 1, :] = y.reshape(H, W, CP)

    # Header 3x3 conv for this TH-row tile: ONE K=9*CP bf16 matmul into the
    # 128-lane-padded output channels, sigmoid, lane-dense bf16 store.
    hd = jnp.dot(im2col(r * TH, TH), hw_ref[...], preferred_element_type=f32)
    hd = hd + hb_ref[...]
    out_ref[...] = jax.nn.sigmoid(hd).astype(out_ref.dtype).reshape(1, TH, W, AKP)


def _pick_row_tile(H, target=8):
    th = min(target, H)
    while H % th:
        th -= 1
    return th


def _run_level(x_nhwc_padded, lp, num_layers, CP, AKP, row_tile=8):
    N, H, W, _ = x_nhwc_padded.shape
    L = num_layers
    TH = _pick_row_tile(H, row_tile)
    R = H // TH
    kernel = functools.partial(_classnet_level_kernel, L, H, W, TH, CP, AKP)

    flops = N * (L * 2 * H * W * 9 * CP * CP + 2 * H * W * 9 * CP * AKP)
    transcendentals = N * (L * H * W * CP + H * W * AKP)
    bytes_accessed = (4 * N * H * W * CP + 2 * N * H * W * AKP
                      + 2 * L * 9 * CP * CP + 4 * L * CP
                      + 2 * 9 * CP * AKP + 4 * AKP)

    return pl.pallas_call(
        kernel,
        out_shape=jax.ShapeDtypeStruct((N, H, W, AKP), jnp.bfloat16),
        grid_spec=pltpu.PrefetchScalarGridSpec(
            num_scalar_prefetch=0,
            grid=(N, R),
            in_specs=[
                pl.BlockSpec((1, H, W, CP), lambda n, r: (n, 0, 0, 0)),
                # TODO(synk): pipeline_mode=pl.Buffered(1) on the four
                # grid-invariant weight specs for v7x VMEM relief.
                pl.BlockSpec((L, 9 * CP, CP), lambda n, r: (0, 0, 0)),
                pl.BlockSpec((L, 1, CP), lambda n, r: (0, 0, 0)),
                pl.BlockSpec((9 * CP, AKP), lambda n, r: (0, 0)),
                pl.BlockSpec((1, AKP), lambda n, r: (0, 0)),
            ],
            out_specs=pl.BlockSpec((1, TH, W, AKP), lambda n, r: (n, r, 0, 0)),
            scratch_shapes=[pltpu.VMEM((H + 2, W + 2, CP), jnp.float32)],
        ),
        compiler_params=pltpu.CompilerParams(
            dimension_semantics=("parallel", "arbitrary"),
            vmem_limit_bytes=64 * 1024 * 1024),
        cost_estimate=pl.CostEstimate(flops=flops,
                                      transcendentals=transcendentals,
                                      bytes_accessed=bytes_accessed),
    )(x_nhwc_padded, lp["wfold"], lp["bfold"], lp["hwfold"], lp["hbp"])


def fold_params(p):
    """Fold depthwise*pointwise*BN into im2col weights, lane-pad channels to
    CP and header outputs to AKP, and ship matmul weights in bfloat16."""
    L = p["dw"].shape[0]
    C = p["dw"].shape[-1]
    AK = p["hw"].shape[-1]
    CP = ((C + 127) // 128) * 128
    AKP = ((AK + 127) // 128) * 128

    # wfold[l, dy, dx, ci, co] = dw[l,dy,dx,ci] * pww[l,ci,co] * bns[l,co]
    wfold = (p["dw"][..., None] * p["pww"][:, None, None, :, :]
             * p["bns"][:, None, None, None, :])                   # (L,3,3,C,C)
    wfold = jnp.pad(wfold, ((0, 0), (0, 0), (0, 0), (0, CP - C), (0, CP - C)))
    wfold = wfold.reshape(L, 9 * CP, CP).astype(jnp.bfloat16)

    bfold = jnp.pad(p["pwb"] * p["bns"] + p["bnb"],
                    ((0, 0), (0, CP - C))).reshape(L, 1, CP)        # f32

    hw = jnp.pad(p["hw"], ((0, 0), (0, 0), (0, CP - C), (0, AKP - AK)))
    hwfold = hw.reshape(9 * CP, AKP).astype(jnp.bfloat16)
    hbp = jnp.pad(p["hb"], (0, AKP - AK)).reshape(1, AKP)           # f32
    return dict(wfold=wfold, bfold=bfold, hwfold=hwfold, hbp=hbp), C, CP, AK, AKP


def classnet_forward(inputs_nchw, params, num_layers, num_anchors, num_classes):
    """Matches ClassNet.forward: list of NCHW feature maps -> (N, sum(H*W*A), K)."""
    # TODO(synk): if upstream activations can stay NHWC (and downstream can
    # consume the 128-lane-padded AKP layout), the transpose/pad here and the
    # out[..., :AK] slice below are redundant HBM passes and should be dropped.
    lp, C, CP, AK, AKP = fold_params(params)
    feats = []
    for x in inputs_nchw:
        x_nhwc = jnp.transpose(x, (0, 2, 3, 1)).astype(jnp.float32)
        x_nhwc = jnp.pad(x_nhwc, ((0, 0), (0, 0), (0, 0), (0, CP - C)))
        out = _run_level(x_nhwc, lp, num_layers, CP, AKP)   # (N, H, W, AKP) bf16
        out = out[..., :AK]                                  # drop lane padding
        feats.append(out.reshape(out.shape[0], -1, num_classes))
    return jnp.concatenate(feats, axis=1).astype(jnp.float32)


def init_params(key, C, num_layers, num_anchors, num_classes):
    AK = num_anchors * num_classes
    ks = jax.random.split(key, 9)
    dw = 0.1 * jax.random.normal(ks[0], (num_layers, 3, 3, C), jnp.float32)
    pww = jax.random.normal(ks[1], (num_layers, C, C), jnp.float32) / np.sqrt(C)
    pwb = 0.05 * jax.random.normal(ks[2], (num_layers, C), jnp.float32)
    gamma = 1.0 + 0.1 * jax.random.normal(ks[3], (num_layers, C), jnp.float32)
    beta = 0.05 * jax.random.normal(ks[4], (num_layers, C), jnp.float32)
    mean = 0.05 * jax.random.normal(ks[5], (num_layers, C), jnp.float32)
    var = 1.0 + 0.1 * jax.nn.softplus(
        jax.random.normal(ks[6], (num_layers, C), jnp.float32))
    eps = 1e-3  # BatchNorm2d(..., eps=0.001)
    bns = gamma / jnp.sqrt(var + eps)
    bnb = beta - mean * bns
    hw = jax.random.normal(ks[7], (3, 3, C, AK), jnp.float32) / np.sqrt(9 * C)
    hb = 0.1 * jax.random.normal(ks[8], (AK,), jnp.float32)
    return dict(dw=dw, pww=pww, pwb=pwb, bns=bns, bnb=bnb, hw=hw, hb=hb)


def reference_forward(inputs_nchw, p, num_layers, num_anchors, num_classes):
    """Plain-JAX reference (identical math, unfused, f32) for correctness."""
    AK = num_anchors * num_classes
    feats = []
    for x in inputs_nchw:
        f = jnp.transpose(x, (0, 2, 3, 1)).astype(jnp.float32)
        N, H, W, C = f.shape
        for l in range(num_layers):
            padded = jnp.pad(f, ((0, 0), (1, 1), (1, 1), (0, 0)))
            acc = jnp.zeros_like(f)
            for dy in range(3):
                for dx in range(3):
                    acc = acc + padded[:, dy:dy + H, dx:dx + W, :] * p["dw"][l, dy, dx]
            y = jnp.einsum("nhwc,cd->nhwd", acc, p["pww"][l]) + p["pwb"][l]
            y = y * p["bns"][l] + p["bnb"][l]
            f = y * jax.nn.sigmoid(y)
        padded = jnp.pad(f, ((0, 0), (1, 1), (1, 1), (0, 0)))
        out = jnp.zeros((N, H, W, AK), jnp.float32) + p["hb"]
        for dy in range(3):
            for dx in range(3):
                out = out + jnp.einsum("nhwc,cd->nhwd",
                                       padded[:, dy:dy + H, dx:dx + W, :],
                                       p["hw"][dy, dx])
        out = jax.nn.sigmoid(out)
        feats.append(out.reshape(N, -1, num_classes))
    return jnp.concatenate(feats, axis=1)


if __name__ == "__main__":
    # Small, module-consistent shapes: 2 pyramid levels, NCHW like PyTorch.
    N, C = 2, 16
    num_layers, num_classes, num_anchors = 2, 4, 9

    key = jax.random.PRNGKey(0)
    k_p, k_x1, k_x2 = jax.random.split(key, 3)
    params = init_params(k_p, C, num_layers, num_anchors, num_classes)

    inputs = [
        jax.random.normal(k_x1, (N, C, 16, 16), jnp.float32),  # level 0
        jax.random.normal(k_x2, (N, C, 8, 8), jnp.float32),    # level 1
    ]

    out = classnet_forward(inputs, params, num_layers, num_anchors, num_classes)
    out = jax.block_until_ready(out)

    expected_boxes = sum(h * w * num_anchors
                         for (_, _, h, w) in [x.shape for x in inputs])
    assert out.shape == (N, expected_boxes, num_classes), out.shape

    ref = jax.block_until_ready(
        reference_forward(inputs, params, num_layers, num_anchors, num_classes))
    max_err = float(jnp.max(jnp.abs(out - ref)))
    assert max_err < 1e-2, f"max abs error too large: {max_err}"

    print("KERNEL_OK")
</pallas_src>

<mosaic_0001>
module attributes {stable_mosaic.version = 11 : i64} {
  func.func @_classnet_level_kernel(%arg0: i32, %arg1: i32, %arg2: memref<1x16x16x128xf32, #tpu.memory_space<vmem>>, %arg3: memref<2x1152x128xbf16, #tpu.memory_space<vmem>>, %arg4: memref<2x1x128xf32, #tpu.memory_space<vmem>>, %arg5: memref<1152x128xbf16, #tpu.memory_space<vmem>>, %arg6: memref<1x128xf32, #tpu.memory_space<vmem>>, %arg7: memref<1x8x16x128xbf16, #tpu.memory_space<vmem>>, %arg8: memref<18x18x128xf32, #tpu.memory_space<vmem>>) attributes {dimension_semantics = [#tpu.dimension_semantics<parallel>, #tpu.dimension_semantics<arbitrary>], iteration_bounds = array<i64: 2, 2>, scalar_prefetch = 0 : i64, scratch_operands = 1 : i64, tpu.core_type = #tpu.core_type<tc>, window_params = [{transform_indices = @transform_0, window_bounds = array<i64: 1, 16, 16, 128>}, {pipeline_mode = #tpu.pipeline_mode<synchronous>, transform_indices = @transform_1, window_bounds = array<i64: 2, 1152, 128>}, {pipeline_mode = #tpu.pipeline_mode<synchronous>, transform_indices = @transform_2, window_bounds = array<i64: 2, 1, 128>}, {pipeline_mode = #tpu.pipeline_mode<synchronous>, transform_indices = @transform_3, window_bounds = array<i64: 1152, 128>}, {pipeline_mode = #tpu.pipeline_mode<synchronous>, transform_indices = @transform_4, window_bounds = array<i64: 1, 128>}, {transform_indices = @transform_5, window_bounds = array<i64: 1, 8, 16, 128>}]} {
    %c0_i32 = arith.constant 0 : i32
    %0 = arith.cmpi eq, %arg1, %c0_i32 : i32
    %1 = arith.extui %0 : i1 to i32
    %c0_i32_0 = arith.constant 0 : i32
    %2 = arith.cmpi ne, %1, %c0_i32_0 : i32
    scf.if %2 {
      %cst_32 = arith.constant 0.000000e+00 : f32
      %63 = vector.broadcast %cst_32 : f32 to vector<1x18x128xf32>
      %c0_33 = arith.constant 0 : index
      %c0_34 = arith.constant 0 : index
      %c0_35 = arith.constant 0 : index
      %64 = vector.load %arg8[%c0_33, %c0_34, %c0_35] : memref<18x18x128xf32, #tpu.memory_space<vmem>>, vector<1x18x128xf32>
      tpu.vector_store %arg8[%c0_33, %c0_34, %c0_35], %63 {strides = array<i32>} : memref<18x18x128xf32, #tpu.memory_space<vmem>>, vector<1x18x128xf32>,
      %cst_36 = arith.constant 0.000000e+00 : f32
      %65 = vector.broadcast %cst_36 : f32 to vector<1x18x128xf32>
      %c17 = arith.constant 17 : index
      %c0_37 = arith.constant 0 : index
      %c0_38 = arith.constant 0 : index
      %66 = vector.load %arg8[%c17, %c0_37, %c0_38] : memref<18x18x128xf32, #tpu.memory_space<vmem>>, vector<1x18x128xf32>
      tpu.vector_store %arg8[%c17, %c0_37, %c0_38], %65 {strides = array<i32>} : memref<18x18x128xf32, #tpu.memory_space<vmem>>, vector<1x18x128xf32>,
      %cst_39 = arith.constant 0.000000e+00 : f32
      %67 = vector.broadcast %cst_39 : f32 to vector<18x1x128xf32>
      %c0_40 = arith.constant 0 : index
      %c0_41 = arith.constant 0 : index
      %c0_42 = arith.constant 0 : index
      %68 = vector.load %arg8[%c0_40, %c0_41, %c0_42] : memref<18x18x128xf32, #tpu.memory_space<vmem>>, vector<18x1x128xf32>
      tpu.vector_store %arg8[%c0_40, %c0_41, %c0_42], %67 {strides = array<i32>} : memref<18x18x128xf32, #tpu.memory_space<vmem>>, vector<18x1x128xf32>,
      %cst_43 = arith.constant 0.000000e+00 : f32
      %69 = vector.broadcast %cst_43 : f32 to vector<18x1x128xf32>
      %c0_44 = arith.constant 0 : index
      %c17_45 = arith.constant 17 : index
      %c0_46 = arith.constant 0 : index
      %70 = vector.load %arg8[%c0_44, %c17_45, %c0_46] : memref<18x18x128xf32, #tpu.memory_space<vmem>>, vector<18x1x128xf32>
      tpu.vector_store %arg8[%c0_44, %c17_45, %c0_46], %69 {strides = array<i32>} : memref<18x18x128xf32, #tpu.memory_space<vmem>>, vector<18x1x128xf32>,
      %c0_47 = arith.constant 0 : index
      %c0_48 = arith.constant 0 : index
      %c0_49 = arith.constant 0 : index
      %c0_50 = arith.constant 0 : index
      %71 = vector.load %arg2[%c0_47, %c0_48, %c0_49, %c0_50] : memref<1x16x16x128xf32, #tpu.memory_space<vmem>>, vector<1x16x16x128xf32>
      %72 = vector.shape_cast %71 : vector<1x16x16x128xf32> to vector<16x16x128xf32>
      %c1_51 = arith.constant 1 : index
      %c1_52 = arith.constant 1 : index
      %c0_53 = arith.constant 0 : index
      %73 = vector.load %arg8[%c1_51, %c1_52, %c0_53] : memref<18x18x128xf32, #tpu.memory_space<vmem>>, vector<16x16x128xf32>
      tpu.vector_store %arg8[%c1_51, %c1_52, %c0_53], %72 {strides = array<i32>} : memref<18x18x128xf32, #tpu.memory_space<vmem>>, vector<16x16x128xf32>,
      %c0_54 = arith.constant 0 : index
      %c0_55 = arith.constant 0 : index
      %c0_56 = arith.constant 0 : index
      %74 = vector.load %arg8[%c0_54, %c0_55, %c0_56] : memref<18x18x128xf32, #tpu.memory_space<vmem>>, vector<16x16x128xf32>
      %75 = vector.shape_cast %74 : vector<16x16x128xf32> to vector<256x128xf32>
      %76 = arith.truncf %75 : vector<256x128xf32> to vector<256x128xbf16>
      %c0_57 = arith.constant 0 : index
      %c1_58 = arith.constant 1 : index
      %c0_59 = arith.constant 0 : index
      %77 = vector.load %arg8[%c0_57, %c1_58, %c0_59] : memref<18x18x128xf32, #tpu.memory_space<vmem>>, vector<16x16x128xf32>
      %78 = vector.shape_cast %77 : vector<16x16x128xf32> to vector<256x128xf32>
      %79 = arith.truncf %78 : vector<256x128xf32> to vector<256x128xbf16>
      %c0_60 = arith.constant 0 : index
      %c2_61 = arith.constant 2 : index
      %c0_62 = arith.constant 0 : index
      %80 = vector.load %arg8[%c0_60, %c2_61, %c0_62] : memref<18x18x128xf32, #tpu.memory_space<vmem>>, vector<16x16x128xf32>
      %81 = vector.shape_cast %80 : vector<16x16x128xf32> to vector<256x128xf32>
      %82 = arith.truncf %81 : vector<256x128xf32> to vector<256x128xbf16>
      %c1_63 = arith.constant 1 : index
      %c0_64 = arith.constant 0 : index
      %c0_65 = arith.constant 0 : index
      %83 = vector.load %arg8[%c1_63, %c0_64, %c0_65] : memref<18x18x128xf32, #tpu.memory_space<vmem>>, vector<16x16x128xf32>
      %84 = vector.shape_cast %83 : vector<16x16x128xf32> to vector<256x128xf32>
      %85 = arith.truncf %84 : vector<256x128xf32> to vector<256x128xbf16>
      %c1_66 = arith.constant 1 : index
      %c1_67 = arith.constant 1 : index
      %c0_68 = arith.constant 0 : index
      %86 = vector.load %arg8[%c1_66, %c1_67, %c0_68] : memref<18x18x128xf32, #tpu.memory_space<vmem>>, vector<16x16x128xf32>
      %87 = vector.shape_cast %86 : vector<16x16x128xf32> to vector<256x128xf32>
      %88 = arith.truncf %87 : vector<256x128xf32> to vector<256x128xbf16>
      %c1_69 = arith.constant 1 : index
      %c2_70 = arith.constant 2 : index
      %c0_71 = arith.constant 0 : index
      %89 = vector.load %arg8[%c1_69, %c2_70, %c0_71] : memref<18x18x128xf32, #tpu.memory_space<vmem>>, vector<16x16x128xf32>
      %90 = vector.shape_cast %89 : vector<16x16x128xf32> to vector<256x128xf32>
      %91 = arith.truncf %90 : vector<256x128xf32> to vector<256x128xbf16>
      %c2_72 = arith.constant 2 : index
      %c0_73 = arith.constant 0 : index
      %c0_74 = arith.constant 0 : index
      %92 = vector.load %arg8[%c2_72, %c0_73, %c0_74] : memref<18x18x128xf32, #tpu.memory_space<vmem>>, vector<16x16x128xf32>
      %93 = vector.shape_cast %92 : vector<16x16x128xf32> to vector<256x128xf32>
      %94 = arith.truncf %93 : vector<256x128xf32> to vector<256x128xbf16>
      %c2_75 = arith.constant 2 : index
      %c1_76 = arith.constant 1 : index
      %c0_77 = arith.constant 0 : index
      %95 = vector.load %arg8[%c2_75, %c1_76, %c0_77] : memref<18x18x128xf32, #tpu.memory_space<vmem>>, vector<16x16x128xf32>
      %96 = vector.shape_cast %95 : vector<16x16x128xf32> to vector<256x128xf32>
      %97 = arith.truncf %96 : vector<256x128xf32> to vector<256x128xbf16>
      %c2_78 = arith.constant 2 : index
      %c2_79 = arith.constant 2 : index
      %c0_80 = arith.constant 0 : index
      %98 = vector.load %arg8[%c2_78, %c2_79, %c0_80] : memref<18x18x128xf32, #tpu.memory_space<vmem>>, vector<16x16x128xf32>
      %99 = vector.shape_cast %98 : vector<16x16x128xf32> to vector<256x128xf32>
      %100 = arith.truncf %99 : vector<256x128xf32> to vector<256x128xbf16>
      %101 = tpu.concatenate %76, %79, %82, %85, %88, %91, %94, %97, %100 in 1 : vector<256x128xbf16>, vector<256x128xbf16>, vector<256x128xbf16>, vector<256x128xbf16>, vector<256x128xbf16>, vector<256x128xbf16>, vector<256x128xbf16>, vector<256x128xbf16>, vector<256x128xbf16> -> vector<256x1152xbf16>
      %c0_81 = arith.constant 0 : index
      %c0_82 = arith.constant 0 : index
      %c0_83 = arith.constant 0 : index
      %102 = vector.load %arg3[%c0_81, %c0_82, %c0_83] : memref<2x1152x128xbf16, #tpu.memory_space<vmem>>, vector<1x1152x128xbf16>
      %103 = vector.shape_cast %102 : vector<1x1152x128xbf16> to vector<1152x128xbf16>
      %cst_84 = arith.constant dense<0.000000e+00> : vector<256x128xf32>
      %104 = tpu.matmul %101, %103, %cst_84 {dimension_numbers = #tpu.dot_dimension_numbers<[1], [0], [0], [1], [0, 0, 1, 1], [], []>} : vector<256x1152xbf16>, vector<1152x128xbf16>, vector<256x128xf32> -> vector<256x128xf32>
      %c0_85 = arith.constant 0 : index
      %c0_86 = arith.constant 0 : index
      %c0_87 = arith.constant 0 : index
      %105 = vector.load %arg4[%c0_85, %c0_86, %c0_87] : memref<2x1x128xf32, #tpu.memory_space<vmem>>, vector<1x1x128xf32>
      %106 = vector.shape_cast %105 : vector<1x1x128xf32> to vector<1x128xf32>
      %107 = vector.broadcast %106 : vector<1x128xf32> to vector<256x128xf32>
      %108 = arith.addf %104, %107 : vector<256x128xf32>
      %109 = arith.negf %108 : vector<256x128xf32>
      %110 = math.exp %109 : vector<256x128xf32>
      %cst_88 = arith.constant 1.000000e+00 : f32
      %111 = vector.broadcast %cst_88 : f32 to vector<256x128xf32>
      %112 = arith.addf %111, %110 : vector<256x128xf32>
      %113 = arith.divf %111, %112 : vector<256x128xf32>
      %114 = arith.mulf %108, %113 : vector<256x128xf32>
      %115 = vector.shape_cast %114 : vector<256x128xf32> to vector<16x16x128xf32>
      %c1_89 = arith.constant 1 : index
      %c1_90 = arith.constant 1 : index
      %c0_91 = arith.constant 0 : index
      %116 = vector.load %arg8[%c1_89, %c1_90, %c0_91] : memref<18x18x128xf32, #tpu.memory_space<vmem>>, vector<16x16x128xf32>
      tpu.vector_store %arg8[%c1_89, %c1_90, %c0_91], %115 {strides = array<i32>} : memref<18x18x128xf32, #tpu.memory_space<vmem>>, vector<16x16x128xf32>,
      %c0_92 = arith.constant 0 : index
      %c0_93 = arith.constant 0 : index
      %c0_94 = arith.constant 0 : index
      %117 = vector.load %arg8[%c0_92, %c0_93, %c0_94] : memref<18x18x128xf32, #tpu.memory_space<vmem>>, vector<16x16x128xf32>
      %118 = vector.shape_cast %117 : vector<16x16x128xf32> to vector<256x128xf32>
      %119 = arith.truncf %118 : vector<256x128xf32> to vector<256x128xbf16>
      %c0_95 = arith.constant 0 : index
      %c1_96 = arith.constant 1 : index
      %c0_97 = arith.constant 0 : index
      %120 = vector.load %arg8[%c0_95, %c1_96, %c0_97] : memref<18x18x128xf32, #tpu.memory_space<vmem>>, vector<16x16x128xf32>
      %121 = vector.shape_cast %120 : vector<16x16x128xf32> to vector<256x128xf32>
      %122 = arith.truncf %121 : vector<256x128xf32> to vector<256x128xbf16>
      %c0_98 = arith.constant 0 : index
      %c2_99 = arith.constant 2 : index
      %c0_100 = arith.constant 0 : index
      %123 = vector.load %arg8[%c0_98, %c2_99, %c0_100] : memref<18x18x128xf32, #tpu.memory_space<vmem>>, vector<16x16x128xf32>
      %124 = vector.shape_cast %123 : vector<16x16x128xf32> to vector<256x128xf32>
      %125 = arith.truncf %124 : vector<256x128xf32> to vector<256x128xbf16>
      %c1_101 = arith.constant 1 : index
      %c0_102 = arith.constant 0 : index
      %c0_103 = arith.constant 0 : index
      %126 = vector.load %arg8[%c1_101, %c0_102, %c0_103] : memref<18x18x128xf32, #tpu.memory_space<vmem>>, vector<16x16x128xf32>
      %127 = vector.shape_cast %126 : vector<16x16x128xf32> to vector<256x128xf32>
      %128 = arith.truncf %127 : vector<256x128xf32> to vector<256x128xbf16>
      %c1_104 = arith.constant 1 : index
      %c1_105 = arith.constant 1 : index
      %c0_106 = arith.constant 0 : index
      %129 = vector.load %arg8[%c1_104, %c1_105, %c0_106] : memref<18x18x128xf32, #tpu.memory_space<vmem>>, vector<16x16x128xf32>
      %130 = vector.shape_cast %129 : vector<16x16x128xf32> to vector<256x128xf32>
      %131 = arith.truncf %130 : vector<256x128xf32> to vector<256x128xbf16>
      %c1_107 = arith.constant 1 : index
      %c2_108 = arith.constant 2 : index
      %c0_109 = arith.constant 0 : index
      %132 = vector.load %arg8[%c1_107, %c2_108, %c0_109] : memref<18x18x128xf32, #tpu.memory_space<vmem>>, vector<16x16x128xf32>
      %133 = vector.shape_cast %132 : vector<16x16x128xf32> to vector<256x128xf32>
      %134 = arith.truncf %133 : vector<256x128xf32> to vector<256x128xbf16>
      %c2_110 = arith.constant 2 : index
      %c0_111 = arith.constant 0 : index
      %c0_112 = arith.constant 0 : index
      %135 = vector.load %arg8[%c2_110, %c0_111, %c0_112] : memref<18x18x128xf32, #tpu.memory_space<vmem>>, vector<16x16x128xf32>
      %136 = vector.shape_cast %135 : vector<16x16x128xf32> to vector<256x128xf32>
      %137 = arith.truncf %136 : vector<256x128xf32> to vector<256x128xbf16>
      %c2_113 = arith.constant 2 : index
      %c1_114 = arith.constant 1 : index
      %c0_115 = arith.constant 0 : index
      %138 = vector.load %arg8[%c2_113, %c1_114, %c0_115] : memref<18x18x128xf32, #tpu.memory_space<vmem>>, vector<16x16x128xf32>
      %139 = vector.shape_cast %138 : vector<16x16x128xf32> to vector<256x128xf32>
      %140 = arith.truncf %139 : vector<256x128xf32> to vector<256x128xbf16>
      %c2_116 = arith.constant 2 : index
      %c2_117 = arith.constant 2 : index
      %c0_118 = arith.constant 0 : index
      %141 = vector.load %arg8[%c2_116, %c2_117, %c0_118] : memref<18x18x128xf32, #tpu.memory_space<vmem>>, vector<16x16x128xf32>
      %142 = vector.shape_cast %141 : vector<16x16x128xf32> to vector<256x128xf32>
      %143 = arith.truncf %142 : vector<256x128xf32> to vector<256x128xbf16>
      %144 = tpu.concatenate %119, %122, %125, %128, %131, %134, %137, %140, %143 in 1 : vector<256x128xbf16>, vector<256x128xbf16>, vector<256x128xbf16>, vector<256x128xbf16>, vector<256x128xbf16>, vector<256x128xbf16>, vector<256x128xbf16>, vector<256x128xbf16>, vector<256x128xbf16> -> vector<256x1152xbf16>
      %c1_119 = arith.constant 1 : index
      %c0_120 = arith.constant 0 : index
      %c0_121 = arith.constant 0 : index
      %145 = vector.load %arg3[%c1_119, %c0_120, %c0_121] : memref<2x1152x128xbf16, #tpu.memory_space<vmem>>, vector<1x1152x128xbf16>
      %146 = vector.shape_cast %145 : vector<1x1152x128xbf16> to vector<1152x128xbf16>
      %cst_122 = arith.constant dense<0.000000e+00> : vector<256x128xf32>
      %147 = tpu.matmul %144, %146, %cst_122 {dimension_numbers = #tpu.dot_dimension_numbers<[1], [0], [0], [1], [0, 0, 1, 1], [], []>} : vector<256x1152xbf16>, vector<1152x128xbf16>, vector<256x128xf32> -> vector<256x128xf32>
      %c1_123 = arith.constant 1 : index
      %c0_124 = arith.constant 0 : index
      %c0_125 = arith.constant 0 : index
      %148 = vector.load %arg4[%c1_123, %c0_124, %c0_125] : memref<2x1x128xf32, #tpu.memory_space<vmem>>, vector<1x1x128xf32>
      %149 = vector.shape_cast %148 : vector<1x1x128xf32> to vector<1x128xf32>
      %150 = vector.broadcast %149 : vector<1x128xf32> to vector<256x128xf32>
      %151 = arith.addf %147, %150 : vector<256x128xf32>
      %152 = arith.negf %151 : vector<256x128xf32>
      %153 = math.exp %152 : vector<256x128xf32>
      %cst_126 = arith.constant 1.000000e+00 : f32
      %154 = vector.broadcast %cst_126 : f32 to vector<256x128xf32>
      %155 = arith.addf %154, %153 : vector<256x128xf32>
      %156 = arith.divf %154, %155 : vector<256x128xf32>
      %157 = arith.mulf %151, %156 : vector<256x128xf32>
      %158 = vector.shape_cast %157 : vector<256x128xf32> to vector<16x16x128xf32>
      %c1_127 = arith.constant 1 : index
      %c1_128 = arith.constant 1 : index
      %c0_129 = arith.constant 0 : index
      %159 = vector.load %arg8[%c1_127, %c1_128, %c0_129] : memref<18x18x128xf32, #tpu.memory_space<vmem>>, vector<16x16x128xf32>
      tpu.vector_store %arg8[%c1_127, %c1_128, %c0_129], %158 {strides = array<i32>} : memref<18x18x128xf32, #tpu.memory_space<vmem>>, vector<16x16x128xf32>,
    } else {
    }
    %c8_i32 = arith.constant 8 : i32
    %3 = arith.muli %arg1, %c8_i32 : i32
    %c0_i32_1 = arith.constant 0 : i32
    %4 = arith.addi %3, %c0_i32_1 : i32
    %5 = arith.index_cast %4 : i32 to index
    %c0 = arith.constant 0 : index
    %c0_2 = arith.constant 0 : index
    %6 = vector.load %arg8[%5, %c0, %c0_2] : memref<18x18x128xf32, #tpu.memory_space<vmem>>, vector<8x16x128xf32>
    %7 = vector.shape_cast %6 : vector<8x16x128xf32> to vector<128x128xf32>
    %8 = arith.truncf %7 : vector<128x128xf32> to vector<128x128xbf16>
    %c0_i32_3 = arith.constant 0 : i32
    %9 = arith.addi %3, %c0_i32_3 : i32
    %10 = arith.index_cast %9 : i32 to index
    %c1 = arith.constant 1 : index
    %c0_4 = arith.constant 0 : index
    %11 = vector.load %arg8[%10, %c1, %c0_4] : memref<18x18x128xf32, #tpu.memory_space<vmem>>, vector<8x16x128xf32>
    %12 = vector.shape_cast %11 : vector<8x16x128xf32> to vector<128x128xf32>
    %13 = arith.truncf %12 : vector<128x128xf32> to vector<128x128xbf16>
    %c0_i32_5 = arith.constant 0 : i32
    %14 = arith.addi %3, %c0_i32_5 : i32
    %15 = arith.index_cast %14 : i32 to index
    %c2 = arith.constant 2 : index
    %c0_6 = arith.constant 0 : index
    %16 = vector.load %arg8[%15, %c2, %c0_6] : memref<18x18x128xf32, #tpu.memory_space<vmem>>, vector<8x16x128xf32>
    %17 = vector.shape_cast %16 : vector<8x16x128xf32> to vector<128x128xf32>
    %18 = arith.truncf %17 : vector<128x128xf32> to vector<128x128xbf16>
    %c1_i32 = arith.constant 1 : i32
    %19 = arith.addi %3, %c1_i32 : i32
    %20 = arith.index_cast %19 : i32 to index
    %c0_7 = arith.constant 0 : index
    %c0_8 = arith.constant 0 : index
    %21 = vector.load %arg8[%20, %c0_7, %c0_8] : memref<18x18x128xf32, #tpu.memory_space<vmem>>, vector<8x16x128xf32>
    %22 = vector.shape_cast %21 : vector<8x16x128xf32> to vector<128x128xf32>
    %23 = arith.truncf %22 : vector<128x128xf32> to vector<128x128xbf16>
    %c1_i32_9 = arith.constant 1 : i32
    %24 = arith.addi %3, %c1_i32_9 : i32
    %25 = arith.index_cast %24 : i32 to index
    %c1_10 = arith.constant 1 : index
    %c0_11 = arith.constant 0 : index
    %26 = vector.load %arg8[%25, %c1_10, %c0_11] : memref<18x18x128xf32, #tpu.memory_space<vmem>>, vector<8x16x128xf32>
    %27 = vector.shape_cast %26 : vector<8x16x128xf32> to vector<128x128xf32>
    %28 = arith.truncf %27 : vector<128x128xf32> to vector<128x128xbf16>
    %c1_i32_12 = arith.constant 1 : i32
    %29 = arith.addi %3, %c1_i32_12 : i32
    %30 = arith.index_cast %29 : i32 to index
    %c2_13 = arith.constant 2 : index
    %c0_14 = arith.constant 0 : index
    %31 = vector.load %arg8[%30, %c2_13, %c0_14] : memref<18x18x128xf32, #tpu.memory_space<vmem>>, vector<8x16x128xf32>
    %32 = vector.shape_cast %31 : vector<8x16x128xf32> to vector<128x128xf32>
    %33 = arith.truncf %32 : vector<128x128xf32> to vector<128x128xbf16>
    %c2_i32 = arith.constant 2 : i32
    %34 = arith.addi %3, %c2_i32 : i32
    %35 = arith.index_cast %34 : i32 to index
    %c0_15 = arith.constant 0 : index
    %c0_16 = arith.constant 0 : index
    %36 = vector.load %arg8[%35, %c0_15, %c0_16] : memref<18x18x128xf32, #tpu.memory_space<vmem>>, vector<8x16x128xf32>
    %37 = vector.shape_cast %36 : vector<8x16x128xf32> to vector<128x128xf32>
    %38 = arith.truncf %37 : vector<128x128xf32> to vector<128x128xbf16>
    %c2_i32_17 = arith.constant 2 : i32
    %39 = arith.addi %3, %c2_i32_17 : i32
    %40 = arith.index_cast %39 : i32 to index
    %c1_18 = arith.constant 1 : index
    %c0_19 = arith.constant 0 : index
    %41 = vector.load %arg8[%40, %c1_18, %c0_19] : memref<18x18x128xf32, #tpu.memory_space<vmem>>, vector<8x16x128xf32>
    %42 = vector.shape_cast %41 : vector<8x16x128xf32> to vector<128x128xf32>
    %43 = arith.truncf %42 : vector<128x128xf32> to vector<128x128xbf16>
    %c2_i32_20 = arith.constant 2 : i32
    %44 = arith.addi %3, %c2_i32_20 : i32
    %45 = arith.index_cast %44 : i32 to index
    %c2_21 = arith.constant 2 : index
    %c0_22 = arith.constant 0 : index
    %46 = vector.load %arg8[%45, %c2_21, %c0_22] : memref<18x18x128xf32, #tpu.memory_space<vmem>>, vector<8x16x128xf32>
    %47 = vector.shape_cast %46 : vector<8x16x128xf32> to vector<128x128xf32>
    %48 = arith.truncf %47 : vector<128x128xf32> to vector<128x128xbf16>
    %49 = tpu.concatenate %8, %13, %18, %23, %28, %33, %38, %43, %48 in 1 : vector<128x128xbf16>, vector<128x128xbf16>, vector<128x128xbf16>, vector<128x128xbf16>, vector<128x128xbf16>, vector<128x128xbf16>, vector<128x128xbf16>, vector<128x128xbf16>, vector<128x128xbf16> -> vector<128x1152xbf16>
    %c0_23 = arith.constant 0 : index
    %c0_24 = arith.constant 0 : index
    %50 = vector.load %arg5[%c0_23, %c0_24] : memref<1152x128xbf16, #tpu.memory_space<vmem>>, vector<1152x128xbf16>
    %cst = arith.constant dense<0.000000e+00> : vector<128x128xf32>
    %51 = tpu.matmul %49, %50, %cst {dimension_numbers = #tpu.dot_dimension_numbers<[1], [0], [0], [1], [0, 0, 1, 1], [], []>} : vector<128x1152xbf16>, vector<1152x128xbf16>, vector<128x128xf32> -> vector<128x128xf32>
    %c0_25 = arith.constant 0 : index
    %c0_26 = arith.constant 0 : index
    %52 = vector.load %arg6[%c0_25, %c0_26] : memref<1x128xf32, #tpu.memory_space<vmem>>, vector<1x128xf32>
    %53 = vector.broadcast %52 : vector<1x128xf32> to vector<128x128xf32>
    %54 = arith.addf %51, %53 : vector<128x128xf32>
    %55 = arith.negf %54 : vector<128x128xf32>
    %56 = math.exp %55 : vector<128x128xf32>
    %cst_27 = arith.constant 1.000000e+00 : f32
    %57 = vector.broadcast %cst_27 : f32 to vector<128x128xf32>
    %58 = arith.addf %57, %56 : vector<128x128xf32>
    %59 = arith.divf %57, %58 : vector<128x128xf32>
    %60 = arith.truncf %59 : vector<128x128xf32> to vector<128x128xbf16>
    %61 = vector.shape_cast %60 : vector<128x128xbf16> to vector<1x8x16x128xbf16>
    %c0_28 = arith.constant 0 : index
    %c0_29 = arith.constant 0 : index
    %c0_30 = arith.constant 0 : index
    %c0_31 = arith.constant 0 : index
    %62 = vector.load %arg7[%c0_28, %c0_29, %c0_30, %c0_31] : memref<1x8x16x128xbf16, #tpu.memory_space<vmem>>, vector<1x8x16x128xbf16>
    tpu.vector_store %arg7[%c0_28, %c0_29, %c0_30, %c0_31], %61 {strides = array<i32>} : memref<1x8x16x128xbf16, #tpu.memory_space<vmem>>, vector<1x8x16x128xbf16>,
    return
  }
  func.func @transform_0(%arg0: i32, %arg1: i32) -> (i32, i32, i32, i32) {
    %c0_i32 = arith.constant 0 : i32
    %c0_i32_0 = arith.constant 0 : i32
    %c0_i32_1 = arith.constant 0 : i32
    %c0_i32_2 = arith.constant 0 : i32
    return %arg0, %c0_i32, %c0_i32_0, %c0_i32_1 : i32, i32, i32, i32
  }
  func.func @transform_1(%arg0: i32, %arg1: i32) -> (i32, i32, i32) {
    %c0_i32 = arith.constant 0 : i32
    %c0_i32_0 = arith.constant 0 : i32
    %c0_i32_1 = arith.constant 0 : i32
    %c0_i32_2 = arith.constant 0 : i32
    return %c0_i32, %c0_i32_0, %c0_i32_1 : i32, i32, i32
  }
  func.func @transform_2(%arg0: i32, %arg1: i32) -> (i32, i32, i32) {
    %c0_i32 = arith.constant 0 : i32
    %c0_i32_0 = arith.constant 0 : i32
    %c0_i32_1 = arith.constant 0 : i32
    %c0_i32_2 = arith.constant 0 : i32
    return %c0_i32, %c0_i32_0, %c0_i32_1 : i32, i32, i32
  }
  func.func @transform_3(%arg0: i32, %arg1: i32) -> (i32, i32) {
    %c0_i32 = arith.constant 0 : i32
    %c0_i32_0 = arith.constant 0 : i32
    %c0_i32_1 = arith.constant 0 : i32
    return %c0_i32, %c0_i32_0 : i32, i32
  }
  func.func @transform_4(%arg0: i32, %arg1: i32) -> (i32, i32) {
    %c0_i32 = arith.constant 0 : i32
    %c0_i32_0 = arith.constant 0 : i32
    %c0_i32_1 = arith.constant 0 : i32
    return %c0_i32, %c0_i32_0 : i32, i32
  }
  func.func @transform_5(%arg0: i32, %arg1: i32) -> (i32, i32, i32, i32) {
    %c0_i32 = arith.constant 0 : i32
    %c0_i32_0 = arith.constant 0 : i32
    %c0_i32_1 = arith.constant 0 : i32
    return %arg0, %arg1, %c0_i32, %c0_i32_0 : i32, i32, i32, i32
  }
}

</mosaic_0001>

<llo_original>
// kernel: tpu_custom_call.1
$region0: #{tpu_custom_call.1}
  #allocation0 [shape = 'u32[]', space=smem, size = 0x4, offset = 0x4, fixed_abs, tag = 'smem constant byte address 0x4 - core index']
  #allocation1 [shape = 'u32[144,128]{1,0:T(1,128)}', space=vmem, size = 0x12000, scoped, tag = 'internal scratch']
  #allocation2 [shape = 'f32[18,18,128]{2,1,0:T(8,128)}', space=vmem, size = 0x36000, scoped, tag = 'scratch operand']
  %s0 = inlined_call_operand.hbm [shape: f32[2,16,16,128], index: 0, kind: input, shape index: {}]
  %s1 = inlined_call_operand.hbm [shape: bf16[2,1152,128], index: 1, kind: input, shape index: {}]
  %s2 = inlined_call_operand.hbm [shape: f32[2,1,128], index: 2, kind: input, shape index: {}]
  %s3 = inlined_call_operand.hbm [shape: bf16[1152,128], index: 3, kind: input, shape index: {}]
  %s4 = inlined_call_operand.hbm [shape: f32[1,128], index: 4, kind: input, shape index: {}]
  %s5 = inlined_call_operand.hbm [shape: bf16[2,16,16,128], index: 5, kind: output, shape index: {}]
  %s6 = sld [smem:[#allocation0]]
  $region77: #{tpu_custom_call.1} parent=0
    _
  %s8 = ssub.s32 1, %s6
  %s9 = scalar_select 0, %s8, %s6
  $region1: #{tpu_custom_call.1} parent=0
    #allocation3 [shape = 'u8[262144]{0}', space=vmem, size = 0x40000, scoped, tag = 'input window, operand 0']
    #allocation4 [shape = 's32[2]{0}', space=sflag, size = 0x8, scoped, tag = 'scoped memory for tpu_custom_call.1']
    #allocation5 [shape = 's32[2]{0}', space=sflag, size = 0x8, scoped, tag = 'scoped memory for tpu_custom_call.1']
    #allocation6 [shape = 'u8[589824]{0}', space=vmem, size = 0x90000, scoped, tag = 'input window, operand 1, single buffered']
    #allocation7 [shape = 's32[1]{0}', space=sflag, size = 0x4, scoped, tag = 'scoped memory for tpu_custom_call.1']
    #allocation8 [shape = 'u8[1024]{0}', space=vmem, size = 0x400, scoped, tag = 'input window, operand 2, single buffered']
    #allocation9 [shape = 'u8[294912]{0}', space=vmem, size = 0x48000, scoped, tag = 'input window, operand 3, single buffered']
    #allocation10 [shape = 's32[1]{0}', space=sflag, size = 0x4, scoped, tag = 'scoped memory for tpu_custom_call.1']
    #allocation11 [shape = 'u8[512]{0}', space=vmem, size = 0x400, scoped, tag = 'input window, operand 4, single buffered']
    #allocation12 [shape = 'u8[65536]{0}', space=vmem, size = 0x10000, scoped, tag = 'output window, operand 0']
    %10 = vsyncpa [#allocation4], 0
    %s11 = scalar_lea.sflag [#allocation4], 1
    %12 = vsyncpa %s11, 0
    %13 = vsyncpa [#allocation7], 0
    %14 = vsyncpa [#allocation10], 0
    %15 = vsyncpa [#allocation5], 0
    %s16 = scalar_lea.sflag [#allocation5], 1
    %17 = vsyncpa %s16, 0
    loop: start=0, step=1, limit=6
    $region2: #{tpu_custom_call.1} parent=1 // loop_pre_header
      _
    $region3: #{tpu_custom_call.1} parent=1 // loop_header
      %s19 = sphi 0, %s23
      %p20 = scmp.ge.s32.totalorder %s19, 6
      %s26 = sphi 0, %s38
      %s27 = sphi 0, %s34
      %s28 = sphi 0, %s26
      %s29 = sphi 0, %s27
      %s30 = sphi 0, %s28
      %s31 = sphi 0, %s29
      %s41 = sphi 0, %s43
      %s44 = sphi 0, %s41
      %s45 = sphi 0, %s44
      %s61 = sphi 0, %s45
      %s65 = sphi 0, %s65
      %s67 = sphi 0, %s65
      %s68 = sphi 0, %s67
      %s82 = sphi 0, %s68
      %s86 = sphi 0, %s86
      %s88 = sphi 0, %s86
      %s89 = sphi 0, %s88
      %s103 = sphi 0, %s89
      %s107 = sphi 0, %s107
      %s109 = sphi 0, %s107
      %s110 = sphi 0, %s109
      %s124 = sphi 0, %s110
      %s128 = sphi 0, %s128
      %s130 = sphi 0, %s128
      %s131 = sphi 0, %s130
      %s145 = sphi 0, %s131
      %s153 = sphi 0, %s155
      %s156 = sphi 0, %s153
      %s157 = sphi 0, %s156
      %s173 = sphi 0, %s157
    $region4: #{tpu_custom_call.1} parent=1 // loop_header_branch
      %22 = sbr.rel (%p20) target = $region8
    $region5: #{tpu_custom_call.1} parent=1 // loop_body
      %s24 = ssub.s32 %s19, 1
      %s25 = ssub.s32 %s19, 2
      %s32 = sadd.s32 1, %s27
      %p33 = scmp.ge.s32.totalorder %s32, 2
      %s34 = scalar_select %p33, 0, %s32
      %s35 = sadd.s32 1, %s26
      %s36 = scalar_select %p33, %s35, %s26
      %p37 = scmp.ge.s32.totalorder %s36, 2
      %s38 = scalar_select %p37, 0, %s36
      %s39 = ssub.s32 %s26, %s38
      %p40 = scmp.eq.s32.totalorder %s39, 0
      %s42 = sadd.s32 %s41, 1
      %s43 = scalar_select %p40, %s41, %s42
      %p46 = pneg %p40
      %p47 = scmp.eq.s32.totalorder %s19, 3
      %p48 = por %p46, %p47
      %p49 = scmp.ne.s32.totalorder %s41, %s44
      %p50 = scmp.eq.s32.totalorder %s19, 0
      %p51 = por %p49, %p50
      %p52 = scmp.ne.s32.totalorder %s41, %s44
      %p53 = scmp.eq.s32.totalorder %s24, 3
      %p54 = por %p52, %p53
      %p55 = scmp.ne.s32.totalorder %s44, %s45
      %p56 = scmp.eq.s32.totalorder %s24, 0
      %p57 = por %p55, %p56
      %p58 = scmp.ne.s32.totalorder %s44, %s45
      %p59 = scmp.eq.s32.totalorder %s25, 3
      %p60 = por %p58, %p59
      %p62 = scmp.ne.s32.totalorder %s45, %s61
      %p63 = scmp.eq.s32.totalorder %s25, 0
      %p64 = por %p62, %p63
      %s66 = sadd.s32 %s65, 1
      %p69 = scmp.eq.s32.totalorder %s19, 3
      %p70 = scmp.ne.s32.totalorder %s65, %s67
      %p71 = scmp.eq.s32.totalorder %s19, 0
      %p72 = por %p70, %p71
      %p73 = scmp.ne.s32.totalorder %s65, %s67
      %p74 = scmp.eq.s32.totalorder %s24, 3
      %p75 = por %p73, %p74
      %p76 = scmp.ne.s32.totalorder %s67, %s68
      %p77 = scmp.eq.s32.totalorder %s24, 0
      %p78 = por %p76, %p77
      %p79 = scmp.ne.s32.totalorder %s67, %s68
      %p80 = scmp.eq.s32.totalorder %s25, 3
      %p81 = por %p79, %p80
      %p83 = scmp.ne.s32.totalorder %s68, %s82
      %p84 = scmp.eq.s32.totalorder %s25, 0
      %p85 = por %p83, %p84
      %s87 = sadd.s32 %s86, 1
      %p90 = scmp.eq.s32.totalorder %s19, 3
      %p91 = scmp.ne.s32.totalorder %s86, %s88
      %p92 = scmp.eq.s32.totalorder %s19, 0
      %p93 = por %p91, %p92
      %p94 = scmp.ne.s32.totalorder %s86, %s88
      %p95 = scmp.eq.s32.totalorder %s24, 3
      %p96 = por %p94, %p95
      %p97 = scmp.ne.s32.totalorder %s88, %s89
      %p98 = scmp.eq.s32.totalorder %s24, 0
      %p99 = por %p97, %p98
      %p100 = scmp.ne.s32.totalorder %s88, %s89
      %p101 = scmp.eq.s32.totalorder %s25, 3
      %p102 = por %p100, %p101
      %p104 = scmp.ne.s32.totalorder %s89, %s103
      %p105 = scmp.eq.s32.totalorder %s25, 0
      %p106 = por %p104, %p105
      %s108 = sadd.s32 %s107, 1
      %p111 = scmp.eq.s32.totalorder %s19, 3
      %p112 = scmp.ne.s32.totalorder %s107, %s109
      %p113 = scmp.eq.s32.totalorder %s19, 0
      %p114 = por %p112, %p113
      %p115 = scmp.ne.s32.totalorder %s107, %s109
      %p116 = scmp.eq.s32.totalorder %s24, 3
      %p117 = por %p115, %p116
      %p118 = scmp.ne.s32.totalorder %s109, %s110
      %p119 = scmp.eq.s32.totalorder %s24, 0
      %p120 = por %p118, %p119
      %p121 = scmp.ne.s32.totalorder %s109, %s110
      %p122 = scmp.eq.s32.totalorder %s25, 3
      %p123 = por %p121, %p122
      %p125 = scmp.ne.s32.totalorder %s110, %s124
      %p126 = scmp.eq.s32.totalorder %s25, 0
      %p127 = por %p125, %p126
      %s129 = sadd.s32 %s128, 1
      %p132 = scmp.eq.s32.totalorder %s19, 3
      %p133 = scmp.ne.s32.totalorder %s128, %s130
      %p134 = scmp.eq.s32.totalorder %s19, 0
      %p135 = por %p133, %p134
      %p136 = scmp.ne.s32.totalorder %s128, %s130
      %p137 = scmp.eq.s32.totalorder %s24, 3
      %p138 = por %p136, %p137
      %p139 = scmp.ne.s32.totalorder %s130, %s131
      %p140 = scmp.eq.s32.totalorder %s24, 0
      %p141 = por %p139, %p140
      %p142 = scmp.ne.s32.totalorder %s130, %s131
      %p143 = scmp.eq.s32.totalorder %s25, 3
      %p144 = por %p142, %p143
      %p146 = scmp.ne.s32.totalorder %s131, %s145
      %p147 = scmp.eq.s32.totalorder %s25, 0
      %p148 = por %p146, %p147
      %s149 = ssub.s32 %s26, %s38
      %s150 = ssub.s32 %s27, %s34
      %s151 = sor.u32 %s149, %s150
      %p152 = scmp.eq.s32.totalorder %s151, 0
      %s154 = sadd.s32 %s153, 1
      %s155 = scalar_select %p152, %s153, %s154
      %p158 = pneg %p152
      %p159 = scmp.eq.s32.totalorder %s19, 3
      %p160 = por %p158, %p159
      %p161 = scmp.ne.s32.totalorder %s153, %s156
      %p162 = scmp.eq.s32.totalorder %s19, 0
      %p163 = por %p161, %p162
      %p164 = scmp.ne.s32.totalorder %s153, %s156
      %p165 = scmp.eq.s32.totalorder %s24, 3
      %p166 = por %p164, %p165
      %p167 = scmp.ne.s32.totalorder %s156, %s157
      %p168 = scmp.eq.s32.totalorder %s24, 0
      %p169 = por %p167, %p168
      %p170 = scmp.ne.s32.totalorder %s156, %s157
      %p171 = scmp.eq.s32.totalorder %s25, 3
      %p172 = por %p170, %p171
      %p174 = scmp.ne.s32.totalorder %s157, %s173
      %p175 = scmp.eq.s32.totalorder %s25, 0
      %p176 = por %p174, %p175
      %p177 = scmp.le.s32.totalorder 1, %s19
      %p178 = scmp.lt.s32.totalorder %s19, 5
      %p179 = pnand %p177, %p178
      %p180 = pneg %p179
      // Predicated region
      $region9: #{tpu_custom_call.1} parent=5 // pred_check
        _
      $region10: #{tpu_custom_call.1} parent=5 // pred_check_branch
        %182 = sbr.rel (%p179) target = $region12
      $region11: #{tpu_custom_call.1} parent=5 // pred_region
        %s183 = ssub.s32 %s19, 1
        // Predicated region
        $region13: #{tpu_custom_call.1} parent=11 // pred_check
          %p184 = pneg %p78
        $region14: #{tpu_custom_call.1} parent=11 // pred_check_branch
          %186 = sbr.rel (%p184) target = $region16
        $region15: #{tpu_custom_call.1} parent=11 // pred_region
          %s188 = ssub.s32 18432, 18432
          %189 = vsyncadd [#allocation7], %s188
          %s190 = sshll.u32 [#allocation6], 4
          %s191 = int_to_ptr.vmem [resolvable:$true] %s190
          %196 = dma.hbm_to_vmem [thread:$0]  %s1, 18432, %s191, [#allocation7], 64, 64, 4
        $region16: #{tpu_custom_call.1} parent=11 // pred_fallthru
          _
        // Predicated region
        $region17: #{tpu_custom_call.1} parent=11 // pred_check
          %p197 = pneg %p99
        $region18: #{tpu_custom_call.1} parent=11 // pred_check_branch
          %199 = sbr.rel (%p197) target = $region20
        $region19: #{tpu_custom_call.1} parent=11 // pred_region
          %s201 = ssub.s32 32, 32
          %202 = vsyncadd [#allocation7], %s201
          %s203 = sshll.u32 [#allocation8], 4
          %s204 = int_to_ptr.vmem [resolvable:$true] %s203
          %209 = dma.hbm_to_vmem [thread:$0]  %s2, 32, %s204, [#allocation7], 16, 16, 1
        $region20: #{tpu_custom_call.1} parent=11 // pred_fallthru
          _
        // Predicated region
        $region21: #{tpu_custom_call.1} parent=11 // pred_check
          %p210 = pneg %p120
        $region22: #{tpu_custom_call.1} parent=11 // pred_check_branch
          %212 = sbr.rel (%p210) target = $region24
        $region23: #{tpu_custom_call.1} parent=11 // pred_region
          %s214 = ssub.s32 9216, 9216
          %215 = vsyncadd [#allocation10], %s214
          %s216 = sshll.u32 [#allocation9], 4
          %s217 = int_to_ptr.vmem [resolvable:$true] %s216
          %222 = dma.hbm_to_vmem [thread:$0]  %s3, 9216, %s217, [#allocation10], 64, 64, 4
        $region24: #{tpu_custom_call.1} parent=11 // pred_fallthru
          _
        // Predicated region
        $region25: #{tpu_custom_call.1} parent=11 // pred_check
          %p223 = pneg %p141
        $region26: #{tpu_custom_call.1} parent=11 // pred_check_branch
          %225 = sbr.rel (%p223) target = $region28
        $region27: #{tpu_custom_call.1} parent=11 // pred_region
          %s227 = ssub.s32 16, 16
          %228 = vsyncadd [#allocation10], %s227
          %s230 = sshll.u32 [#allocation11], 4
          %s231 = int_to_ptr.vmem [resolvable:$true] %s230
          %233 = dma.hbm_to_vmem [thread:$0]  %s4, 16, %s231, [#allocation10]
        $region28: #{tpu_custom_call.1} parent=11 // pred_fallthru
          _
      $region12: #{tpu_custom_call.1} parent=5 // pred_fallthru
        _
      %p234 = scmp.lt.s32.totalorder %s19, 4
      // Predicated region
      $region29: #{tpu_custom_call.1} parent=5 // pred_check
        %p235 = pneg %p234
      $region30: #{tpu_custom_call.1} parent=5 // pred_check_branch
        %237 = sbr.rel (%p235) target = $region32
      $region31: #{tpu_custom_call.1} parent=5 // pred_region
        // Predicated region
        $region33: #{tpu_custom_call.1} parent=31 // pred_check
          %p238 = pneg %p51
        $region34: #{tpu_custom_call.1} parent=31 // pred_check_branch
          %240 = sbr.rel (%p238) target = $region36
        $region35: #{tpu_custom_call.1} parent=31 // pred_region
          %s241 = sand.u32 %s41, 1
          %s242 = scalar_lea.sflag [#allocation4], %s241
          %s243 = sand.u32 %s41, 1
          %s244 = smul.addr %s243, 256
          %s245 = scalar_lea.vmem [#allocation3], %s244
          %s247 = ssub.s32 4096, 4096
          %248 = vsyncadd %s242, %s247
          %s249 = smul.addr %s26, 32
          %s250 = smul.addr %s249, 128
          %s251 = scalar_lea.hbm %s0, %s250
          %s252 = sshll.u32 %s245, 4
          %s253 = int_to_ptr.vmem [resolvable:$true] %s252
          %258 = dma.hbm_to_vmem [thread:$0]  %s251, 4096, %s253, %s242, 128, 128, 8
        $region36: #{tpu_custom_call.1} parent=31 // pred_fallthru
          _
      $region32: #{tpu_custom_call.1} parent=5 // pred_fallthru
        _
      %p259 = scmp.le.s32.totalorder 1, %s19
      %p260 = scmp.lt.s32.totalorder %s19, 5
      %p261 = pnand %p259, %p260
      %p262 = pneg %p261
      // Predicated region
      $region37: #{tpu_custom_call.1} parent=5 // pred_check
        _
      $region38: #{tpu_custom_call.1} parent=5 // pred_check_branch
        %264 = sbr.rel (%p261) target = $region40
      $region39: #{tpu_custom_call.1} parent=5 // pred_region
        %s265 = ssub.s32 %s19, 1
        %s266 = sand.u32 %s44, 1
        %s267 = scalar_lea.sflag [#allocation4], %s266
        %s268 = sand.u32 %s44, 1
        %s269 = smul.addr %s268, 256
        %s270 = scalar_lea.vmem [#allocation3], %s269
        // Predicated region
        $region41: #{tpu_custom_call.1} parent=39 // pred_check
          %p271 = pneg %p57
        $region42: #{tpu_custom_call.1} parent=39 // pred_check_branch
          %273 = sbr.rel (%p271) target = $region44
        $region43: #{tpu_custom_call.1} parent=39 // pred_region
          %274 = dma.done %s267, 4096
        $region44: #{tpu_custom_call.1} parent=39 // pred_fallthru
          _
        // Predicated region
        $region45: #{tpu_custom_call.1} parent=39 // pred_check
          %p275 = pneg %p78
        $region46: #{tpu_custom_call.1} parent=39 // pred_check_branch
          %277 = sbr.rel (%p275) target = $region48
        $region47: #{tpu_custom_call.1} parent=39 // pred_region
          %278 = dma.done [#allocation7], 18432
        $region48: #{tpu_custom_call.1} parent=39 // pred_fallthru
          _
        // Predicated region
        $region49: #{tpu_custom_call.1} parent=39 // pred_check
          %p279 = pneg %p99
        $region50: #{tpu_custom_call.1} parent=39 // pred_check_branch
          %281 = sbr.rel (%p279) target = $region52
        $region51: #{tpu_custom_call.1} parent=39 // pred_region
          %282 = dma.done [#allocation7], 32
        $region52: #{tpu_custom_call.1} parent=39 // pred_fallthru
          _
        // Predicated region
        $region53: #{tpu_custom_call.1} parent=39 // pred_check
          %p283 = pneg %p120
        $region54: #{tpu_custom_call.1} parent=39 // pred_check_branch
          %285 = sbr.rel (%p283) target = $region56
        $region55: #{tpu_custom_call.1} parent=39 // pred_region
          %286 = dma.done [#allocation10], 9216
        $region56: #{tpu_custom_call.1} parent=39 // pred_fallthru
          _
        // Predicated region
        $region57: #{tpu_custom_call.1} parent=39 // pred_check
          %p287 = pneg %p141
        $region58: #{tpu_custom_call.1} parent=39 // pred_check_branch
          %289 = sbr.rel (%p287) target = $region60
        $region59: #{tpu_custom_call.1} parent=39 // pred_region
          %290 = dma.done [#allocation10], 16
        $region60: #{tpu_custom_call.1} parent=39 // pred_fallthru
          _
        %s291 = sand.u32 %s44, 1
        %s292 = scalar_lea.sflag [#allocation4], %s291
        %s293 = sand.u32 %s44, 1
        %s294 = smul.addr %s293, 256
        %s295 = scalar_lea.vmem [#allocation3], %s294
        %p296 = pneg %p57
        %p297 = pneg %p54
        %p298 = pneg %p78
        %p299 = pneg %p75
        %p300 = pneg %p99
        %p301 = pneg %p96
        %p302 = pneg %p120
        %p303 = pneg %p117
        %p304 = pneg %p141
        %p305 = pneg %p138
        %p306 = pneg %p169
        %p307 = pneg %p166
        %s308 = sand.u32 %s156, 1
        %s309 = scalar_lea.sflag [#allocation5], %s308
        %s310 = sand.u32 %s156, 1
        %s311 = smul.addr %s310, 64
        %s312 = scalar_lea.vmem [#allocation12], %s311
        %s313 = smul.u32 8, %s29
        %p315 = scmp.eq.s32.totalorder %s29, 0
        // Predicated region
        $region61: #{tpu_custom_call.1} parent=39 // pred_check
          %p316 = pneg %p315
        $region62: #{tpu_custom_call.1} parent=39 // pred_check_branch
          %318 = sbr.rel (%p316) target = $region64
        $region63: #{tpu_custom_call.1} parent=39 // pred_region
          %319 = vst [vmem:[#allocation2] sm:$0xff] 0.0
          %320 = vst [vmem:[#allocation2 + $0x8] sm:$0xff] 0.0
          %321 = vst [vmem:[#allocation2 + $0x10] sm:$0x3] 0.0
          %s322 = scalar_lea.vmem [#allocation2], 408
          %323 = vst [vmem:[%s322] sm:$0xff] 0.0
          %324 = vst [vmem:[%s322 + $0x8] sm:$0xff] 0.0
          %325 = vst [vmem:[%s322 + $0x10] sm:$0x3] 0.0
          %326 = vst [vmem:[#allocation2] sm:$0x1] 0.0
          %327 = vst [vmem:[#allocation2 + $0x18] sm:$0x1] 0.0
          %328 = vst [vmem:[#allocation2 + $0x30] sm:$0x1] 0.0
          %329 = vst [vmem:[#allocation2 + $0x48] sm:$0x1] 0.0
          %330 = vst [vmem:[#allocation2 + $0x60] sm:$0x1] 0.0
          %331 = vst [vmem:[#allocation2 + $0x78] sm:$0x1] 0.0
          %332 = vst [vmem:[#allocation2 + $0x90] sm:$0x1] 0.0
          %333 = vst [vmem:[#allocation2 + $0xa8] sm:$0x1] 0.0
          %334 = vst [vmem:[#allocation2 + $0xc0] sm:$0x1] 0.0
          %335 = vst [vmem:[#allocation2 + $0xd8] sm:$0x1] 0.0
          %336 = vst [vmem:[#allocation2 + $0xf0] sm:$0x1] 0.0
          %337 = vst [vmem:[#allocation2 + $0x108] sm:$0x1] 0.0
          %338 = vst [vmem:[#allocation2 + $0x120] sm:$0x1] 0.0
          %339 = vst [vmem:[#allocation2 + $0x138] sm:$0x1] 0.0
          %340 = vst [vmem:[#allocation2 + $0x150] sm:$0x1] 0.0
          %341 = vst [vmem:[#allocation2 + $0x168] sm:$0x1] 0.0
          %342 = vst [vmem:[#allocation2 + $0x180] sm:$0x1] 0.0
          %343 = vst [vmem:[#allocation2 + $0x198] sm:$0x1] 0.0
          %344 = vst [vmem:[#allocation2 + $0x11] sm:$0x1] 0.0
          %345 = vst [vmem:[#allocation2 + $0x29] sm:$0x1] 0.0
          %346 = vst [vmem:[#allocation2 + $0x41] sm:$0x1] 0.0
          %347 = vst [vmem:[#allocation2 + $0x59] sm:$0x1] 0.0
          %348 = vst [vmem:[#allocation2 + $0x71] sm:$0x1] 0.0
          %349 = vst [vmem:[#allocation2 + $0x89] sm:$0x1] 0.0
          %350 = vst [vmem:[#allocation2 + $0xa1] sm:$0x1] 0.0
          %351 = vst [vmem:[#allocation2 + $0xb9] sm:$0x1] 0.0
          %352 = vst [vmem:[#allocation2 + $0xd1] sm:$0x1] 0.0
          %353 = vst [vmem:[#allocation2 + $0xe9] sm:$0x1] 0.0
          %354 = vst [vmem:[#allocation2 + $0x101] sm:$0x1] 0.0
          %355 = vst [vmem:[#allocation2 + $0x119] sm:$0x1] 0.0
          %356 = vst [vmem:[#allocation2 + $0x131] sm:$0x1] 0.0
          %357 = vst [vmem:[#allocation2 + $0x149] sm:$0x1] 0.0
          %358 = vst [vmem:[#allocation2 + $0x161] sm:$0x1] 0.0
          %359 = vst [vmem:[#allocation2 + $0x179] sm:$0x1] 0.0
          %360 = vst [vmem:[#allocation2 + $0x191] sm:$0x1] 0.0
          %361 = vst [vmem:[#allocation2 + $0x1a9] sm:$0x1] 0.0
          %v362 = vld [vmem:[%s270] sm:$0xff]
          %v363 = vld [vmem:[%s270 + $0x8] sm:$0xff]
          %v364 = vld [vmem:[%s270 + $0x10] sm:$0xff]
          %v365 = vld [vmem:[%s270 + $0x18] sm:$0xff]
          %v366 = vld [vmem:[%s270 + $0x20] sm:$0xff]
          %v367 = vld [vmem:[%s270 + $0x28] sm:$0xff]
          %v368 = vld [vmem:[%s270 + $0x30] sm:$0xff]
          %v369 = vld [vmem:[%s270 + $0x38] sm:$0xff]
          %v370 = vld [vmem:[%s270 + $0x40] sm:$0xff]
          %v371 = vld [vmem:[%s270 + $0x48] sm:$0xff]
          %v372 = vld [vmem:[%s270 + $0x50] sm:$0xff]
          %v373 = vld [vmem:[%s270 + $0x58] sm:$0xff]
          %v374 = vld [vmem:[%s270 + $0x60] sm:$0xff]
          %v375 = vld [vmem:[%s270 + $0x68] sm:$0xff]
          %v376 = vld [vmem:[%s270 + $0x70] sm:$0xff]
          %v377 = vld [vmem:[%s270 + $0x78] sm:$0xff]
          %v378 = vld [vmem:[%s270 + $0x80] sm:$0xff]
          %v379 = vld [vmem:[%s270 + $0x88] sm:$0xff]
          %v380 = vld [vmem:[%s270 + $0x90] sm:$0xff]
          %v381 = vld [vmem:[%s270 + $0x98] sm:$0xff]
          %v382 = vld [vmem:[%s270 + $0xa0] sm:$0xff]
          %v383 = vld [vmem:[%s270 + $0xa8] sm:$0xff]
          %v384 = vld [vmem:[%s270 + $0xb0] sm:$0xff]
          %v385 = vld [vmem:[%s270 + $0xb8] sm:$0xff]
          %v386 = vld [vmem:[%s270 + $0xc0] sm:$0xff]
          %v387 = vld [vmem:[%s270 + $0xc8] sm:$0xff]
          %v388 = vld [vmem:[%s270 + $0xd0] sm:$0xff]
          %v389 = vld [vmem:[%s270 + $0xd8] sm:$0xff]
          %v390 = vld [vmem:[%s270 + $0xe0] sm:$0xff]
          %v391 = vld [vmem:[%s270 + $0xe8] sm:$0xff]
          %v392 = vld [vmem:[%s270 + $0xf0] sm:$0xff]
          %v393 = vld [vmem:[%s270 + $0xf8] sm:$0xff]
          %s394 = scalar_lea.vmem [#allocation2], 24
          %395 = vst [vmem:[%s394 + $0x1] sm:$0xff] %v362
          %396 = vst [vmem:[%s394 + $0x9] sm:$0xff] %v363
          %397 = vst [vmem:[%s394 + $0x19] sm:$0xff] %v364
          %398 = vst [vmem:[%s394 + $0x21] sm:$0xff] %v365
          %399 = vst [vmem:[%s394 + $0x31] sm:$0xff] %v366
          %400 = vst [vmem:[%s394 + $0x39] sm:$0xff] %v367
          %401 = vst [vmem:[%s394 + $0x49] sm:$0xff] %v368
          %402 = vst [vmem:[%s394 + $0x51] sm:$0xff] %v369
          %403 = vst [vmem:[%s394 + $0x61] sm:$0xff] %v370
          %404 = vst [vmem:[%s394 + $0x69] sm:$0xff] %v371
          %405 = vst [vmem:[%s394 + $0x79] sm:$0xff] %v372
          %406 = vst [vmem:[%s394 + $0x81] sm:$0xff] %v373
          %407 = vst [vmem:[%s394 + $0x91] sm:$0xff] %v374
          %408 = vst [vmem:[%s394 + $0x99] sm:$0xff] %v375
          %409 = vst [vmem:[%s394 + $0xa9] sm:$0xff] %v376
          %410 = vst [vmem:[%s394 + $0xb1] sm:$0xff] %v377
          %411 = vst [vmem:[%s394 + $0xc1] sm:$0xff] %v378
          %412 = vst [vmem:[%s394 + $0xc9] sm:$0xff] %v379
          %413 = vst [vmem:[%s394 + $0xd9] sm:$0xff] %v380
          %414 = vst [vmem:[%s394 + $0xe1] sm:$0xff] %v381
          %415 = vst [vmem:[%s394 + $0xf1] sm:$0xff] %v382
          %416 = vst [vmem:[%s394 + $0xf9] sm:$0xff] %v383
          %417 = vst [vmem:[%s394 + $0x109] sm:$0xff] %v384
          %418 = vst [vmem:[%s394 + $0x111] sm:$0xff] %v385
          %419 = vst [vmem:[%s394 + $0x121] sm:$0xff] %v386
          %420 = vst [vmem:[%s394 + $0x129] sm:$0xff] %v387
          %421 = vst [vmem:[%s394 + $0x139] sm:$0xff] %v388
          %422 = vst [vmem:[%s394 + $0x141] sm:$0xff] %v389
          %423 = vst [vmem:[%s394 + $0x151] sm:$0xff] %v390
          %424 = vst [vmem:[%s394 + $0x159] sm:$0xff] %v391
          %425 = vst [vmem:[%s394 + $0x169] sm:$0xff] %v392
          %426 = vst [vmem:[%s394 + $0x171] sm:$0xff] %v393
          %v427 = vld [vmem:[#allocation2] sm:$0xff]
          %v428 = vld [vmem:[#allocation2 + $0x8] sm:$0xff]
          %v429 = vld [vmem:[#allocation2 + $0x18] sm:$0xff]
          %v430 = vld [vmem:[#allocation2 + $0x20] sm:$0xff]
          %v431 = vld [vmem:[#allocation2 + $0x30] sm:$0xff]
          %v432 = vld [vmem:[#allocation2 + $0x38] sm:$0xff]
          %v433 = vld [vmem:[#allocation2 + $0x48] sm:$0xff]
          %v434 = vld [vmem:[#allocation2 + $0x50] sm:$0xff]
          %v435 = vld [vmem:[#allocation2 + $0x60] sm:$0xff]
          %v436 = vld [vmem:[#allocation2 + $0x68] sm:$0xff]
          %v437 = vld [vmem:[#allocation2 + $0x78] sm:$0xff]
          %v438 = vld [vmem:[#allocation2 + $0x80] sm:$0xff]
          %v439 = vld [vmem:[#allocation2 + $0x90] sm:$0xff]
          %v440 = vld [vmem:[#allocation2 + $0x98] sm:$0xff]
          %v441 = vld [vmem:[#allocation2 + $0xa8] sm:$0xff]
          %v442 = vld [vmem:[#allocation2 + $0xb0] sm:$0xff]
          %v443 = vld [vmem:[#allocation2 + $0xc0] sm:$0xff]
          %v444 = vld [vmem:[#allocation2 + $0xc8] sm:$0xff]
          %v445 = vld [vmem:[#allocation2 + $0xd8] sm:$0xff]
          %v446 = vld [vmem:[#allocation2 + $0xe0] sm:$0xff]
          %v447 = vld [vmem:[#allocation2 + $0xf0] sm:$0xff]
          %v448 = vld [vmem:[#allocation2 + $0xf8] sm:$0xff]
          %v449 = vld [vmem:[#allocation2 + $0x108] sm:$0xff]
          %v450 = vld [vmem:[#allocation2 + $0x110] sm:$0xff]
          %v451 = vld [vmem:[#allocation2 + $0x120] sm:$0xff]
          %v452 = vld [vmem:[#allocation2 + $0x128] sm:$0xff]
          %v453 = vld [vmem:[#allocation2 + $0x138] sm:$0xff]
          %v454 = vld [vmem:[#allocation2 + $0x140] sm:$0xff]
          %v455 = vld [vmem:[#allocation2 + $0x150] sm:$0xff]
          %v456 = vld [vmem:[#allocation2 + $0x158] sm:$0xff]
          %v457 = vld [vmem:[#allocation2 + $0x168] sm:$0xff]
          %v458 = vld [vmem:[#allocation2 + $0x170] sm:$0xff]
          %v459 = vpack.c.bf16 %v428, %v427
          %v460 = vpack.c.bf16 %v430, %v429
          %v461 = vpack.c.bf16 %v432, %v431
          %v462 = vpack.c.bf16 %v434, %v433
          %v463 = vpack.c.bf16 %v436, %v435
          %v464 = vpack.c.bf16 %v438, %v437
          %v465 = vpack.c.bf16 %v440, %v439
          %v466 = vpack.c.bf16 %v442, %v441
          %v467 = vpack.c.bf16 %v444, %v443
          %v468 = vpack.c.bf16 %v446, %v445
          %v469 = vpack.c.bf16 %v448, %v447
          %v470 = vpack.c.bf16 %v450, %v449
          %v471 = vpack.c.bf16 %v452, %v451
          %v472 = vpack.c.bf16 %v454, %v453
          %v473 = vpack.c.bf16 %v456, %v455
          %v474 = vpack.c.bf16 %v458, %v457
          %v475 = vld [vmem:[#allocation2 + $0x1] sm:$0xff]
          %v476 = vld [vmem:[#allocation2 + $0x9] sm:$0xff]
          %v477 = vld [vmem:[#allocation2 + $0x19] sm:$0xff]
          %v478 = vld [vmem:[#allocation2 + $0x21] sm:$0xff]
          %v479 = vld [vmem:[#allocation2 + $0x31] sm:$0xff]
          %v480 = vld [vmem:[#allocation2 + $0x39] sm:$0xff]
          %v481 = vld [vmem:[#allocation2 + $0x49] sm:$0xff]
          %v482 = vld [vmem:[#allocation2 + $0x51] sm:$0xff]
          %v483 = vld [vmem:[#allocation2 + $0x61] sm:$0xff]
          %v484 = vld [vmem:[#allocation2 + $0x69] sm:$0xff]
          %v485 = vld [vmem:[#allocation2 + $0x79] sm:$0xff]
          %v486 = vld [vmem:[#allocation2 + $0x81] sm:$0xff]
          %v487 = vld [vmem:[#allocation2 + $0x91] sm:$0xff]
          %v488 = vld [vmem:[#allocation2 + $0x99] sm:$0xff]
          %v489 = vld [vmem:[#allocation2 + $0xa9] sm:$0xff]
          %v490 = vld [vmem:[#allocation2 + $0xb1] sm:$0xff]
          %v491 = vld [vmem:[#allocation2 + $0xc1] sm:$0xff]
          %v492 = vld [vmem:[#allocation2 + $0xc9] sm:$0xff]
          %v493 = vld [vmem:[#allocation2 + $0xd9] sm:$0xff]
          %v494 = vld [vmem:[#allocation2 + $0xe1] sm:$0xff]
          %v495 = vld [vmem:[#allocation2 + $0xf1] sm:$0xff]
          %v496 = vld [vmem:[#allocation2 + $0xf9] sm:$0xff]
          %v497 = vld [vmem:[#allocation2 + $0x109] sm:$0xff]
          %v498 = vld [vmem:[#allocation2 + $0x111] sm:$0xff]
          %v499 = vld [vmem:[#allocation2 + $0x121] sm:$0xff]
          %v500 = vld [vmem:[#allocation2 + $0x129] sm:$0xff]
          %v501 = vld [vmem:[#allocation2 + $0x139] sm:$0xff]
          %v502 = vld [vmem:[#allocation2 + $0x141] sm:$0xff]
          %v503 = vld [vmem:[#allocation2 + $0x151] sm:$0xff]
          %v504 = vld [vmem:[#allocation2 + $0x159] sm:$0xff]
          %v505 = vld [vmem:[#allocation2 + $0x169] sm:$0xff]
          %v506 = vld [vmem:[#allocation2 + $0x171] sm:$0xff]
          %v507 = vpack.c.bf16 %v476, %v475
          %v508 = vpack.c.bf16 %v478, %v477
          %v509 = vpack.c.bf16 %v480, %v479
          %v510 = vpack.c.bf16 %v482, %v481
          %v511 = vpack.c.bf16 %v484, %v483
          %v512 = vpack.c.bf16 %v486, %v485
          %v513 = vpack.c.bf16 %v488, %v487
          %v514 = vpack.c.bf16 %v490, %v489
          %v515 = vpack.c.bf16 %v492, %v491
          %v516 = vpack.c.bf16 %v494, %v493
          %v517 = vpack.c.bf16 %v496, %v495
          %v518 = vpack.c.bf16 %v498, %v497
          %v519 = vpack.c.bf16 %v500, %v499
          %v520 = vpack.c.bf16 %v502, %v501
          %v521 = vpack.c.bf16 %v504, %v503
          %v522 = vpack.c.bf16 %v506, %v505
          %v523 = vld [vmem:[#allocation2 + $0x2] sm:$0xff]
          %v524 = vld [vmem:[#allocation2 + $0xa] sm:$0xff]
          %v525 = vld [vmem:[#allocation2 + $0x1a] sm:$0xff]
          %v526 = vld [vmem:[#allocation2 + $0x22] sm:$0xff]
          %v527 = vld [vmem:[#allocation2 + $0x32] sm:$0xff]
          %v528 = vld [vmem:[#allocation2 + $0x3a] sm:$0xff]
          %v529 = vld [vmem:[#allocation2 + $0x4a] sm:$0xff]
          %v530 = vld [vmem:[#allocation2 + $0x52] sm:$0xff]
          %v531 = vld [vmem:[#allocation2 + $0x62] sm:$0xff]
          %v532 = vld [vmem:[#allocation2 + $0x6a] sm:$0xff]
          %v533 = vld [vmem:[#allocation2 + $0x7a] sm:$0xff]
          %v534 = vld [vmem:[#allocation2 + $0x82] sm:$0xff]
          %v535 = vld [vmem:[#allocation2 + $0x92] sm:$0xff]
          %v536 = vld [vmem:[#allocation2 + $0x9a] sm:$0xff]
          %v537 = vld [vmem:[#allocation2 + $0xaa] sm:$0xff]
          %v538 = vld [vmem:[#allocation2 + $0xb2] sm:$0xff]
          %v539 = vld [vmem:[#allocation2 + $0xc2] sm:$0xff]
          %v540 = vld [vmem:[#allocation2 + $0xca] sm:$0xff]
          %v541 = vld [vmem:[#allocation2 + $0xda] sm:$0xff]
          %v542 = vld [vmem:[#allocation2 + $0xe2] sm:$0xff]
          %v543 = vld [vmem:[#allocation2 + $0xf2] sm:$0xff]
          %v544 = vld [vmem:[#allocation2 + $0xfa] sm:$0xff]
          %v545 = vld [vmem:[#allocation2 + $0x10a] sm:$0xff]
          %v546 = vld [vmem:[#allocation2 + $0x112] sm:$0xff]
          %v547 = vld [vmem:[#allocation2 + $0x122] sm:$0xff]
          %v548 = vld [vmem:[#allocation2 + $0x12a] sm:$0xff]
          %v549 = vld [vmem:[#allocation2 + $0x13a] sm:$0xff]
          %v550 = vld [vmem:[#allocation2 + $0x142] sm:$0xff]
          %v551 = vld [vmem:[#allocation2 + $0x152] sm:$0xff]
          %v552 = vld [vmem:[#allocation2 + $0x15a] sm:$0xff]
          %v553 = vld [vmem:[#allocation2 + $0x16a] sm:$0xff]
          %v554 = vld [vmem:[#allocation2 + $0x172] sm:$0xff]
          %v555 = vpack.c.bf16 %v524, %v523
          %v556 = vpack.c.bf16 %v526, %v525
          %v557 = vpack.c.bf16 %v528, %v527
          %v558 = vpack.c.bf16 %v530, %v529
          %v559 = vpack.c.bf16 %v532, %v531
          %v560 = vpack.c.bf16 %v534, %v533
          %v561 = vpack.c.bf16 %v536, %v535
          %v562 = vpack.c.bf16 %v538, %v537
          %v563 = vpack.c.bf16 %v540, %v539
          %v564 = vpack.c.bf16 %v542, %v541
          %v565 = vpack.c.bf16 %v544, %v543
          %v566 = vpack.c.bf16 %v546, %v545
          %v567 = vpack.c.bf16 %v548, %v547
          %v568 = vpack.c.bf16 %v550, %v549
          %v569 = vpack.c.bf16 %v552, %v551
          %v570 = vpack.c.bf16 %v554, %v553
          %v571 = vld [vmem:[%s394] sm:$0xff]
          %v572 = vld [vmem:[%s394 + $0x8] sm:$0xff]
          %v573 = vld [vmem:[%s394 + $0x18] sm:$0xff]
          %v574 = vld [vmem:[%s394 + $0x20] sm:$0xff]
          %v575 = vld [vmem:[%s394 + $0x30] sm:$0xff]
          %v576 = vld [vmem:[%s394 + $0x38] sm:$0xff]
          %v577 = vld [vmem:[%s394 + $0x48] sm:$0xff]
          %v578 = vld [vmem:[%s394 + $0x50] sm:$0xff]
          %v579 = vld [vmem:[%s394 + $0x60] sm:$0xff]
          %v580 = vld [vmem:[%s394 + $0x68] sm:$0xff]
          %v581 = vld [vmem:[%s394 + $0x78] sm:$0xff]
          %v582 = vld [vmem:[%s394 + $0x80] sm:$0xff]
          %v583 = vld [vmem:[%s394 + $0x90] sm:$0xff]
          %v584 = vld [vmem:[%s394 + $0x98] sm:$0xff]
          %v585 = vld [vmem:[%s394 + $0xa8] sm:$0xff]
          %v586 = vld [vmem:[%s394 + $0xb0] sm:$0xff]
          %v587 = vld [vmem:[%s394 + $0xc0] sm:$0xff]
          %v588 = vld [vmem:[%s394 + $0xc8] sm:$0xff]
          %v589 = vld [vmem:[%s394 + $0xd8] sm:$0xff]
          %v590 = vld [vmem:[%s394 + $0xe0] sm:$0xff]
          %v591 = vld [vmem:[%s394 + $0xf0] sm:$0xff]
          %v592 = vld [vmem:[%s394 + $0xf8] sm:$0xff]
          %v593 = vld [vmem:[%s394 + $0x108] sm:$0xff]
          %v594 = vld [vmem:[%s394 + $0x110] sm:$0xff]
          %v595 = vld [vmem:[%s394 + $0x120] sm:$0xff]
          %v596 = vld [vmem:[%s394 + $0x128] sm:$0xff]
          %v597 = vld [vmem:[%s394 + $0x138] sm:$0xff]
          %v598 = vld [vmem:[%s394 + $0x140] sm:$0xff]
          %v599 = vld [vmem:[%s394 + $0x150] sm:$0xff]
          %v600 = vld [vmem:[%s394 + $0x158] sm:$0xff]
          %v601 = vld [vmem:[%s394 + $0x168] sm:$0xff]
          %v602 = vld [vmem:[%s394 + $0x170] sm:$0xff]
          %v603 = vpack.c.bf16 %v572, %v571
          %v604 = vpack.c.bf16 %v574, %v573
          %v605 = vpack.c.bf16 %v576, %v575
          %v606 = vpack.c.bf16 %v578, %v577
          %v607 = vpack.c.bf16 %v580, %v579
          %v608 = vpack.c.bf16 %v582, %v581
          %v609 = vpack.c.bf16 %v584, %v583
          %v610 = vpack.c.bf16 %v586, %v585
          %v611 = vpack.c.bf16 %v588, %v587
          %v612 = vpack.c.bf16 %v590, %v589
          %v613 = vpack.c.bf16 %v592, %v591
          %v614 = vpack.c.bf16 %v594, %v593
          %v615 = vpack.c.bf16 %v596, %v595
          %v616 = vpack.c.bf16 %v598, %v597
          %v617 = vpack.c.bf16 %v600, %v599
          %v618 = vpack.c.bf16 %v602, %v601
          %v619 = vld [vmem:[%s394 + $0x1] sm:$0xff]
          %v620 = vld [vmem:[%s394 + $0x9] sm:$0xff]
          %v621 = vld [vmem:[%s394 + $0x19] sm:$0xff]
          %v622 = vld [vmem:[%s394 + $0x21] sm:$0xff]
          %v623 = vld [vmem:[%s394 + $0x31] sm:$0xff]
          %v624 = vld [vmem:[%s394 + $0x39] sm:$0xff]
          %v625 = vld [vmem:[%s394 + $0x49] sm:$0xff]
          %v626 = vld [vmem:[%s394 + $0x51] sm:$0xff]
          %v627 = vld [vmem:[%s394 + $0x61] sm:$0xff]
          %v628 = vld [vmem:[%s394 + $0x69] sm:$0xff]
          %v629 = vld [vmem:[%s394 + $0x79] sm:$0xff]
          %v630 = vld [vmem:[%s394 + $0x81] sm:$0xff]
          %v631 = vld [vmem:[%s394 + $0x91] sm:$0xff]
          %v632 = vld [vmem:[%s394 + $0x99] sm:$0xff]
          %v633 = vld [vmem:[%s394 + $0xa9] sm:$0xff]
          %v634 = vld [vmem:[%s394 + $0xb1] sm:$0xff]
          %v635 = vld [vmem:[%s394 + $0xc1] sm:$0xff]
          %v636 = vld [vmem:[%s394 + $0xc9] sm:$0xff]
          %v637 = vld [vmem:[%s394 + $0xd9] sm:$0xff]
          %v638 = vld [vmem:[%s394 + $0xe1] sm:$0xff]
          %v639 = vld [vmem:[%s394 + $0xf1] sm:$0xff]
          %v640 = vld [vmem:[%s394 + $0xf9] sm:$0xff]
          %v641 = vld [vmem:[%s394 + $0x109] sm:$0xff]
          %v642 = vld [vmem:[%s394 + $0x111] sm:$0xff]
          %v643 = vld [vmem:[%s394 + $0x121] sm:$0xff]
          %v644 = vld [vmem:[%s394 + $0x129] sm:$0xff]
          %v645 = vld [vmem:[%s394 + $0x139] sm:$0xff]
          %v646 = vld [vmem:[%s394 + $0x141] sm:$0xff]
          %v647 = vld [vmem:[%s394 + $0x151] sm:$0xff]
          %v648 = vld [vmem:[%s394 + $0x159] sm:$0xff]
          %v649 = vld [vmem:[%s394 + $0x169] sm:$0xff]
          %v650 = vld [vmem:[%s394 + $0x171] sm:$0xff]
          %v651 = vpack.c.bf16 %v620, %v619
          %v652 = vpack.c.bf16 %v622, %v621
          %v653 = vpack.c.bf16 %v624, %v623
          %v654 = vpack.c.bf16 %v626, %v625
          %v655 = vpack.c.bf16 %v628, %v627
          %v656 = vpack.c.bf16 %v630, %v629
          %v657 = vpack.c.bf16 %v632, %v631
          %v658 = vpack.c.bf16 %v634, %v633
          %v659 = vpack.c.bf16 %v636, %v635
          %v660 = vpack.c.bf16 %v638, %v637
          %v661 = vpack.c.bf16 %v640, %v639
          %v662 = vpack.c.bf16 %v642, %v641
          %v663 = vpack.c.bf16 %v644, %v643
          %v664 = vpack.c.bf16 %v646, %v645
          %v665 = vpack.c.bf16 %v648, %v647
          %v666 = vpack.c.bf16 %v650, %v649
          %v667 = vld [vmem:[%s394 + $0x2] sm:$0xff]
          %v668 = vld [vmem:[%s394 + $0xa] sm:$0xff]
          %v669 = vld [vmem:[%s394 + $0x1a] sm:$0xff]
          %v670 = vld [vmem:[%s394 + $0x22] sm:$0xff]
          %v671 = vld [vmem:[%s394 + $0x32] sm:$0xff]
          %v672 = vld [vmem:[%s394 + $0x3a] sm:$0xff]
          %v673 = vld [vmem:[%s394 + $0x4a] sm:$0xff]
          %v674 = vld [vmem:[%s394 + $0x52] sm:$0xff]
          %v675 = vld [vmem:[%s394 + $0x62] sm:$0xff]
          %v676 = vld [vmem:[%s394 + $0x6a] sm:$0xff]
          %v677 = vld [vmem:[%s394 + $0x7a] sm:$0xff]
          %v678 = vld [vmem:[%s394 + $0x82] sm:$0xff]
          %v679 = vld [vmem:[%s394 + $0x92] sm:$0xff]
          %v680 = vld [vmem:[%s394 + $0x9a] sm:$0xff]
          %v681 = vld [vmem:[%s394 + $0xaa] sm:$0xff]
          %v682 = vld [vmem:[%s394 + $0xb2] sm:$0xff]
          %v683 = vld [vmem:[%s394 + $0xc2] sm:$0xff]
          %v684 = vld [vmem:[%s394 + $0xca] sm:$0xff]
          %v685 = vld [vmem:[%s394 + $0xda] sm:$0xff]
          %v686 = vld [vmem:[%s394 + $0xe2] sm:$0xff]
          %v687 = vld [vmem:[%s394 + $0xf2] sm:$0xff]
          %v688 = vld [vmem:[%s394 + $0xfa] sm:$0xff]
          %v689 = vld [vmem:[%s394 + $0x10a] sm:$0xff]
          %v690 = vld [vmem:[%s394 + $0x112] sm:$0xff]
          %v691 = vld [vmem:[%s394 + $0x122] sm:$0xff]
          %v692 = vld [vmem:[%s394 + $0x12a] sm:$0xff]
          %v693 = vld [vmem:[%s394 + $0x13a] sm:$0xff]
          %v694 = vld [vmem:[%s394 + $0x142] sm:$0xff]
          %v695 = vld [vmem:[%s394 + $0x152] sm:$0xff]
          %v696 = vld [vmem:[%s394 + $0x15a] sm:$0xff]
          %v697 = vld [vmem:[%s394 + $0x16a] sm:$0xff]
          %v698 = vld [vmem:[%s394 + $0x172] sm:$0xff]
          %v699 = vpack.c.bf16 %v668, %v667
          %v700 = vpack.c.bf16 %v670, %v669
          %v701 = vpack.c.bf16 %v672, %v671
          %v702 = vpack.c.bf16 %v674, %v673
          %v703 = vpack.c.bf16 %v676, %v675
          %v704 = vpack.c.bf16 %v678, %v677
          %v705 = vpack.c.bf16 %v680, %v679
          %v706 = vpack.c.bf16 %v682, %v681
          %v707 = vpack.c.bf16 %v684, %v683
          %v708 = vpack.c.bf16 %v686, %v685
          %v709 = vpack.c.bf16 %v688, %v687
          %v710 = vpack.c.bf16 %v690, %v689
          %v711 = vpack.c.bf16 %v692, %v691
          %v712 = vpack.c.bf16 %v694, %v693
          %v713 = vpack.c.bf16 %v696, %v695
          %v714 = vpack.c.bf16 %v698, %v697
          %s715 = scalar_lea.vmem [#allocation2], 48
          %v716 = vld [vmem:[%s715] sm:$0xff]
          %v717 = vld [vmem:[%s715 + $0x8] sm:$0xff]
          %v718 = vld [vmem:[%s715 + $0x18] sm:$0xff]
          %v719 = vld [vmem:[%s715 + $0x20] sm:$0xff]
          %v720 = vld [vmem:[%s715 + $0x30] sm:$0xff]
          %v721 = vld [vmem:[%s715 + $0x38] sm:$0xff]
          %v722 = vld [vmem:[%s715 + $0x48] sm:$0xff]
          %v723 = vld [vmem:[%s715 + $0x50] sm:$0xff]
          %v724 = vld [vmem:[%s715 + $0x60] sm:$0xff]
          %v725 = vld [vmem:[%s715 + $0x68] sm:$0xff]
          %v726 = vld [vmem:[%s715 + $0x78] sm:$0xff]
          %v727 = vld [vmem:[%s715 + $0x80] sm:$0xff]
          %v728 = vld [vmem:[%s715 + $0x90] sm:$0xff]
          %v729 = vld [vmem:[%s715 + $0x98] sm:$0xff]
          %v730 = vld [vmem:[%s715 + $0xa8] sm:$0xff]
          %v731 = vld [vmem:[%s715 + $0xb0] sm:$0xff]
          %v732 = vld [vmem:[%s715 + $0xc0] sm:$0xff]
          %v733 = vld [vmem:[%s715 + $0xc8] sm:$0xff]
          %v734 = vld [vmem:[%s715 + $0xd8] sm:$0xff]
          %v735 = vld [vmem:[%s715 + $0xe0] sm:$0xff]
          %v736 = vld [vmem:[%s715 + $0xf0] sm:$0xff]
          %v737 = vld [vmem:[%s715 + $0xf8] sm:$0xff]
          %v738 = vld [vmem:[%s715 + $0x108] sm:$0xff]
          %v739 = vld [vmem:[%s715 + $0x110] sm:$0xff]
          %v740 = vld [vmem:[%s715 + $0x120] sm:$0xff]
          %v741 = vld [vmem:[%s715 + $0x128] sm:$0xff]
          %v742 = vld [vmem:[%s715 + $0x138] sm:$0xff]
          %v743 = vld [vmem:[%s715 + $0x140] sm:$0xff]
          %v744 = vld [vmem:[%s715 + $0x150] sm:$0xff]
          %v745 = vld [vmem:[%s715 + $0x158] sm:$0xff]
          %v746 = vld [vmem:[%s715 + $0x168] sm:$0xff]
          %v747 = vld [vmem:[%s715 + $0x170] sm:$0xff]
          %v748 = vpack.c.bf16 %v717, %v716
          %v749 = vpack.c.bf16 %v719, %v718
          %v750 = vpack.c.bf16 %v721, %v720
          %v751 = vpack.c.bf16 %v723, %v722
          %v752 = vpack.c.bf16 %v725, %v724
          %v753 = vpack.c.bf16 %v727, %v726
          %v754 = vpack.c.bf16 %v729, %v728
          %v755 = vpack.c.bf16 %v731, %v730
          %v756 = vpack.c.bf16 %v733, %v732
          %v757 = vpack.c.bf16 %v735, %v734
          %v758 = vpack.c.bf16 %v737, %v736
          %v759 = vpack.c.bf16 %v739, %v738
          %v760 = vpack.c.bf16 %v741, %v740
          %v761 = vpack.c.bf16 %v743, %v742
          %v762 = vpack.c.bf16 %v745, %v744
          %v763 = vpack.c.bf16 %v747, %v746
          %v764 = vld [vmem:[%s715 + $0x1] sm:$0xff]
          %v765 = vld [vmem:[%s715 + $0x9] sm:$0xff]
          %v766 = vld [vmem:[%s715 + $0x19] sm:$0xff]
          %v767 = vld [vmem:[%s715 + $0x21] sm:$0xff]
          %v768 = vld [vmem:[%s715 + $0x31] sm:$0xff]
          %v769 = vld [vmem:[%s715 + $0x39] sm:$0xff]
          %v770 = vld [vmem:[%s715 + $0x49] sm:$0xff]
          %v771 = vld [vmem:[%s715 + $0x51] sm:$0xff]
          %v772 = vld [vmem:[%s715 + $0x61] sm:$0xff]
          %v773 = vld [vmem:[%s715 + $0x69] sm:$0xff]
          %v774 = vld [vmem:[%s715 + $0x79] sm:$0xff]
          %v775 = vld [vmem:[%s715 + $0x81] sm:$0xff]
          %v776 = vld [vmem:[%s715 + $0x91] sm:$0xff]
          %v777 = vld [vmem:[%s715 + $0x99] sm:$0xff]
          %v778 = vld [vmem:[%s715 + $0xa9] sm:$0xff]
          %v779 = vld [vmem:[%s715 + $0xb1] sm:$0xff]
          %v780 = vld [vmem:[%s715 + $0xc1] sm:$0xff]
          %v781 = vld [vmem:[%s715 + $0xc9] sm:$0xff]
          %v782 = vld [vmem:[%s715 + $0xd9] sm:$0xff]
          %v783 = vld [vmem:[%s715 + $0xe1] sm:$0xff]
          %v784 = vld [vmem:[%s715 + $0xf1] sm:$0xff]
          %v785 = vld [vmem:[%s715 + $0xf9] sm:$0xff]
          %v786 = vld [vmem:[%s715 + $0x109] sm:$0xff]
          %v787 = vld [vmem:[%s715 + $0x111] sm:$0xff]
          %v788 = vld [vmem:[%s715 + $0x121] sm:$0xff]
          %v789 = vld [vmem:[%s715 + $0x129] sm:$0xff]
          %v790 = vld [vmem:[%s715 + $0x139] sm:$0xff]
          %v791 = vld [vmem:[%s715 + $0x141] sm:$0xff]
          %v792 = vld [vmem:[%s715 + $0x151] sm:$0xff]
          %v793 = vld [vmem:[%s715 + $0x159] sm:$0xff]
          %v794 = vld [vmem:[%s715 + $0x169] sm:$0xff]
          %v795 = vld [vmem:[%s715 + $0x171] sm:$0xff]
          %v796 = vpack.c.bf16 %v765, %v764
          %v797 = vpack.c.bf16 %v767, %v766
          %v798 = vpack.c.bf16 %v769, %v768
          %v799 = vpack.c.bf16 %v771, %v770
          %v800 = vpack.c.bf16 %v773, %v772
          %v801 = vpack.c.bf16 %v775, %v774
          %v802 = vpack.c.bf16 %v777, %v776
          %v803 = vpack.c.bf16 %v779, %v778
          %v804 = vpack.c.bf16 %v781, %v780
          %v805 = vpack.c.bf16 %v783, %v782
          %v806 = vpack.c.bf16 %v785, %v784
          %v807 = vpack.c.bf16 %v787, %v786
          %v808 = vpack.c.bf16 %v789, %v788
          %v809 = vpack.c.bf16 %v791, %v790
          %v810 = vpack.c.bf16 %v793, %v792
          %v811 = vpack.c.bf16 %v795, %v794
          %v812 = vld [vmem:[%s715 + $0x2] sm:$0xff]
          %v813 = vld [vmem:[%s715 + $0xa] sm:$0xff]
          %v814 = vld [vmem:[%s715 + $0x1a] sm:$0xff]
          %v815 = vld [vmem:[%s715 + $0x22] sm:$0xff]
          %v816 = vld [vmem:[%s715 + $0x32] sm:$0xff]
          %v817 = vld [vmem:[%s715 + $0x3a] sm:$0xff]
          %v818 = vld [vmem:[%s715 + $0x4a] sm:$0xff]
          %v819 = vld [vmem:[%s715 + $0x52] sm:$0xff]
          %v820 = vld [vmem:[%s715 + $0x62] sm:$0xff]
          %v821 = vld [vmem:[%s715 + $0x6a] sm:$0xff]
          %v822 = vld [vmem:[%s715 + $0x7a] sm:$0xff]
          %v823 = vld [vmem:[%s715 + $0x82] sm:$0xff]
          %v824 = vld [vmem:[%s715 + $0x92] sm:$0xff]
          %v825 = vld [vmem:[%s715 + $0x9a] sm:$0xff]
          %v826 = vld [vmem:[%s715 + $0xaa] sm:$0xff]
          %v827 = vld [vmem:[%s715 + $0xb2] sm:$0xff]
          %v828 = vld [vmem:[%s715 + $0xc2] sm:$0xff]
          %v829 = vld [vmem:[%s715 + $0xca] sm:$0xff]
          %v830 = vld [vmem:[%s715 + $0xda] sm:$0xff]
          %v831 = vld [vmem:[%s715 + $0xe2] sm:$0xff]
          %v832 = vld [vmem:[%s715 + $0xf2] sm:$0xff]
          %v833 = vld [vmem:[%s715 + $0xfa] sm:$0xff]
          %v834 = vld [vmem:[%s715 + $0x10a] sm:$0xff]
          %v835 = vld [vmem:[%s715 + $0x112] sm:$0xff]
          %v836 = vld [vmem:[%s715 + $0x122] sm:$0xff]
          %v837 = vld [vmem:[%s715 + $0x12a] sm:$0xff]
          %v838 = vld [vmem:[%s715 + $0x13a] sm:$0xff]
          %v839 = vld [vmem:[%s715 + $0x142] sm:$0xff]
          %v840 = vld [vmem:[%s715 + $0x152] sm:$0xff]
          %v841 = vld [vmem:[%s715 + $0x15a] sm:$0xff]
          %v842 = vld [vmem:[%s715 + $0x16a] sm:$0xff]
          %v843 = vld [vmem:[%s715 + $0x172] sm:$0xff]
          %v844 = vpack.c.bf16 %v813, %v812
          %v845 = vpack.c.bf16 %v815, %v814
          %v846 = vpack.c.bf16 %v817, %v816
          %v847 = vpack.c.bf16 %v819, %v818
          %v848 = vpack.c.bf16 %v821, %v820
          %v849 = vpack.c.bf16 %v823, %v822
          %v850 = vpack.c.bf16 %v825, %v824
          %v851 = vpack.c.bf16 %v827, %v826
          %v852 = vpack.c.bf16 %v829, %v828
          %v853 = vpack.c.bf16 %v831, %v830
          %v854 = vpack.c.bf16 %v833, %v832
          %v855 = vpack.c.bf16 %v835, %v834
          %v856 = vpack.c.bf16 %v837, %v836
          %v857 = vpack.c.bf16 %v839, %v838
          %v858 = vpack.c.bf16 %v841, %v840
          %v859 = vpack.c.bf16 %v843, %v842
          %v860 = vld [vmem:[#allocation6] sm:$0xf]
          %v861 = vld [vmem:[#allocation6 + $0x4] sm:$0xf]
          %v862 = vld [vmem:[#allocation6 + $0x8] sm:$0xf]
          %v863 = vld [vmem:[#allocation6 + $0xc] sm:$0xf]
          %v864 = vld [vmem:[#allocation6 + $0x10] sm:$0xf]
          %v865 = vld [vmem:[#allocation6 + $0x14] sm:$0xf]
          %v866 = vld [vmem:[#allocation6 + $0x18] sm:$0xf]
          %v867 = vld [vmem:[#allocation6 + $0x1c] sm:$0xf]
          %v868 = vld [vmem:[#allocation6 + $0x20] sm:$0xf]
          %v869 = vld [vmem:[#allocation6 + $0x24] sm:$0xf]
          %v870 = vld [vmem:[#allocation6 + $0x28] sm:$0xf]
          %v871 = vld [vmem:[#allocation6 + $0x2c] sm:$0xf]
          %v872 = vld [vmem:[#allocation6 + $0x30] sm:$0xf]
          %v873 = vld [vmem:[#allocation6 + $0x34] sm:$0xf]
          %v874 = vld [vmem:[#allocation6 + $0x38] sm:$0xf]
          %v875 = vld [vmem:[#allocation6 + $0x3c] sm:$0xf]
          %v876 = vld [vmem:[#allocation6 + $0x40] sm:$0xf]
          %v877 = vld [vmem:[#allocation6 + $0x44] sm:$0xf]
          %v878 = vld [vmem:[#allocation6 + $0x48] sm:$0xf]
          %v879 = vld [vmem:[#allocation6 + $0x4c] sm:$0xf]
          %v880 = vld [vmem:[#allocation6 + $0x50] sm:$0xf]
          %v881 = vld [vmem:[#allocation6 + $0x54] sm:$0xf]
          %v882 = vld [vmem:[#allocation6 + $0x58] sm:$0xf]
          %v883 = vld [vmem:[#allocation6 + $0x5c] sm:$0xf]
          %v884 = vld [vmem:[#allocation6 + $0x60] sm:$0xf]
          %v885 = vld [vmem:[#allocation6 + $0x64] sm:$0xf]
          %v886 = vld [vmem:[#allocation6 + $0x68] sm:$0xf]
          %v887 = vld [vmem:[#allocation6 + $0x6c] sm:$0xf]
          %v888 = vld [vmem:[#allocation6 + $0x70] sm:$0xf]
          %v889 = vld [vmem:[#allocation6 + $0x74] sm:$0xf]
          %v890 = vld [vmem:[#allocation6 + $0x78] sm:$0xf]
          %v891 = vld [vmem:[#allocation6 + $0x7c] sm:$0xf]
          %v892 = vld [vmem:[#allocation6 + $0x80] sm:$0xf]
          %v893 = vld [vmem:[#allocation6 + $0x84] sm:$0xf]
          %v894 = vld [vmem:[#allocation6 + $0x88] sm:$0xf]
          %v895 = vld [vmem:[#allocation6 + $0x8c] sm:$0xf]
          %v896 = vld [vmem:[#allocation6 + $0x90] sm:$0xf]
          %v897 = vld [vmem:[#allocation6 + $0x94] sm:$0xf]
          %v898 = vld [vmem:[#allocation6 + $0x98] sm:$0xf]
          %v899 = vld [vmem:[#allocation6 + $0x9c] sm:$0xf]
          %v900 = vld [vmem:[#allocation6 + $0xa0] sm:$0xf]
          %v901 = vld [vmem:[#allocation6 + $0xa4] sm:$0xf]
          %v902 = vld [vmem:[#allocation6 + $0xa8] sm:$0xf]
          %v903 = vld [vmem:[#allocation6 + $0xac] sm:$0xf]
          %v904 = vld [vmem:[#allocation6 + $0xb0] sm:$0xf]
          %v905 = vld [vmem:[#allocation6 + $0xb4] sm:$0xf]
          %v906 = vld [vmem:[#allocation6 + $0xb8] sm:$0xf]
          %v907 = vld [vmem:[#allocation6 + $0xbc] sm:$0xf]
          %v908 = vld [vmem:[#allocation6 + $0xc0] sm:$0xf]
          %v909 = vld [vmem:[#allocation6 + $0xc4] sm:$0xf]
          %v910 = vld [vmem:[#allocation6 + $0xc8] sm:$0xf]
          %v911 = vld [vmem:[#allocation6 + $0xcc] sm:$0xf]
          %v912 = vld [vmem:[#allocation6 + $0xd0] sm:$0xf]
          %v913 = vld [vmem:[#allocation6 + $0xd4] sm:$0xf]
          %v914 = vld [vmem:[#allocation6 + $0xd8] sm:$0xf]
          %v915 = vld [vmem:[#allocation6 + $0xdc] sm:$0xf]
          %v916 = vld [vmem:[#allocation6 + $0xe0] sm:$0xf]
          %v917 = vld [vmem:[#allocation6 + $0xe4] sm:$0xf]
          %v918 = vld [vmem:[#allocation6 + $0xe8] sm:$0xf]
          %v919 = vld [vmem:[#allocation6 + $0xec] sm:$0xf]
          %v920 = vld [vmem:[#allocation6 + $0xf0] sm:$0xf]
          %v921 = vld [vmem:[#allocation6 + $0xf4] sm:$0xf]
          %v922 = vld [vmem:[#allocation6 + $0xf8] sm:$0xf]
          %v923 = vld [vmem:[#allocation6 + $0xfc] sm:$0xf]
          %v924 = vld [vmem:[#allocation6 + $0x100] sm:$0xf]
          %v925 = vld [vmem:[#allocation6 + $0x104] sm:$0xf]
          %v926 = vld [vmem:[#allocation6 + $0x108] sm:$0xf]
          %v927 = vld [vmem:[#allocation6 + $0x10c] sm:$0xf]
          %v928 = vld [vmem:[#allocation6 + $0x110] sm:$0xf]
          %v929 = vld [vmem:[#allocation6 + $0x114] sm:$0xf]
          %v930 = vld [vmem:[#allocation6 + $0x118] sm:$0xf]
          %v931 = vld [vmem:[#allocation6 + $0x11c] sm:$0xf]
          %v932 = vld [vmem:[#allocation6 + $0x120] sm:$0xf]
          %v933 = vld [vmem:[#allocation6 + $0x124] sm:$0xf]
          %v934 = vld [vmem:[#allocation6 + $0x128] sm:$0xf]
          %v935 = vld [vmem:[#allocation6 + $0x12c] sm:$0xf]
          %v936 = vld [vmem:[#allocation6 + $0x130] sm:$0xf]
          %v937 = vld [vmem:[#allocation6 + $0x134] sm:$0xf]
          %v938 = vld [vmem:[#allocation6 + $0x138] sm:$0xf]
          %v939 = vld [vmem:[#allocation6 + $0x13c] sm:$0xf]
          %v940 = vld [vmem:[#allocation6 + $0x140] sm:$0xf]
          %v941 = vld [vmem:[#allocation6 + $0x144] sm:$0xf]
          %v942 = vld [vmem:[#allocation6 + $0x148] sm:$0xf]
          %v943 = vld [vmem:[#allocation6 + $0x14c] sm:$0xf]
          %v944 = vld [vmem:[#allocation6 + $0x150] sm:$0xf]
          %v945 = vld [vmem:[#allocation6 + $0x154] sm:$0xf]
          %v946 = vld [vmem:[#allocation6 + $0x158] sm:$0xf]
          %v947 = vld [vmem:[#allocation6 + $0x15c] sm:$0xf]
          %v948 = vld [vmem:[#allocation6 + $0x160] sm:$0xf]
          %v949 = vld [vmem:[#allocation6 + $0x164] sm:$0xf]
          %v950 = vld [vmem:[#allocation6 + $0x168] sm:$0xf]
          %v951 = vld [vmem:[#allocation6 + $0x16c] sm:$0xf]
          %v952 = vld [vmem:[#allocation6 + $0x170] sm:$0xf]
          %v953 = vld [vmem:[#allocation6 + $0x174] sm:$0xf]
          %v954 = vld [vmem:[#allocation6 + $0x178] sm:$0xf]
          %v955 = vld [vmem:[#allocation6 + $0x17c] sm:$0xf]
          %v956 = vld [vmem:[#allocation6 + $0x180] sm:$0xf]
          %v957 = vld [vmem:[#allocation6 + $0x184] sm:$0xf]
          %v958 = vld [vmem:[#allocation6 + $0x188] sm:$0xf]
          %v959 = vld [vmem:[#allocation6 + $0x18c] sm:$0xf]
          %v960 = vld [vmem:[#allocation6 + $0x190] sm:$0xf]
          %v961 = vld [vmem:[#allocation6 + $0x194] sm:$0xf]
          %v962 = vld [vmem:[#allocation6 + $0x198] sm:$0xf]
          %v963 = vld [vmem:[#allocation6 + $0x19c] sm:$0xf]
          %v964 = vld [vmem:[#allocation6 + $0x1a0] sm:$0xf]
          %v965 = vld [vmem:[#allocation6 + $0x1a4] sm:$0xf]
          %v966 = vld [vmem:[#allocation6 + $0x1a8] sm:$0xf]
          %v967 = vld [vmem:[#allocation6 + $0x1ac] sm:$0xf]
          %v968 = vld [vmem:[#allocation6 + $0x1b0] sm:$0xf]
          %v969 = vld [vmem:[#allocation6 + $0x1b4] sm:$0xf]
          %v970 = vld [vmem:[#allocation6 + $0x1b8] sm:$0xf]
          %v971 = vld [vmem:[#allocation6 + $0x1bc] sm:$0xf]
          %v972 = vld [vmem:[#allocation6 + $0x1c0] sm:$0xf]
          %v973 = vld [vmem:[#allocation6 + $0x1c4] sm:$0xf]
          %v974 = vld [vmem:[#allocation6 + $0x1c8] sm:$0xf]
          %v975 = vld [vmem:[#allocation6 + $0x1cc] sm:$0xf]
          %v976 = vld [vmem:[#allocation6 + $0x1d0] sm:$0xf]
          %v977 = vld [vmem:[#allocation6 + $0x1d4] sm:$0xf]
          %v978 = vld [vmem:[#allocation6 + $0x1d8] sm:$0xf]
          %v979 = vld [vmem:[#allocation6 + $0x1dc] sm:$0xf]
          %v980 = vld [vmem:[#allocation6 + $0x1e0] sm:$0xf]
          %v981 = vld [vmem:[#allocation6 + $0x1e4] sm:$0xf]
          %v982 = vld [vmem:[#allocation6 + $0x1e8] sm:$0xf]
          %v983 = vld [vmem:[#allocation6 + $0x1ec] sm:$0xf]
          %v984 = vld [vmem:[#allocation6 + $0x1f0] sm:$0xf]
          %v985 = vld [vmem:[#allocation6 + $0x1f4] sm:$0xf]
          %v986 = vld [vmem:[#allocation6 + $0x1f8] sm:$0xf]
          %v987 = vld [vmem:[#allocation6 + $0x1fc] sm:$0xf]
          %v988 = vld [vmem:[#allocation6 + $0x200] sm:$0xf]
          %v989 = vld [vmem:[#allocation6 + $0x204] sm:$0xf]
          %v990 = vld [vmem:[#allocation6 + $0x208] sm:$0xf]
          %v991 = vld [vmem:[#allocation6 + $0x20c] sm:$0xf]
          %v992 = vld [vmem:[#allocation6 + $0x210] sm:$0xf]
          %v993 = vld [vmem:[#allocation6 + $0x214] sm:$0xf]
          %v994 = vld [vmem:[#allocation6 + $0x218] sm:$0xf]
          %v995 = vld [vmem:[#allocation6 + $0x21c] sm:$0xf]
          %v996 = vld [vmem:[#allocation6 + $0x220] sm:$0xf]
          %v997 = vld [vmem:[#allocation6 + $0x224] sm:$0xf]
          %v998 = vld [vmem:[#allocation6 + $0x228] sm:$0xf]
          %v999 = vld [vmem:[#allocation6 + $0x22c] sm:$0xf]
          %v1000 = vld [vmem:[#allocation6 + $0x230] sm:$0xf]
          %v1001 = vld [vmem:[#allocation6 + $0x234] sm:$0xf]
          %v1002 = vld [vmem:[#allocation6 + $0x238] sm:$0xf]
          %v1003 = vld [vmem:[#allocation6 + $0x23c] sm:$0xf]
          %v1004 = vld [vmem:[#allocation8] sm:$0x1]
          %v1006 = vlaneseq
          %v1007 = vshrl.u32 %v1006, 7
          %v1008 = vsub.s32 0, %v1007
          %v1009 = vrot.slane %v1004, %v1008
          %v1155 = vunpack.c.l.b16 %v860
          %v1156 = vunpack.c.l.b16 %v861
          %v1157 = vunpack.c.l.b16 %v862
          %v1158 = vunpack.c.l.b16 %v863
          %v1159 = vunpack.c.l.b16 %v864
          %v1160 = vunpack.c.l.b16 %v865
          %v1161 = vunpack.c.l.b16 %v866
          %v1162 = vunpack.c.l.b16 %v867
          %v1163 = vunpack.c.l.b16 %v868
          %v1164 = vunpack.c.l.b16 %v869
          %v1165 = vunpack.c.l.b16 %v870
          %v1166 = vunpack.c.l.b16 %v871
          %v1167 = vunpack.c.l.b16 %v872
          %v1168 = vunpack.c.l.b16 %v873
          %v1169 = vunpack.c.l.b16 %v874
          %v1170 = vunpack.c.l.b16 %v875
          %v1171 = vunpack.c.l.b16 %v876
          %v1172 = vunpack.c.l.b16 %v877
          %v1173 = vunpack.c.l.b16 %v878
          %v1174 = vunpack.c.l.b16 %v879
          %v1175 = vunpack.c.l.b16 %v880
          %v1176 = vunpack.c.l.b16 %v881
          %v1177 = vunpack.c.l.b16 %v882
          %v1178 = vunpack.c.l.b16 %v883
          %v1179 = vunpack.c.l.b16 %v884
          %v1180 = vunpack.c.l.b16 %v885
          %v1181 = vunpack.c.l.b16 %v886
          %v1182 = vunpack.c.l.b16 %v887
          %v1183 = vunpack.c.l.b16 %v888
          %v1184 = vunpack.c.l.b16 %v889
          %v1185 = vunpack.c.l.b16 %v890
          %v1186 = vunpack.c.l.b16 %v891
          %v1187 = vunpack.c.l.b16 %v892
          %v1188 = vunpack.c.l.b16 %v893
          %v1189 = vunpack.c.l.b16 %v894
          %v1190 = vunpack.c.l.b16 %v895
          %v1191 = vunpack.c.l.b16 %v896
          %v1192 = vunpack.c.l.b16 %v897
          %v1193 = vunpack.c.l.b16 %v898
          %v1194 = vunpack.c.l.b16 %v899
          %v1195 = vunpack.c.l.b16 %v900
          %v1196 = vunpack.c.l.b16 %v901
          %v1197 = vunpack.c.l.b16 %v902
          %v1198 = vunpack.c.l.b16 %v903
          %v1199 = vunpack.c.l.b16 %v904
          %v1200 = vunpack.c.l.b16 %v905
          %v1201 = vunpack.c.l.b16 %v906
          %v1202 = vunpack.c.l.b16 %v907
          %v1203 = vunpack.c.l.b16 %v908
          %v1204 = vunpack.c.l.b16 %v909
          %v1205 = vunpack.c.l.b16 %v910
          %v1206 = vunpack.c.l.b16 %v911
          %v1207 = vunpack.c.l.b16 %v912
          %v1208 = vunpack.c.l.b16 %v913
          %v1209 = vunpack.c.l.b16 %v914
          %v1210 = vunpack.c.l.b16 %v915
          %v1211 = vunpack.c.l.b16 %v916
          %v1212 = vunpack.c.l.b16 %v917
          %v1213 = vunpack.c.l.b16 %v918
          %v1214 = vunpack.c.l.b16 %v919
          %v1215 = vunpack.c.l.b16 %v920
          %v1216 = vunpack.c.l.b16 %v921
          %v1217 = vunpack.c.l.b16 %v922
          %v1218 = vunpack.c.l.b16 %v923
          %v1219 = vunpack.c.l.b16 %v924
          %v1220 = vunpack.c.l.b16 %v925
          %v1221 = vunpack.c.l.b16 %v926
          %v1222 = vunpack.c.l.b16 %v927
          %v1223 = vunpack.c.l.b16 %v928
          %v1224 = vunpack.c.l.b16 %v929
          %v1225 = vunpack.c.l.b16 %v930
          %v1226 = vunpack.c.l.b16 %v931
          %v1227 = vunpack.c.l.b16 %v932
          %v1228 = vunpack.c.l.b16 %v933
          %v1229 = vunpack.c.l.b16 %v934
          %v1230 = vunpack.c.l.b16 %v935
          %v1231 = vunpack.c.l.b16 %v936
          %v1232 = vunpack.c.l.b16 %v937
          %v1233 = vunpack.c.l.b16 %v938
          %v1234 = vunpack.c.l.b16 %v939
          %v1235 = vunpack.c.l.b16 %v940
          %v1236 = vunpack.c.l.b16 %v941
          %v1237 = vunpack.c.l.b16 %v942
          %v1238 = vunpack.c.l.b16 %v943
          %v1239 = vunpack.c.l.b16 %v944
          %v1240 = vunpack.c.l.b16 %v945
          %v1241 = vunpack.c.l.b16 %v946
          %v1242 = vunpack.c.l.b16 %v947
          %v1243 = vunpack.c.l.b16 %v948
          %v1244 = vunpack.c.l.b16 %v949
          %v1245 = vunpack.c.l.b16 %v950
          %v1246 = vunpack.c.l.b16 %v951
          %v1247 = vunpack.c.l.b16 %v952
          %v1248 = vunpack.c.l.b16 %v953
          %v1249 = vunpack.c.l.b16 %v954
          %v1250 = vunpack.c.l.b16 %v955
          %v1251 = vunpack.c.l.b16 %v956
          %v1252 = vunpack.c.l.b16 %v957
          %v1253 = vunpack.c.l.b16 %v958
          %v1254 = vunpack.c.l.b16 %v959
          %v1255 = vunpack.c.l.b16 %v960
          %v1256 = vunpack.c.l.b16 %v961
          %v1257 = vunpack.c.l.b16 %v962
          %v1258 = vunpack.c.l.b16 %v963
          %v1259 = vunpack.c.l.b16 %v964
          %v1260 = vunpack.c.l.b16 %v965
          %v1261 = vunpack.c.l.b16 %v966
          %v1262 = vunpack.c.l.b16 %v967
          %v1263 = vunpack.c.l.b16 %v968
          %v1264 = vunpack.c.l.b16 %v969
          %v1265 = vunpack.c.l.b16 %v970
          %v1266 = vunpack.c.l.b16 %v971
          %v1267 = vunpack.c.l.b16 %v972
          %v1268 = vunpack.c.l.b16 %v973
          %v1269 = vunpack.c.l.b16 %v974
          %v1270 = vunpack.c.l.b16 %v975
          %v1271 = vunpack.c.l.b16 %v976
          %v1272 = vunpack.c.l.b16 %v977
          %v1273 = vunpack.c.l.b16 %v978
          %v1274 = vunpack.c.l.b16 %v979
          %v1275 = vunpack.c.l.b16 %v980
          %v1276 = vunpack.c.l.b16 %v981
          %v1277 = vunpack.c.l.b16 %v982
          %v1278 = vunpack.c.l.b16 %v983
          %v1279 = vunpack.c.l.b16 %v984
          %v1280 = vunpack.c.l.b16 %v985
          %v1281 = vunpack.c.l.b16 %v986
          %v1282 = vunpack.c.l.b16 %v987
          %v1283 = vunpack.c.l.b16 %v988
          %v1284 = vunpack.c.l.b16 %v989
          %v1285 = vunpack.c.l.b16 %v990
          %v1286 = vunpack.c.l.b16 %v991
          %v1287 = vunpack.c.l.b16 %v992
          %v1288 = vunpack.c.l.b16 %v993
          %v1289 = vunpack.c.l.b16 %v994
          %v1290 = vunpack.c.l.b16 %v995
          %v1291 = vunpack.c.l.b16 %v996
          %v1292 = vunpack.c.l.b16 %v997
          %v1293 = vunpack.c.l.b16 %v998
          %v1294 = vunpack.c.l.b16 %v999
          %v1295 = vunpack.c.l.b16 %v1000
          %v1296 = vunpack.c.l.b16 %v1001
          %v1297 = vunpack.c.l.b16 %v1002
          %v1298 = vunpack.c.l.b16 %v1003
          %v1299 = vpack.c.b16 %v1156, %v1155
          %v1300 = vpack.c.b16 %v1158, %v1157
          %v1301 = vpack.c.b16 %v1160, %v1159
          %v1302 = vpack.c.b16 %v1162, %v1161
          %v1303 = vpack.c.b16 %v1164, %v1163
          %v1304 = vpack.c.b16 %v1166, %v1165
          %v1305 = vpack.c.b16 %v1168, %v1167
          %v1306 = vpack.c.b16 %v1170, %v1169
          %v1307 = vpack.c.b16 %v1172, %v1171
          %v1308 = vpack.c.b16 %v1174, %v1173
          %v1309 = vpack.c.b16 %v1176, %v1175
          %v1310 = vpack.c.b16 %v1178, %v1177
          %v1311 = vpack.c.b16 %v1180, %v1179
          %v1312 = vpack.c.b16 %v1182, %v1181
          %v1313 = vpack.c.b16 %v1184, %v1183
          %v1314 = vpack.c.b16 %v1186, %v1185
          %v1315 = vpack.c.b16 %v1188, %v1187
          %v1316 = vpack.c.b16 %v1190, %v1189
          %v1317 = vpack.c.b16 %v1192, %v1191
          %v1318 = vpack.c.b16 %v1194, %v1193
          %v1319 = vpack.c.b16 %v1196, %v1195
          %v1320 = vpack.c.b16 %v1198, %v1197
          %v1321 = vpack.c.b16 %v1200, %v1199
          %v1322 = vpack.c.b16 %v1202, %v1201
          %v1323 = vpack.c.b16 %v1204, %v1203
          %v1324 = vpack.c.b16 %v1206, %v1205
          %v1325 = vpack.c.b16 %v1208, %v1207
          %v1326 = vpack.c.b16 %v1210, %v1209
          %v1327 = vpack.c.b16 %v1212, %v1211
          %v1328 = vpack.c.b16 %v1214, %v1213
          %v1329 = vpack.c.b16 %v1216, %v1215
          %v1330 = vpack.c.b16 %v1218, %v1217
          %v1331 = vpack.c.b16 %v1220, %v1219
          %v1332 = vpack.c.b16 %v1222, %v1221
          %v1333 = vpack.c.b16 %v1224, %v1223
          %v1334 = vpack.c.b16 %v1226, %v1225
          %v1335 = vpack.c.b16 %v1228, %v1227
          %v1336 = vpack.c.b16 %v1230, %v1229
          %v1337 = vpack.c.b16 %v1232, %v1231
          %v1338 = vpack.c.b16 %v1234, %v1233
          %v1339 = vpack.c.b16 %v1236, %v1235
          %v1340 = vpack.c.b16 %v1238, %v1237
          %v1341 = vpack.c.b16 %v1240, %v1239
          %v1342 = vpack.c.b16 %v1242, %v1241
          %v1343 = vpack.c.b16 %v1244, %v1243
          %v1344 = vpack.c.b16 %v1246, %v1245
          %v1345 = vpack.c.b16 %v1248, %v1247
          %v1346 = vpack.c.b16 %v1250, %v1249
          %v1347 = vpack.c.b16 %v1252, %v1251
          %v1348 = vpack.c.b16 %v1254, %v1253
          %v1349 = vpack.c.b16 %v1256, %v1255
          %v1350 = vpack.c.b16 %v1258, %v1257
          %v1351 = vpack.c.b16 %v1260, %v1259
          %v1352 = vpack.c.b16 %v1262, %v1261
          %v1353 = vpack.c.b16 %v1264, %v1263
          %v1354 = vpack.c.b16 %v1266, %v1265
          %v1355 = vpack.c.b16 %v1268, %v1267
          %v1356 = vpack.c.b16 %v1270, %v1269
          %v1357 = vpack.c.b16 %v1272, %v1271
          %v1358 = vpack.c.b16 %v1274, %v1273
          %v1359 = vpack.c.b16 %v1276, %v1275
          %v1360 = vpack.c.b16 %v1278, %v1277
          %v1361 = vpack.c.b16 %v1280, %v1279
          %v1362 = vpack.c.b16 %v1282, %v1281
          %v1363 = vpack.c.b16 %v1284, %v1283
          %v1364 = vpack.c.b16 %v1286, %v1285
          %v1365 = vpack.c.b16 %v1288, %v1287
          %v1366 = vpack.c.b16 %v1290, %v1289
          %v1367 = vpack.c.b16 %v1292, %v1291
          %v1368 = vpack.c.b16 %v1294, %v1293
          %v1369 = vpack.c.b16 %v1296, %v1295
          %v1370 = vpack.c.b16 %v1298, %v1297
          %1443 = vmatprep.subr.bf16.mxu0 0
          %1444 = vmatpush1.bf16.msra.mxu0 %v1299
          %1445 = vmatprep.subr.bf16.mxu0 0
          %1446 = vmatpush1.bf16.msra.mxu0 %v1300
          %1447 = vmatprep.subr.bf16.mxu0 0
          %1448 = vmatpush1.bf16.msra.mxu0 %v1301
          %1449 = vmatprep.subr.bf16.mxu0 0
          %1450 = vmatpush1.bf16.msra.mxu0 %v1302
          %1451 = vmatprep.subr.bf16.mxu0 0
          %1452 = vmatpush1.bf16.msra.mxu0 %v1303
          %1453 = vmatprep.subr.bf16.mxu0 0
          %1454 = vmatpush1.bf16.msra.mxu0 %v1304
          %1455 = vmatprep.subr.bf16.mxu0 0
          %1456 = vmatpush1.bf16.msra.mxu0 %v1305
          %1457 = vmatprep.subr.bf16.mxu0 0
          %1458 = vmatpush1.bf16.msra.mxu0 %v1306
          %1459 = vmatprep.subr.bf16.mxu0 0
          %1460 = vmatpush1.bf16.msra.mxu0 %v1307
          %1461 = vmatprep.subr.bf16.mxu0 0
          %1462 = vmatpush1.bf16.msra.mxu0 %v1308
          %1463 = vmatprep.subr.bf16.mxu0 0
          %1464 = vmatpush1.bf16.msra.mxu0 %v1309
          %1465 = vmatprep.subr.bf16.mxu0 0
          %1466 = vmatpush1.bf16.msra.mxu0 %v1310
          %1467 = vmatprep.subr.bf16.mxu0 0
          %1468 = vmatpush1.bf16.msra.mxu0 %v1311
          %1469 = vmatprep.subr.bf16.mxu0 0
          %1470 = vmatpush1.bf16.msra.mxu0 %v1312
          %1471 = vmatprep.subr.bf16.mxu0 0
          %1472 = vmatpush1.bf16.msra.mxu0 %v1313
          %1473 = vmatprep.subr.bf16.mxu0 0
          %1474 = vmatpush1.bf16.msra.mxu0 %v1314
          %1475 = vmatprep.mubr.bf16.mxu0 %v507
          %1476 = vmatmul.mubr.bf16.gmra.mrb[0].mxu0 %v459
          %v1477 = vpop.f32.mrb[0].mxu0
          %v1478 = vadd.f32 %v1009, %v1477
          %v1479 = vpop.f32.mrb[0].mxu0
          %v1480 = vpop.f32.mrb[0].mxu0
          %v1481 = vadd.f32 %v1009, %v1480
          %v1482 = vpop.f32.mrb[0].mxu0
          %1483 = vmatprep.mubr.bf16.mxu0 %v508
          %1484 = vmatmul.mubr.bf16.gmra.mrb[0].mxu0 %v460
          %v1485 = vpop.f32.mrb[0].mxu0
          %v1486 = vadd.f32 %v1009, %v1485
          %v1487 = vpop.f32.mrb[0].mxu0
          %v1488 = vpop.f32.mrb[0].mxu0
          %v1489 = vadd.f32 %v1009, %v1488
          %v1490 = vpop.f32.mrb[0].mxu0
          %1491 = vmatprep.mubr.bf16.mxu0 %v509
          %1492 = vmatmul.mubr.bf16.gmra.mrb[0].mxu0 %v461
          %v1493 = vpop.f32.mrb[0].mxu0
          %v1494 = vadd.f32 %v1009, %v1493
          %v1495 = vpop.f32.mrb[0].mxu0
          %v1496 = vpop.f32.mrb[0].mxu0
          %v1497 = vadd.f32 %v1009, %v1496
          %v1498 = vpop.f32.mrb[0].mxu0
          %1499 = vmatprep.mubr.bf16.mxu0 %v510
          %1500 = vmatmul.mubr.bf16.gmra.mrb[0].mxu0 %v462
          %v1501 = vpop.f32.mrb[0].mxu0
          %v1502 = vadd.f32 %v1009, %v1501
          %v1503 = vpop.f32.mrb[0].mxu0
          %v1504 = vpop.f32.mrb[0].mxu0
          %v1505 = vadd.f32 %v1009, %v1504
          %v1506 = vpop.f32.mrb[0].mxu0
          %1507 = vmatprep.mubr.bf16.mxu0 %v511
          %1508 = vmatmul.mubr.bf16.gmra.mrb[0].mxu0 %v463
          %v1509 = vpop.f32.mrb[0].mxu0
          %v1510 = vadd.f32 %v1009, %v1509
          %v1511 = vpop.f32.mrb[0].mxu0
          %v1512 = vpop.f32.mrb[0].mxu0
          %v1513 = vadd.f32 %v1009, %v1512
          %v1514 = vpop.f32.mrb[0].mxu0
          %1515 = vmatprep.mubr.bf16.mxu0 %v512
          %1516 = vmatmul.mubr.bf16.gmra.mrb[0].mxu0 %v464
          %v1517 = vpop.f32.mrb[0].mxu0
          %v1518 = vadd.f32 %v1009, %v1517
          %v1519 = vpop.f32.mrb[0].mxu0
          %v1520 = vpop.f32.mrb[0].mxu0
          %v1521 = vadd.f32 %v1009, %v1520
          %v1522 = vpop.f32.mrb[0].mxu0
          %1523 = vmatprep.mubr.bf16.mxu0 %v513
          %1524 = vmatmul.mubr.bf16.gmra.mrb[0].mxu0 %v465
          %v1525 = vpop.f32.mrb[0].mxu0
          %v1526 = vadd.f32 %v1009, %v1525
          %v1527 = vpop.f32.mrb[0].mxu0
          %v1528 = vpop.f32.mrb[0].mxu0
          %v1529 = vadd.f32 %v1009, %v1528
          %v1530 = vpop.f32.mrb[0].mxu0
          %1531 = vmatprep.mubr.bf16.mxu0 %v514
          %1532 = vmatmul.mubr.bf16.gmra.mrb[0].mxu0 %v466
          %v1533 = vpop.f32.mrb[0].mxu0
          %v1534 = vadd.f32 %v1009, %v1533
          %v1535 = vpop.f32.mrb[0].mxu0
          %v1536 = vpop.f32.mrb[0].mxu0
          %v1537 = vadd.f32 %v1009, %v1536
          %v1538 = vpop.f32.mrb[0].mxu0
          %1539 = vmatprep.mubr.bf16.mxu0 %v515
          %1540 = vmatmul.mubr.bf16.gmra.mrb[0].mxu0 %v467
          %v1541 = vpop.f32.mrb[0].mxu0
          %v1542 = vadd.f32 %v1009, %v1541
          %v1543 = vpop.f32.mrb[0].mxu0
          %v1544 = vpop.f32.mrb[0].mxu0
          %v1545 = vadd.f32 %v1009, %v1544
          %v1546 = vpop.f32.mrb[0].mxu0
          %1547 = vmatprep.mubr.bf16.mxu0 %v516
          %1548 = vmatmul.mubr.bf16.gmra.mrb[0].mxu0 %v468
          %v1549 = vpop.f32.mrb[0].mxu0
          %v1550 = vadd.f32 %v1009, %v1549
          %v1551 = vpop.f32.mrb[0].mxu0
          %v1552 = vpop.f32.mrb[0].mxu0
          %v1553 = vadd.f32 %v1009, %v1552
          %v1554 = vpop.f32.mrb[0].mxu0
          %1555 = vmatprep.mubr.bf16.mxu0 %v517
          %1556 = vmatmul.mubr.bf16.gmra.mrb[0].mxu0 %v469
          %v1557 = vpop.f32.mrb[0].mxu0
          %v1558 = vadd.f32 %v1009, %v1557
          %v1559 = vpop.f32.mrb[0].mxu0
          %v1560 = vpop.f32.mrb[0].mxu0
          %v1561 = vadd.f32 %v1009, %v1560
          %v1562 = vpop.f32.mrb[0].mxu0
          %1563 = vmatprep.mubr.bf16.mxu0 %v518
          %1564 = vmatmul.mubr.bf16.gmra.mrb[0].mxu0 %v470
          %v1565 = vpop.f32.mrb[0].mxu0
          %v1566 = vadd.f32 %v1009, %v1565
          %v1567 = vpop.f32.mrb[0].mxu0
          %v1568 = vpop.f32.mrb[0].mxu0
          %v1569 = vadd.f32 %v1009, %v1568
          %v1570 = vpop.f32.mrb[0].mxu0
          %1571 = vmatprep.mubr.bf16.mxu0 %v519
          %1572 = vmatmul.mubr.bf16.gmra.mrb[0].mxu0 %v471
          %v1573 = vpop.f32.mrb[0].mxu0
          %v1574 = vadd.f32 %v1009, %v1573
          %v1575 = vpop.f32.mrb[0].mxu0
          %v1576 = vpop.f32.mrb[0].mxu0
          %v1577 = vadd.f32 %v1009, %v1576
          %v1578 = vpop.f32.mrb[0].mxu0
          %1579 = vmatprep.mubr.bf16.mxu0 %v520
          %1580 = vmatmul.mubr.bf16.gmra.mrb[0].mxu0 %v472
          %v1581 = vpop.f32.mrb[0].mxu0
          %v1582 = vadd.f32 %v1009, %v1581
          %v1583 = vpop.f32.mrb[0].mxu0
          %v1584 = vpop.f32.mrb[0].mxu0
          %v1585 = vadd.f32 %v1009, %v1584
          %v1586 = vpop.f32.mrb[0].mxu0
          %1587 = vmatprep.mubr.bf16.mxu0 %v521
          %1588 = vmatmul.mubr.bf16.gmra.mrb[0].mxu0 %v473
          %v1589 = vpop.f32.mrb[0].mxu0
          %v1590 = vadd.f32 %v1009, %v1589
          %v1591 = vpop.f32.mrb[0].mxu0
          %v1592 = vpop.f32.mrb[0].mxu0
          %v1593 = vadd.f32 %v1009, %v1592
          %v1594 = vpop.f32.mrb[0].mxu0
          %1595 = vmatprep.mubr.bf16.mxu0 %v522
          %1596 = vmatmul.mubr.bf16.gmra.mrb[0].mxu0 %v474
          %v1597 = vpop.f32.mrb[0].mxu0
          %v1598 = vadd.f32 %v1009, %v1597
          %v1599 = vpop.f32.mrb[0].mxu0
          %v1600 = vpop.f32.mrb[0].mxu0
          %v1601 = vadd.f32 %v1009, %v1600
          %v1602 = vpop.f32.mrb[0].mxu0
          %1603 = vdwg.mxu0
          %1604 = vmatprep.subr.bf16.mxu0 0
          %1605 = vmatpush1.bf16.msra.mxu0 %v1315
          %1606 = vmatprep.subr.bf16.mxu0 0
          %1607 = vmatpush1.bf16.msra.mxu0 %v1316
          %1608 = vmatprep.subr.bf16.mxu0 0
          %1609 = vmatpush1.bf16.msra.mxu0 %v1317
          %1610 = vmatprep.subr.bf16.mxu0 0
          %1611 = vmatpush1.bf16.msra.mxu0 %v1318
          %1612 = vmatprep.subr.bf16.mxu0 0
          %1613 = vmatpush1.bf16.msra.mxu0 %v1319
          %1614 = vmatprep.subr.bf16.mxu0 0
          %1615 = vmatpush1.bf16.msra.mxu0 %v1320
          %1616 = vmatprep.subr.bf16.mxu0 0
          %1617 = vmatpush1.bf16.msra.mxu0 %v1321
          %1618 = vmatprep.subr.bf16.mxu0 0
          %1619 = vmatpush1.bf16.msra.mxu0 %v1322
          %1620 = vmatprep.subr.bf16.mxu0 0
          %1621 = vmatpush1.bf16.msra.mxu0 %v1323
          %1622 = vmatprep.subr.bf16.mxu0 0
          %1623 = vmatpush1.bf16.msra.mxu0 %v1324
          %1624 = vmatprep.subr.bf16.mxu0 0
          %1625 = vmatpush1.bf16.msra.mxu0 %v1325
          %1626 = vmatprep.subr.bf16.mxu0 0
          %1627 = vmatpush1.bf16.msra.mxu0 %v1326
          %1628 = vmatprep.subr.bf16.mxu0 0
          %1629 = vmatpush1.bf16.msra.mxu0 %v1327
          %1630 = vmatprep.subr.bf16.mxu0 0
          %1631 = vmatpush1.bf16.msra.mxu0 %v1328
          %1632 = vmatprep.subr.bf16.mxu0 0
          %1633 = vmatpush1.bf16.msra.mxu0 %v1329
          %1634 = vmatprep.subr.bf16.mxu0 0
          %1635 = vmatpush1.bf16.msra.mxu0 %v1330
          %1636 = vmatprep.mubr.bf16.mxu0 %v603
          %1637 = vmatmul.mubr.bf16.gmra.mrb[0].mxu0 %v555
          %v1638 = vpop.f32.mrb[0].mxu0
          %v1639 = vadd.f32 %v1478, %v1638
          %v1640 = vpop.f32.mrb[0].mxu0
          %v1641 = vpop.f32.mrb[0].mxu0
          %v1642 = vadd.f32 %v1481, %v1641
          %v1643 = vpop.f32.mrb[0].mxu0
          %1644 = vmatprep.mubr.bf16.mxu0 %v604
          %1645 = vmatmul.mubr.bf16.gmra.mrb[0].mxu0 %v556
          %v1646 = vpop.f32.mrb[0].mxu0
          %v1647 = vadd.f32 %v1486, %v1646
          %v1648 = vpop.f32.mrb[0].mxu0
          %v1649 = vpop.f32.mrb[0].mxu0
          %v1650 = vadd.f32 %v1489, %v1649
          %v1651 = vpop.f32.mrb[0].mxu0
          %1652 = vmatprep.mubr.bf16.mxu0 %v605
          %1653 = vmatmul.mubr.bf16.gmra.mrb[0].mxu0 %v557
          %v1654 = vpop.f32.mrb[0].mxu0
          %v1655 = vadd.f32 %v1494, %v1654
          %v1656 = vpop.f32.mrb[0].mxu0
          %v1657 = vpop.f32.mrb[0].mxu0
          %v1658 = vadd.f32 %v1497, %v1657
          %v1659 = vpop.f32.mrb[0].mxu0
          %1660 = vmatprep.mubr.bf16.mxu0 %v606
          %1661 = vmatmul.mubr.bf16.gmra.mrb[0].mxu0 %v558
          %v1662 = vpop.f32.mrb[0].mxu0
          %v1663 = vadd.f32 %v1502, %v1662
          %v1664 = vpop.f32.mrb[0].mxu0
          %v1665 = vpop.f32.mrb[0].mxu0
          %v1666 = vadd.f32 %v1505, %v1665
          %v1667 = vpop.f32.mrb[0].mxu0
          %1668 = vmatprep.mubr.bf16.mxu0 %v607
          %1669 = vmatmul.mubr.bf16.gmra.mrb[0].mxu0 %v559
          %v1670 = vpop.f32.mrb[0].mxu0
          %v1671 = vadd.f32 %v1510, %v1670
          %v1672 = vpop.f32.mrb[0].mxu0
          %v1673 = vpop.f32.mrb[0].mxu0
          %v1674 = vadd.f32 %v1513, %v1673
          %v1675 = vpop.f32.mrb[0].mxu0
          %1676 = vmatprep.mubr.bf16.mxu0 %v608
          %1677 = vmatmul.mubr.bf16.gmra.mrb[0].mxu0 %v560
          %v1678 = vpop.f32.mrb[0].mxu0
          %v1679 = vadd.f32 %v1518, %v1678
          %v1680 = vpop.f32.mrb[0].mxu0
          %v1681 = vpop.f32.mrb[0].mxu0
          %v1682 = vadd.f32 %v1521, %v1681
          %v1683 = vpop.f32.mrb[0].mxu0
          %1684 = vmatprep.mubr.bf16.mxu0 %v609
          %1685 = vmatmul.mubr.bf16.gmra.mrb[0].mxu0 %v561
          %v1686 = vpop.f32.mrb[0].mxu0
          %v1687 = vadd.f32 %v1526, %v1686
          %v1688 = vpop.f32.mrb[0].mxu0
          %v1689 = vpop.f32.mrb[0].mxu0
          %v1690 = vadd.f32 %v1529, %v1689
          %v1691 = vpop.f32.mrb[0].mxu0
          %1692 = vmatprep.mubr.bf16.mxu0 %v610
          %1693 = vmatmul.mubr.bf16.gmra.mrb[0].mxu0 %v562
          %v1694 = vpop.f32.mrb[0].mxu0
          %v1695 = vadd.f32 %v1534, %v1694
          %v1696 = vpop.f32.mrb[0].mxu0
          %v1697 = vpop.f32.mrb[0].mxu0
          %v1698 = vadd.f32 %v1537, %v1697
          %v1699 = vpop.f32.mrb[0].mxu0
          %1700 = vmatprep.mubr.bf16.mxu0 %v611
          %1701 = vmatmul.mubr.bf16.gmra.mrb[0].mxu0 %v563
          %v1702 = vpop.f32.mrb[0].mxu0
          %v1703 = vadd.f32 %v1542, %v1702
          %v1704 = vpop.f32.mrb[0].mxu0
          %v1705 = vpop.f32.mrb[0].mxu0
          %v1706 = vadd.f32 %v1545, %v1705
          %v1707 = vpop.f32.mrb[0].mxu0
          %1708 = vmatprep.mubr.bf16.mxu0 %v612
          %1709 = vmatmul.mubr.bf16.gmra.mrb[0].mxu0 %v564
          %v1710 = vpop.f32.mrb[0].mxu0
          %v1711 = vadd.f32 %v1550, %v1710
          %v1712 = vpop.f32.mrb[0].mxu0
          %v1713 = vpop.f32.mrb[0].mxu0
          %v1714 = vadd.f32 %v1553, %v1713
          %v1715 = vpop.f32.mrb[0].mxu0
          %1716 = vmatprep.mubr.bf16.mxu0 %v613
          %1717 = vmatmul.mubr.bf16.gmra.mrb[0].mxu0 %v565
          %v1718 = vpop.f32.mrb[0].mxu0
          %v1719 = vadd.f32 %v1558, %v1718
          %v1720 = vpop.f32.mrb[0].mxu0
          %v1721 = vpop.f32.mrb[0].mxu0
          %v1722 = vadd.f32 %v1561, %v1721
          %v1723 = vpop.f32.mrb[0].mxu0
          %1724 = vmatprep.mubr.bf16.mxu0 %v614
          %1725 = vmatmul.mubr.bf16.gmra.mrb[0].mxu0 %v566
          %v1726 = vpop.f32.mrb[0].mxu0
          %v1727 = vadd.f32 %v1566, %v1726
          %v1728 = vpop.f32.mrb[0].mxu0
          %v1729 = vpop.f32.mrb[0].mxu0
          %v1730 = vadd.f32 %v1569, %v1729
          %v1731 = vpop.f32.mrb[0].mxu0
          %1732 = vmatprep.mubr.bf16.mxu0 %v615
          %1733 = vmatmul.mubr.bf16.gmra.mrb[0].mxu0 %v567
          %v1734 = vpop.f32.mrb[0].mxu0
          %v1735 = vadd.f32 %v1574, %v1734
          %v1736 = vpop.f32.mrb[0].mxu0
          %v1737 = vpop.f32.mrb[0].mxu0
          %v1738 = vadd.f32 %v1577, %v1737
          %v1739 = vpop.f32.mrb[0].mxu0
          %1740 = vmatprep.mubr.bf16.mxu0 %v616
          %1741 = vmatmul.mubr.bf16.gmra.mrb[0].mxu0 %v568
          %v1742 = vpop.f32.mrb[0].mxu0
          %v1743 = vadd.f32 %v1582, %v1742
          %v1744 = vpop.f32.mrb[0].mxu0
          %v1745 = vpop.f32.mrb[0].mxu0
          %v1746 = vadd.f32 %v1585, %v1745
          %v1747 = vpop.f32.mrb[0].mxu0
          %1748 = vmatprep.mubr.bf16.mxu0 %v617
          %1749 = vmatmul.mubr.bf16.gmra.mrb[0].mxu0 %v569
          %v1750 = vpop.f32.mrb[0].mxu0
          %v1751 = vadd.f32 %v1590, %v1750
          %v1752 = vpop.f32.mrb[0].mxu0
          %v1753 = vpop.f32.mrb[0].mxu0
          %v1754 = vadd.f32 %v1593, %v1753
          %v1755 = vpop.f32.mrb[0].mxu0
          %1756 = vmatprep.mubr.bf16.mxu0 %v618
          %1757 = vmatmul.mubr.bf16.gmra.mrb[0].mxu0 %v570
          %v1758 = vpop.f32.mrb[0].mxu0
          %v1759 = vadd.f32 %v1598, %v1758
          %v1760 = vpop.f32.mrb[0].mxu0
          %v1761 = vpop.f32.mrb[0].mxu0
          %v1762 = vadd.f32 %v1601, %v1761
          %v1763 = vpop.f32.mrb[0].mxu0
          %1764 = vdwg.mxu0
          %1765 = vmatprep.subr.bf16.mxu0 0
          %1766 = vmatpush1.bf16.msra.mxu0 %v1331
          %1767 = vmatprep.subr.bf16.mxu0 0
          %1768 = vmatpush1.bf16.msra.mxu0 %v1332
          %1769 = vmatprep.subr.bf16.mxu0 0
          %1770 = vmatpush1.bf16.msra.mxu0 %v1333
          %1771 = vmatprep.subr.bf16.mxu0 0
          %1772 = vmatpush1.bf16.msra.mxu0 %v1334
          %1773 = vmatprep.subr.bf16.mxu0 0
          %1774 = vmatpush1.bf16.msra.mxu0 %v1335
          %1775 = vmatprep.subr.bf16.mxu0 0
          %1776 = vmatpush1.bf16.msra.mxu0 %v1336
          %1777 = vmatprep.subr.bf16.mxu0 0
          %1778 = vmatpush1.bf16.msra.mxu0 %v1337
          %1779 = vmatprep.subr.bf16.mxu0 0
          %1780 = vmatpush1.bf16.msra.mxu0 %v1338
          %1781 = vmatprep.subr.bf16.mxu0 0
          %1782 = vmatpush1.bf16.msra.mxu0 %v1339
          %1783 = vmatprep.subr.bf16.mxu0 0
          %1784 = vmatpush1.bf16.msra.mxu0 %v1340
          %1785 = vmatprep.subr.bf16.mxu0 0
          %1786 = vmatpush1.bf16.msra.mxu0 %v1341
          %1787 = vmatprep.subr.bf16.mxu0 0
          %1788 = vmatpush1.bf16.msra.mxu0 %v1342
          %1789 = vmatprep.subr.bf16.mxu0 0
          %1790 = vmatpush1.bf16.msra.mxu0 %v1343
          %1791 = vmatprep.subr.bf16.mxu0 0
          %1792 = vmatpush1.bf16.msra.mxu0 %v1344
          %1793 = vmatprep.subr.bf16.mxu0 0
          %1794 = vmatpush1.bf16.msra.mxu0 %v1345
          %1795 = vmatprep.subr.bf16.mxu0 0
          %1796 = vmatpush1.bf16.msra.mxu0 %v1346
          %1797 = vmatprep.mubr.bf16.mxu0 %v699
          %1798 = vmatmul.mubr.bf16.gmra.mrb[0].mxu0 %v651
          %v1799 = vpop.f32.mrb[0].mxu0
          %v1800 = vadd.f32 %v1639, %v1799
          %v1801 = vpop.f32.mrb[0].mxu0
          %v1802 = vpop.f32.mrb[0].mxu0
          %v1803 = vadd.f32 %v1642, %v1802
          %v1804 = vpop.f32.mrb[0].mxu0
          %1805 = vmatprep.mubr.bf16.mxu0 %v700
          %1806 = vmatmul.mubr.bf16.gmra.mrb[0].mxu0 %v652
          %v1807 = vpop.f32.mrb[0].mxu0
          %v1808 = vadd.f32 %v1647, %v1807
          %v1809 = vpop.f32.mrb[0].mxu0
          %v1810 = vpop.f32.mrb[0].mxu0
          %v1811 = vadd.f32 %v1650, %v1810
          %v1812 = vpop.f32.mrb[0].mxu0
          %1813 = vmatprep.mubr.bf16.mxu0 %v701
          %1814 = vmatmul.mubr.bf16.gmra.mrb[0].mxu0 %v653
          %v1815 = vpop.f32.mrb[0].mxu0
          %v1816 = vadd.f32 %v1655, %v1815
          %v1817 = vpop.f32.mrb[0].mxu0
          %v1818 = vpop.f32.mrb[0].mxu0
          %v1819 = vadd.f32 %v1658, %v1818
          %v1820 = vpop.f32.mrb[0].mxu0
          %1821 = vmatprep.mubr.bf16.mxu0 %v702
          %1822 = vmatmul.mubr.bf16.gmra.mrb[0].mxu0 %v654
          %v1823 = vpop.f32.mrb[0].mxu0
          %v1824 = vadd.f32 %v1663, %v1823
          %v1825 = vpop.f32.mrb[0].mxu0
          %v1826 = vpop.f32.mrb[0].mxu0
          %v1827 = vadd.f32 %v1666, %v1826
          %v1828 = vpop.f32.mrb[0].mxu0
          %1829 = vmatprep.mubr.bf16.mxu0 %v703
          %1830 = vmatmul.mubr.bf16.gmra.mrb[0].mxu0 %v655
          %v1831 = vpop.f32.mrb[0].mxu0
          %v1832 = vadd.f32 %v1671, %v1831
          %v1833 = vpop.f32.mrb[0].mxu0
          %v1834 = vpop.f32.mrb[0].mxu0
          %v1835 = vadd.f32 %v1674, %v1834
          %v1836 = vpop.f32.mrb[0].mxu0
          %1837 = vmatprep.mubr.bf16.mxu0 %v704
          %1838 = vmatmul.mubr.bf16.gmra.mrb[0].mxu0 %v656
          %v1839 = vpop.f32.mrb[0].mxu0
          %v1840 = vadd.f32 %v1679, %v1839
          %v1841 = vpop.f32.mrb[0].mxu0
          %v1842 = vpop.f32.mrb[0].mxu0
          %v1843 = vadd.f32 %v1682, %v1842
          %v1844 = vpop.f32.mrb[0].mxu0
          %1845 = vmatprep.mubr.bf16.mxu0 %v705
          %1846 = vmatmul.mubr.bf16.gmra.mrb[0].mxu0 %v657
          %v1847 = vpop.f32.mrb[0].mxu0
          %v1848 = vadd.f32 %v1687, %v1847
          %v1849 = vpop.f32.mrb[0].mxu0
          %v1850 = vpop.f32.mrb[0].mxu0
          %v1851 = vadd.f32 %v1690, %v1850
          %v1852 = vpop.f32.mrb[0].mxu0
          %1853 = vmatprep.mubr.bf16.mxu0 %v706
          %1854 = vmatmul.mubr.bf16.gmra.mrb[0].mxu0 %v658
          %v1855 = vpop.f32.mrb[0].mxu0
          %v1856 = vadd.f32 %v1695, %v1855
          %v1857 = vpop.f32.mrb[0].mxu0
          %v1858 = vpop.f32.mrb[0].mxu0
          %v1859 = vadd.f32 %v1698, %v1858
          %v1860 = vpop.f32.mrb[0].mxu0
          %1861 = vmatprep.mubr.bf16.mxu0 %v707
          %1862 = vmatmul.mubr.bf16.gmra.mrb[0].mxu0 %v659
          %v1863 = vpop.f32.mrb[0].mxu0
          %v1864 = vadd.f32 %v1703, %v1863
          %v1865 = vpop.f32.mrb[0].mxu0
          %v1866 = vpop.f32.mrb[0].mxu0
          %v1867 = vadd.f32 %v1706, %v1866
          %v1868 = vpop.f32.mrb[0].mxu0
          %1869 = vmatprep.mubr.bf16.mxu0 %v708
          %1870 = vmatmul.mubr.bf16.gmra.mrb[0].mxu0 %v660
          %v1871 = vpop.f32.mrb[0].mxu0
          %v1872 = vadd.f32 %v1711, %v1871
          %v1873 = vpop.f32.mrb[0].mxu0
          %v1874 = vpop.f32.mrb[0].mxu0
          %v1875 = vadd.f32 %v1714, %v1874
          %v1876 = vpop.f32.mrb[0].mxu0
          %1877 = vmatprep.mubr.bf16.mxu0 %v709
          %1878 = vmatmul.mubr.bf16.gmra.mrb[0].mxu0 %v661
          %v1879 = vpop.f32.mrb[0].mxu0
          %v1880 = vadd.f32 %v1719, %v1879
          %v1881 = vpop.f32.mrb[0].mxu0
          %v1882 = vpop.f32.mrb[0].mxu0
          %v1883 = vadd.f32 %v1722, %v1882
          %v1884 = vpop.f32.mrb[0].mxu0
          %1885 = vmatprep.mubr.bf16.mxu0 %v710
          %1886 = vmatmul.mubr.bf16.gmra.mrb[0].mxu0 %v662
          %v1887 = vpop.f32.mrb[0].mxu0
          %v1888 = vadd.f32 %v1727, %v1887
          %v1889 = vpop.f32.mrb[0].mxu0
          %v1890 = vpop.f32.mrb[0].mxu0
          %v1891 = vadd.f32 %v1730, %v1890
          %v1892 = vpop.f32.mrb[0].mxu0
          %1893 = vmatprep.mubr.bf16.mxu0 %v711
          %1894 = vmatmul.mubr.bf16.gmra.mrb[0].mxu0 %v663
          %v1895 = vpop.f32.mrb[0].mxu0
          %v1896 = vadd.f32 %v1735, %v1895
          %v1897 = vpop.f32.mrb[0].mxu0
          %v1898 = vpop.f32.mrb[0].mxu0
          %v1899 = vadd.f32 %v1738, %v1898
          %v1900 = vpop.f32.mrb[0].mxu0
          %1901 = vmatprep.mubr.bf16.mxu0 %v712
          %1902 = vmatmul.mubr.bf16.gmra.mrb[0].mxu0 %v664
          %v1903 = vpop.f32.mrb[0].mxu0
          %v1904 = vadd.f32 %v1743, %v1903
          %v1905 = vpop.f32.mrb[0].mxu0
          %v1906 = vpop.f32.mrb[0].mxu0
          %v1907 = vadd.f32 %v1746, %v1906
          %v1908 = vpop.f32.mrb[0].mxu0
          %1909 = vmatprep.mubr.bf16.mxu0 %v713
          %1910 = vmatmul.mubr.bf16.gmra.mrb[0].mxu0 %v665
          %v1911 = vpop.f32.mrb[0].mxu0
          %v1912 = vadd.f32 %v1751, %v1911
          %v1913 = vpop.f32.mrb[0].mxu0
          %v1914 = vpop.f32.mrb[0].mxu0
          %v1915 = vadd.f32 %v1754, %v1914
          %v1916 = vpop.f32.mrb[0].mxu0
          %1917 = vmatprep.mubr.bf16.mxu0 %v714
          %1918 = vmatmul.mubr.bf16.gmra.mrb[0].mxu0 %v666
          %v1919 = vpop.f32.mrb[0].mxu0
          %v1920 = vadd.f32 %v1759, %v1919
          %v1921 = vpop.f32.mrb[0].mxu0
          %v1922 = vpop.f32.mrb[0].mxu0
          %v1923 = vadd.f32 %v1762, %v1922
          %v1924 = vpop.f32.mrb[0].mxu0
          %1925 = vdwg.mxu0
          %1926 = vmatprep.subr.bf16.mxu0 0
          %1927 = vmatpush1.bf16.msra.mxu0 %v1347
          %1928 = vmatprep.subr.bf16.mxu0 0
          %1929 = vmatpush1.bf16.msra.mxu0 %v1348
          %1930 = vmatprep.subr.bf16.mxu0 0
          %1931 = vmatpush1.bf16.msra.mxu0 %v1349
          %1932 = vmatprep.subr.bf16.mxu0 0
          %1933 = vmatpush1.bf16.msra.mxu0 %v1350
          %1934 = vmatprep.subr.bf16.mxu0 0
          %1935 = vmatpush1.bf16.msra.mxu0 %v1351
          %1936 = vmatprep.subr.bf16.mxu0 0
          %1937 = vmatpush1.bf16.msra.mxu0 %v1352
          %1938 = vmatprep.subr.bf16.mxu0 0
          %1939 = vmatpush1.bf16.msra.mxu0 %v1353
          %1940 = vmatprep.subr.bf16.mxu0 0
          %1941 = vmatpush1.bf16.msra.mxu0 %v1354
          %1942 = vmatprep.subr.bf16.mxu0 0
          %1943 = vmatpush1.bf16.msra.mxu0 %v1355
          %1944 = vmatprep.subr.bf16.mxu0 0
          %1945 = vmatpush1.bf16.msra.mxu0 %v1356
          %1946 = vmatprep.subr.bf16.mxu0 0
          %1947 = vmatpush1.bf16.msra.mxu0 %v1357
          %1948 = vmatprep.subr.bf16.mxu0 0
          %1949 = vmatpush1.bf16.msra.mxu0 %v1358
          %1950 = vmatprep.subr.bf16.mxu0 0
          %1951 = vmatpush1.bf16.msra.mxu0 %v1359
          %1952 = vmatprep.subr.bf16.mxu0 0
          %1953 = vmatpush1.bf16.msra.mxu0 %v1360
          %1954 = vmatprep.subr.bf16.mxu0 0
          %1955 = vmatpush1.bf16.msra.mxu0 %v1361
          %1956 = vmatprep.subr.bf16.mxu0 0
          %1957 = vmatpush1.bf16.msra.mxu0 %v1362
          %1958 = vmatprep.mubr.bf16.mxu0 %v796
          %1959 = vmatmul.mubr.bf16.gmra.mrb[0].mxu0 %v748
          %v1960 = vpop.f32.mrb[0].mxu0
          %v1961 = vadd.f32 %v1800, %v1960
          %v1962 = vpop.f32.mrb[0].mxu0
          %v1963 = vpop.f32.mrb[0].mxu0
          %v1964 = vadd.f32 %v1803, %v1963
          %v1965 = vpop.f32.mrb[0].mxu0
          %1966 = vmatprep.mubr.bf16.mxu0 %v797
          %1967 = vmatmul.mubr.bf16.gmra.mrb[0].mxu0 %v749
          %v1968 = vpop.f32.mrb[0].mxu0
          %v1969 = vadd.f32 %v1808, %v1968
          %v1970 = vpop.f32.mrb[0].mxu0
          %v1971 = vpop.f32.mrb[0].mxu0
          %v1972 = vadd.f32 %v1811, %v1971
          %v1973 = vpop.f32.mrb[0].mxu0
          %1974 = vmatprep.mubr.bf16.mxu0 %v798
          %1975 = vmatmul.mubr.bf16.gmra.mrb[0].mxu0 %v750
          %v1976 = vpop.f32.mrb[0].mxu0
          %v1977 = vadd.f32 %v1816, %v1976
          %v1978 = vpop.f32.mrb[0].mxu0
          %v1979 = vpop.f32.mrb[0].mxu0
          %v1980 = vadd.f32 %v1819, %v1979
          %v1981 = vpop.f32.mrb[0].mxu0
          %1982 = vmatprep.mubr.bf16.mxu0 %v799
          %1983 = vmatmul.mubr.bf16.gmra.mrb[0].mxu0 %v751
          %v1984 = vpop.f32.mrb[0].mxu0
          %v1985 = vadd.f32 %v1824, %v1984
          %v1986 = vpop.f32.mrb[0].mxu0
          %v1987 = vpop.f32.mrb[0].mxu0
          %v1988 = vadd.f32 %v1827, %v1987
          %v1989 = vpop.f32.mrb[0].mxu0
          %1990 = vmatprep.mubr.bf16.mxu0 %v800
          %1991 = vmatmul.mubr.bf16.gmra.mrb[0].mxu0 %v752
          %v1992 = vpop.f32.mrb[0].mxu0
          %v1993 = vadd.f32 %v1832, %v1992
          %v1994 = vpop.f32.mrb[0].mxu0
          %v1995 = vpop.f32.mrb[0].mxu0
          %v1996 = vadd.f32 %v1835, %v1995
          %v1997 = vpop.f32.mrb[0].mxu0
          %1998 = vmatprep.mubr.bf16.mxu0 %v801
          %1999 = vmatmul.mubr.bf16.gmra.mrb[0].mxu0 %v753
          %v2000 = vpop.f32.mrb[0].mxu0
          %v2001 = vadd.f32 %v1840, %v2000
          %v2002 = vpop.f32.mrb[0].mxu0
          %v2003 = vpop.f32.mrb[0].mxu0
          %v2004 = vadd.f32 %v1843, %v2003
          %v2005 = vpop.f32.mrb[0].mxu0
          %2006 = vmatprep.mubr.bf16.mxu0 %v802
          %2007 = vmatmul.mubr.bf16.gmra.mrb[0].mxu0 %v754
          %v2008 = vpop.f32.mrb[0].mxu0
          %v2009 = vadd.f32 %v1848, %v2008
          %v2010 = vpop.f32.mrb[0].mxu0
          %v2011 = vpop.f32.mrb[0].mxu0
          %v2012 = vadd.f32 %v1851, %v2011
          %v2013 = vpop.f32.mrb[0].mxu0
          %2014 = vmatprep.mubr.bf16.mxu0 %v803
          %2015 = vmatmul.mubr.bf16.gmra.mrb[0].mxu0 %v755
          %v2016 = vpop.f32.mrb[0].mxu0
          %v2017 = vadd.f32 %v1856, %v2016
          %v2018 = vpop.f32.mrb[0].mxu0
          %v2019 = vpop.f32.mrb[0].mxu0
          %v2020 = vadd.f32 %v1859, %v2019
          %v2021 = vpop.f32.mrb[0].mxu0
          %2022 = vmatprep.mubr.bf16.mxu0 %v804
          %2023 = vmatmul.mubr.bf16.gmra.mrb[0].mxu0 %v756
          %v2024 = vpop.f32.mrb[0].mxu0
          %v2025 = vadd.f32 %v1864, %v2024
          %v2026 = vpop.f32.mrb[0].mxu0
          %v2027 = vpop.f32.mrb[0].mxu0
          %v2028 = vadd.f32 %v1867, %v2027
          %v2029 = vpop.f32.mrb[0].mxu0
          %2030 = vmatprep.mubr.bf16.mxu0 %v805
          %2031 = vmatmul.mubr.bf16.gmra.mrb[0].mxu0 %v757
          %v2032 = vpop.f32.mrb[0].mxu0
          %v2033 = vadd.f32 %v1872, %v2032
          %v2034 = vpop.f32.mrb[0].mxu0
          %v2035 = vpop.f32.mrb[0].mxu0
          %v2036 = vadd.f32 %v1875, %v2035
          %v2037 = vpop.f32.mrb[0].mxu0
          %2038 = vmatprep.mubr.bf16.mxu0 %v806
          %2039 = vmatmul.mubr.bf16.gmra.mrb[0].mxu0 %v758
          %v2040 = vpop.f32.mrb[0].mxu0
          %v2041 = vadd.f32 %v1880, %v2040
          %v2042 = vpop.f32.mrb[0].mxu0
          %v2043 = vpop.f32.mrb[0].mxu0
          %v2044 = vadd.f32 %v1883, %v2043
          %v2045 = vpop.f32.mrb[0].mxu0
          %2046 = vmatprep.mubr.bf16.mxu0 %v807
          %2047 = vmatmul.mubr.bf16.gmra.mrb[0].mxu0 %v759
          %v2048 = vpop.f32.mrb[0].mxu0
          %v2049 = vadd.f32 %v1888, %v2048
          %v2050 = vpop.f32.mrb[0].mxu0
          %v2051 = vpop.f32.mrb[0].mxu0
          %v2052 = vadd.f32 %v1891, %v2051
          %v2053 = vpop.f32.mrb[0].mxu0
          %2054 = vmatprep.mubr.bf16.mxu0 %v808
          %2055 = vmatmul.mubr.bf16.gmra.mrb[0].mxu0 %v760
          %v2056 = vpop.f32.mrb[0].mxu0
          %v2057 = vadd.f32 %v1896, %v2056
          %v2058 = vpop.f32.mrb[0].mxu0
          %v2059 = vpop.f32.mrb[0].mxu0
          %v2060 = vadd.f32 %v1899, %v2059
          %v2061 = vpop.f32.mrb[0].mxu0
          %2062 = vmatprep.mubr.bf16.mxu0 %v809
          %2063 = vmatmul.mubr.bf16.gmra.mrb[0].mxu0 %v761
          %v2064 = vpop.f32.mrb[0].mxu0
          %v2065 = vadd.f32 %v1904, %v2064
          %v2066 = vpop.f32.mrb[0].mxu0
          %v2067 = vpop.f32.mrb[0].mxu0
          %v2068 = vadd.f32 %v1907, %v2067
          %v2069 = vpop.f32.mrb[0].mxu0
          %2070 = vmatprep.mubr.bf16.mxu0 %v810
          %2071 = vmatmul.mubr.bf16.gmra.mrb[0].mxu0 %v762
          %v2072 = vpop.f32.mrb[0].mxu0
          %v2073 = vadd.f32 %v1912, %v2072
          %v2074 = vpop.f32.mrb[0].mxu0
          %v2075 = vpop.f32.mrb[0].mxu0
          %v2076 = vadd.f32 %v1915, %v2075
          %v2077 = vpop.f32.mrb[0].mxu0
          %2078 = vmatprep.mubr.bf16.mxu0 %v811
          %2079 = vmatmul.mubr.bf16.gmra.mrb[0].mxu0 %v763
          %v2080 = vpop.f32.mrb[0].mxu0
          %v2081 = vadd.f32 %v1920, %v2080
          %v2082 = vpop.f32.mrb[0].mxu0
          %v2083 = vpop.f32.mrb[0].mxu0
          %v2084 = vadd.f32 %v1923, %v2083
          %v2085 = vpop.f32.mrb[0].mxu0
          %2086 = vdwg.mxu0
          %2087 = vmatprep.subr.bf16.mxu0 0
          %2088 = vmatpush1.bf16.msra.mxu0 %v1363
          %2089 = vmatprep.subr.bf16.mxu0 0
          %2090 = vmatpush1.bf16.msra.mxu0 %v1364
          %2091 = vmatprep.subr.bf16.mxu0 0
          %2092 = vmatpush1.bf16.msra.mxu0 %v1365
          %2093 = vmatprep.subr.bf16.mxu0 0
          %2094 = vmatpush1.bf16.msra.mxu0 %v1366
          %2095 = vmatprep.subr.bf16.mxu0 0
          %2096 = vmatpush1.bf16.msra.mxu0 %v1367
          %2097 = vmatprep.subr.bf16.mxu0 0
          %2098 = vmatpush1.bf16.msra.mxu0 %v1368
          %2099 = vmatprep.subr.bf16.mxu0 0
          %2100 = vmatpush1.bf16.msra.mxu0 %v1369
          %2101 = vmatprep.subr.bf16.mxu0 0
          %2102 = vmatpush1.bf16.msra.mxu0 %v1370
          %2103 = vmatprep.subr.bf16.mxu0 0
          %2104 = vmatpush1.bf16.msra.mxu0 0
          %2105 = vmatprep.subr.bf16.mxu0 0
          %2106 = vmatpush1.bf16.msra.mxu0 0
          %2107 = vmatprep.subr.bf16.mxu0 0
          %2108 = vmatpush1.bf16.msra.mxu0 0
          %2109 = vmatprep.subr.bf16.mxu0 0
          %2110 = vmatpush1.bf16.msra.mxu0 0
          %2111 = vmatprep.subr.bf16.mxu0 0
          %2112 = vmatpush1.bf16.msra.mxu0 0
          %2113 = vmatprep.subr.bf16.mxu0 0
          %2114 = vmatpush1.bf16.msra.mxu0 0
          %2115 = vmatprep.subr.bf16.mxu0 0
          %2116 = vmatpush1.bf16.msra.mxu0 0
          %2117 = vmatprep.subr.bf16.mxu0 0
          %2118 = vmatpush1.bf16.msra.mxu0 0
          %2119 = vmatprep.mubr.bf16.mxu0 0
          %2120 = vmatmul.mubr.bf16.gmra.mrb[0].mxu0 %v844
          %v2121 = vpop.f32.mrb[0].mxu0
          %v2122 = vadd.f32 %v1961, %v2121
          %v2123 = vpop.f32.mrb[0].mxu0
          %v2124 = vpop.f32.mrb[0].mxu0
          %v2125 = vadd.f32 %v1964, %v2124
          %v2126 = vpop.f32.mrb[0].mxu0
          %2127 = vmatprep.mubr.bf16.mxu0 0
          %2128 = vmatmul.mubr.bf16.gmra.mrb[0].mxu0 %v845
          %v2129 = vpop.f32.mrb[0].mxu0
          %v2130 = vadd.f32 %v1969, %v2129
          %v2131 = vpop.f32.mrb[0].mxu0
          %v2132 = vpop.f32.mrb[0].mxu0
          %v2133 = vadd.f32 %v1972, %v2132
          %v2134 = vpop.f32.mrb[0].mxu0
          %2135 = vmatprep.mubr.bf16.mxu0 0
          %2136 = vmatmul.mubr.bf16.gmra.mrb[0].mxu0 %v846
          %v2137 = vpop.f32.mrb[0].mxu0
          %v2138 = vadd.f32 %v1977, %v2137
          %v2139 = vpop.f32.mrb[0].mxu0
          %v2140 = vpop.f32.mrb[0].mxu0
          %v2141 = vadd.f32 %v1980, %v2140
          %v2142 = vpop.f32.mrb[0].mxu0
          %2143 = vmatprep.mubr.bf16.mxu0 0
          %2144 = vmatmul.mubr.bf16.gmra.mrb[0].mxu0 %v847
          %v2145 = vpop.f32.mrb[0].mxu0
          %v2146 = vadd.f32 %v1985, %v2145
          %v2147 = vpop.f32.mrb[0].mxu0
          %v2148 = vpop.f32.mrb[0].mxu0
          %v2149 = vadd.f32 %v1988, %v2148
          %v2150 = vpop.f32.mrb[0].mxu0
          %2151 = vmatprep.mubr.bf16.mxu0 0
          %2152 = vmatmul.mubr.bf16.gmra.mrb[0].mxu0 %v848
          %v2153 = vpop.f32.mrb[0].mxu0
          %v2154 = vadd.f32 %v1993, %v2153
          %v2155 = vpop.f32.mrb[0].mxu0
          %v2156 = vpop.f32.mrb[0].mxu0
          %v2157 = vadd.f32 %v1996, %v2156
          %v2158 = vpop.f32.mrb[0].mxu0
          %2159 = vmatprep.mubr.bf16.mxu0 0
          %2160 = vmatmul.mubr.bf16.gmra.mrb[0].mxu0 %v849
          %v2161 = vpop.f32.mrb[0].mxu0
          %v2162 = vadd.f32 %v2001, %v2161
          %v2163 = vpop.f32.mrb[0].mxu0
          %v2164 = vpop.f32.mrb[0].mxu0
          %v2165 = vadd.f32 %v2004, %v2164
          %v2166 = vpop.f32.mrb[0].mxu0
          %2167 = vmatprep.mubr.bf16.mxu0 0
          %2168 = vmatmul.mubr.bf16.gmra.mrb[0].mxu0 %v850
          %v2169 = vpop.f32.mrb[0].mxu0
          %v2170 = vadd.f32 %v2009, %v2169
          %v2171 = vpop.f32.mrb[0].mxu0
          %v2172 = vpop.f32.mrb[0].mxu0
          %v2173 = vadd.f32 %v2012, %v2172
          %v2174 = vpop.f32.mrb[0].mxu0
          %2175 = vmatprep.mubr.bf16.mxu0 0
          %2176 = vmatmul.mubr.bf16.gmra.mrb[0].mxu0 %v851
          %v2177 = vpop.f32.mrb[0].mxu0
          %v2178 = vadd.f32 %v2017, %v2177
          %v2179 = vpop.f32.mrb[0].mxu0
          %v2180 = vpop.f32.mrb[0].mxu0
          %v2181 = vadd.f32 %v2020, %v2180
          %v2182 = vpop.f32.mrb[0].mxu0
          %2183 = vmatprep.mubr.bf16.mxu0 0
          %2184 = vmatmul.mubr.bf16.gmra.mrb[0].mxu0 %v852
          %v2185 = vpop.f32.mrb[0].mxu0
          %v2186 = vadd.f32 %v2025, %v2185
          %v2187 = vpop.f32.mrb[0].mxu0
          %v2188 = vpop.f32.mrb[0].mxu0
          %v2189 = vadd.f32 %v2028, %v2188
          %v2190 = vpop.f32.mrb[0].mxu0
          %2191 = vmatprep.mubr.bf16.mxu0 0
          %2192 = vmatmul.mubr.bf16.gmra.mrb[0].mxu0 %v853
          %v2193 = vpop.f32.mrb[0].mxu0
          %v2194 = vadd.f32 %v2033, %v2193
          %v2195 = vpop.f32.mrb[0].mxu0
          %v2196 = vpop.f32.mrb[0].mxu0
          %v2197 = vadd.f32 %v2036, %v2196
          %v2198 = vpop.f32.mrb[0].mxu0
          %2199 = vmatprep.mubr.bf16.mxu0 0
          %2200 = vmatmul.mubr.bf16.gmra.mrb[0].mxu0 %v854
          %v2201 = vpop.f32.mrb[0].mxu0
          %v2202 = vadd.f32 %v2041, %v2201
          %v2203 = vpop.f32.mrb[0].mxu0
          %v2204 = vpop.f32.mrb[0].mxu0
          %v2205 = vadd.f32 %v2044, %v2204
          %v2206 = vpop.f32.mrb[0].mxu0
          %2207 = vmatprep.mubr.bf16.mxu0 0
          %2208 = vmatmul.mubr.bf16.gmra.mrb[0].mxu0 %v855
          %v2209 = vpop.f32.mrb[0].mxu0
          %v2210 = vadd.f32 %v2049, %v2209
          %v2211 = vpop.f32.mrb[0].mxu0
          %v2212 = vpop.f32.mrb[0].mxu0
          %v2213 = vadd.f32 %v2052, %v2212
          %v2214 = vpop.f32.mrb[0].mxu0
          %2215 = vmatprep.mubr.bf16.mxu0 0
          %2216 = vmatmul.mubr.bf16.gmra.mrb[0].mxu0 %v856
          %v2217 = vpop.f32.mrb[0].mxu0
          %v2218 = vadd.f32 %v2057, %v2217
          %v2219 = vpop.f32.mrb[0].mxu0
          %v2220 = vpop.f32.mrb[0].mxu0
          %v2221 = vadd.f32 %v2060, %v2220
          %v2222 = vpop.f32.mrb[0].mxu0
          %2223 = vmatprep.mubr.bf16.mxu0 0
          %2224 = vmatmul.mubr.bf16.gmra.mrb[0].mxu0 %v857
          %v2225 = vpop.f32.mrb[0].mxu0
          %v2226 = vadd.f32 %v2065, %v2225
          %v2227 = vpop.f32.mrb[0].mxu0
          %v2228 = vpop.f32.mrb[0].mxu0
          %v2229 = vadd.f32 %v2068, %v2228
          %v2230 = vpop.f32.mrb[0].mxu0
          %2231 = vmatprep.mubr.bf16.mxu0 0
          %2232 = vmatmul.mubr.bf16.gmra.mrb[0].mxu0 %v858
          %v2233 = vpop.f32.mrb[0].mxu0
          %v2234 = vadd.f32 %v2073, %v2233
          %v2235 = vpop.f32.mrb[0].mxu0
          %v2236 = vpop.f32.mrb[0].mxu0
          %v2237 = vadd.f32 %v2076, %v2236
          %v2238 = vpop.f32.mrb[0].mxu0
          %2239 = vmatprep.mubr.bf16.mxu0 0
          %2240 = vmatmul.mubr.bf16.gmra.mrb[0].mxu0 %v859
          %v2241 = vpop.f32.mrb[0].mxu0
          %v2242 = vadd.f32 %v2081, %v2241
          %v2243 = vpop.f32.mrb[0].mxu0
          %v2244 = vpop.f32.mrb[0].mxu0
          %v2245 = vadd.f32 %v2084, %v2244
          %v2246 = vpop.f32.mrb[0].mxu0
          %2247 = vdwg.mxu0
          %v2248 = vxor.u32 %v2122, 2147483648
          %v2249 = vxor.u32 %v2125, 2147483648
          %v2250 = vxor.u32 %v2130, 2147483648
          %v2251 = vxor.u32 %v2133, 2147483648
          %v2252 = vxor.u32 %v2138, 2147483648
          %v2253 = vxor.u32 %v2141, 2147483648
          %v2254 = vxor.u32 %v2146, 2147483648
          %v2255 = vxor.u32 %v2149, 2147483648
          %v2256 = vxor.u32 %v2154, 2147483648
          %v2257 = vxor.u32 %v2157, 2147483648
          %v2258 = vxor.u32 %v2162, 2147483648
          %v2259 = vxor.u32 %v2165, 2147483648
          %v2260 = vxor.u32 %v2170, 2147483648
          %v2261 = vxor.u32 %v2173, 2147483648
          %v2262 = vxor.u32 %v2178, 2147483648
          %v2263 = vxor.u32 %v2181, 2147483648
          %v2264 = vxor.u32 %v2186, 2147483648
          %v2265 = vxor.u32 %v2189, 2147483648
          %v2266 = vxor.u32 %v2194, 2147483648
          %v2267 = vxor.u32 %v2197, 2147483648
          %v2268 = vxor.u32 %v2202, 2147483648
          %v2269 = vxor.u32 %v2205, 2147483648
          %v2270 = vxor.u32 %v2210, 2147483648
          %v2271 = vxor.u32 %v2213, 2147483648
          %v2272 = vxor.u32 %v2218, 2147483648
          %v2273 = vxor.u32 %v2221, 2147483648
          %v2274 = vxor.u32 %v2226, 2147483648
          %v2275 = vxor.u32 %v2229, 2147483648
          %v2276 = vxor.u32 %v2234, 2147483648
          %v2277 = vxor.u32 %v2237, 2147483648
          %v2278 = vxor.u32 %v2242, 2147483648
          %v2279 = vxor.u32 %v2245, 2147483648
          %v2280 = vmul.f32 %v2248, 1.442695
          %v2281 = vpow.pop %v2280
          %v2282 = vmul.f32 %v2249, 1.442695
          %v2283 = vpow.pop %v2282
          %v2284 = vmul.f32 %v2250, 1.442695
          %v2285 = vpow.pop %v2284
          %v2286 = vmul.f32 %v2251, 1.442695
          %v2287 = vpow.pop %v2286
          %v2288 = vmul.f32 %v2252, 1.442695
          %v2289 = vpow.pop %v2288
          %v2290 = vmul.f32 %v2253, 1.442695
          %v2291 = vpow.pop %v2290
          %v2292 = vmul.f32 %v2254, 1.442695
          %v2293 = vpow.pop %v2292
          %v2294 = vmul.f32 %v2255, 1.442695
          %v2295 = vpow.pop %v2294
          %v2296 = vmul.f32 %v2256, 1.442695
          %v2297 = vpow.pop %v2296
          %v2298 = vmul.f32 %v2257, 1.442695
          %v2299 = vpow.pop %v2298
          %v2300 = vmul.f32 %v2258, 1.442695
          %v2301 = vpow.pop %v2300
          %v2302 = vmul.f32 %v2259, 1.442695
          %v2303 = vpow.pop %v2302
          %v2304 = vmul.f32 %v2260, 1.442695
          %v2305 = vpow.pop %v2304
          %v2306 = vmul.f32 %v2261, 1.442695
          %v2307 = vpow.pop %v2306
          %v2308 = vmul.f32 %v2262, 1.442695
          %v2309 = vpow.pop %v2308
          %v2310 = vmul.f32 %v2263, 1.442695
          %v2311 = vpow.pop %v2310
          %v2312 = vmul.f32 %v2264, 1.442695
          %v2313 = vpow.pop %v2312
          %v2314 = vmul.f32 %v2265, 1.442695
          %v2315 = vpow.pop %v2314
          %v2316 = vmul.f32 %v2266, 1.442695
          %v2317 = vpow.pop %v2316
          %v2318 = vmul.f32 %v2267, 1.442695
          %v2319 = vpow.pop %v2318
          %v2320 = vmul.f32 %v2268, 1.442695
          %v2321 = vpow.pop %v2320
          %v2322 = vmul.f32 %v2269, 1.442695
          %v2323 = vpow.pop %v2322
          %v2324 = vmul.f32 %v2270, 1.442695
          %v2325 = vpow.pop %v2324
          %v2326 = vmul.f32 %v2271, 1.442695
          %v2327 = vpow.pop %v2326
          %v2328 = vmul.f32 %v2272, 1.442695
          %v2329 = vpow.pop %v2328
          %v2330 = vmul.f32 %v2273, 1.442695
          %v2331 = vpow.pop %v2330
          %v2332 = vmul.f32 %v2274, 1.442695
          %v2333 = vpow.pop %v2332
          %v2334 = vmul.f32 %v2275, 1.442695
          %v2335 = vpow.pop %v2334
          %v2336 = vmul.f32 %v2276, 1.442695
          %v2337 = vpow.pop %v2336
          %v2338 = vmul.f32 %v2277, 1.442695
          %v2339 = vpow.pop %v2338
          %v2340 = vmul.f32 %v2278, 1.442695
          %v2341 = vpow.pop %v2340
          %v2342 = vmul.f32 %v2279, 1.442695
          %v2343 = vpow.pop %v2342
          %v2344 = vadd.f32 %v2281, 1.0
          %v2345 = vadd.f32 %v2283, 1.0
          %v2346 = vadd.f32 %v2285, 1.0
          %v2347 = vadd.f32 %v2287, 1.0
          %v2348 = vadd.f32 %v2289, 1.0
          %v2349 = vadd.f32 %v2291, 1.0
          %v2350 = vadd.f32 %v2293, 1.0
          %v2351 = vadd.f32 %v2295, 1.0
          %v2352 = vadd.f32 %v2297, 1.0
          %v2353 = vadd.f32 %v2299, 1.0
          %v2354 = vadd.f32 %v2301, 1.0
          %v2355 = vadd.f32 %v2303, 1.0
          %v2356 = vadd.f32 %v2305, 1.0
          %v2357 = vadd.f32 %v2307, 1.0
          %v2358 = vadd.f32 %v2309, 1.0
          %v2359 = vadd.f32 %v2311, 1.0
          %v2360 = vadd.f32 %v2313, 1.0
          %v2361 = vadd.f32 %v2315, 1.0
          %v2362 = vadd.f32 %v2317, 1.0
          %v2363 = vadd.f32 %v2319, 1.0
          %v2364 = vadd.f32 %v2321, 1.0
          %v2365 = vadd.f32 %v2323, 1.0
          %v2366 = vadd.f32 %v2325, 1.0
          %v2367 = vadd.f32 %v2327, 1.0
          %v2368 = vadd.f32 %v2329, 1.0
          %v2369 = vadd.f32 %v2331, 1.0
          %v2370 = vadd.f32 %v2333, 1.0
          %v2371 = vadd.f32 %v2335, 1.0
          %v2372 = vadd.f32 %v2337, 1.0
          %v2373 = vadd.f32 %v2339, 1.0
          %v2374 = vadd.f32 %v2341, 1.0
          %v2375 = vadd.f32 %v2343, 1.0
          %v2376 = vrcp.pop %v2344
          %v2377 = vmul.f32 1.0, %v2376
          %v2378 = vrcp.pop %v2345
          %v2379 = vmul.f32 1.0, %v2378
          %v2380 = vrcp.pop %v2346
          %v2381 = vmul.f32 1.0, %v2380
          %v2382 = vrcp.pop %v2347
          %v2383 = vmul.f32 1.0, %v2382
          %v2384 = vrcp.pop %v2348
          %v2385 = vmul.f32 1.0, %v2384
          %v2386 = vrcp.pop %v2349
          %v2387 = vmul.f32 1.0, %v2386
          %v2388 = vrcp.pop %v2350
          %v2389 = vmul.f32 1.0, %v2388
          %v2390 = vrcp.pop %v2351
          %v2391 = vmul.f32 1.0, %v2390
          %v2392 = vrcp.pop %v2352
          %v2393 = vmul.f32 1.0, %v2392
          %v2394 = vrcp.pop %v2353
          %v2395 = vmul.f32 1.0, %v2394
          %v2396 = vrcp.pop %v2354
          %v2397 = vmul.f32 1.0, %v2396
          %v2398 = vrcp.pop %v2355
          %v2399 = vmul.f32 1.0, %v2398
          %v2400 = vrcp.pop %v2356
          %v2401 = vmul.f32 1.0, %v2400
          %v2402 = vrcp.pop %v2357
          %v2403 = vmul.f32 1.0, %v2402
          %v2404 = vrcp.pop %v2358
          %v2405 = vmul.f32 1.0, %v2404
          %v2406 = vrcp.pop %v2359
          %v2407 = vmul.f32 1.0, %v2406
          %v2408 = vrcp.pop %v2360
          %v2409 = vmul.f32 1.0, %v2408
          %v2410 = vrcp.pop %v2361
          %v2411 = vmul.f32 1.0, %v2410
          %v2412 = vrcp.pop %v2362
          %v2413 = vmul.f32 1.0, %v2412
          %v2414 = vrcp.pop %v2363
          %v2415 = vmul.f32 1.0, %v2414
          %v2416 = vrcp.pop %v2364
          %v2417 = vmul.f32 1.0, %v2416
          %v2418 = vrcp.pop %v2365
          %v2419 = vmul.f32 1.0, %v2418
          %v2420 = vrcp.pop %v2366
          %v2421 = vmul.f32 1.0, %v2420
          %v2422 = vrcp.pop %v2367
          %v2423 = vmul.f32 1.0, %v2422
          %v2424 = vrcp.pop %v2368
          %v2425 = vmul.f32 1.0, %v2424
          %v2426 = vrcp.pop %v2369
          %v2427 = vmul.f32 1.0, %v2426
          %v2428 = vrcp.pop %v2370
          %v2429 = vmul.f32 1.0, %v2428
          %v2430 = vrcp.pop %v2371
          %v2431 = vmul.f32 1.0, %v2430
          %v2432 = vrcp.pop %v2372
          %v2433 = vmul.f32 1.0, %v2432
          %v2434 = vrcp.pop %v2373
          %v2435 = vmul.f32 1.0, %v2434
          %v2436 = vrcp.pop %v2374
          %v2437 = vmul.f32 1.0, %v2436
          %v2438 = vrcp.pop %v2375
          %v2439 = vmul.f32 1.0, %v2438
          %v2440 = vmul.f32 %v2122, %v2377
          %v2441 = vmul.f32 %v2125, %v2379
          %v2442 = vmul.f32 %v2130, %v2381
          %v2443 = vmul.f32 %v2133, %v2383
          %v2444 = vmul.f32 %v2138, %v2385
          %v2445 = vmul.f32 %v2141, %v2387
          %v2446 = vmul.f32 %v2146, %v2389
          %v2447 = vmul.f32 %v2149, %v2391
          %v2448 = vmul.f32 %v2154, %v2393
          %v2449 = vmul.f32 %v2157, %v2395
          %v2450 = vmul.f32 %v2162, %v2397
          %v2451 = vmul.f32 %v2165, %v2399
          %v2452 = vmul.f32 %v2170, %v2401
          %v2453 = vmul.f32 %v2173, %v2403
          %v2454 = vmul.f32 %v2178, %v2405
          %v2455 = vmul.f32 %v2181, %v2407
          %v2456 = vmul.f32 %v2186, %v2409
          %v2457 = vmul.f32 %v2189, %v2411
          %v2458 = vmul.f32 %v2194, %v2413
          %v2459 = vmul.f32 %v2197, %v2415
          %v2460 = vmul.f32 %v2202, %v2417
          %v2461 = vmul.f32 %v2205, %v2419
          %v2462 = vmul.f32 %v2210, %v2421
          %v2463 = vmul.f32 %v2213, %v2423
          %v2464 = vmul.f32 %v2218, %v2425
          %v2465 = vmul.f32 %v2221, %v2427
          %v2466 = vmul.f32 %v2226, %v2429
          %v2467 = vmul.f32 %v2229, %v2431
          %v2468 = vmul.f32 %v2234, %v2433
          %v2469 = vmul.f32 %v2237, %v2435
          %v2470 = vmul.f32 %v2242, %v2437
          %v2471 = vmul.f32 %v2245, %v2439
          %2472 = vst [vmem:[%s394 + $0x1] sm:$0xff] %v2440
          %2473 = vst [vmem:[%s394 + $0x9] sm:$0xff] %v2441
          %2474 = vst [vmem:[%s394 + $0x19] sm:$0xff] %v2442
          %2475 = vst [vmem:[%s394 + $0x21] sm:$0xff] %v2443
          %2476 = vst [vmem:[%s394 + $0x31] sm:$0xff] %v2444
          %2477 = vst [vmem:[%s394 + $0x39] sm:$0xff] %v2445
          %2478 = vst [vmem:[%s394 + $0x49] sm:$0xff] %v2446
          %2479 = vst [vmem:[%s394 + $0x51] sm:$0xff] %v2447
          %2480 = vst [vmem:[%s394 + $0x61] sm:$0xff] %v2448
          %2481 = vst [vmem:[%s394 + $0x69] sm:$0xff] %v2449
          %2482 = vst [vmem:[%s394 + $0x79] sm:$0xff] %v2450
          %2483 = vst [vmem:[%s394 + $0x81] sm:$0xff] %v2451
          %2484 = vst [vmem:[%s394 + $0x91] sm:$0xff] %v2452
          %2485 = vst [vmem:[%s394 + $0x99] sm:$0xff] %v2453
          %2486 = vst [vmem:[%s394 + $0xa9] sm:$0xff] %v2454
          %2487 = vst [vmem:[%s394 + $0xb1] sm:$0xff] %v2455
          %2488 = vst [vmem:[%s394 + $0xc1] sm:$0xff] %v2456
          %2489 = vst [vmem:[%s394 + $0xc9] sm:$0xff] %v2457
          %2490 = vst [vmem:[%s394 + $0xd9] sm:$0xff] %v2458
          %2491 = vst [vmem:[%s394 + $0xe1] sm:$0xff] %v2459
          %2492 = vst [vmem:[%s394 + $0xf1] sm:$0xff] %v2460
          %2493 = vst [vmem:[%s394 + $0xf9] sm:$0xff] %v2461
          %2494 = vst [vmem:[%s394 + $0x109] sm:$0xff] %v2462
          %2495 = vst [vmem:[%s394 + $0x111] sm:$0xff] %v2463
          %2496 = vst [vmem:[%s394 + $0x121] sm:$0xff] %v2464
          %2497 = vst [vmem:[%s394 + $0x129] sm:$0xff] %v2465
          %2498 = vst [vmem:[%s394 + $0x139] sm:$0xff] %v2466
          %2499 = vst [vmem:[%s394 + $0x141] sm:$0xff] %v2467
          %2500 = vst [vmem:[%s394 + $0x151] sm:$0xff] %v2468
          %2501 = vst [vmem:[%s394 + $0x159] sm:$0xff] %v2469
          %2502 = vst [vmem:[%s394 + $0x169] sm:$0xff] %v2470
          %2503 = vst [vmem:[%s394 + $0x171] sm:$0xff] %v2471
          %v2504 = vld [vmem:[#allocation2] sm:$0xff]
          %v2505 = vld [vmem:[#allocation2 + $0x8] sm:$0xff]
          %v2506 = vld [vmem:[#allocation2 + $0x18] sm:$0xff]
          %v2507 = vld [vmem:[#allocation2 + $0x20] sm:$0xff]
          %v2508 = vld [vmem:[#allocation2 + $0x30] sm:$0xff]
          %v2509 = vld [vmem:[#allocation2 + $0x38] sm:$0xff]
          %v2510 = vld [vmem:[#allocation2 + $0x48] sm:$0xff]
          %v2511 = vld [vmem:[#allocation2 + $0x50] sm:$0xff]
          %v2512 = vld [vmem:[#allocation2 + $0x60] sm:$0xff]
          %v2513 = vld [vmem:[#allocation2 + $0x68] sm:$0xff]
          %v2514 = vld [vmem:[#allocation2 + $0x78] sm:$0xff]
          %v2515 = vld [vmem:[#allocation2 + $0x80] sm:$0xff]
          %v2516 = vld [vmem:[#allocation2 + $0x90] sm:$0xff]
          %v2517 = vld [vmem:[#allocation2 + $0x98] sm:$0xff]
          %v2518 = vld [vmem:[#allocation2 + $0xa8] sm:$0xff]
          %v2519 = vld [vmem:[#allocation2 + $0xb0] sm:$0xff]
          %v2520 = vld [vmem:[#allocation2 + $0xc0] sm:$0xff]
          %v2521 = vld [vmem:[#allocation2 + $0xc8] sm:$0xff]
          %v2522 = vld [vmem:[#allocation2 + $0xd8] sm:$0xff]
          %v2523 = vld [vmem:[#allocation2 + $0xe0] sm:$0xff]
          %v2524 = vld [vmem:[#allocation2 + $0xf0] sm:$0xff]
          %v2525 = vld [vmem:[#allocation2 + $0xf8] sm:$0xff]
          %v2526 = vld [vmem:[#allocation2 + $0x108] sm:$0xff]
          %v2527 = vld [vmem:[#allocation2 + $0x110] sm:$0xff]
          %v2528 = vld [vmem:[#allocation2 + $0x120] sm:$0xff]
          %v2529 = vld [vmem:[#allocation2 + $0x128] sm:$0xff]
          %v2530 = vld [vmem:[#allocation2 + $0x138] sm:$0xff]
          %v2531 = vld [vmem:[#allocation2 + $0x140] sm:$0xff]
          %v2532 = vld [vmem:[#allocation2 + $0x150] sm:$0xff]
          %v2533 = vld [vmem:[#allocation2 + $0x158] sm:$0xff]
          %v2534 = vld [vmem:[#allocation2 + $0x168] sm:$0xff]
          %v2535 = vld [vmem:[#allocation2 + $0x170] sm:$0xff]
          %v2536 = vpack.c.bf16 %v2505, %v2504
          %v2537 = vpack.c.bf16 %v2507, %v2506
          %v2538 = vpack.c.bf16 %v2509, %v2508
          %v2539 = vpack.c.bf16 %v2511, %v2510
          %v2540 = vpack.c.bf16 %v2513, %v2512
          %v2541 = vpack.c.bf16 %v2515, %v2514
          %v2542 = vpack.c.bf16 %v2517, %v2516
          %v2543 = vpack.c.bf16 %v2519, %v2518
          %v2544 = vpack.c.bf16 %v2521, %v2520
          %v2545 = vpack.c.bf16 %v2523, %v2522
          %v2546 = vpack.c.bf16 %v2525, %v2524
          %v2547 = vpack.c.bf16 %v2527, %v2526
          %v2548 = vpack.c.bf16 %v2529, %v2528
          %v2549 = vpack.c.bf16 %v2531, %v2530
          %v2550 = vpack.c.bf16 %v2533, %v2532
          %v2551 = vpack.c.bf16 %v2535, %v2534
          %v2552 = vld [vmem:[#allocation2 + $0x1] sm:$0xff]
          %v2553 = vld [vmem:[#allocation2 + $0x9] sm:$0xff]
          %v2554 = vld [vmem:[#allocation2 + $0x19] sm:$0xff]
          %v2555 = vld [vmem:[#allocation2 + $0x21] sm:$0xff]
          %v2556 = vld [vmem:[#allocation2 + $0x31] sm:$0xff]
          %v2557 = vld [vmem:[#allocation2 + $0x39] sm:$0xff]
          %v2558 = vld [vmem:[#allocation2 + $0x49] sm:$0xff]
          %v2559 = vld [vmem:[#allocation2 + $0x51] sm:$0xff]
          %v2560 = vld [vmem:[#allocation2 + $0x61] sm:$0xff]
          %v2561 = vld [vmem:[#allocation2 + $0x69] sm:$0xff]
          %v2562 = vld [vmem:[#allocation2 + $0x79] sm:$0xff]
          %v2563 = vld [vmem:[#allocation2 + $0x81] sm:$0xff]
          %v2564 = vld [vmem:[#allocation2 + $0x91] sm:$0xff]
          %v2565 = vld [vmem:[#allocation2 + $0x99] sm:$0xff]
          %v2566 = vld [vmem:[#allocation2 + $0xa9] sm:$0xff]
          %v2567 = vld [vmem:[#allocation2 + $0xb1] sm:$0xff]
          %v2568 = vld [vmem:[#allocation2 + $0xc1] sm:$0xff]
          %v2569 = vld [vmem:[#allocation2 + $0xc9] sm:$0xff]
          %v2570 = vld [vmem:[#allocation2 + $0xd9] sm:$0xff]
          %v2571 = vld [vmem:[#allocation2 + $0xe1] sm:$0xff]
          %v2572 = vld [vmem:[#allocation2 + $0xf1] sm:$0xff]
          %v2573 = vld [vmem:[#allocation2 + $0xf9] sm:$0xff]
          %v2574 = vld [vmem:[#allocation2 + $0x109] sm:$0xff]
          %v2575 = vld [vmem:[#allocation2 + $0x111] sm:$0xff]
          %v2576 = vld [vmem:[#allocation2 + $0x121] sm:$0xff]
          %v2577 = vld [vmem:[#allocation2 + $0x129] sm:$0xff]
          %v2578 = vld [vmem:[#allocation2 + $0x139] sm:$0xff]
          %v2579 = vld [vmem:[#allocation2 + $0x141] sm:$0xff]
          %v2580 = vld [vmem:[#allocation2 + $0x151] sm:$0xff]
          %v2581 = vld [vmem:[#allocation2 + $0x159] sm:$0xff]
          %v2582 = vld [vmem:[#allocation2 + $0x169] sm:$0xff]
          %v2583 = vld [vmem:[#allocation2 + $0x171] sm:$0xff]
          %v2584 = vpack.c.bf16 %v2553, %v2552
          %v2585 = vpack.c.bf16 %v2555, %v2554
          %v2586 = vpack.c.bf16 %v2557, %v2556
          %v2587 = vpack.c.bf16 %v2559, %v2558
          %v2588 = vpack.c.bf16 %v2561, %v2560
          %v2589 = vpack.c.bf16 %v2563, %v2562
          %v2590 = vpack.c.bf16 %v2565, %v2564
          %v2591 = vpack.c.bf16 %v2567, %v2566
          %v2592 = vpack.c.bf16 %v2569, %v2568
          %v2593 = vpack.c.bf16 %v2571, %v2570
          %v2594 = vpack.c.bf16 %v2573, %v2572
          %v2595 = vpack.c.bf16 %v2575, %v2574
          %v2596 = vpack.c.bf16 %v2577, %v2576
          %v2597 = vpack.c.bf16 %v2579, %v2578
          %v2598 = vpack.c.bf16 %v2581, %v2580
          %v2599 = vpack.c.bf16 %v2583, %v2582
          %v2600 = vld [vmem:[#allocation2 + $0x2] sm:$0xff]
          %v2601 = vld [vmem:[#allocation2 + $0xa] sm:$0xff]
          %v2602 = vld [vmem:[#allocation2 + $0x1a] sm:$0xff]
          %v2603 = vld [vmem:[#allocation2 + $0x22] sm:$0xff]
          %v2604 = vld [vmem:[#allocation2 + $0x32] sm:$0xff]
          %v2605 = vld [vmem:[#allocation2 + $0x3a] sm:$0xff]
          %v2606 = vld [vmem:[#allocation2 + $0x4a] sm:$0xff]
          %v2607 = vld [vmem:[#allocation2 + $0x52] sm:$0xff]
          %v2608 = vld [vmem:[#allocation2 + $0x62] sm:$0xff]
          %v2609 = vld [vmem:[#allocation2 + $0x6a] sm:$0xff]
          %v2610 = vld [vmem:[#allocation2 + $0x7a] sm:$0xff]
          %v2611 = vld [vmem:[#allocation2 + $0x82] sm:$0xff]
          %v2612 = vld [vmem:[#allocation2 + $0x92] sm:$0xff]
          %v2613 = vld [vmem:[#allocation2 + $0x9a] sm:$0xff]
          %v2614 = vld [vmem:[#allocation2 + $0xaa] sm:$0xff]
          %v2615 = vld [vmem:[#allocation2 + $0xb2] sm:$0xff]
          %v2616 = vld [vmem:[#allocation2 + $0xc2] sm:$0xff]
          %v2617 = vld [vmem:[#allocation2 + $0xca] sm:$0xff]
          %v2618 = vld [vmem:[#allocation2 + $0xda] sm:$0xff]
          %v2619 = vld [vmem:[#allocation2 + $0xe2] sm:$0xff]
          %v2620 = vld [vmem:[#allocation2 + $0xf2] sm:$0xff]
          %v2621 = vld [vmem:[#allocation2 + $0xfa] sm:$0xff]
          %v2622 = vld [vmem:[#allocation2 + $0x10a] sm:$0xff]
          %v2623 = vld [vmem:[#allocation2 + $0x112] sm:$0xff]
          %v2624 = vld [vmem:[#allocation2 + $0x122] sm:$0xff]
          %v2625 = vld [vmem:[#allocation2 + $0x12a] sm:$0xff]
          %v2626 = vld [vmem:[#allocation2 + $0x13a] sm:$0xff]
          %v2627 = vld [vmem:[#allocation2 + $0x142] sm:$0xff]
          %v2628 = vld [vmem:[#allocation2 + $0x152] sm:$0xff]
          %v2629 = vld [vmem:[#allocation2 + $0x15a] sm:$0xff]
          %v2630 = vld [vmem:[#allocation2 + $0x16a] sm:$0xff]
          %v2631 = vld [vmem:[#allocation2 + $0x172] sm:$0xff]
          %v2632 = vpack.c.bf16 %v2601, %v2600
          %v2633 = vpack.c.bf16 %v2603, %v2602
          %v2634 = vpack.c.bf16 %v2605, %v2604
          %v2635 = vpack.c.bf16 %v2607, %v2606
          %v2636 = vpack.c.bf16 %v2609, %v2608
          %v2637 = vpack.c.bf16 %v2611, %v2610
          %v2638 = vpack.c.bf16 %v2613, %v2612
          %v2639 = vpack.c.bf16 %v2615, %v2614
          %v2640 = vpack.c.bf16 %v2617, %v2616
          %v2641 = vpack.c.bf16 %v2619, %v2618
          %v2642 = vpack.c.bf16 %v2621, %v2620
          %v2643 = vpack.c.bf16 %v2623, %v2622
          %v2644 = vpack.c.bf16 %v2625, %v2624
          %v2645 = vpack.c.bf16 %v2627, %v2626
          %v2646 = vpack.c.bf16 %v2629, %v2628
          %v2647 = vpack.c.bf16 %v2631, %v2630
          %v2648 = vld [vmem:[%s394] sm:$0xff]
          %v2649 = vld [vmem:[%s394 + $0x8] sm:$0xff]
          %v2650 = vld [vmem:[%s394 + $0x18] sm:$0xff]
          %v2651 = vld [vmem:[%s394 + $0x20] sm:$0xff]
          %v2652 = vld [vmem:[%s394 + $0x30] sm:$0xff]
          %v2653 = vld [vmem:[%s394 + $0x38] sm:$0xff]
          %v2654 = vld [vmem:[%s394 + $0x48] sm:$0xff]
          %v2655 = vld [vmem:[%s394 + $0x50] sm:$0xff]
          %v2656 = vld [vmem:[%s394 + $0x60] sm:$0xff]
          %v2657 = vld [vmem:[%s394 + $0x68] sm:$0xff]
          %v2658 = vld [vmem:[%s394 + $0x78] sm:$0xff]
          %v2659 = vld [vmem:[%s394 + $0x80] sm:$0xff]
          %v2660 = vld [vmem:[%s394 + $0x90] sm:$0xff]
          %v2661 = vld [vmem:[%s394 + $0x98] sm:$0xff]
          %v2662 = vld [vmem:[%s394 + $0xa8] sm:$0xff]
          %v2663 = vld [vmem:[%s394 + $0xb0] sm:$0xff]
          %v2664 = vld [vmem:[%s394 + $0xc0] sm:$0xff]
          %v2665 = vld [vmem:[%s394 + $0xc8] sm:$0xff]
          %v2666 = vld [vmem:[%s394 + $0xd8] sm:$0xff]
          %v2667 = vld [vmem:[%s394 + $0xe0] sm:$0xff]
          %v2668 = vld [vmem:[%s394 + $0xf0] sm:$0xff]
          %v2669 = vld [vmem:[%s394 + $0xf8] sm:$0xff]
          %v2670 = vld [vmem:[%s394 + $0x108] sm:$0xff]
          %v2671 = vld [vmem:[%s394 + $0x110] sm:$0xff]
          %v2672 = vld [vmem:[%s394 + $0x120] sm:$0xff]
          %v2673 = vld [vmem:[%s394 + $0x128] sm:$0xff]
          %v2674 = vld [vmem:[%s394 + $0x138] sm:$0xff]
          %v2675 = vld [vmem:[%s394 + $0x140] sm:$0xff]
          %v2676 = vld [vmem:[%s394 + $0x150] sm:$0xff]
          %v2677 = vld [vmem:[%s394 + $0x158] sm:$0xff]
          %v2678 = vld [vmem:[%s394 + $0x168] sm:$0xff]
          %v2679 = vld [vmem:[%s394 + $0x170] sm:$0xff]
          %v2680 = vpack.c.bf16 %v2649, %v2648
          %v2681 = vpack.c.bf16 %v2651, %v2650
          %v2682 = vpack.c.bf16 %v2653, %v2652
          %v2683 = vpack.c.bf16 %v2655, %v2654
          %v2684 = vpack.c.bf16 %v2657, %v2656
          %v2685 = vpack.c.bf16 %v2659, %v2658
          %v2686 = vpack.c.bf16 %v2661, %v2660
          %v2687 = vpack.c.bf16 %v2663, %v2662
          %v2688 = vpack.c.bf16 %v2665, %v2664
          %v2689 = vpack.c.bf16 %v2667, %v2666
          %v2690 = vpack.c.bf16 %v2669, %v2668
          %v2691 = vpack.c.bf16 %v2671, %v2670
          %v2692 = vpack.c.bf16 %v2673, %v2672
          %v2693 = vpack.c.bf16 %v2675, %v2674
          %v2694 = vpack.c.bf16 %v2677, %v2676
          %v2695 = vpack.c.bf16 %v2679, %v2678
          %v2696 = vld [vmem:[%s394 + $0x1] sm:$0xff]
          %v2697 = vld [vmem:[%s394 + $0x9] sm:$0xff]
          %v2698 = vld [vmem:[%s394 + $0x19] sm:$0xff]
          %v2699 = vld [vmem:[%s394 + $0x21] sm:$0xff]
          %v2700 = vld [vmem:[%s394 + $0x31] sm:$0xff]
          %v2701 = vld [vmem:[%s394 + $0x39] sm:$0xff]
          %v2702 = vld [vmem:[%s394 + $0x49] sm:$0xff]
          %v2703 = vld [vmem:[%s394 + $0x51] sm:$0xff]
          %v2704 = vld [vmem:[%s394 + $0x61] sm:$0xff]
          %v2705 = vld [vmem:[%s394 + $0x69] sm:$0xff]
          %v2706 = vld [vmem:[%s394 + $0x79] sm:$0xff]
          %v2707 = vld [vmem:[%s394 + $0x81] sm:$0xff]
          %v2708 = vld [vmem:[%s394 + $0x91] sm:$0xff]
          %v2709 = vld [vmem:[%s394 + $0x99] sm:$0xff]
          %v2710 = vld [vmem:[%s394 + $0xa9] sm:$0xff]
          %v2711 = vld [vmem:[%s394 + $0xb1] sm:$0xff]
          %v2712 = vld [vmem:[%s394 + $0xc1] sm:$0xff]
          %v2713 = vld [vmem:[%s394 + $0xc9] sm:$0xff]
          %v2714 = vld [vmem:[%s394 + $0xd9] sm:$0xff]
          %v2715 = vld [vmem:[%s394 + $0xe1] sm:$0xff]
          %v2716 = vld [vmem:[%s394 + $0xf1] sm:$0xff]
          %v2717 = vld [vmem:[%s394 + $0xf9] sm:$0xff]
          %v2718 = vld [vmem:[%s394 + $0x109] sm:$0xff]
          %v2719 = vld [vmem:[%s394 + $0x111] sm:$0xff]
          %v2720 = vld [vmem:[%s394 + $0x121] sm:$0xff]
          %v2721 = vld [vmem:[%s394 + $0x129] sm:$0xff]
          %v2722 = vld [vmem:[%s394 + $0x139] sm:$0xff]
          %v2723 = vld [vmem:[%s394 + $0x141] sm:$0xff]
          %v2724 = vld [vmem:[%s394 + $0x151] sm:$0xff]
          %v2725 = vld [vmem:[%s394 + $0x159] sm:$0xff]
          %v2726 = vld [vmem:[%s394 + $0x169] sm:$0xff]
          %v2727 = vld [vmem:[%s394 + $0x171] sm:$0xff]
          %v2728 = vpack.c.bf16 %v2697, %v2696
          %v2729 = vpack.c.bf16 %v2699, %v2698
          %v2730 = vpack.c.bf16 %v2701, %v2700
          %v2731 = vpack.c.bf16 %v2703, %v2702
          %v2732 = vpack.c.bf16 %v2705, %v2704
          %v2733 = vpack.c.bf16 %v2707, %v2706
          %v2734 = vpack.c.bf16 %v2709, %v2708
          %v2735 = vpack.c.bf16 %v2711, %v2710
          %v2736 = vpack.c.bf16 %v2713, %v2712
          %v2737 = vpack.c.bf16 %v2715, %v2714
          %v2738 = vpack.c.bf16 %v2717, %v2716
          %v2739 = vpack.c.bf16 %v2719, %v2718
          %v2740 = vpack.c.bf16 %v2721, %v2720
          %v2741 = vpack.c.bf16 %v2723, %v2722
          %v2742 = vpack.c.bf16 %v2725, %v2724
          %v2743 = vpack.c.bf16 %v2727, %v2726
          %v2744 = vld [vmem:[%s394 + $0x2] sm:$0xff]
          %v2745 = vld [vmem:[%s394 + $0xa] sm:$0xff]
          %v2746 = vld [vmem:[%s394 + $0x1a] sm:$0xff]
          %v2747 = vld [vmem:[%s394 + $0x22] sm:$0xff]
          %v2748 = vld [vmem:[%s394 + $0x32] sm:$0xff]
          %v2749 = vld [vmem:[%s394 + $0x3a] sm:$0xff]
          %v2750 = vld [vmem:[%s394 + $0x4a] sm:$0xff]
          %v2751 = vld [vmem:[%s394 + $0x52] sm:$0xff]
          %v2752 = vld [vmem:[%s394 + $0x62] sm:$0xff]
          %v2753 = vld [vmem:[%s394 + $0x6a] sm:$0xff]
          %v2754 = vld [vmem:[%s394 + $0x7a] sm:$0xff]
          %v2755 = vld [vmem:[%s394 + $0x82] sm:$0xff]
          %v2756 = vld [vmem:[%s394 + $0x92] sm:$0xff]
          %v2757 = vld [vmem:[%s394 + $0x9a] sm:$0xff]
          %v2758 = vld [vmem:[%s394 + $0xaa] sm:$0xff]
          %v2759 = vld [vmem:[%s394 + $0xb2] sm:$0xff]
          %v2760 = vld [vmem:[%s394 + $0xc2] sm:$0xff]
          %v2761 = vld [vmem:[%s394 + $0xca] sm:$0xff]
          %v2762 = vld [vmem:[%s394 + $0xda] sm:$0xff]
          %v2763 = vld [vmem:[%s394 + $0xe2] sm:$0xff]
          %v2764 = vld [vmem:[%s394 + $0xf2] sm:$0xff]
          %v2765 = vld [vmem:[%s394 + $0xfa] sm:$0xff]
          %v2766 = vld [vmem:[%s394 + $0x10a] sm:$0xff]
          %v2767 = vld [vmem:[%s394 + $0x112] sm:$0xff]
          %v2768 = vld [vmem:[%s394 + $0x122] sm:$0xff]
          %v2769 = vld [vmem:[%s394 + $0x12a] sm:$0xff]
          %v2770 = vld [vmem:[%s394 + $0x13a] sm:$0xff]
          %v2771 = vld [vmem:[%s394 + $0x142] sm:$0xff]
          %v2772 = vld [vmem:[%s394 + $0x152] sm:$0xff]
          %v2773 = vld [vmem:[%s394 + $0x15a] sm:$0xff]
          %v2774 = vld [vmem:[%s394 + $0x16a] sm:$0xff]
          %v2775 = vld [vmem:[%s394 + $0x172] sm:$0xff]
          %v2776 = vpack.c.bf16 %v2745, %v2744
          %v2777 = vpack.c.bf16 %v2747, %v2746
          %v2778 = vpack.c.bf16 %v2749, %v2748
          %v2779 = vpack.c.bf16 %v2751, %v2750
          %v2780 = vpack.c.bf16 %v2753, %v2752
          %v2781 = vpack.c.bf16 %v2755, %v2754
          %v2782 = vpack.c.bf16 %v2757, %v2756
          %v2783 = vpack.c.bf16 %v2759, %v2758
          %v2784 = vpack.c.bf16 %v2761, %v2760
          %v2785 = vpack.c.bf16 %v2763, %v2762
          %v2786 = vpack.c.bf16 %v2765, %v2764
          %v2787 = vpack.c.bf16 %v2767, %v2766
          %v2788 = vpack.c.bf16 %v2769, %v2768
          %v2789 = vpack.c.bf16 %v2771, %v2770
          %v2790 = vpack.c.bf16 %v2773, %v2772
          %v2791 = vpack.c.bf16 %v2775, %v2774
          %v2792 = vld [vmem:[%s715] sm:$0xff]
          %v2793 = vld [vmem:[%s715 + $0x8] sm:$0xff]
          %v2794 = vld [vmem:[%s715 + $0x18] sm:$0xff]
          %v2795 = vld [vmem:[%s715 + $0x20] sm:$0xff]
          %v2796 = vld [vmem:[%s715 + $0x30] sm:$0xff]
          %v2797 = vld [vmem:[%s715 + $0x38] sm:$0xff]
          %v2798 = vld [vmem:[%s715 + $0x48] sm:$0xff]
          %v2799 = vld [vmem:[%s715 + $0x50] sm:$0xff]
          %v2800 = vld [vmem:[%s715 + $0x60] sm:$0xff]
          %v2801 = vld [vmem:[%s715 + $0x68] sm:$0xff]
          %v2802 = vld [vmem:[%s715 + $0x78] sm:$0xff]
          %v2803 = vld [vmem:[%s715 + $0x80] sm:$0xff]
          %v2804 = vld [vmem:[%s715 + $0x90] sm:$0xff]
          %v2805 = vld [vmem:[%s715 + $0x98] sm:$0xff]
          %v2806 = vld [vmem:[%s715 + $0xa8] sm:$0xff]
          %v2807 = vld [vmem:[%s715 + $0xb0] sm:$0xff]
          %v2808 = vld [vmem:[%s715 + $0xc0] sm:$0xff]
          %v2809 = vld [vmem:[%s715 + $0xc8] sm:$0xff]
          %v2810 = vld [vmem:[%s715 + $0xd8] sm:$0xff]
          %v2811 = vld [vmem:[%s715 + $0xe0] sm:$0xff]
          %v2812 = vld [vmem:[%s715 + $0xf0] sm:$0xff]
          %v2813 = vld [vmem:[%s715 + $0xf8] sm:$0xff]
          %v2814 = vld [vmem:[%s715 + $0x108] sm:$0xff]
          %v2815 = vld [vmem:[%s715 + $0x110] sm:$0xff]
          %v2816 = vld [vmem:[%s715 + $0x120] sm:$0xff]
          %v2817 = vld [vmem:[%s715 + $0x128] sm:$0xff]
          %v2818 = vld [vmem:[%s715 + $0x138] sm:$0xff]
          %v2819 = vld [vmem:[%s715 + $0x140] sm:$0xff]
          %v2820 = vld [vmem:[%s715 + $0x150] sm:$0xff]
          %v2821 = vld [vmem:[%s715 + $0x158] sm:$0xff]
          %v2822 = vld [vmem:[%s715 + $0x168] sm:$0xff]
          %v2823 = vld [vmem:[%s715 + $0x170] sm:$0xff]
          %v2824 = vpack.c.bf16 %v2793, %v2792
          %v2825 = vpack.c.bf16 %v2795, %v2794
          %v2826 = vpack.c.bf16 %v2797, %v2796
          %v2827 = vpack.c.bf16 %v2799, %v2798
          %v2828 = vpack.c.bf16 %v2801, %v2800
          %v2829 = vpack.c.bf16 %v2803, %v2802
          %v2830 = vpack.c.bf16 %v2805, %v2804
          %v2831 = vpack.c.bf16 %v2807, %v2806
          %v2832 = vpack.c.bf16 %v2809, %v2808
          %v2833 = vpack.c.bf16 %v2811, %v2810
          %v2834 = vpack.c.bf16 %v2813, %v2812
          %v2835 = vpack.c.bf16 %v2815, %v2814
          %v2836 = vpack.c.bf16 %v2817, %v2816
          %v2837 = vpack.c.bf16 %v2819, %v2818
          %v2838 = vpack.c.bf16 %v2821, %v2820
          %v2839 = vpack.c.bf16 %v2823, %v2822
          %v2840 = vld [vmem:[%s715 + $0x1] sm:$0xff]
          %v2841 = vld [vmem:[%s715 + $0x9] sm:$0xff]
          %v2842 = vld [vmem:[%s715 + $0x19] sm:$0xff]
          %v2843 = vld [vmem:[%s715 + $0x21] sm:$0xff]
          %v2844 = vld [vmem:[%s715 + $0x31] sm:$0xff]
          %v2845 = vld [vmem:[%s715 + $0x39] sm:$0xff]
          %v2846 = vld [vmem:[%s715 + $0x49] sm:$0xff]
          %v2847 = vld [vmem:[%s715 + $0x51] sm:$0xff]
          %v2848 = vld [vmem:[%s715 + $0x61] sm:$0xff]
          %v2849 = vld [vmem:[%s715 + $0x69] sm:$0xff]
          %v2850 = vld [vmem:[%s715 + $0x79] sm:$0xff]
          %v2851 = vld [vmem:[%s715 + $0x81] sm:$0xff]
          %v2852 = vld [vmem:[%s715 + $0x91] sm:$0xff]
          %v2853 = vld [vmem:[%s715 + $0x99] sm:$0xff]
          %v2854 = vld [vmem:[%s715 + $0xa9] sm:$0xff]
          %v2855 = vld [vmem:[%s715 + $0xb1] sm:$0xff]
          %v2856 = vld [vmem:[%s715 + $0xc1] sm:$0xff]
          %v2857 = vld [vmem:[%s715 + $0xc9] sm:$0xff]
          %v2858 = vld [vmem:[%s715 + $0xd9] sm:$0xff]
          %v2859 = vld [vmem:[%s715 + $0xe1] sm:$0xff]
          %v2860 = vld [vmem:[%s715 + $0xf1] sm:$0xff]
          %v2861 = vld [vmem:[%s715 + $0xf9] sm:$0xff]
          %v2862 = vld [vmem:[%s715 + $0x109] sm:$0xff]
          %v2863 = vld [vmem:[%s715 + $0x111] sm:$0xff]
          %v2864 = vld [vmem:[%s715 + $0x121] sm:$0xff]
          %v2865 = vld [vmem:[%s715 + $0x129] sm:$0xff]
          %v2866 = vld [vmem:[%s715 + $0x139] sm:$0xff]
          %v2867 = vld [vmem:[%s715 + $0x141] sm:$0xff]
          %v2868 = vld [vmem:[%s715 + $0x151] sm:$0xff]
          %v2869 = vld [vmem:[%s715 + $0x159] sm:$0xff]
          %v2870 = vld [vmem:[%s715 + $0x169] sm:$0xff]
          %v2871 = vld [vmem:[%s715 + $0x171] sm:$0xff]
          %v2872 = vpack.c.bf16 %v2841, %v2840
          %v2873 = vpack.c.bf16 %v2843, %v2842
          %v2874 = vpack.c.bf16 %v2845, %v2844
          %v2875 = vpack.c.bf16 %v2847, %v2846
          %v2876 = vpack.c.bf16 %v2849, %v2848
          %v2877 = vpack.c.bf16 %v2851, %v2850
          %v2878 = vpack.c.bf16 %v2853, %v2852
          %v2879 = vpack.c.bf16 %v2855, %v2854
          %v2880 = vpack.c.bf16 %v2857, %v2856
          %v2881 = vpack.c.bf16 %v2859, %v2858
          %v2882 = vpack.c.bf16 %v2861, %v2860
          %v2883 = vpack.c.bf16 %v2863, %v2862
          %v2884 = vpack.c.bf16 %v2865, %v2864
          %v2885 = vpack.c.bf16 %v2867, %v2866
          %v2886 = vpack.c.bf16 %v2869, %v2868
          %v2887 = vpack.c.bf16 %v2871, %v2870
          %v2888 = vld [vmem:[%s715 + $0x2] sm:$0xff]
          %v2889 = vld [vmem:[%s715 + $0xa] sm:$0xff]
          %v2890 = vld [vmem:[%s715 + $0x1a] sm:$0xff]
          %v2891 = vld [vmem:[%s715 + $0x22] sm:$0xff]
          %v2892 = vld [vmem:[%s715 + $0x32] sm:$0xff]
          %v2893 = vld [vmem:[%s715 + $0x3a] sm:$0xff]
          %v2894 = vld [vmem:[%s715 + $0x4a] sm:$0xff]
          %v2895 = vld [vmem:[%s715 + $0x52] sm:$0xff]
          %v2896 = vld [vmem:[%s715 + $0x62] sm:$0xff]
          %v2897 = vld [vmem:[%s715 + $0x6a] sm:$0xff]
          %v2898 = vld [vmem:[%s715 + $0x7a] sm:$0xff]
          %v2899 = vld [vmem:[%s715 + $0x82] sm:$0xff]
          %v2900 = vld [vmem:[%s715 + $0x92] sm:$0xff]
          %v2901 = vld [vmem:[%s715 + $0x9a] sm:$0xff]
          %v2902 = vld [vmem:[%s715 + $0xaa] sm:$0xff]
          %v2903 = vld [vmem:[%s715 + $0xb2] sm:$0xff]
          %v2904 = vld [vmem:[%s715 + $0xc2] sm:$0xff]
          %v2905 = vld [vmem:[%s715 + $0xca] sm:$0xff]
          %v2906 = vld [vmem:[%s715 + $0xda] sm:$0xff]
          %v2907 = vld [vmem:[%s715 + $0xe2] sm:$0xff]
          %v2908 = vld [vmem:[%s715 + $0xf2] sm:$0xff]
          %v2909 = vld [vmem:[%s715 + $0xfa] sm:$0xff]
          %v2910 = vld [vmem:[%s715 + $0x10a] sm:$0xff]
          %v2911 = vld [vmem:[%s715 + $0x112] sm:$0xff]
          %v2912 = vld [vmem:[%s715 + $0x122] sm:$0xff]
          %v2913 = vld [vmem:[%s715 + $0x12a] sm:$0xff]
          %v2914 = vld [vmem:[%s715 + $0x13a] sm:$0xff]
          %v2915 = vld [vmem:[%s715 + $0x142] sm:$0xff]
          %v2916 = vld [vmem:[%s715 + $0x152] sm:$0xff]
          %v2917 = vld [vmem:[%s715 + $0x15a] sm:$0xff]
          %v2918 = vld [vmem:[%s715 + $0x16a] sm:$0xff]
          %v2919 = vld [vmem:[%s715 + $0x172] sm:$0xff]
          %v2920 = vpack.c.bf16 %v2889, %v2888
          %v2921 = vpack.c.bf16 %v2891, %v2890
          %v2922 = vpack.c.bf16 %v2893, %v2892
          %v2923 = vpack.c.bf16 %v2895, %v2894
          %v2924 = vpack.c.bf16 %v2897, %v2896
          %v2925 = vpack.c.bf16 %v2899, %v2898
          %v2926 = vpack.c.bf16 %v2901, %v2900
          %v2927 = vpack.c.bf16 %v2903, %v2902
          %v2928 = vpack.c.bf16 %v2905, %v2904
          %v2929 = vpack.c.bf16 %v2907, %v2906
          %v2930 = vpack.c.bf16 %v2909, %v2908
          %v2931 = vpack.c.bf16 %v2911, %v2910
          %v2932 = vpack.c.bf16 %v2913, %v2912
          %v2933 = vpack.c.bf16 %v2915, %v2914
          %v2934 = vpack.c.bf16 %v2917, %v2916
          %v2935 = vpack.c.bf16 %v2919, %v2918
          %s2936 = scalar_lea.vmem [#allocation6], 576
          %v2937 = vld [vmem:[%s2936] sm:$0xf]
          %v2938 = vld [vmem:[%s2936 + $0x4] sm:$0xf]
          %v2939 = vld [vmem:[%s2936 + $0x8] sm:$0xf]
          %v2940 = vld [vmem:[%s2936 + $0xc] sm:$0xf]
          %v2941 = vld [vmem:[%s2936 + $0x10] sm:$0xf]
          %v2942 = vld [vmem:[%s2936 + $0x14] sm:$0xf]
          %v2943 = vld [vmem:[%s2936 + $0x18] sm:$0xf]
          %v2944 = vld [vmem:[%s2936 + $0x1c] sm:$0xf]
          %v2945 = vld [vmem:[%s2936 + $0x20] sm:$0xf]
          %v2946 = vld [vmem:[%s2936 + $0x24] sm:$0xf]
          %v2947 = vld [vmem:[%s2936 + $0x28] sm:$0xf]
          %v2948 = vld [vmem:[%s2936 + $0x2c] sm:$0xf]
          %v2949 = vld [vmem:[%s2936 + $0x30] sm:$0xf]
          %v2950 = vld [vmem:[%s2936 + $0x34] sm:$0xf]
          %v2951 = vld [vmem:[%s2936 + $0x38] sm:$0xf]
          %v2952 = vld [vmem:[%s2936 + $0x3c] sm:$0xf]
          %v2953 = vld [vmem:[%s2936 + $0x40] sm:$0xf]
          %v2954 = vld [vmem:[%s2936 + $0x44] sm:$0xf]
          %v2955 = vld [vmem:[%s2936 + $0x48] sm:$0xf]
          %v2956 = vld [vmem:[%s2936 + $0x4c] sm:$0xf]
          %v2957 = vld [vmem:[%s2936 + $0x50] sm:$0xf]
          %v2958 = vld [vmem:[%s2936 + $0x54] sm:$0xf]
          %v2959 = vld [vmem:[%s2936 + $0x58] sm:$0xf]
          %v2960 = vld [vmem:[%s2936 + $0x5c] sm:$0xf]
          %v2961 = vld [vmem:[%s2936 + $0x60] sm:$0xf]
          %v2962 = vld [vmem:[%s2936 + $0x64] sm:$0xf]
          %v2963 = vld [vmem:[%s2936 + $0x68] sm:$0xf]
          %v2964 = vld [vmem:[%s2936 + $0x6c] sm:$0xf]
          %v2965 = vld [vmem:[%s2936 + $0x70] sm:$0xf]
          %v2966 = vld [vmem:[%s2936 + $0x74] sm:$0xf]
          %v2967 = vld [vmem:[%s2936 + $0x78] sm:$0xf]
          %v2968 = vld [vmem:[%s2936 + $0x7c] sm:$0xf]
          %v2969 = vld [vmem:[%s2936 + $0x80] sm:$0xf]
          %v2970 = vld [vmem:[%s2936 + $0x84] sm:$0xf]
          %v2971 = vld [vmem:[%s2936 + $0x88] sm:$0xf]
          %v2972 = vld [vmem:[%s2936 + $0x8c] sm:$0xf]
          %v2973 = vld [vmem:[%s2936 + $0x90] sm:$0xf]
          %v2974 = vld [vmem:[%s2936 + $0x94] sm:$0xf]
          %v2975 = vld [vmem:[%s2936 + $0x98] sm:$0xf]
          %v2976 = vld [vmem:[%s2936 + $0x9c] sm:$0xf]
          %v2977 = vld [vmem:[%s2936 + $0xa0] sm:$0xf]
          %v2978 = vld [vmem:[%s2936 + $0xa4] sm:$0xf]
          %v2979 = vld [vmem:[%s2936 + $0xa8] sm:$0xf]
          %v2980 = vld [vmem:[%s2936 + $0xac] sm:$0xf]
          %v2981 = vld [vmem:[%s2936 + $0xb0] sm:$0xf]
          %v2982 = vld [vmem:[%s2936 + $0xb4] sm:$0xf]
          %v2983 = vld [vmem:[%s2936 + $0xb8] sm:$0xf]
          %v2984 = vld [vmem:[%s2936 + $0xbc] sm:$0xf]
          %v2985 = vld [vmem:[%s2936 + $0xc0] sm:$0xf]
          %v2986 = vld [vmem:[%s2936 + $0xc4] sm:$0xf]
          %v2987 = vld [vmem:[%s2936 + $0xc8] sm:$0xf]
          %v2988 = vld [vmem:[%s2936 + $0xcc] sm:$0xf]
          %v2989 = vld [vmem:[%s2936 + $0xd0] sm:$0xf]
          %v2990 = vld [vmem:[%s2936 + $0xd4] sm:$0xf]
          %v2991 = vld [vmem:[%s2936 + $0xd8] sm:$0xf]
          %v2992 = vld [vmem:[%s2936 + $0xdc] sm:$0xf]
          %v2993 = vld [vmem:[%s2936 + $0xe0] sm:$0xf]
          %v2994 = vld [vmem:[%s2936 + $0xe4] sm:$0xf]
          %v2995 = vld [vmem:[%s2936 + $0xe8] sm:$0xf]
          %v2996 = vld [vmem:[%s2936 + $0xec] sm:$0xf]
          %v2997 = vld [vmem:[%s2936 + $0xf0] sm:$0xf]
          %v2998 = vld [vmem:[%s2936 + $0xf4] sm:$0xf]
          %v2999 = vld [vmem:[%s2936 + $0xf8] sm:$0xf]
          %v3000 = vld [vmem:[%s2936 + $0xfc] sm:$0xf]
          %v3001 = vld [vmem:[%s2936 + $0x100] sm:$0xf]
          %v3002 = vld [vmem:[%s2936 + $0x104] sm:$0xf]
          %v3003 = vld [vmem:[%s2936 + $0x108] sm:$0xf]
          %v3004 = vld [vmem:[%s2936 + $0x10c] sm:$0xf]
          %v3005 = vld [vmem:[%s2936 + $0x110] sm:$0xf]
          %v3006 = vld [vmem:[%s2936 + $0x114] sm:$0xf]
          %v3007 = vld [vmem:[%s2936 + $0x118] sm:$0xf]
          %v3008 = vld [vmem:[%s2936 + $0x11c] sm:$0xf]
          %v3009 = vld [vmem:[%s2936 + $0x120] sm:$0xf]
          %v3010 = vld [vmem:[%s2936 + $0x124] sm:$0xf]
          %v3011 = vld [vmem:[%s2936 + $0x128] sm:$0xf]
          %v3012 = vld [vmem:[%s2936 + $0x12c] sm:$0xf]
          %v3013 = vld [vmem:[%s2936 + $0x130] sm:$0xf]
          %v3014 = vld [vmem:[%s2936 + $0x134] sm:$0xf]
          %v3015 = vld [vmem:[%s2936 + $0x138] sm:$0xf]
          %v3016 = vld [vmem:[%s2936 + $0x13c] sm:$0xf]
          %v3017 = vld [vmem:[%s2936 + $0x140] sm:$0xf]
          %v3018 = vld [vmem:[%s2936 + $0x144] sm:$0xf]
          %v3019 = vld [vmem:[%s2936 + $0x148] sm:$0xf]
          %v3020 = vld [vmem:[%s2936 + $0x14c] sm:$0xf]
          %v3021 = vld [vmem:[%s2936 + $0x150] sm:$0xf]
          %v3022 = vld [vmem:[%s2936 + $0x154] sm:$0xf]
          %v3023 = vld [vmem:[%s2936 + $0x158] sm:$0xf]
          %v3024 = vld [vmem:[%s2936 + $0x15c] sm:$0xf]
          %v3025 = vld [vmem:[%s2936 + $0x160] sm:$0xf]
          %v3026 = vld [vmem:[%s2936 + $0x164] sm:$0xf]
          %v3027 = vld [vmem:[%s2936 + $0x168] sm:$0xf]
          %v3028 = vld [vmem:[%s2936 + $0x16c] sm:$0xf]
          %v3029 = vld [vmem:[%s2936 + $0x170] sm:$0xf]
          %v3030 = vld [vmem:[%s2936 + $0x174] sm:$0xf]
          %v3031 = vld [vmem:[%s2936 + $0x178] sm:$0xf]
          %v3032 = vld [vmem:[%s2936 + $0x17c] sm:$0xf]
          %v3033 = vld [vmem:[%s2936 + $0x180] sm:$0xf]
          %v3034 = vld [vmem:[%s2936 + $0x184] sm:$0xf]
          %v3035 = vld [vmem:[%s2936 + $0x188] sm:$0xf]
          %v3036 = vld [vmem:[%s2936 + $0x18c] sm:$0xf]
          %v3037 = vld [vmem:[%s2936 + $0x190] sm:$0xf]
          %v3038 = vld [vmem:[%s2936 + $0x194] sm:$0xf]
          %v3039 = vld [vmem:[%s2936 + $0x198] sm:$0xf]
          %v3040 = vld [vmem:[%s2936 + $0x19c] sm:$0xf]
          %v3041 = vld [vmem:[%s2936 + $0x1a0] sm:$0xf]
          %v3042 = vld [vmem:[%s2936 + $0x1a4] sm:$0xf]
          %v3043 = vld [vmem:[%s2936 + $0x1a8] sm:$0xf]
          %v3044 = vld [vmem:[%s2936 + $0x1ac] sm:$0xf]
          %v3045 = vld [vmem:[%s2936 + $0x1b0] sm:$0xf]
          %v3046 = vld [vmem:[%s2936 + $0x1b4] sm:$0xf]
          %v3047 = vld [vmem:[%s2936 + $0x1b8] sm:$0xf]
          %v3048 = vld [vmem:[%s2936 + $0x1bc] sm:$0xf]
          %v3049 = vld [vmem:[%s2936 + $0x1c0] sm:$0xf]
          %v3050 = vld [vmem:[%s2936 + $0x1c4] sm:$0xf]
          %v3051 = vld [vmem:[%s2936 + $0x1c8] sm:$0xf]
          %v3052 = vld [vmem:[%s2936 + $0x1cc] sm:$0xf]
          %v3053 = vld [vmem:[%s2936 + $0x1d0] sm:$0xf]
          %v3054 = vld [vmem:[%s2936 + $0x1d4] sm:$0xf]
          %v3055 = vld [vmem:[%s2936 + $0x1d8] sm:$0xf]
          %v3056 = vld [vmem:[%s2936 + $0x1dc] sm:$0xf]
          %v3057 = vld [vmem:[%s2936 + $0x1e0] sm:$0xf]
          %v3058 = vld [vmem:[%s2936 + $0x1e4] sm:$0xf]
          %v3059 = vld [vmem:[%s2936 + $0x1e8] sm:$0xf]
          %v3060 = vld [vmem:[%s2936 + $0x1ec] sm:$0xf]
          %v3061 = vld [vmem:[%s2936 + $0x1f0] sm:$0xf]
          %v3062 = vld [vmem:[%s2936 + $0x1f4] sm:$0xf]
          %v3063 = vld [vmem:[%s2936 + $0x1f8] sm:$0xf]
          %v3064 = vld [vmem:[%s2936 + $0x1fc] sm:$0xf]
          %v3065 = vld [vmem:[%s2936 + $0x200] sm:$0xf]
          %v3066 = vld [vmem:[%s2936 + $0x204] sm:$0xf]
          %v3067 = vld [vmem:[%s2936 + $0x208] sm:$0xf]
          %v3068 = vld [vmem:[%s2936 + $0x20c] sm:$0xf]
          %v3069 = vld [vmem:[%s2936 + $0x210] sm:$0xf]
          %v3070 = vld [vmem:[%s2936 + $0x214] sm:$0xf]
          %v3071 = vld [vmem:[%s2936 + $0x218] sm:$0xf]
          %v3072 = vld [vmem:[%s2936 + $0x21c] sm:$0xf]
          %v3073 = vld [vmem:[%s2936 + $0x220] sm:$0xf]
          %v3074 = vld [vmem:[%s2936 + $0x224] sm:$0xf]
          %v3075 = vld [vmem:[%s2936 + $0x228] sm:$0xf]
          %v3076 = vld [vmem:[%s2936 + $0x22c] sm:$0xf]
          %v3077 = vld [vmem:[%s2936 + $0x230] sm:$0xf]
          %v3078 = vld [vmem:[%s2936 + $0x234] sm:$0xf]
          %v3079 = vld [vmem:[%s2936 + $0x238] sm:$0xf]
          %v3080 = vld [vmem:[%s2936 + $0x23c] sm:$0xf]
          %s3081 = scalar_lea.vmem [#allocation8], 1
          %v3082 = vld [vmem:[%s3081] sm:$0x1]
          %v3084 = vlaneseq
          %v3085 = vshrl.u32 %v3084, 7
          %v3086 = vsub.s32 0, %v3085
          %v3087 = vrot.slane %v3082, %v3086
          %v3233 = vunpack.c.l.b16 %v2937
          %v3234 = vunpack.c.l.b16 %v2938
          %v3235 = vunpack.c.l.b16 %v2939
          %v3236 = vunpack.c.l.b16 %v2940
          %v3237 = vunpack.c.l.b16 %v2941
          %v3238 = vunpack.c.l.b16 %v2942
          %v3239 = vunpack.c.l.b16 %v2943
          %v3240 = vunpack.c.l.b16 %v2944
          %v3241 = vunpack.c.l.b16 %v2945
          %v3242 = vunpack.c.l.b16 %v2946
          %v3243 = vunpack.c.l.b16 %v2947
          %v3244 = vunpack.c.l.b16 %v2948
          %v3245 = vunpack.c.l.b16 %v2949
          %v3246 = vunpack.c.l.b16 %v2950
          %v3247 = vunpack.c.l.b16 %v2951
          %v3248 = vunpack.c.l.b16 %v2952
          %v3249 = vunpack.c.l.b16 %v2953
          %v3250 = vunpack.c.l.b16 %v2954
          %v3251 = vunpack.c.l.b16 %v2955
          %v3252 = vunpack.c.l.b16 %v2956
          %v3253 = vunpack.c.l.b16 %v2957
          %v3254 = vunpack.c.l.b16 %v2958
          %v3255 = vunpack.c.l.b16 %v2959
          %v3256 = vunpack.c.l.b16 %v2960
          %v3257 = vunpack.c.l.b16 %v2961
          %v3258 = vunpack.c.l.b16 %v2962
          %v3259 = vunpack.c.l.b16 %v2963
          %v3260 = vunpack.c.l.b16 %v2964
          %v3261 = vunpack.c.l.b16 %v2965
          %v3262 = vunpack.c.l.b16 %v2966
          %v3263 = vunpack.c.l.b16 %v2967
          %v3264 = vunpack.c.l.b16 %v2968
          %v3265 = vunpack.c.l.b16 %v2969
          %v3266 = vunpack.c.l.b16 %v2970
          %v3267 = vunpack.c.l.b16 %v2971
          %v3268 = vunpack.c.l.b16 %v2972
          %v3269 = vunpack.c.l.b16 %v2973
          %v3270 = vunpack.c.l.b16 %v2974
          %v3271 = vunpack.c.l.b16 %v2975
          %v3272 = vunpack.c.l.b16 %v2976
          %v3273 = vunpack.c.l.b16 %v2977
          %v3274 = vunpack.c.l.b16 %v2978
          %v3275 = vunpack.c.l.b16 %v2979
          %v3276 = vunpack.c.l.b16 %v2980
          %v3277 = vunpack.c.l.b16 %v2981
          %v3278 = vunpack.c.l.b16 %v2982
          %v3279 = vunpack.c.l.b16 %v2983
          %v3280 = vunpack.c.l.b16 %v2984
          %v3281 = vunpack.c.l.b16 %v2985
          %v3282 = vunpack.c.l.b16 %v2986
          %v3283 = vunpack.c.l.b16 %v2987
          %v3284 = vunpack.c.l.b16 %v2988
          %v3285 = vunpack.c.l.b16 %v2989
          %v3286 = vunpack.c.l.b16 %v2990
          %v3287 = vunpack.c.l.b16 %v2991
          %v3288 = vunpack.c.l.b16 %v2992
          %v3289 = vunpack.c.l.b16 %v2993
          %v3290 = vunpack.c.l.b16 %v2994
          %v3291 = vunpack.c.l.b16 %v2995
          %v3292 = vunpack.c.l.b16 %v2996
          %v3293 = vunpack.c.l.b16 %v2997
          %v3294 = vunpack.c.l.b16 %v2998
          %v3295 = vunpack.c.l.b16 %v2999
          %v3296 = vunpack.c.l.b16 %v3000
          %v3297 = vunpack.c.l.b16 %v3001
          %v3298 = vunpack.c.l.b16 %v3002
          %v3299 = vunpack.c.l.b16 %v3003
          %v3300 = vunpack.c.l.b16 %v3004
          %v3301 = vunpack.c.l.b16 %v3005
          %v3302 = vunpack.c.l.b16 %v3006
          %v3303 = vunpack.c.l.b16 %v3007
          %v3304 = vunpack.c.l.b16 %v3008
          %v3305 = vunpack.c.l.b16 %v3009
          %v3306 = vunpack.c.l.b16 %v3010
          %v3307 = vunpack.c.l.b16 %v3011
          %v3308 = vunpack.c.l.b16 %v3012
          %v3309 = vunpack.c.l.b16 %v3013
          %v3310 = vunpack.c.l.b16 %v3014
          %v3311 = vunpack.c.l.b16 %v3015
          %v3312 = vunpack.c.l.b16 %v3016
          %v3313 = vunpack.c.l.b16 %v3017
          %v3314 = vunpack.c.l.b16 %v3018
          %v3315 = vunpack.c.l.b16 %v3019
          %v3316 = vunpack.c.l.b16 %v3020
          %v3317 = vunpack.c.l.b16 %v3021
          %v3318 = vunpack.c.l.b16 %v3022
          %v3319 = vunpack.c.l.b16 %v3023
          %v3320 = vunpack.c.l.b16 %v3024
          %v3321 = vunpack.c.l.b16 %v3025
          %v3322 = vunpack.c.l.b16 %v3026
          %v3323 = vunpack.c.l.b16 %v3027
          %v3324 = vunpack.c.l.b16 %v3028
          %v3325 = vunpack.c.l.b16 %v3029
          %v3326 = vunpack.c.l.b16 %v3030
          %v3327 = vunpack.c.l.b16 %v3031
          %v3328 = vunpack.c.l.b16 %v3032
          %v3329 = vunpack.c.l.b16 %v3033
          %v3330 = vunpack.c.l.b16 %v3034
          %v3331 = vunpack.c.l.b16 %v3035
          %v3332 = vunpack.c.l.b16 %v3036
          %v3333 = vunpack.c.l.b16 %v3037
          %v3334 = vunpack.c.l.b16 %v3038
          %v3335 = vunpack.c.l.b16 %v3039
          %v3336 = vunpack.c.l.b16 %v3040
          %v3337 = vunpack.c.l.b16 %v3041
          %v3338 = vunpack.c.l.b16 %v3042
          %v3339 = vunpack.c.l.b16 %v3043
          %v3340 = vunpack.c.l.b16 %v3044
          %v3341 = vunpack.c.l.b16 %v3045
          %v3342 = vunpack.c.l.b16 %v3046
          %v3343 = vunpack.c.l.b16 %v3047
          %v3344 = vunpack.c.l.b16 %v3048
          %v3345 = vunpack.c.l.b16 %v3049
          %v3346 = vunpack.c.l.b16 %v3050
          %v3347 = vunpack.c.l.b16 %v3051
          %v3348 = vunpack.c.l.b16 %v3052
          %v3349 = vunpack.c.l.b16 %v3053
          %v3350 = vunpack.c.l.b16 %v3054
          %v3351 = vunpack.c.l.b16 %v3055
          %v3352 = vunpack.c.l.b16 %v3056
          %v3353 = vunpack.c.l.b16 %v3057
          %v3354 = vunpack.c.l.b16 %v3058
          %v3355 = vunpack.c.l.b16 %v3059
          %v3356 = vunpack.c.l.b16 %v3060
          %v3357 = vunpack.c.l.b16 %v3061
          %v3358 = vunpack.c.l.b16 %v3062
          %v3359 = vunpack.c.l.b16 %v3063
          %v3360 = vunpack.c.l.b16 %v3064
          %v3361 = vunpack.c.l.b16 %v3065
          %v3362 = vunpack.c.l.b16 %v3066
          %v3363 = vunpack.c.l.b16 %v3067
          %v3364 = vunpack.c.l.b16 %v3068
          %v3365 = vunpack.c.l.b16 %v3069
          %v3366 = vunpack.c.l.b16 %v3070
          %v3367 = vunpack.c.l.b16 %v3071
          %v3368 = vunpack.c.l.b16 %v3072
          %v3369 = vunpack.c.l.b16 %v3073
          %v3370 = vunpack.c.l.b16 %v3074
          %v3371 = vunpack.c.l.b16 %v3075
          %v3372 = vunpack.c.l.b16 %v3076
          %v3373 = vunpack.c.l.b16 %v3077
          %v3374 = vunpack.c.l.b16 %v3078
          %v3375 = vunpack.c.l.b16 %v3079
          %v3376 = vunpack.c.l.b16 %v3080
          %v3377 = vpack.c.b16 %v3234, %v3233
          %v3378 = vpack.c.b16 %v3236, %v3235
          %v3379 = vpack.c.b16 %v3238, %v3237
          %v3380 = vpack.c.b16 %v3240, %v3239
          %v3381 = vpack.c.b16 %v3242, %v3241
          %v3382 = vpack.c.b16 %v3244, %v3243
          %v3383 = vpack.c.b16 %v3246, %v3245
          %v3384 = vpack.c.b16 %v3248, %v3247
          %v3385 = vpack.c.b16 %v3250, %v3249
          %v3386 = vpack.c.b16 %v3252, %v3251
          %v3387 = vpack.c.b16 %v3254, %v3253
          %v3388 = vpack.c.b16 %v3256, %v3255
          %v3389 = vpack.c.b16 %v3258, %v3257
          %v3390 = vpack.c.b16 %v3260, %v3259
          %v3391 = vpack.c.b16 %v3262, %v3261
          %v3392 = vpack.c.b16 %v3264, %v3263
          %v3393 = vpack.c.b16 %v3266, %v3265
          %v3394 = vpack.c.b16 %v3268, %v3267
          %v3395 = vpack.c.b16 %v3270, %v3269
          %v3396 = vpack.c.b16 %v3272, %v3271
          %v3397 = vpack.c.b16 %v3274, %v3273
          %v3398 = vpack.c.b16 %v3276, %v3275
          %v3399 = vpack.c.b16 %v3278, %v3277
          %v3400 = vpack.c.b16 %v3280, %v3279
          %v3401 = vpack.c.b16 %v3282, %v3281
          %v3402 = vpack.c.b16 %v3284, %v3283
          %v3403 = vpack.c.b16 %v3286, %v3285
          %v3404 = vpack.c.b16 %v3288, %v3287
          %v3405 = vpack.c.b16 %v3290, %v3289
          %v3406 = vpack.c.b16 %v3292, %v3291
          %v3407 = vpack.c.b16 %v3294, %v3293
          %v3408 = vpack.c.b16 %v3296, %v3295
          %v3409 = vpack.c.b16 %v3298, %v3297
          %v3410 = vpack.c.b16 %v3300, %v3299
          %v3411 = vpack.c.b16 %v3302, %v3301
          %v3412 = vpack.c.b16 %v3304, %v3303
          %v3413 = vpack.c.b16 %v3306, %v3305
          %v3414 = vpack.c.b16 %v3308, %v3307
          %v3415 = vpack.c.b16 %v3310, %v3309
          %v3416 = vpack.c.b16 %v3312, %v3311
          %v3417 = vpack.c.b16 %v3314, %v3313
          %v3418 = vpack.c.b16 %v3316, %v3315
          %v3419 = vpack.c.b16 %v3318, %v3317
          %v3420 = vpack.c.b16 %v3320, %v3319
          %v3421 = vpack.c.b16 %v3322, %v3321
          %v3422 = vpack.c.b16 %v3324, %v3323
          %v3423 = vpack.c.b16 %v3326, %v3325
          %v3424 = vpack.c.b16 %v3328, %v3327
          %v3425 = vpack.c.b16 %v3330, %v3329
          %v3426 = vpack.c.b16 %v3332, %v3331
          %v3427 = vpack.c.b16 %v3334, %v3333
          %v3428 = vpack.c.b16 %v3336, %v3335
          %v3429 = vpack.c.b16 %v3338, %v3337
          %v3430 = vpack.c.b16 %v3340, %v3339
          %v3431 = vpack.c.b16 %v3342, %v3341
          %v3432 = vpack.c.b16 %v3344, %v3343
          %v3433 = vpack.c.b16 %v3346, %v3345
          %v3434 = vpack.c.b16 %v3348, %v3347
          %v3435 = vpack.c.b16 %v3350, %v3349
          %v3436 = vpack.c.b16 %v3352, %v3351
          %v3437 = vpack.c.b16 %v3354, %v3353
          %v3438 = vpack.c.b16 %v3356, %v3355
          %v3439 = vpack.c.b16 %v3358, %v3357
          %v3440 = vpack.c.b16 %v3360, %v3359
          %v3441 = vpack.c.b16 %v3362, %v3361
          %v3442 = vpack.c.b16 %v3364, %v3363
          %v3443 = vpack.c.b16 %v3366, %v3365
          %v3444 = vpack.c.b16 %v3368, %v3367
          %v3445 = vpack.c.b16 %v3370, %v3369
          %v3446 = vpack.c.b16 %v3372, %v3371
          %v3447 = vpack.c.b16 %v3374, %v3373
          %v3448 = vpack.c.b16 %v3376, %v3375
          %3521 = vmatprep.subr.bf16.mxu0 0
          %3522 = vmatpush1.bf16.msra.mxu0 %v3377
          %3523 = vmatprep.subr.bf16.mxu0 0
          %3524 = vmatpush1.bf16.msra.mxu0 %v3378
          %3525 = vmatprep.subr.bf16.mxu0 0
          %3526 = vmatpush1.bf16.msra.mxu0 %v3379
          %3527 = vmatprep.subr.bf16.mxu0 0
          %3528 = vmatpush1.bf16.msra.mxu0 %v3380
          %3529 = vmatprep.subr.bf16.mxu0 0
          %3530 = vmatpush1.bf16.msra.mxu0 %v3381
          %3531 = vmatprep.subr.bf16.mxu0 0
          %3532 = vmatpush1.bf16.msra.mxu0 %v3382
          %3533 = vmatprep.subr.bf16.mxu0 0
          %3534 = vmatpush1.bf16.msra.mxu0 %v3383
          %3535 = vmatprep.subr.bf16.mxu0 0
          %3536 = vmatpush1.bf16.msra.mxu0 %v3384
          %3537 = vmatprep.subr.bf16.mxu0 0
          %3538 = vmatpush1.bf16.msra.mxu0 %v3385
          %3539 = vmatprep.subr.bf16.mxu0 0
          %3540 = vmatpush1.bf16.msra.mxu0 %v3386
          %3541 = vmatprep.subr.bf16.mxu0 0
          %3542 = vmatpush1.bf16.msra.mxu0 %v3387
          %3543 = vmatprep.subr.bf16.mxu0 0
          %3544 = vmatpush1.bf16.msra.mxu0 %v3388
          %3545 = vmatprep.subr.bf16.mxu0 0
          %3546 = vmatpush1.bf16.msra.mxu0 %v3389
          %3547 = vmatprep.subr.bf16.mxu0 0
          %3548 = vmatpush1.bf16.msra.mxu0 %v3390
          %3549 = vmatprep.subr.bf16.mxu0 0
          %3550 = vmatpush1.bf16.msra.mxu0 %v3391
          %3551 = vmatprep.subr.bf16.mxu0 0
          %3552 = vmatpush1.bf16.msra.mxu0 %v3392
          %3553 = vmatprep.mubr.bf16.mxu0 %v2584
          %3554 = vmatmul.mubr.bf16.gmra.mrb[0].mxu0 %v2536
          %v3555 = vpop.f32.mrb[0].mxu0
          %v3556 = vadd.f32 %v3087, %v3555
          %v3557 = vpop.f32.mrb[0].mxu0
          %v3558 = vpop.f32.mrb[0].mxu0
          %v3559 = vadd.f32 %v3087, %v3558
          %v3560 = vpop.f32.mrb[0].mxu0
          %3561 = vmatprep.mubr.bf16.mxu0 %v2585
          %3562 = vmatmul.mubr.bf16.gmra.mrb[0].mxu0 %v2537
          %v3563 = vpop.f32.mrb[0].mxu0
          %v3564 = vadd.f32 %v3087, %v3563
          %v3565 = vpop.f32.mrb[0].mxu0
          %v3566 = vpop.f32.mrb[0].mxu0
          %v3567 = vadd.f32 %v3087, %v3566
          %v3568 = vpop.f32.mrb[0].mxu0
          %3569 = vmatprep.mubr.bf16.mxu0 %v2586
          %3570 = vmatmul.mubr.bf16.gmra.mrb[0].mxu0 %v2538
          %v3571 = vpop.f32.mrb[0].mxu0
          %v3572 = vadd.f32 %v3087, %v3571
          %v3573 = vpop.f32.mrb[0].mxu0
          %v3574 = vpop.f32.mrb[0].mxu0
          %v3575 = vadd.f32 %v3087, %v3574
          %v3576 = vpop.f32.mrb[0].mxu0
          %3577 = vmatprep.mubr.bf16.mxu0 %v2587
          %3578 = vmatmul.mubr.bf16.gmra.mrb[0].mxu0 %v2539
          %v3579 = vpop.f32.mrb[0].mxu0
          %v3580 = vadd.f32 %v3087, %v3579
          %v3581 = vpop.f32.mrb[0].mxu0
          %v3582 = vpop.f32.mrb[0].mxu0
          %v3583 = vadd.f32 %v3087, %v3582
          %v3584 = vpop.f32.mrb[0].mxu0
          %3585 = vmatprep.mubr.bf16.mxu0 %v2588
          %3586 = vmatmul.mubr.bf16.gmra.mrb[0].mxu0 %v2540
          %v3587 = vpop.f32.mrb[0].mxu0
          %v3588 = vadd.f32 %v3087, %v3587
          %v3589 = vpop.f32.mrb[0].mxu0
          %v3590 = vpop.f32.mrb[0].mxu0
          %v3591 = vadd.f32 %v3087, %v3590
          %v3592 = vpop.f32.mrb[0].mxu0
          %3593 = vmatprep.mubr.bf16.mxu0 %v2589
          %3594 = vmatmul.mubr.bf16.gmra.mrb[0].mxu0 %v2541
          %v3595 = vpop.f32.mrb[0].mxu0
          %v3596 = vadd.f32 %v3087, %v3595
          %v3597 = vpop.f32.mrb[0].mxu0
          %v3598 = vpop.f32.mrb[0].mxu0
          %v3599 = vadd.f32 %v3087, %v3598
          %v3600 = vpop.f32.mrb[0].mxu0
          %3601 = vmatprep.mubr.bf16.mxu0 %v2590
          %3602 = vmatmul.mubr.bf16.gmra.mrb[0].mxu0 %v2542
          %v3603 = vpop.f32.mrb[0].mxu0
          %v3604 = vadd.f32 %v3087, %v3603
          %v3605 = vpop.f32.mrb[0].mxu0
          %v3606 = vpop.f32.mrb[0].mxu0
          %v3607 = vadd.f32 %v3087, %v3606
          %v3608 = vpop.f32.mrb[0].mxu0
          %3609 = vmatprep.mubr.bf16.mxu0 %v2591
          %3610 = vmatmul.mubr.bf16.gmra.mrb[0].mxu0 %v2543
          %v3611 = vpop.f32.mrb[0].mxu0
          %v3612 = vadd.f32 %v3087, %v3611
          %v3613 = vpop.f32.mrb[0].mxu0
          %v3614 = vpop.f32.mrb[0].mxu0
          %v3615 = vadd.f32 %v3087, %v3614
          %v3616 = vpop.f32.mrb[0].mxu0
          %3617 = vmatprep.mubr.bf16.mxu0 %v2592
          %3618 = vmatmul.mubr.bf16.gmra.mrb[0].mxu0 %v2544
          %v3619 = vpop.f32.mrb[0].mxu0
          %v3620 = vadd.f32 %v3087, %v3619
          %v3621 = vpop.f32.mrb[0].mxu0
          %v3622 = vpop.f32.mrb[0].mxu0
          %v3623 = vadd.f32 %v3087, %v3622
          %v3624 = vpop.f32.mrb[0].mxu0
          %3625 = vmatprep.mubr.bf16.mxu0 %v2593
          %3626 = vmatmul.mubr.bf16.gmra.mrb[0].mxu0 %v2545
          %v3627 = vpop.f32.mrb[0].mxu0
          %v3628 = vadd.f32 %v3087, %v3627
          %v3629 = vpop.f32.mrb[0].mxu0
          %v3630 = vpop.f32.mrb[0].mxu0
          %v3631 = vadd.f32 %v3087, %v3630
          %v3632 = vpop.f32.mrb[0].mxu0
          %3633 = vmatprep.mubr.bf16.mxu0 %v2594
          %3634 = vmatmul.mubr.bf16.gmra.mrb[0].mxu0 %v2546
          %v3635 = vpop.f32.mrb[0].mxu0
          %v3636 = vadd.f32 %v3087, %v3635
          %v3637 = vpop.f32.mrb[0].mxu0
          %v3638 = vpop.f32.mrb[0].mxu0
          %v3639 = vadd.f32 %v3087, %v3638
          %v3640 = vpop.f32.mrb[0].mxu0
          %3641 = vmatprep.mubr.bf16.mxu0 %v2595
          %3642 = vmatmul.mubr.bf16.gmra.mrb[0].mxu0 %v2547
          %v3643 = vpop.f32.mrb[0].mxu0
          %v3644 = vadd.f32 %v3087, %v3643
          %v3645 = vpop.f32.mrb[0].mxu0
          %v3646 = vpop.f32.mrb[0].mxu0
          %v3647 = vadd.f32 %v3087, %v3646
          %v3648 = vpop.f32.mrb[0].mxu0
          %3649 = vmatprep.mubr.bf16.mxu0 %v2596
          %3650 = vmatmul.mubr.bf16.gmra.mrb[0].mxu0 %v2548
          %v3651 = vpop.f32.mrb[0].mxu0
          %v3652 = vadd.f32 %v3087, %v3651
          %v3653 = vpop.f32.mrb[0].mxu0
          %v3654 = vpop.f32.mrb[0].mxu0
          %v3655 = vadd.f32 %v3087, %v3654
          %v3656 = vpop.f32.mrb[0].mxu0
          %3657 = vmatprep.mubr.bf16.mxu0 %v2597
          %3658 = vmatmul.mubr.bf16.gmra.mrb[0].mxu0 %v2549
          %v3659 = vpop.f32.mrb[0].mxu0
          %v3660 = vadd.f32 %v3087, %v3659
          %v3661 = vpop.f32.mrb[0].mxu0
          %v3662 = vpop.f32.mrb[0].mxu0
          %v3663 = vadd.f32 %v3087, %v3662
          %v3664 = vpop.f32.mrb[0].mxu0
          %3665 = vmatprep.mubr.bf16.mxu0 %v2598
          %3666 = vmatmul.mubr.bf16.gmra.mrb[0].mxu0 %v2550
          %v3667 = vpop.f32.mrb[0].mxu0
          %v3668 = vadd.f32 %v3087, %v3667
          %v3669 = vpop.f32.mrb[0].mxu0
          %v3670 = vpop.f32.mrb[0].mxu0
          %v3671 = vadd.f32 %v3087, %v3670
          %v3672 = vpop.f32.mrb[0].mxu0
          %3673 = vmatprep.mubr.bf16.mxu0 %v2599
          %3674 = vmatmul.mubr.bf16.gmra.mrb[0].mxu0 %v2551
          %v3675 = vpop.f32.mrb[0].mxu0
          %v3676 = vadd.f32 %v3087, %v3675
          %v3677 = vpop.f32.mrb[0].mxu0
          %v3678 = vpop.f32.mrb[0].mxu0
          %v3679 = vadd.f32 %v3087, %v3678
          %v3680 = vpop.f32.mrb[0].mxu0
          %3681 = vdwg.mxu0
          %3682 = vmatprep.subr.bf16.mxu0 0
          %3683 = vmatpush1.bf16.msra.mxu0 %v3393
          %3684 = vmatprep.subr.bf16.mxu0 0
          %3685 = vmatpush1.bf16.msra.mxu0 %v3394
          %3686 = vmatprep.subr.bf16.mxu0 0
          %3687 = vmatpush1.bf16.msra.mxu0 %v3395
          %3688 = vmatprep.subr.bf16.mxu0 0
          %3689 = vmatpush1.bf16.msra.mxu0 %v3396
          %3690 = vmatprep.subr.bf16.mxu0 0
          %3691 = vmatpush1.bf16.msra.mxu0 %v3397
          %3692 = vmatprep.subr.bf16.mxu0 0
          %3693 = vmatpush1.bf16.msra.mxu0 %v3398
          %3694 = vmatprep.subr.bf16.mxu0 0
          %3695 = vmatpush1.bf16.msra.mxu0 %v3399
          %3696 = vmatprep.subr.bf16.mxu0 0
          %3697 = vmatpush1.bf16.msra.mxu0 %v3400
          %3698 = vmatprep.subr.bf16.mxu0 0
          %3699 = vmatpush1.bf16.msra.mxu0 %v3401
          %3700 = vmatprep.subr.bf16.mxu0 0
          %3701 = vmatpush1.bf16.msra.mxu0 %v3402
          %3702 = vmatprep.subr.bf16.mxu0 0
          %3703 = vmatpush1.bf16.msra.mxu0 %v3403
          %3704 = vmatprep.subr.bf16.mxu0 0
          %3705 = vmatpush1.bf16.msra.mxu0 %v3404
          %3706 = vmatprep.subr.bf16.mxu0 0
          %3707 = vmatpush1.bf16.msra.mxu0 %v3405
          %3708 = vmatprep.subr.bf16.mxu0 0
          %3709 = vmatpush1.bf16.msra.mxu0 %v3406
          %3710 = vmatprep.subr.bf16.mxu0 0
          %3711 = vmatpush1.bf16.msra.mxu0 %v3407
          %3712 = vmatprep.subr.bf16.mxu0 0
          %3713 = vmatpush1.bf16.msra.mxu0 %v3408
          %3714 = vmatprep.mubr.bf16.mxu0 %v2680
          %3715 = vmatmul.mubr.bf16.gmra.mrb[0].mxu0 %v2632
          %v3716 = vpop.f32.mrb[0].mxu0
          %v3717 = vadd.f32 %v3556, %v3716
          %v3718 = vpop.f32.mrb[0].mxu0
          %v3719 = vpop.f32.mrb[0].mxu0
          %v3720 = vadd.f32 %v3559, %v3719
          %v3721 = vpop.f32.mrb[0].mxu0
          %3722 = vmatprep.mubr.bf16.mxu0 %v2681
          %3723 = vmatmul.mubr.bf16.gmra.mrb[0].mxu0 %v2633
          %v3724 = vpop.f32.mrb[0].mxu0
          %v3725 = vadd.f32 %v3564, %v3724
          %v3726 = vpop.f32.mrb[0].mxu0
          %v3727 = vpop.f32.mrb[0].mxu0
          %v3728 = vadd.f32 %v3567, %v3727
          %v3729 = vpop.f32.mrb[0].mxu0
          %3730 = vmatprep.mubr.bf16.mxu0 %v2682
          %3731 = vmatmul.mubr.bf16.gmra.mrb[0].mxu0 %v2634
          %v3732 = vpop.f32.mrb[0].mxu0
          %v3733 = vadd.f32 %v3572, %v3732
          %v3734 = vpop.f32.mrb[0].mxu0
          %v3735 = vpop.f32.mrb[0].mxu0
          %v3736 = vadd.f32 %v3575, %v3735
          %v3737 = vpop.f32.mrb[0].mxu0
          %3738 = vmatprep.mubr.bf16.mxu0 %v2683
          %3739 = vmatmul.mubr.bf16.gmra.mrb[0].mxu0 %v2635
          %v3740 = vpop.f32.mrb[0].mxu0
          %v3741 = vadd.f32 %v3580, %v3740
          %v3742 = vpop.f32.mrb[0].mxu0
          %v3743 = vpop.f32.mrb[0].mxu0
          %v3744 = vadd.f32 %v3583, %v3743
          %v3745 = vpop.f32.mrb[0].mxu0
          %3746 = vmatprep.mubr.bf16.mxu0 %v2684
          %3747 = vmatmul.mubr.bf16.gmra.mrb[0].mxu0 %v2636
          %v3748 = vpop.f32.mrb[0].mxu0
          %v3749 = vadd.f32 %v3588, %v3748
          %v3750 = vpop.f32.mrb[0].mxu0
          %v3751 = vpop.f32.mrb[0].mxu0
          %v3752 = vadd.f32 %v3591, %v3751
          %v3753 = vpop.f32.mrb[0].mxu0
          %3754 = vmatprep.mubr.bf16.mxu0 %v2685
          %3755 = vmatmul.mubr.bf16.gmra.mrb[0].mxu0 %v2637
          %v3756 = vpop.f32.mrb[0].mxu0
          %v3757 = vadd.f32 %v3596, %v3756
          %v3758 = vpop.f32.mrb[0].mxu0
          %v3759 = vpop.f32.mrb[0].mxu0
          %v3760 = vadd.f32 %v3599, %v3759
          %v3761 = vpop.f32.mrb[0].mxu0
          %3762 = vmatprep.mubr.bf16.mxu0 %v2686
          %3763 = vmatmul.mubr.bf16.gmra.mrb[0].mxu0 %v2638
          %v3764 = vpop.f32.mrb[0].mxu0
          %v3765 = vadd.f32 %v3604, %v3764
          %v3766 = vpop.f32.mrb[0].mxu0
          %v3767 = vpop.f32.mrb[0].mxu0
          %v3768 = vadd.f32 %v3607, %v3767
          %v3769 = vpop.f32.mrb[0].mxu0
          %3770 = vmatprep.mubr.bf16.mxu0 %v2687
          %3771 = vmatmul.mubr.bf16.gmra.mrb[0].mxu0 %v2639
          %v3772 = vpop.f32.mrb[0].mxu0
          %v3773 = vadd.f32 %v3612, %v3772
          %v3774 = vpop.f32.mrb[0].mxu0
          %v3775 = vpop.f32.mrb[0].mxu0
          %v3776 = vadd.f32 %v3615, %v3775
          %v3777 = vpop.f32.mrb[0].mxu0
          %3778 = vmatprep.mubr.bf16.mxu0 %v2688
          %3779 = vmatmul.mubr.bf16.gmra.mrb[0].mxu0 %v2640
          %v3780 = vpop.f32.mrb[0].mxu0
          %v3781 = vadd.f32 %v3620, %v3780
          %v3782 = vpop.f32.mrb[0].mxu0
          %v3783 = vpop.f32.mrb[0].mxu0
          %v3784 = vadd.f32 %v3623, %v3783
          %v3785 = vpop.f32.mrb[0].mxu0
          %3786 = vmatprep.mubr.bf16.mxu0 %v2689
          %3787 = vmatmul.mubr.bf16.gmra.mrb[0].mxu0 %v2641
          %v3788 = vpop.f32.mrb[0].mxu0
          %v3789 = vadd.f32 %v3628, %v3788
          %v3790 = vpop.f32.mrb[0].mxu0
          %v3791 = vpop.f32.mrb[0].mxu0
          %v3792 = vadd.f32 %v3631, %v3791
          %v3793 = vpop.f32.mrb[0].mxu0
          %3794 = vmatprep.mubr.bf16.mxu0 %v2690
          %3795 = vmatmul.mubr.bf16.gmra.mrb[0].mxu0 %v2642
          %v3796 = vpop.f32.mrb[0].mxu0
          %v3797 = vadd.f32 %v3636, %v3796
          %v3798 = vpop.f32.mrb[0].mxu0
          %v3799 = vpop.f32.mrb[0].mxu0
          %v3800 = vadd.f32 %v3639, %v3799
          %v3801 = vpop.f32.mrb[0].mxu0
          %3802 = vmatprep.mubr.bf16.mxu0 %v2691
          %3803 = vmatmul.mubr.bf16.gmra.mrb[0].mxu0 %v2643
          %v3804 = vpop.f32.mrb[0].mxu0
          %v3805 = vadd.f32 %v3644, %v3804
          %v3806 = vpop.f32.mrb[0].mxu0
          %v3807 = vpop.f32.mrb[0].mxu0
          %v3808 = vadd.f32 %v3647, %v3807
          %v3809 = vpop.f32.mrb[0].mxu0
          %3810 = vmatprep.mubr.bf16.mxu0 %v2692
          %3811 = vmatmul.mubr.bf16.gmra.mrb[0].mxu0 %v2644
          %v3812 = vpop.f32.mrb[0].mxu0
          %v3813 = vadd.f32 %v3652, %v3812
          %v3814 = vpop.f32.mrb[0].mxu0
          %v3815 = vpop.f32.mrb[0].mxu0
          %v3816 = vadd.f32 %v3655, %v3815
          %v3817 = vpop.f32.mrb[0].mxu0
          %3818 = vmatprep.mubr.bf16.mxu0 %v2693
          %3819 = vmatmul.mubr.bf16.gmra.mrb[0].mxu0 %v2645
          %v3820 = vpop.f32.mrb[0].mxu0
          %v3821 = vadd.f32 %v3660, %v3820
          %v3822 = vpop.f32.mrb[0].mxu0
          %v3823 = vpop.f32.mrb[0].mxu0
          %v3824 = vadd.f32 %v3663, %v3823
          %v3825 = vpop.f32.mrb[0].mxu0
          %3826 = vmatprep.mubr.bf16.mxu0 %v2694
          %3827 = vmatmul.mubr.bf16.gmra.mrb[0].mxu0 %v2646
          %v3828 = vpop.f32.mrb[0].mxu0
          %v3829 = vadd.f32 %v3668, %v3828
          %v3830 = vpop.f32.mrb[0].mxu0
          %v3831 = vpop.f32.mrb[0].mxu0
          %v3832 = vadd.f32 %v3671, %v3831
          %v3833 = vpop.f32.mrb[0].mxu0
          %3834 = vmatprep.mubr.bf16.mxu0 %v2695
          %3835 = vmatmul.mubr.bf16.gmra.mrb[0].mxu0 %v2647
          %v3836 = vpop.f32.mrb[0].mxu0
          %v3837 = vadd.f32 %v3676, %v3836
          %v3838 = vpop.f32.mrb[0].mxu0
          %v3839 = vpop.f32.mrb[0].mxu0
          %v3840 = vadd.f32 %v3679, %v3839
          %v3841 = vpop.f32.mrb[0].mxu0
          %3842 = vdwg.mxu0
          %3843 = vmatprep.subr.bf16.mxu0 0
          %3844 = vmatpush1.bf16.msra.mxu0 %v3409
          %3845 = vmatprep.subr.bf16.mxu0 0
          %3846 = vmatpush1.bf16.msra.mxu0 %v3410
          %3847 = vmatprep.subr.bf16.mxu0 0
          %3848 = vmatpush1.bf16.msra.mxu0 %v3411
          %3849 = vmatprep.subr.bf16.mxu0 0
          %3850 = vmatpush1.bf16.msra.mxu0 %v3412
          %3851 = vmatprep.subr.bf16.mxu0 0
          %3852 = vmatpush1.bf16.msra.mxu0 %v3413
          %3853 = vmatprep.subr.bf16.mxu0 0
          %3854 = vmatpush1.bf16.msra.mxu0 %v3414
          %3855 = vmatprep.subr.bf16.mxu0 0
          %3856 = vmatpush1.bf16.msra.mxu0 %v3415
          %3857 = vmatprep.subr.bf16.mxu0 0
          %3858 = vmatpush1.bf16.msra.mxu0 %v3416
          %3859 = vmatprep.subr.bf16.mxu0 0
          %3860 = vmatpush1.bf16.msra.mxu0 %v3417
          %3861 = vmatprep.subr.bf16.mxu0 0
          %3862 = vmatpush1.bf16.msra.mxu0 %v3418
          %3863 = vmatprep.subr.bf16.mxu0 0
          %3864 = vmatpush1.bf16.msra.mxu0 %v3419
          %3865 = vmatprep.subr.bf16.mxu0 0
          %3866 = vmatpush1.bf16.msra.mxu0 %v3420
          %3867 = vmatprep.subr.bf16.mxu0 0
          %3868 = vmatpush1.bf16.msra.mxu0 %v3421
          %3869 = vmatprep.subr.bf16.mxu0 0
          %3870 = vmatpush1.bf16.msra.mxu0 %v3422
          %3871 = vmatprep.subr.bf16.mxu0 0
          %3872 = vmatpush1.bf16.msra.mxu0 %v3423
          %3873 = vmatprep.subr.bf16.mxu0 0
          %3874 = vmatpush1.bf16.msra.mxu0 %v3424
          %3875 = vmatprep.mubr.bf16.mxu0 %v2776
          %3876 = vmatmul.mubr.bf16.gmra.mrb[0].mxu0 %v2728
          %v3877 = vpop.f32.mrb[0].mxu0
          %v3878 = vadd.f32 %v3717, %v3877
          %v3879 = vpop.f32.mrb[0].mxu0
          %v3880 = vpop.f32.mrb[0].mxu0
          %v3881 = vadd.f32 %v3720, %v3880
          %v3882 = vpop.f32.mrb[0].mxu0
          %3883 = vmatprep.mubr.bf16.mxu0 %v2777
          %3884 = vmatmul.mubr.bf16.gmra.mrb[0].mxu0 %v2729
          %v3885 = vpop.f32.mrb[0].mxu0
          %v3886 = vadd.f32 %v3725, %v3885
          %v3887 = vpop.f32.mrb[0].mxu0
          %v3888 = vpop.f32.mrb[0].mxu0
          %v3889 = vadd.f32 %v3728, %v3888
          %v3890 = vpop.f32.mrb[0].mxu0
          %3891 = vmatprep.mubr.bf16.mxu0 %v2778
          %3892 = vmatmul.mubr.bf16.gmra.mrb[0].mxu0 %v2730
          %v3893 = vpop.f32.mrb[0].mxu0
          %v3894 = vadd.f32 %v3733, %v3893
          %v3895 = vpop.f32.mrb[0].mxu0
          %v3896 = vpop.f32.mrb[0].mxu0
          %v3897 = vadd.f32 %v3736, %v3896
          %v3898 = vpop.f32.mrb[0].mxu0
          %3899 = vmatprep.mubr.bf16.mxu0 %v2779
          %3900 = vmatmul.mubr.bf16.gmra.mrb[0].mxu0 %v2731
          %v3901 = vpop.f32.mrb[0].mxu0
          %v3902 = vadd.f32 %v3741, %v3901
          %v3903 = vpop.f32.mrb[0].mxu0
          %v3904 = vpop.f32.mrb[0].mxu0
          %v3905 = vadd.f32 %v3744, %v3904
          %v3906 = vpop.f32.mrb[0].mxu0
          %3907 = vmatprep.mubr.bf16.mxu0 %v2780
          %3908 = vmatmul.mubr.bf16.gmra.mrb[0].mxu0 %v2732
          %v3909 = vpop.f32.mrb[0].mxu0
          %v3910 = vadd.f32 %v3749, %v3909
          %v3911 = vpop.f32.mrb[0].mxu0
          %v3912 = vpop.f32.mrb[0].mxu0
          %v3913 = vadd.f32 %v3752, %v3912
          %v3914 = vpop.f32.mrb[0].mxu0
          %3915 = vmatprep.mubr.bf16.mxu0 %v2781
          %3916 = vmatmul.mubr.bf16.gmra.mrb[0].mxu0 %v2733
          %v3917 = vpop.f32.mrb[0].mxu0
          %v3918 = vadd.f32 %v3757, %v3917
          %v3919 = vpop.f32.mrb[0].mxu0
          %v3920 = vpop.f32.mrb[0].mxu0
          %v3921 = vadd.f32 %v3760, %v3920
          %v3922 = vpop.f32.mrb[0].mxu0
          %3923 = vmatprep.mubr.bf16.mxu0 %v2782
          %3924 = vmatmul.mubr.bf16.gmra.mrb[0].mxu0 %v2734
          %v3925 = vpop.f32.mrb[0].mxu0
          %v3926 = vadd.f32 %v3765, %v3925
          %v3927 = vpop.f32.mrb[0].mxu0
          %v3928 = vpop.f32.mrb[0].mxu0
          %v3929 = vadd.f32 %v3768, %v3928
          %v3930 = vpop.f32.mrb[0].mxu0
          %3931 = vmatprep.mubr.bf16.mxu0 %v2783
          %3932 = vmatmul.mubr.bf16.gmra.mrb[0].mxu0 %v2735
          %v3933 = vpop.f32.mrb[0].mxu0
          %v3934 = vadd.f32 %v3773, %v3933
          %v3935 = vpop.f32.mrb[0].mxu0
          %v3936 = vpop.f32.mrb[0].mxu0
          %v3937 = vadd.f32 %v3776, %v3936
          %v3938 = vpop.f32.mrb[0].mxu0
          %3939 = vmatprep.mubr.bf16.mxu0 %v2784
          %3940 = vmatmul.mubr.bf16.gmra.mrb[0].mxu0 %v2736
          %v3941 = vpop.f32.mrb[0].mxu0
          %v3942 = vadd.f32 %v3781, %v3941
          %v3943 = vpop.f32.mrb[0].mxu0
          %v3944 = vpop.f32.mrb[0].mxu0
          %v3945 = vadd.f32 %v3784, %v3944
          %v3946 = vpop.f32.mrb[0].mxu0
          %3947 = vmatprep.mubr.bf16.mxu0 %v2785
          %3948 = vmatmul.mubr.bf16.gmra.mrb[0].mxu0 %v2737
          %v3949 = vpop.f32.mrb[0].mxu0
          %v3950 = vadd.f32 %v3789, %v3949
          %v3951 = vpop.f32.mrb[0].mxu0
          %v3952 = vpop.f32.mrb[0].mxu0
          %v3953 = vadd.f32 %v3792, %v3952
          %v3954 = vpop.f32.mrb[0].mxu0
          %3955 = vmatprep.mubr.bf16.mxu0 %v2786
          %3956 = vmatmul.mubr.bf16.gmra.mrb[0].mxu0 %v2738
          %v3957 = vpop.f32.mrb[0].mxu0
          %v3958 = vadd.f32 %v3797, %v3957
          %v3959 = vpop.f32.mrb[0].mxu0
          %v3960 = vpop.f32.mrb[0].mxu0
          %v3961 = vadd.f32 %v3800, %v3960
          %v3962 = vpop.f32.mrb[0].mxu0
          %3963 = vmatprep.mubr.bf16.mxu0 %v2787
          %3964 = vmatmul.mubr.bf16.gmra.mrb[0].mxu0 %v2739
          %v3965 = vpop.f32.mrb[0].mxu0
          %v3966 = vadd.f32 %v3805, %v3965
          %v3967 = vpop.f32.mrb[0].mxu0
          %v3968 = vpop.f32.mrb[0].mxu0
          %v3969 = vadd.f32 %v3808, %v3968
          %v3970 = vpop.f32.mrb[0].mxu0
          %3971 = vmatprep.mubr.bf16.mxu0 %v2788
          %3972 = vmatmul.mubr.bf16.gmra.mrb[0].mxu0 %v2740
          %v3973 = vpop.f32.mrb[0].mxu0
          %v3974 = vadd.f32 %v3813, %v3973
          %v3975 = vpop.f32.mrb[0].mxu0
          %v3976 = vpop.f32.mrb[0].mxu0
          %v3977 = vadd.f32 %v3816, %v3976
          %v3978 = vpop.f32.mrb[0].mxu0
          %3979 = vmatprep.mubr.bf16.mxu0 %v2789
          %3980 = vmatmul.mubr.bf16.gmra.mrb[0].mxu0 %v2741
          %v3981 = vpop.f32.mrb[0].mxu0
          %v3982 = vadd.f32 %v3821, %v3981
          %v3983 = vpop.f32.mrb[0].mxu0
          %v3984 = vpop.f32.mrb[0].mxu0
          %v3985 = vadd.f32 %v3824, %v3984
          %v3986 = vpop.f32.mrb[0].mxu0
          %3987 = vmatprep.mubr.bf16.mxu0 %v2790
          %3988 = vmatmul.mubr.bf16.gmra.mrb[0].mxu0 %v2742
          %v3989 = vpop.f32.mrb[0].mxu0
          %v3990 = vadd.f32 %v3829, %v3989
          %v3991 = vpop.f32.mrb[0].mxu0
          %v3992 = vpop.f32.mrb[0].mxu0
          %v3993 = vadd.f32 %v3832, %v3992
          %v3994 = vpop.f32.mrb[0].mxu0
          %3995 = vmatprep.mubr.bf16.mxu0 %v2791
          %3996 = vmatmul.mubr.bf16.gmra.mrb[0].mxu0 %v2743
          %v3997 = vpop.f32.mrb[0].mxu0
          %v3998 = vadd.f32 %v3837, %v3997
          %v3999 = vpop.f32.mrb[0].mxu0
          %v4000 = vpop.f32.mrb[0].mxu0
          %v4001 = vadd.f32 %v3840, %v4000
          %v4002 = vpop.f32.mrb[0].mxu0
          %4003 = vdwg.mxu0
          %4004 = vmatprep.subr.bf16.mxu0 0
          %4005 = vmatpush1.bf16.msra.mxu0 %v3425
          %4006 = vmatprep.subr.bf16.mxu0 0
          %4007 = vmatpush1.bf16.msra.mxu0 %v3426
          %4008 = vmatprep.subr.bf16.mxu0 0
          %4009 = vmatpush1.bf16.msra.mxu0 %v3427
          %4010 = vmatprep.subr.bf16.mxu0 0
          %4011 = vmatpush1.bf16.msra.mxu0 %v3428
          %4012 = vmatprep.subr.bf16.mxu0 0
          %4013 = vmatpush1.bf16.msra.mxu0 %v3429
          %4014 = vmatprep.subr.bf16.mxu0 0
          %4015 = vmatpush1.bf16.msra.mxu0 %v3430
          %4016 = vmatprep.subr.bf16.mxu0 0
          %4017 = vmatpush1.bf16.msra.mxu0 %v3431
          %4018 = vmatprep.subr.bf16.mxu0 0
          %4019 = vmatpush1.bf16.msra.mxu0 %v3432
          %4020 = vmatprep.subr.bf16.mxu0 0
          %4021 = vmatpush1.bf16.msra.mxu0 %v3433
          %4022 = vmatprep.subr.bf16.mxu0 0
          %4023 = vmatpush1.bf16.msra.mxu0 %v3434
          %4024 = vmatprep.subr.bf16.mxu0 0
          %4025 = vmatpush1.bf16.msra.mxu0 %v3435
          %4026 = vmatprep.subr.bf16.mxu0 0
          %4027 = vmatpush1.bf16.msra.mxu0 %v3436
          %4028 = vmatprep.subr.bf16.mxu0 0
          %4029 = vmatpush1.bf16.msra.mxu0 %v3437
          %4030 = vmatprep.subr.bf16.mxu0 0
          %4031 = vmatpush1.bf16.msra.mxu0 %v3438
          %4032 = vmatprep.subr.bf16.mxu0 0
          %4033 = vmatpush1.bf16.msra.mxu0 %v3439
          %4034 = vmatprep.subr.bf16.mxu0 0
          %4035 = vmatpush1.bf16.msra.mxu0 %v3440
          %4036 = vmatprep.mubr.bf16.mxu0 %v2872
          %4037 = vmatmul.mubr.bf16.gmra.mrb[0].mxu0 %v2824
          %v4038 = vpop.f32.mrb[0].mxu0
          %v4039 = vadd.f32 %v3878, %v4038
          %v4040 = vpop.f32.mrb[0].mxu0
          %v4041 = vpop.f32.mrb[0].mxu0
          %v4042 = vadd.f32 %v3881, %v4041
          %v4043 = vpop.f32.mrb[0].mxu0
          %4044 = vmatprep.mubr.bf16.mxu0 %v2873
          %4045 = vmatmul.mubr.bf16.gmra.mrb[0].mxu0 %v2825
          %v4046 = vpop.f32.mrb[0].mxu0
          %v4047 = vadd.f32 %v3886, %v4046
          %v4048 = vpop.f32.mrb[0].mxu0
          %v4049 = vpop.f32.mrb[0].mxu0
          %v4050 = vadd.f32 %v3889, %v4049
          %v4051 = vpop.f32.mrb[0].mxu0
          %4052 = vmatprep.mubr.bf16.mxu0 %v2874
          %4053 = vmatmul.mubr.bf16.gmra.mrb[0].mxu0 %v2826
          %v4054 = vpop.f32.mrb[0].mxu0
          %v4055 = vadd.f32 %v3894, %v4054
          %v4056 = vpop.f32.mrb[0].mxu0
          %v4057 = vpop.f32.mrb[0].mxu0
          %v4058 = vadd.f32 %v3897, %v4057
          %v4059 = vpop.f32.mrb[0].mxu0
          %4060 = vmatprep.mubr.bf16.mxu0 %v2875
          %4061 = vmatmul.mubr.bf16.gmra.mrb[0].mxu0 %v2827
          %v4062 = vpop.f32.mrb[0].mxu0
          %v4063 = vadd.f32 %v3902, %v4062
          %v4064 = vpop.f32.mrb[0].mxu0
          %v4065 = vpop.f32.mrb[0].mxu0
          %v4066 = vadd.f32 %v3905, %v4065
          %v4067 = vpop.f32.mrb[0].mxu0
          %4068 = vmatprep.mubr.bf16.mxu0 %v2876
          %4069 = vmatmul.mubr.bf16.gmra.mrb[0].mxu0 %v2828
          %v4070 = vpop.f32.mrb[0].mxu0
          %v4071 = vadd.f32 %v3910, %v4070
          %v4072 = vpop.f32.mrb[0].mxu0
          %v4073 = vpop.f32.mrb[0].mxu0
          %v4074 = vadd.f32 %v3913, %v4073
          %v4075 = vpop.f32.mrb[0].mxu0
          %4076 = vmatprep.mubr.bf16.mxu0 %v2877
          %4077 = vmatmul.mubr.bf16.gmra.mrb[0].mxu0 %v2829
          %v4078 = vpop.f32.mrb[0].mxu0
          %v4079 = vadd.f32 %v3918, %v4078
          %v4080 = vpop.f32.mrb[0].mxu0
          %v4081 = vpop.f32.mrb[0].mxu0
          %v4082 = vadd.f32 %v3921, %v4081
          %v4083 = vpop.f32.mrb[0].mxu0
          %4084 = vmatprep.mubr.bf16.mxu0 %v2878
          %4085 = vmatmul.mubr.bf16.gmra.mrb[0].mxu0 %v2830
          %v4086 = vpop.f32.mrb[0].mxu0
          %v4087 = vadd.f32 %v3926, %v4086
          %v4088 = vpop.f32.mrb[0].mxu0
          %v4089 = vpop.f32.mrb[0].mxu0
          %v4090 = vadd.f32 %v3929, %v4089
          %v4091 = vpop.f32.mrb[0].mxu0
          %4092 = vmatprep.mubr.bf16.mxu0 %v2879
          %4093 = vmatmul.mubr.bf16.gmra.mrb[0].mxu0 %v2831
          %v4094 = vpop.f32.mrb[0].mxu0
          %v4095 = vadd.f32 %v3934, %v4094
          %v4096 = vpop.f32.mrb[0].mxu0
          %v4097 = vpop.f32.mrb[0].mxu0
          %v4098 = vadd.f32 %v3937, %v4097
          %v4099 = vpop.f32.mrb[0].mxu0
          %4100 = vmatprep.mubr.bf16.mxu0 %v2880
          %4101 = vmatmul.mubr.bf16.gmra.mrb[0].mxu0 %v2832
          %v4102 = vpop.f32.mrb[0].mxu0
          %v4103 = vadd.f32 %v3942, %v4102
          %v4104 = vpop.f32.mrb[0].mxu0
          %v4105 = vpop.f32.mrb[0].mxu0
          %v4106 = vadd.f32 %v3945, %v4105
          %v4107 = vpop.f32.mrb[0].mxu0
          %4108 = vmatprep.mubr.bf16.mxu0 %v2881
          %4109 = vmatmul.mubr.bf16.gmra.mrb[0].mxu0 %v2833
          %v4110 = vpop.f32.mrb[0].mxu0
          %v4111 = vadd.f32 %v3950, %v4110
          %v4112 = vpop.f32.mrb[0].mxu0
          %v4113 = vpop.f32.mrb[0].mxu0
          %v4114 = vadd.f32 %v3953, %v4113
          %v4115 = vpop.f32.mrb[0].mxu0
          %4116 = vmatprep.mubr.bf16.mxu0 %v2882
          %4117 = vmatmul.mubr.bf16.gmra.mrb[0].mxu0 %v2834
          %v4118 = vpop.f32.mrb[0].mxu0
          %v4119 = vadd.f32 %v3958, %v4118
          %v4120 = vpop.f32.mrb[0].mxu0
          %v4121 = vpop.f32.mrb[0].mxu0
          %v4122 = vadd.f32 %v3961, %v4121
          %v4123 = vpop.f32.mrb[0].mxu0
          %4124 = vmatprep.mubr.bf16.mxu0 %v2883
          %4125 = vmatmul.mubr.bf16.gmra.mrb[0].mxu0 %v2835
          %v4126 = vpop.f32.mrb[0].mxu0
          %v4127 = vadd.f32 %v3966, %v4126
          %v4128 = vpop.f32.mrb[0].mxu0
          %v4129 = vpop.f32.mrb[0].mxu0
          %v4130 = vadd.f32 %v3969, %v4129
          %v4131 = vpop.f32.mrb[0].mxu0
          %4132 = vmatprep.mubr.bf16.mxu0 %v2884
          %4133 = vmatmul.mubr.bf16.gmra.mrb[0].mxu0 %v2836
          %v4134 = vpop.f32.mrb[0].mxu0
          %v4135 = vadd.f32 %v3974, %v4134
          %v4136 = vpop.f32.mrb[0].mxu0
          %v4137 = vpop.f32.mrb[0].mxu0
          %v4138 = vadd.f32 %v3977, %v4137
          %v4139 = vpop.f32.mrb[0].mxu0
          %4140 = vmatprep.mubr.bf16.mxu0 %v2885
          %4141 = vmatmul.mubr.bf16.gmra.mrb[0].mxu0 %v2837
          %v4142 = vpop.f32.mrb[0].mxu0
          %v4143 = vadd.f32 %v3982, %v4142
          %v4144 = vpop.f32.mrb[0].mxu0
          %v4145 = vpop.f32.mrb[0].mxu0
          %v4146 = vadd.f32 %v3985, %v4145
          %v4147 = vpop.f32.mrb[0].mxu0
          %4148 = vmatprep.mubr.bf16.mxu0 %v2886
          %4149 = vmatmul.mubr.bf16.gmra.mrb[0].mxu0 %v2838
          %v4150 = vpop.f32.mrb[0].mxu0
          %v4151 = vadd.f32 %v3990, %v4150
          %v4152 = vpop.f32.mrb[0].mxu0
          %v4153 = vpop.f32.mrb[0].mxu0
          %v4154 = vadd.f32 %v3993, %v4153
          %v4155 = vpop.f32.mrb[0].mxu0
          %4156 = vmatprep.mubr.bf16.mxu0 %v2887
          %4157 = vmatmul.mubr.bf16.gmra.mrb[0].mxu0 %v2839
          %v4158 = vpop.f32.mrb[0].mxu0
          %v4159 = vadd.f32 %v3998, %v4158
          %v4160 = vpop.f32.mrb[0].mxu0
          %v4161 = vpop.f32.mrb[0].mxu0
          %v4162 = vadd.f32 %v4001, %v4161
          %v4163 = vpop.f32.mrb[0].mxu0
          %4164 = vdwg.mxu0
          %4165 = vmatprep.subr.bf16.mxu0 0
          %4166 = vmatpush1.bf16.msra.mxu0 %v3441
          %4167 = vmatprep.subr.bf16.mxu0 0
          %4168 = vmatpush1.bf16.msra.mxu0 %v3442
          %4169 = vmatprep.subr.bf16.mxu0 0
          %4170 = vmatpush1.bf16.msra.mxu0 %v3443
          %4171 = vmatprep.subr.bf16.mxu0 0
          %4172 = vmatpush1.bf16.msra.mxu0 %v3444
          %4173 = vmatprep.subr.bf16.mxu0 0
          %4174 = vmatpush1.bf16.msra.mxu0 %v3445
          %4175 = vmatprep.subr.bf16.mxu0 0
          %4176 = vmatpush1.bf16.msra.mxu0 %v3446
          %4177 = vmatprep.subr.bf16.mxu0 0
          %4178 = vmatpush1.bf16.msra.mxu0 %v3447
          %4179 = vmatprep.subr.bf16.mxu0 0
          %4180 = vmatpush1.bf16.msra.mxu0 %v3448
          %4181 = vmatprep.subr.bf16.mxu0 0
          %4182 = vmatpush1.bf16.msra.mxu0 0
          %4183 = vmatprep.subr.bf16.mxu0 0
          %4184 = vmatpush1.bf16.msra.mxu0 0
          %4185 = vmatprep.subr.bf16.mxu0 0
          %4186 = vmatpush1.bf16.msra.mxu0 0
          %4187 = vmatprep.subr.bf16.mxu0 0
          %4188 = vmatpush1.bf16.msra.mxu0 0
          %4189 = vmatprep.subr.bf16.mxu0 0
          %4190 = vmatpush1.bf16.msra.mxu0 0
          %4191 = vmatprep.subr.bf16.mxu0 0
          %4192 = vmatpush1.bf16.msra.mxu0 0
          %4193 = vmatprep.subr.bf16.mxu0 0
          %4194 = vmatpush1.bf16.msra.mxu0 0
          %4195 = vmatprep.subr.bf16.mxu0 0
          %4196 = vmatpush1.bf16.msra.mxu0 0
          %4197 = vmatprep.mubr.bf16.mxu0 0
          %4198 = vmatmul.mubr.bf16.gmra.mrb[0].mxu0 %v2920
          %v4199 = vpop.f32.mrb[0].mxu0
          %v4200 = vadd.f32 %v4039, %v4199
          %v4201 = vpop.f32.mrb[0].mxu0
          %v4202 = vpop.f32.mrb[0].mxu0
          %v4203 = vadd.f32 %v4042, %v4202
          %v4204 = vpop.f32.mrb[0].mxu0
          %4205 = vmatprep.mubr.bf16.mxu0 0
          %4206 = vmatmul.mubr.bf16.gmra.mrb[0].mxu0 %v2921
          %v4207 = vpop.f32.mrb[0].mxu0
          %v4208 = vadd.f32 %v4047, %v4207
          %v4209 = vpop.f32.mrb[0].mxu0
          %v4210 = vpop.f32.mrb[0].mxu0
          %v4211 = vadd.f32 %v4050, %v4210
          %v4212 = vpop.f32.mrb[0].mxu0
          %4213 = vmatprep.mubr.bf16.mxu0 0
          %4214 = vmatmul.mubr.bf16.gmra.mrb[0].mxu0 %v2922
          %v4215 = vpop.f32.mrb[0].mxu0
          %v4216 = vadd.f32 %v4055, %v4215
          %v4217 = vpop.f32.mrb[0].mxu0
          %v4218 = vpop.f32.mrb[0].mxu0
          %v4219 = vadd.f32 %v4058, %v4218
          %v4220 = vpop.f32.mrb[0].mxu0
          %4221 = vmatprep.mubr.bf16.mxu0 0
          %4222 = vmatmul.mubr.bf16.gmra.mrb[0].mxu0 %v2923
          %v4223 = vpop.f32.mrb[0].mxu0
          %v4224 = vadd.f32 %v4063, %v4223
          %v4225 = vpop.f32.mrb[0].mxu0
          %v4226 = vpop.f32.mrb[0].mxu0
          %v4227 = vadd.f32 %v4066, %v4226
          %v4228 = vpop.f32.mrb[0].mxu0
          %4229 = vmatprep.mubr.bf16.mxu0 0
          %4230 = vmatmul.mubr.bf16.gmra.mrb[0].mxu0 %v2924
          %v4231 = vpop.f32.mrb[0].mxu0
          %v4232 = vadd.f32 %v4071, %v4231
          %v4233 = vpop.f32.mrb[0].mxu0
          %v4234 = vpop.f32.mrb[0].mxu0
          %v4235 = vadd.f32 %v4074, %v4234
          %v4236 = vpop.f32.mrb[0].mxu0
          %4237 = vmatprep.mubr.bf16.mxu0 0
          %4238 = vmatmul.mubr.bf16.gmra.mrb[0].mxu0 %v2925
          %v4239 = vpop.f32.mrb[0].mxu0
          %v4240 = vadd.f32 %v4079, %v4239
          %v4241 = vpop.f32.mrb[0].mxu0
          %v4242 = vpop.f32.mrb[0].mxu0
          %v4243 = vadd.f32 %v4082, %v4242
          %v4244 = vpop.f32.mrb[0].mxu0
          %4245 = vmatprep.mubr.bf16.mxu0 0
          %4246 = vmatmul.mubr.bf16.gmra.mrb[0].mxu0 %v2926
          %v4247 = vpop.f32.mrb[0].mxu0
          %v4248 = vadd.f32 %v4087, %v4247
          %v4249 = vpop.f32.mrb[0].mxu0
          %v4250 = vpop.f32.mrb[0].mxu0
          %v4251 = vadd.f32 %v4090, %v4250
          %v4252 = vpop.f32.mrb[0].mxu0
          %4253 = vmatprep.mubr.bf16.mxu0 0
          %4254 = vmatmul.mubr.bf16.gmra.mrb[0].mxu0 %v2927
          %v4255 = vpop.f32.mrb[0].mxu0
          %v4256 = vadd.f32 %v4095, %v4255
          %v4257 = vpop.f32.mrb[0].mxu0
          %v4258 = vpop.f32.mrb[0].mxu0
          %v4259 = vadd.f32 %v4098, %v4258
          %v4260 = vpop.f32.mrb[0].mxu0
          %4261 = vmatprep.mubr.bf16.mxu0 0
          %4262 = vmatmul.mubr.bf16.gmra.mrb[0].mxu0 %v2928
          %v4263 = vpop.f32.mrb[0].mxu0
          %v4264 = vadd.f32 %v4103, %v4263
          %v4265 = vpop.f32.mrb[0].mxu0
          %v4266 = vpop.f32.mrb[0].mxu0
          %v4267 = vadd.f32 %v4106, %v4266
          %v4268 = vpop.f32.mrb[0].mxu0
          %4269 = vmatprep.mubr.bf16.mxu0 0
          %4270 = vmatmul.mubr.bf16.gmra.mrb[0].mxu0 %v2929
          %v4271 = vpop.f32.mrb[0].mxu0
          %v4272 = vadd.f32 %v4111, %v4271
          %v4273 = vpop.f32.mrb[0].mxu0
          %v4274 = vpop.f32.mrb[0].mxu0
          %v4275 = vadd.f32 %v4114, %v4274
          %v4276 = vpop.f32.mrb[0].mxu0
          %4277 = vmatprep.mubr.bf16.mxu0 0
          %4278 = vmatmul.mubr.bf16.gmra.mrb[0].mxu0 %v2930
          %v4279 = vpop.f32.mrb[0].mxu0
          %v4280 = vadd.f32 %v4119, %v4279
          %v4281 = vpop.f32.mrb[0].mxu0
          %v4282 = vpop.f32.mrb[0].mxu0
          %v4283 = vadd.f32 %v4122, %v4282
          %v4284 = vpop.f32.mrb[0].mxu0
          %4285 = vmatprep.mubr.bf16.mxu0 0
          %4286 = vmatmul.mubr.bf16.gmra.mrb[0].mxu0 %v2931
          %v4287 = vpop.f32.mrb[0].mxu0
          %v4288 = vadd.f32 %v4127, %v4287
          %v4289 = vpop.f32.mrb[0].mxu0
          %v4290 = vpop.f32.mrb[0].mxu0
          %v4291 = vadd.f32 %v4130, %v4290
          %v4292 = vpop.f32.mrb[0].mxu0
          %4293 = vmatprep.mubr.bf16.mxu0 0
          %4294 = vmatmul.mubr.bf16.gmra.mrb[0].mxu0 %v2932
          %v4295 = vpop.f32.mrb[0].mxu0
          %v4296 = vadd.f32 %v4135, %v4295
          %v4297 = vpop.f32.mrb[0].mxu0
          %v4298 = vpop.f32.mrb[0].mxu0
          %v4299 = vadd.f32 %v4138, %v4298
          %v4300 = vpop.f32.mrb[0].mxu0
          %4301 = vmatprep.mubr.bf16.mxu0 0
          %4302 = vmatmul.mubr.bf16.gmra.mrb[0].mxu0 %v2933
          %v4303 = vpop.f32.mrb[0].mxu0
          %v4304 = vadd.f32 %v4143, %v4303
          %v4305 = vpop.f32.mrb[0].mxu0
          %v4306 = vpop.f32.mrb[0].mxu0
          %v4307 = vadd.f32 %v4146, %v4306
          %v4308 = vpop.f32.mrb[0].mxu0
          %4309 = vmatprep.mubr.bf16.mxu0 0
          %4310 = vmatmul.mubr.bf16.gmra.mrb[0].mxu0 %v2934
          %v4311 = vpop.f32.mrb[0].mxu0
          %v4312 = vadd.f32 %v4151, %v4311
          %v4313 = vpop.f32.mrb[0].mxu0
          %v4314 = vpop.f32.mrb[0].mxu0
          %v4315 = vadd.f32 %v4154, %v4314
          %v4316 = vpop.f32.mrb[0].mxu0
          %4317 = vmatprep.mubr.bf16.mxu0 0
          %4318 = vmatmul.mubr.bf16.gmra.mrb[0].mxu0 %v2935
          %v4319 = vpop.f32.mrb[0].mxu0
          %v4320 = vadd.f32 %v4159, %v4319
          %v4321 = vpop.f32.mrb[0].mxu0
          %v4322 = vpop.f32.mrb[0].mxu0
          %v4323 = vadd.f32 %v4162, %v4322
          %v4324 = vpop.f32.mrb[0].mxu0
          %4325 = vdwg.mxu0
          %v4326 = vxor.u32 %v4200, 2147483648
          %v4327 = vxor.u32 %v4203, 2147483648
          %v4328 = vxor.u32 %v4208, 2147483648
          %v4329 = vxor.u32 %v4211, 2147483648
          %v4330 = vxor.u32 %v4216, 2147483648
          %v4331 = vxor.u32 %v4219, 2147483648
          %v4332 = vxor.u32 %v4224, 2147483648
          %v4333 = vxor.u32 %v4227, 2147483648
          %v4334 = vxor.u32 %v4232, 2147483648
          %v4335 = vxor.u32 %v4235, 2147483648
          %v4336 = vxor.u32 %v4240, 2147483648
          %v4337 = vxor.u32 %v4243, 2147483648
          %v4338 = vxor.u32 %v4248, 2147483648
          %v4339 = vxor.u32 %v4251, 2147483648
          %v4340 = vxor.u32 %v4256, 2147483648
          %v4341 = vxor.u32 %v4259, 2147483648
          %v4342 = vxor.u32 %v4264, 2147483648
          %v4343 = vxor.u32 %v4267, 2147483648
          %v4344 = vxor.u32 %v4272, 2147483648
          %v4345 = vxor.u32 %v4275, 2147483648
          %v4346 = vxor.u32 %v4280, 2147483648
          %v4347 = vxor.u32 %v4283, 2147483648
          %v4348 = vxor.u32 %v4288, 2147483648
          %v4349 = vxor.u32 %v4291, 2147483648
          %v4350 = vxor.u32 %v4296, 2147483648
          %v4351 = vxor.u32 %v4299, 2147483648
          %v4352 = vxor.u32 %v4304, 2147483648
          %v4353 = vxor.u32 %v4307, 2147483648
          %v4354 = vxor.u32 %v4312, 2147483648
          %v4355 = vxor.u32 %v4315, 2147483648
          %v4356 = vxor.u32 %v4320, 2147483648
          %v4357 = vxor.u32 %v4323, 2147483648
          %v4358 = vmul.f32 %v4326, 1.442695
          %v4359 = vpow.pop %v4358
          %v4360 = vmul.f32 %v4327, 1.442695
          %v4361 = vpow.pop %v4360
          %v4362 = vmul.f32 %v4328, 1.442695
          %v4363 = vpow.pop %v4362
          %v4364 = vmul.f32 %v4329, 1.442695
          %v4365 = vpow.pop %v4364
          %v4366 = vmul.f32 %v4330, 1.442695
          %v4367 = vpow.pop %v4366
          %v4368 = vmul.f32 %v4331, 1.442695
          %v4369 = vpow.pop %v4368
          %v4370 = vmul.f32 %v4332, 1.442695
          %v4371 = vpow.pop %v4370
          %v4372 = vmul.f32 %v4333, 1.442695
          %v4373 = vpow.pop %v4372
          %v4374 = vmul.f32 %v4334, 1.442695
          %v4375 = vpow.pop %v4374
          %v4376 = vmul.f32 %v4335, 1.442695
          %v4377 = vpow.pop %v4376
          %v4378 = vmul.f32 %v4336, 1.442695
          %v4379 = vpow.pop %v4378
          %v4380 = vmul.f32 %v4337, 1.442695
          %v4381 = vpow.pop %v4380
          %v4382 = vmul.f32 %v4338, 1.442695
          %v4383 = vpow.pop %v4382
          %v4384 = vmul.f32 %v4339, 1.442695
          %v4385 = vpow.pop %v4384
          %v4386 = vmul.f32 %v4340, 1.442695
          %v4387 = vpow.pop %v4386
          %v4388 = vmul.f32 %v4341, 1.442695
          %v4389 = vpow.pop %v4388
          %v4390 = vmul.f32 %v4342, 1.442695
          %v4391 = vpow.pop %v4390
          %v4392 = vmul.f32 %v4343, 1.442695
          %v4393 = vpow.pop %v4392
          %v4394 = vmul.f32 %v4344, 1.442695
          %v4395 = vpow.pop %v4394
          %v4396 = vmul.f32 %v4345, 1.442695
          %v4397 = vpow.pop %v4396
          %v4398 = vmul.f32 %v4346, 1.442695
          %v4399 = vpow.pop %v4398
          %v4400 = vmul.f32 %v4347, 1.442695
          %v4401 = vpow.pop %v4400
          %v4402 = vmul.f32 %v4348, 1.442695
          %v4403 = vpow.pop %v4402
          %v4404 = vmul.f32 %v4349, 1.442695
          %v4405 = vpow.pop %v4404
          %v4406 = vmul.f32 %v4350, 1.442695
          %v4407 = vpow.pop %v4406
          %v4408 = vmul.f32 %v4351, 1.442695
          %v4409 = vpow.pop %v4408
          %v4410 = vmul.f32 %v4352, 1.442695
          %v4411 = vpow.pop %v4410
          %v4412 = vmul.f32 %v4353, 1.442695
          %v4413 = vpow.pop %v4412
          %v4414 = vmul.f32 %v4354, 1.442695
          %v4415 = vpow.pop %v4414
          %v4416 = vmul.f32 %v4355, 1.442695
          %v4417 = vpow.pop %v4416
          %v4418 = vmul.f32 %v4356, 1.442695
          %v4419 = vpow.pop %v4418
          %v4420 = vmul.f32 %v4357, 1.442695
          %v4421 = vpow.pop %v4420
          %v4422 = vadd.f32 %v4359, 1.0
          %v4423 = vadd.f32 %v4361, 1.0
          %v4424 = vadd.f32 %v4363, 1.0
          %v4425 = vadd.f32 %v4365, 1.0
          %v4426 = vadd.f32 %v4367, 1.0
          %v4427 = vadd.f32 %v4369, 1.0
          %v4428 = vadd.f32 %v4371, 1.0
          %v4429 = vadd.f32 %v4373, 1.0
          %v4430 = vadd.f32 %v4375, 1.0
          %v4431 = vadd.f32 %v4377, 1.0
          %v4432 = vadd.f32 %v4379, 1.0
          %v4433 = vadd.f32 %v4381, 1.0
          %v4434 = vadd.f32 %v4383, 1.0
          %v4435 = vadd.f32 %v4385, 1.0
          %v4436 = vadd.f32 %v4387, 1.0
          %v4437 = vadd.f32 %v4389, 1.0
          %v4438 = vadd.f32 %v4391, 1.0
          %v4439 = vadd.f32 %v4393, 1.0
          %v4440 = vadd.f32 %v4395, 1.0
          %v4441 = vadd.f32 %v4397, 1.0
          %v4442 = vadd.f32 %v4399, 1.0
          %v4443 = vadd.f32 %v4401, 1.0
          %v4444 = vadd.f32 %v4403, 1.0
          %v4445 = vadd.f32 %v4405, 1.0
          %v4446 = vadd.f32 %v4407, 1.0
          %v4447 = vadd.f32 %v4409, 1.0
          %v4448 = vadd.f32 %v4411, 1.0
          %v4449 = vadd.f32 %v4413, 1.0
          %v4450 = vadd.f32 %v4415, 1.0
          %v4451 = vadd.f32 %v4417, 1.0
          %v4452 = vadd.f32 %v4419, 1.0
          %v4453 = vadd.f32 %v4421, 1.0
          %v4454 = vrcp.pop %v4422
          %v4455 = vmul.f32 1.0, %v4454
          %v4456 = vrcp.pop %v4423
          %v4457 = vmul.f32 1.0, %v4456
          %v4458 = vrcp.pop %v4424
          %v4459 = vmul.f32 1.0, %v4458
          %v4460 = vrcp.pop %v4425
          %v4461 = vmul.f32 1.0, %v4460
          %v4462 = vrcp.pop %v4426
          %v4463 = vmul.f32 1.0, %v4462
          %v4464 = vrcp.pop %v4427
          %v4465 = vmul.f32 1.0, %v4464
          %v4466 = vrcp.pop %v4428
          %v4467 = vmul.f32 1.0, %v4466
          %v4468 = vrcp.pop %v4429
          %v4469 = vmul.f32 1.0, %v4468
          %v4470 = vrcp.pop %v4430
          %v4471 = vmul.f32 1.0, %v4470
          %v4472 = vrcp.pop %v4431
          %v4473 = vmul.f32 1.0, %v4472
          %v4474 = vrcp.pop %v4432
          %v4475 = vmul.f32 1.0, %v4474
          %v4476 = vrcp.pop %v4433
          %v4477 = vmul.f32 1.0, %v4476
          %v4478 = vrcp.pop %v4434
          %v4479 = vmul.f32 1.0, %v4478
          %v4480 = vrcp.pop %v4435
          %v4481 = vmul.f32 1.0, %v4480
          %v4482 = vrcp.pop %v4436
          %v4483 = vmul.f32 1.0, %v4482
          %v4484 = vrcp.pop %v4437
          %v4485 = vmul.f32 1.0, %v4484
          %v4486 = vrcp.pop %v4438
          %v4487 = vmul.f32 1.0, %v4486
          %v4488 = vrcp.pop %v4439
          %v4489 = vmul.f32 1.0, %v4488
          %v4490 = vrcp.pop %v4440
          %v4491 = vmul.f32 1.0, %v4490
          %v4492 = vrcp.pop %v4441
          %v4493 = vmul.f32 1.0, %v4492
          %v4494 = vrcp.pop %v4442
          %v4495 = vmul.f32 1.0, %v4494
          %v4496 = vrcp.pop %v4443
          %v4497 = vmul.f32 1.0, %v4496
          %v4498 = vrcp.pop %v4444
          %v4499 = vmul.f32 1.0, %v4498
          %v4500 = vrcp.pop %v4445
          %v4501 = vmul.f32 1.0, %v4500
          %v4502 = vrcp.pop %v4446
          %v4503 = vmul.f32 1.0, %v4502
          %v4504 = vrcp.pop %v4447
          %v4505 = vmul.f32 1.0, %v4504
          %v4506 = vrcp.pop %v4448
          %v4507 = vmul.f32 1.0, %v4506
          %v4508 = vrcp.pop %v4449
          %v4509 = vmul.f32 1.0, %v4508
          %v4510 = vrcp.pop %v4450
          %v4511 = vmul.f32 1.0, %v4510
          %v4512 = vrcp.pop %v4451
          %v4513 = vmul.f32 1.0, %v4512
          %v4514 = vrcp.pop %v4452
          %v4515 = vmul.f32 1.0, %v4514
          %v4516 = vrcp.pop %v4453
          %v4517 = vmul.f32 1.0, %v4516
          %v4518 = vmul.f32 %v4200, %v4455
          %v4519 = vmul.f32 %v4203, %v4457
          %v4520 = vmul.f32 %v4208, %v4459
          %v4521 = vmul.f32 %v4211, %v4461
          %v4522 = vmul.f32 %v4216, %v4463
          %v4523 = vmul.f32 %v4219, %v4465
          %v4524 = vmul.f32 %v4224, %v4467
          %v4525 = vmul.f32 %v4227, %v4469
          %v4526 = vmul.f32 %v4232, %v4471
          %v4527 = vmul.f32 %v4235, %v4473
          %v4528 = vmul.f32 %v4240, %v4475
          %v4529 = vmul.f32 %v4243, %v4477
          %v4530 = vmul.f32 %v4248, %v4479
          %v4531 = vmul.f32 %v4251, %v4481
          %v4532 = vmul.f32 %v4256, %v4483
          %v4533 = vmul.f32 %v4259, %v4485
          %v4534 = vmul.f32 %v4264, %v4487
          %v4535 = vmul.f32 %v4267, %v4489
          %v4536 = vmul.f32 %v4272, %v4491
          %v4537 = vmul.f32 %v4275, %v4493
          %v4538 = vmul.f32 %v4280, %v4495
          %v4539 = vmul.f32 %v4283, %v4497
          %v4540 = vmul.f32 %v4288, %v4499
          %v4541 = vmul.f32 %v4291, %v4501
          %v4542 = vmul.f32 %v4296, %v4503
          %v4543 = vmul.f32 %v4299, %v4505
          %v4544 = vmul.f32 %v4304, %v4507
          %v4545 = vmul.f32 %v4307, %v4509
          %v4546 = vmul.f32 %v4312, %v4511
          %v4547 = vmul.f32 %v4315, %v4513
          %v4548 = vmul.f32 %v4320, %v4515
          %v4549 = vmul.f32 %v4323, %v4517
          %4550 = vst [vmem:[%s394 + $0x1] sm:$0xff] %v4518
          %4551 = vst [vmem:[%s394 + $0x9] sm:$0xff] %v4519
          %4552 = vst [vmem:[%s394 + $0x19] sm:$0xff] %v4520
          %4553 = vst [vmem:[%s394 + $0x21] sm:$0xff] %v4521
          %4554 = vst [vmem:[%s394 + $0x31] sm:$0xff] %v4522
          %4555 = vst [vmem:[%s394 + $0x39] sm:$0xff] %v4523
          %4556 = vst [vmem:[%s394 + $0x49] sm:$0xff] %v4524
          %4557 = vst [vmem:[%s394 + $0x51] sm:$0xff] %v4525
          %4558 = vst [vmem:[%s394 + $0x61] sm:$0xff] %v4526
          %4559 = vst [vmem:[%s394 + $0x69] sm:$0xff] %v4527
          %4560 = vst [vmem:[%s394 + $0x79] sm:$0xff] %v4528
          %4561 = vst [vmem:[%s394 + $0x81] sm:$0xff] %v4529
          %4562 = vst [vmem:[%s394 + $0x91] sm:$0xff] %v4530
          %4563 = vst [vmem:[%s394 + $0x99] sm:$0xff] %v4531
          %4564 = vst [vmem:[%s394 + $0xa9] sm:$0xff] %v4532
          %4565 = vst [vmem:[%s394 + $0xb1] sm:$0xff] %v4533
          %4566 = vst [vmem:[%s394 + $0xc1] sm:$0xff] %v4534
          %4567 = vst [vmem:[%s394 + $0xc9] sm:$0xff] %v4535
          %4568 = vst [vmem:[%s394 + $0xd9] sm:$0xff] %v4536
          %4569 = vst [vmem:[%s394 + $0xe1] sm:$0xff] %v4537
          %4570 = vst [vmem:[%s394 + $0xf1] sm:$0xff] %v4538
          %4571 = vst [vmem:[%s394 + $0xf9] sm:$0xff] %v4539
          %4572 = vst [vmem:[%s394 + $0x109] sm:$0xff] %v4540
          %4573 = vst [vmem:[%s394 + $0x111] sm:$0xff] %v4541
          %4574 = vst [vmem:[%s394 + $0x121] sm:$0xff] %v4542
          %4575 = vst [vmem:[%s394 + $0x129] sm:$0xff] %v4543
          %4576 = vst [vmem:[%s394 + $0x139] sm:$0xff] %v4544
          %4577 = vst [vmem:[%s394 + $0x141] sm:$0xff] %v4545
          %4578 = vst [vmem:[%s394 + $0x151] sm:$0xff] %v4546
          %4579 = vst [vmem:[%s394 + $0x159] sm:$0xff] %v4547
          %4580 = vst [vmem:[%s394 + $0x169] sm:$0xff] %v4548
          %4581 = vst [vmem:[%s394 + $0x171] sm:$0xff] %v4549
        $region64: #{tpu_custom_call.1} parent=39 // pred_fallthru
          _
        %s4582 = smul.u32 %s29, 8
        %s4583 = smul.u32 %s4582, 24
        %s4584 = scalar_lea.vmem [#allocation2], %s4583
        %v4585 = vld [vmem:[%s4584] sm:$0xff]
        %v4586 = vld [vmem:[%s4584 + $0x8] sm:$0xff]
        %v4587 = vld [vmem:[%s4584 + $0x18] sm:$0xff]
        %v4588 = vld [vmem:[%s4584 + $0x20] sm:$0xff]
        %v4589 = vld [vmem:[%s4584 + $0x30] sm:$0xff]
        %v4590 = vld [vmem:[%s4584 + $0x38] sm:$0xff]
        %v4591 = vld [vmem:[%s4584 + $0x48] sm:$0xff]
        %v4592 = vld [vmem:[%s4584 + $0x50] sm:$0xff]
        %v4593 = vld [vmem:[%s4584 + $0x60] sm:$0xff]
        %v4594 = vld [vmem:[%s4584 + $0x68] sm:$0xff]
        %v4595 = vld [vmem:[%s4584 + $0x78] sm:$0xff]
        %v4596 = vld [vmem:[%s4584 + $0x80] sm:$0xff]
        %v4597 = vld [vmem:[%s4584 + $0x90] sm:$0xff]
        %v4598 = vld [vmem:[%s4584 + $0x98] sm:$0xff]
        %v4599 = vld [vmem:[%s4584 + $0xa8] sm:$0xff]
        %v4600 = vld [vmem:[%s4584 + $0xb0] sm:$0xff]
        %v4601 = vpack.c.bf16 %v4586, %v4585
        %v4602 = vpack.c.bf16 %v4588, %v4587
        %v4603 = vpack.c.bf16 %v4590, %v4589
        %v4604 = vpack.c.bf16 %v4592, %v4591
        %v4605 = vpack.c.bf16 %v4594, %v4593
        %v4606 = vpack.c.bf16 %v4596, %v4595
        %v4607 = vpack.c.bf16 %v4598, %v4597
        %v4608 = vpack.c.bf16 %v4600, %v4599
        %v4609 = vld [vmem:[%s4584 + $0x1] sm:$0xff]
        %v4610 = vld [vmem:[%s4584 + $0x9] sm:$0xff]
        %v4611 = vld [vmem:[%s4584 + $0x19] sm:$0xff]
        %v4612 = vld [vmem:[%s4584 + $0x21] sm:$0xff]
        %v4613 = vld [vmem:[%s4584 + $0x31] sm:$0xff]
        %v4614 = vld [vmem:[%s4584 + $0x39] sm:$0xff]
        %v4615 = vld [vmem:[%s4584 + $0x49] sm:$0xff]
        %v4616 = vld [vmem:[%s4584 + $0x51] sm:$0xff]
        %v4617 = vld [vmem:[%s4584 + $0x61] sm:$0xff]
        %v4618 = vld [vmem:[%s4584 + $0x69] sm:$0xff]
        %v4619 = vld [vmem:[%s4584 + $0x79] sm:$0xff]
        %v4620 = vld [vmem:[%s4584 + $0x81] sm:$0xff]
        %v4621 = vld [vmem:[%s4584 + $0x91] sm:$0xff]
        %v4622 = vld [vmem:[%s4584 + $0x99] sm:$0xff]
        %v4623 = vld [vmem:[%s4584 + $0xa9] sm:$0xff]
        %v4624 = vld [vmem:[%s4584 + $0xb1] sm:$0xff]
        %v4625 = vpack.c.bf16 %v4610, %v4609
        %v4626 = vpack.c.bf16 %v4612, %v4611
        %v4627 = vpack.c.bf16 %v4614, %v4613
        %v4628 = vpack.c.bf16 %v4616, %v4615
        %v4629 = vpack.c.bf16 %v4618, %v4617
        %v4630 = vpack.c.bf16 %v4620, %v4619
        %v4631 = vpack.c.bf16 %v4622, %v4621
        %v4632 = vpack.c.bf16 %v4624, %v4623
        %v4633 = vld [vmem:[%s4584 + $0x2] sm:$0xff]
        %v4634 = vld [vmem:[%s4584 + $0xa] sm:$0xff]
        %v4635 = vld [vmem:[%s4584 + $0x1a] sm:$0xff]
        %v4636 = vld [vmem:[%s4584 + $0x22] sm:$0xff]
        %v4637 = vld [vmem:[%s4584 + $0x32] sm:$0xff]
        %v4638 = vld [vmem:[%s4584 + $0x3a] sm:$0xff]
        %v4639 = vld [vmem:[%s4584 + $0x4a] sm:$0xff]
        %v4640 = vld [vmem:[%s4584 + $0x52] sm:$0xff]
        %v4641 = vld [vmem:[%s4584 + $0x62] sm:$0xff]
        %v4642 = vld [vmem:[%s4584 + $0x6a] sm:$0xff]
        %v4643 = vld [vmem:[%s4584 + $0x7a] sm:$0xff]
        %v4644 = vld [vmem:[%s4584 + $0x82] sm:$0xff]
        %v4645 = vld [vmem:[%s4584 + $0x92] sm:$0xff]
        %v4646 = vld [vmem:[%s4584 + $0x9a] sm:$0xff]
        %v4647 = vld [vmem:[%s4584 + $0xaa] sm:$0xff]
        %v4648 = vld [vmem:[%s4584 + $0xb2] sm:$0xff]
        %v4649 = vpack.c.bf16 %v4634, %v4633
        %v4650 = vpack.c.bf16 %v4636, %v4635
        %v4651 = vpack.c.bf16 %v4638, %v4637
        %v4652 = vpack.c.bf16 %v4640, %v4639
        %v4653 = vpack.c.bf16 %v4642, %v4641
        %v4654 = vpack.c.bf16 %v4644, %v4643
        %v4655 = vpack.c.bf16 %v4646, %v4645
        %v4656 = vpack.c.bf16 %v4648, %v4647
        %s4657 = sadd.s32 %s4582, 1
        %s4658 = smul.u32 %s4657, 24
        %s4659 = scalar_lea.vmem [#allocation2], %s4658
        %v4660 = vld [vmem:[%s4659] sm:$0xff]
        %v4661 = vld [vmem:[%s4659 + $0x8] sm:$0xff]
        %v4662 = vld [vmem:[%s4659 + $0x18] sm:$0xff]
        %v4663 = vld [vmem:[%s4659 + $0x20] sm:$0xff]
        %v4664 = vld [vmem:[%s4659 + $0x30] sm:$0xff]
        %v4665 = vld [vmem:[%s4659 + $0x38] sm:$0xff]
        %v4666 = vld [vmem:[%s4659 + $0x48] sm:$0xff]
        %v4667 = vld [vmem:[%s4659 + $0x50] sm:$0xff]
        %v4668 = vld [vmem:[%s4659 + $0x60] sm:$0xff]
        %v4669 = vld [vmem:[%s4659 + $0x68] sm:$0xff]
        %v4670 = vld [vmem:[%s4659 + $0x78] sm:$0xff]
        %v4671 = vld [vmem:[%s4659 + $0x80] sm:$0xff]
        %v4672 = vld [vmem:[%s4659 + $0x90] sm:$0xff]
        %v4673 = vld [vmem:[%s4659 + $0x98] sm:$0xff]
        %v4674 = vld [vmem:[%s4659 + $0xa8] sm:$0xff]
        %v4675 = vld [vmem:[%s4659 + $0xb0] sm:$0xff]
        %v4676 = vpack.c.bf16 %v4661, %v4660
        %v4677 = vpack.c.bf16 %v4663, %v4662
        %v4678 = vpack.c.bf16 %v4665, %v4664
        %v4679 = vpack.c.bf16 %v4667, %v4666
        %v4680 = vpack.c.bf16 %v4669, %v4668
        %v4681 = vpack.c.bf16 %v4671, %v4670
        %v4682 = vpack.c.bf16 %v4673, %v4672
        %v4683 = vpack.c.bf16 %v4675, %v4674
        %v4684 = vld [vmem:[%s4659 + $0x1] sm:$0xff]
        %v4685 = vld [vmem:[%s4659 + $0x9] sm:$0xff]
        %v4686 = vld [vmem:[%s4659 + $0x19] sm:$0xff]
        %v4687 = vld [vmem:[%s4659 + $0x21] sm:$0xff]
        %v4688 = vld [vmem:[%s4659 + $0x31] sm:$0xff]
        %v4689 = vld [vmem:[%s4659 + $0x39] sm:$0xff]
        %v4690 = vld [vmem:[%s4659 + $0x49] sm:$0xff]
        %v4691 = vld [vmem:[%s4659 + $0x51] sm:$0xff]
        %v4692 = vld [vmem:[%s4659 + $0x61] sm:$0xff]
        %v4693 = vld [vmem:[%s4659 + $0x69] sm:$0xff]
        %v4694 = vld [vmem:[%s4659 + $0x79] sm:$0xff]
        %v4695 = vld [vmem:[%s4659 + $0x81] sm:$0xff]
        %v4696 = vld [vmem:[%s4659 + $0x91] sm:$0xff]
        %v4697 = vld [vmem:[%s4659 + $0x99] sm:$0xff]
        %v4698 = vld [vmem:[%s4659 + $0xa9] sm:$0xff]
        %v4699 = vld [vmem:[%s4659 + $0xb1] sm:$0xff]
        %v4700 = vpack.c.bf16 %v4685, %v4684
        %v4701 = vpack.c.bf16 %v4687, %v4686
        %v4702 = vpack.c.bf16 %v4689, %v4688
        %v4703 = vpack.c.bf16 %v4691, %v4690
        %v4704 = vpack.c.bf16 %v4693, %v4692
        %v4705 = vpack.c.bf16 %v4695, %v4694
        %v4706 = vpack.c.bf16 %v4697, %v4696
        %v4707 = vpack.c.bf16 %v4699, %v4698
        %v4708 = vld [vmem:[%s4659 + $0x2] sm:$0xff]
        %v4709 = vld [vmem:[%s4659 + $0xa] sm:$0xff]
        %v4710 = vld [vmem:[%s4659 + $0x1a] sm:$0xff]
        %v4711 = vld [vmem:[%s4659 + $0x22] sm:$0xff]
        %v4712 = vld [vmem:[%s4659 + $0x32] sm:$0xff]
        %v4713 = vld [vmem:[%s4659 + $0x3a] sm:$0xff]
        %v4714 = vld [vmem:[%s4659 + $0x4a] sm:$0xff]
        %v4715 = vld [vmem:[%s4659 + $0x52] sm:$0xff]
        %v4716 = vld [vmem:[%s4659 + $0x62] sm:$0xff]
        %v4717 = vld [vmem:[%s4659 + $0x6a] sm:$0xff]
        %v4718 = vld [vmem:[%s4659 + $0x7a] sm:$0xff]
        %v4719 = vld [vmem:[%s4659 + $0x82] sm:$0xff]
        %v4720 = vld [vmem:[%s4659 + $0x92] sm:$0xff]
        %v4721 = vld [vmem:[%s4659 + $0x9a] sm:$0xff]
        %v4722 = vld [vmem:[%s4659 + $0xaa] sm:$0xff]
        %v4723 = vld [vmem:[%s4659 + $0xb2] sm:$0xff]
        %v4724 = vpack.c.bf16 %v4709, %v4708
        %v4725 = vpack.c.bf16 %v4711, %v4710
        %v4726 = vpack.c.bf16 %v4713, %v4712
        %v4727 = vpack.c.bf16 %v4715, %v4714
        %v4728 = vpack.c.bf16 %v4717, %v4716
        %v4729 = vpack.c.bf16 %v4719, %v4718
        %v4730 = vpack.c.bf16 %v4721, %v4720
        %v4731 = vpack.c.bf16 %v4723, %v4722
        %s4732 = sadd.s32 %s4582, 2
        %s4733 = smul.u32 %s4732, 24
        %s4734 = scalar_lea.vmem [#allocation2], %s4733
        %v4735 = vld [vmem:[%s4734] sm:$0xff]
        %v4736 = vld [vmem:[%s4734 + $0x8] sm:$0xff]
        %v4737 = vld [vmem:[%s4734 + $0x18] sm:$0xff]
        %v4738 = vld [vmem:[%s4734 + $0x20] sm:$0xff]
        %v4739 = vld [vmem:[%s4734 + $0x30] sm:$0xff]
        %v4740 = vld [vmem:[%s4734 + $0x38] sm:$0xff]
        %v4741 = vld [vmem:[%s4734 + $0x48] sm:$0xff]
        %v4742 = vld [vmem:[%s4734 + $0x50] sm:$0xff]
        %v4743 = vld [vmem:[%s4734 + $0x60] sm:$0xff]
        %v4744 = vld [vmem:[%s4734 + $0x68] sm:$0xff]
        %v4745 = vld [vmem:[%s4734 + $0x78] sm:$0xff]
        %v4746 = vld [vmem:[%s4734 + $0x80] sm:$0xff]
        %v4747 = vld [vmem:[%s4734 + $0x90] sm:$0xff]
        %v4748 = vld [vmem:[%s4734 + $0x98] sm:$0xff]
        %v4749 = vld [vmem:[%s4734 + $0xa8] sm:$0xff]
        %v4750 = vld [vmem:[%s4734 + $0xb0] sm:$0xff]
        %v4751 = vpack.c.bf16 %v4736, %v4735
        %v4752 = vpack.c.bf16 %v4738, %v4737
        %v4753 = vpack.c.bf16 %v4740, %v4739
        %v4754 = vpack.c.bf16 %v4742, %v4741
        %v4755 = vpack.c.bf16 %v4744, %v4743
        %v4756 = vpack.c.bf16 %v4746, %v4745
        %v4757 = vpack.c.bf16 %v4748, %v4747
        %v4758 = vpack.c.bf16 %v4750, %v4749
        %v4759 = vld [vmem:[%s4734 + $0x1] sm:$0xff]
        %v4760 = vld [vmem:[%s4734 + $0x9] sm:$0xff]
        %v4761 = vld [vmem:[%s4734 + $0x19] sm:$0xff]
        %v4762 = vld [vmem:[%s4734 + $0x21] sm:$0xff]
        %v4763 = vld [vmem:[%s4734 + $0x31] sm:$0xff]
        %v4764 = vld [vmem:[%s4734 + $0x39] sm:$0xff]
        %v4765 = vld [vmem:[%s4734 + $0x49] sm:$0xff]
        %v4766 = vld [vmem:[%s4734 + $0x51] sm:$0xff]
        %v4767 = vld [vmem:[%s4734 + $0x61] sm:$0xff]
        %v4768 = vld [vmem:[%s4734 + $0x69] sm:$0xff]
        %v4769 = vld [vmem:[%s4734 + $0x79] sm:$0xff]
        %v4770 = vld [vmem:[%s4734 + $0x81] sm:$0xff]
        %v4771 = vld [vmem:[%s4734 + $0x91] sm:$0xff]
        %v4772 = vld [vmem:[%s4734 + $0x99] sm:$0xff]
        %v4773 = vld [vmem:[%s4734 + $0xa9] sm:$0xff]
        %v4774 = vld [vmem:[%s4734 + $0xb1] sm:$0xff]
        %v4775 = vpack.c.bf16 %v4760, %v4759
        %v4776 = vpack.c.bf16 %v4762, %v4761
        %v4777 = vpack.c.bf16 %v4764, %v4763
        %v4778 = vpack.c.bf16 %v4766, %v4765
        %v4779 = vpack.c.bf16 %v4768, %v4767
        %v4780 = vpack.c.bf16 %v4770, %v4769
        %v4781 = vpack.c.bf16 %v4772, %v4771
        %v4782 = vpack.c.bf16 %v4774, %v4773
        %v4783 = vld [vmem:[%s4734 + $0x2] sm:$0xff]
        %v4784 = vld [vmem:[%s4734 + $0xa] sm:$0xff]
        %v4785 = vld [vmem:[%s4734 + $0x1a] sm:$0xff]
        %v4786 = vld [vmem:[%s4734 + $0x22] sm:$0xff]
        %v4787 = vld [vmem:[%s4734 + $0x32] sm:$0xff]
        %v4788 = vld [vmem:[%s4734 + $0x3a] sm:$0xff]
        %v4789 = vld [vmem:[%s4734 + $0x4a] sm:$0xff]
        %v4790 = vld [vmem:[%s4734 + $0x52] sm:$0xff]
        %v4791 = vld [vmem:[%s4734 + $0x62] sm:$0xff]
        %v4792 = vld [vmem:[%s4734 + $0x6a] sm:$0xff]
        %v4793 = vld [vmem:[%s4734 + $0x7a] sm:$0xff]
        %v4794 = vld [vmem:[%s4734 + $0x82] sm:$0xff]
        %v4795 = vld [vmem:[%s4734 + $0x92] sm:$0xff]
        %v4796 = vld [vmem:[%s4734 + $0x9a] sm:$0xff]
        %v4797 = vld [vmem:[%s4734 + $0xaa] sm:$0xff]
        %v4798 = vld [vmem:[%s4734 + $0xb2] sm:$0xff]
        %v4799 = vpack.c.bf16 %v4784, %v4783
        %v4800 = vpack.c.bf16 %v4786, %v4785
        %v4801 = vpack.c.bf16 %v4788, %v4787
        %v4802 = vpack.c.bf16 %v4790, %v4789
        %v4803 = vpack.c.bf16 %v4792, %v4791
        %v4804 = vpack.c.bf16 %v4794, %v4793
        %v4805 = vpack.c.bf16 %v4796, %v4795
        %v4806 = vpack.c.bf16 %v4798, %v4797
        %v4807 = vld [vmem:[#allocation9] sm:$0xf]
        %v4808 = vld [vmem:[#allocation9 + $0x4] sm:$0xf]
        %v4809 = vld [vmem:[#allocation9 + $0x8] sm:$0xf]
        %v4810 = vld [vmem:[#allocation9 + $0xc] sm:$0xf]
        %v4811 = vld [vmem:[#allocation9 + $0x10] sm:$0xf]
        %v4812 = vld [vmem:[#allocation9 + $0x14] sm:$0xf]
        %v4813 = vld [vmem:[#allocation9 + $0x18] sm:$0xf]
        %v4814 = vld [vmem:[#allocation9 + $0x1c] sm:$0xf]
        %v4815 = vld [vmem:[#allocation9 + $0x20] sm:$0xf]
        %v4816 = vld [vmem:[#allocation9 + $0x24] sm:$0xf]
        %v4817 = vld [vmem:[#allocation9 + $0x28] sm:$0xf]
        %v4818 = vld [vmem:[#allocation9 + $0x2c] sm:$0xf]
        %v4819 = vld [vmem:[#allocation9 + $0x30] sm:$0xf]
        %v4820 = vld [vmem:[#allocation9 + $0x34] sm:$0xf]
        %v4821 = vld [vmem:[#allocation9 + $0x38] sm:$0xf]
        %v4822 = vld [vmem:[#allocation9 + $0x3c] sm:$0xf]
        %v4823 = vld [vmem:[#allocation9 + $0x40] sm:$0xf]
        %v4824 = vld [vmem:[#allocation9 + $0x44] sm:$0xf]
        %v4825 = vld [vmem:[#allocation9 + $0x48] sm:$0xf]
        %v4826 = vld [vmem:[#allocation9 + $0x4c] sm:$0xf]
        %v4827 = vld [vmem:[#allocation9 + $0x50] sm:$0xf]
        %v4828 = vld [vmem:[#allocation9 + $0x54] sm:$0xf]
        %v4829 = vld [vmem:[#allocation9 + $0x58] sm:$0xf]
        %v4830 = vld [vmem:[#allocation9 + $0x5c] sm:$0xf]
        %v4831 = vld [vmem:[#allocation9 + $0x60] sm:$0xf]
        %v4832 = vld [vmem:[#allocation9 + $0x64] sm:$0xf]
        %v4833 = vld [vmem:[#allocation9 + $0x68] sm:$0xf]
        %v4834 = vld [vmem:[#allocation9 + $0x6c] sm:$0xf]
        %v4835 = vld [vmem:[#allocation9 + $0x70] sm:$0xf]
        %v4836 = vld [vmem:[#allocation9 + $0x74] sm:$0xf]
        %v4837 = vld [vmem:[#allocation9 + $0x78] sm:$0xf]
        %v4838 = vld [vmem:[#allocation9 + $0x7c] sm:$0xf]
        %v4839 = vld [vmem:[#allocation9 + $0x80] sm:$0xf]
        %v4840 = vld [vmem:[#allocation9 + $0x84] sm:$0xf]
        %v4841 = vld [vmem:[#allocation9 + $0x88] sm:$0xf]
        %v4842 = vld [vmem:[#allocation9 + $0x8c] sm:$0xf]
        %v4843 = vld [vmem:[#allocation9 + $0x90] sm:$0xf]
        %v4844 = vld [vmem:[#allocation9 + $0x94] sm:$0xf]
        %v4845 = vld [vmem:[#allocation9 + $0x98] sm:$0xf]
        %v4846 = vld [vmem:[#allocation9 + $0x9c] sm:$0xf]
        %v4847 = vld [vmem:[#allocation9 + $0xa0] sm:$0xf]
        %v4848 = vld [vmem:[#allocation9 + $0xa4] sm:$0xf]
        %v4849 = vld [vmem:[#allocation9 + $0xa8] sm:$0xf]
        %v4850 = vld [vmem:[#allocation9 + $0xac] sm:$0xf]
        %v4851 = vld [vmem:[#allocation9 + $0xb0] sm:$0xf]
        %v4852 = vld [vmem:[#allocation9 + $0xb4] sm:$0xf]
        %v4853 = vld [vmem:[#allocation9 + $0xb8] sm:$0xf]
        %v4854 = vld [vmem:[#allocation9 + $0xbc] sm:$0xf]
        %v4855 = vld [vmem:[#allocation9 + $0xc0] sm:$0xf]
        %v4856 = vld [vmem:[#allocation9 + $0xc4] sm:$0xf]
        %v4857 = vld [vmem:[#allocation9 + $0xc8] sm:$0xf]
        %v4858 = vld [vmem:[#allocation9 + $0xcc] sm:$0xf]
        %v4859 = vld [vmem:[#allocation9 + $0xd0] sm:$0xf]
        %v4860 = vld [vmem:[#allocation9 + $0xd4] sm:$0xf]
        %v4861 = vld [vmem:[#allocation9 + $0xd8] sm:$0xf]
        %v4862 = vld [vmem:[#allocation9 + $0xdc] sm:$0xf]
        %v4863 = vld [vmem:[#allocation9 + $0xe0] sm:$0xf]
        %v4864 = vld [vmem:[#allocation9 + $0xe4] sm:$0xf]
        %v4865 = vld [vmem:[#allocation9 + $0xe8] sm:$0xf]
        %v4866 = vld [vmem:[#allocation9 + $0xec] sm:$0xf]
        %v4867 = vld [vmem:[#allocation9 + $0xf0] sm:$0xf]
        %v4868 = vld [vmem:[#allocation9 + $0xf4] sm:$0xf]
        %v4869 = vld [vmem:[#allocation9 + $0xf8] sm:$0xf]
        %v4870 = vld [vmem:[#allocation9 + $0xfc] sm:$0xf]
        %v4871 = vld [vmem:[#allocation9 + $0x100] sm:$0xf]
        %v4872 = vld [vmem:[#allocation9 + $0x104] sm:$0xf]
        %v4873 = vld [vmem:[#allocation9 + $0x108] sm:$0xf]
        %v4874 = vld [vmem:[#allocation9 + $0x10c] sm:$0xf]
        %v4875 = vld [vmem:[#allocation9 + $0x110] sm:$0xf]
        %v4876 = vld [vmem:[#allocation9 + $0x114] sm:$0xf]
        %v4877 = vld [vmem:[#allocation9 + $0x118] sm:$0xf]
        %v4878 = vld [vmem:[#allocation9 + $0x11c] sm:$0xf]
        %v4879 = vld [vmem:[#allocation9 + $0x120] sm:$0xf]
        %v4880 = vld [vmem:[#allocation9 + $0x124] sm:$0xf]
        %v4881 = vld [vmem:[#allocation9 + $0x128] sm:$0xf]
        %v4882 = vld [vmem:[#allocation9 + $0x12c] sm:$0xf]
        %v4883 = vld [vmem:[#allocation9 + $0x130] sm:$0xf]
        %v4884 = vld [vmem:[#allocation9 + $0x134] sm:$0xf]
        %v4885 = vld [vmem:[#allocation9 + $0x138] sm:$0xf]
        %v4886 = vld [vmem:[#allocation9 + $0x13c] sm:$0xf]
        %v4887 = vld [vmem:[#allocation9 + $0x140] sm:$0xf]
        %v4888 = vld [vmem:[#allocation9 + $0x144] sm:$0xf]
        %v4889 = vld [vmem:[#allocation9 + $0x148] sm:$0xf]
        %v4890 = vld [vmem:[#allocation9 + $0x14c] sm:$0xf]
        %v4891 = vld [vmem:[#allocation9 + $0x150] sm:$0xf]
        %v4892 = vld [vmem:[#allocation9 + $0x154] sm:$0xf]
        %v4893 = vld [vmem:[#allocation9 + $0x158] sm:$0xf]
        %v4894 = vld [vmem:[#allocation9 + $0x15c] sm:$0xf]
        %v4895 = vld [vmem:[#allocation9 + $0x160] sm:$0xf]
        %v4896 = vld [vmem:[#allocation9 + $0x164] sm:$0xf]
        %v4897 = vld [vmem:[#allocation9 + $0x168] sm:$0xf]
        %v4898 = vld [vmem:[#allocation9 + $0x16c] sm:$0xf]
        %v4899 = vld [vmem:[#allocation9 + $0x170] sm:$0xf]
        %v4900 = vld [vmem:[#allocation9 + $0x174] sm:$0xf]
        %v4901 = vld [vmem:[#allocation9 + $0x178] sm:$0xf]
        %v4902 = vld [vmem:[#allocation9 + $0x17c] sm:$0xf]
        %v4903 = vld [vmem:[#allocation9 + $0x180] sm:$0xf]
        %v4904 = vld [vmem:[#allocation9 + $0x184] sm:$0xf]
        %v4905 = vld [vmem:[#allocation9 + $0x188] sm:$0xf]
        %v4906 = vld [vmem:[#allocation9 + $0x18c] sm:$0xf]
        %v4907 = vld [vmem:[#allocation9 + $0x190] sm:$0xf]
        %v4908 = vld [vmem:[#allocation9 + $0x194] sm:$0xf]
        %v4909 = vld [vmem:[#allocation9 + $0x198] sm:$0xf]
        %v4910 = vld [vmem:[#allocation9 + $0x19c] sm:$0xf]
        %v4911 = vld [vmem:[#allocation9 + $0x1a0] sm:$0xf]
        %v4912 = vld [vmem:[#allocation9 + $0x1a4] sm:$0xf]
        %v4913 = vld [vmem:[#allocation9 + $0x1a8] sm:$0xf]
        %v4914 = vld [vmem:[#allocation9 + $0x1ac] sm:$0xf]
        %v4915 = vld [vmem:[#allocation9 + $0x1b0] sm:$0xf]
        %v4916 = vld [vmem:[#allocation9 + $0x1b4] sm:$0xf]
        %v4917 = vld [vmem:[#allocation9 + $0x1b8] sm:$0xf]
        %v4918 = vld [vmem:[#allocation9 + $0x1bc] sm:$0xf]
        %v4919 = vld [vmem:[#allocation9 + $0x1c0] sm:$0xf]
        %v4920 = vld [vmem:[#allocation9 + $0x1c4] sm:$0xf]
        %v4921 = vld [vmem:[#allocation9 + $0x1c8] sm:$0xf]
        %v4922 = vld [vmem:[#allocation9 + $0x1cc] sm:$0xf]
        %v4923 = vld [vmem:[#allocation9 + $0x1d0] sm:$0xf]
        %v4924 = vld [vmem:[#allocation9 + $0x1d4] sm:$0xf]
        %v4925 = vld [vmem:[#allocation9 + $0x1d8] sm:$0xf]
        %v4926 = vld [vmem:[#allocation9 + $0x1dc] sm:$0xf]
        %v4927 = vld [vmem:[#allocation9 + $0x1e0] sm:$0xf]
        %v4928 = vld [vmem:[#allocation9 + $0x1e4] sm:$0xf]
        %v4929 = vld [vmem:[#allocation9 + $0x1e8] sm:$0xf]
        %v4930 = vld [vmem:[#allocation9 + $0x1ec] sm:$0xf]
        %v4931 = vld [vmem:[#allocation9 + $0x1f0] sm:$0xf]
        %v4932 = vld [vmem:[#allocation9 + $0x1f4] sm:$0xf]
        %v4933 = vld [vmem:[#allocation9 + $0x1f8] sm:$0xf]
        %v4934 = vld [vmem:[#allocation9 + $0x1fc] sm:$0xf]
        %v4935 = vld [vmem:[#allocation9 + $0x200] sm:$0xf]
        %v4936 = vld [vmem:[#allocation9 + $0x204] sm:$0xf]
        %v4937 = vld [vmem:[#allocation9 + $0x208] sm:$0xf]
        %v4938 = vld [vmem:[#allocation9 + $0x20c] sm:$0xf]
        %v4939 = vld [vmem:[#allocation9 + $0x210] sm:$0xf]
        %v4940 = vld [vmem:[#allocation9 + $0x214] sm:$0xf]
        %v4941 = vld [vmem:[#allocation9 + $0x218] sm:$0xf]
        %v4942 = vld [vmem:[#allocation9 + $0x21c] sm:$0xf]
        %v4943 = vld [vmem:[#allocation9 + $0x220] sm:$0xf]
        %v4944 = vld [vmem:[#allocation9 + $0x224] sm:$0xf]
        %v4945 = vld [vmem:[#allocation9 + $0x228] sm:$0xf]
        %v4946 = vld [vmem:[#allocation9 + $0x22c] sm:$0xf]
        %v4947 = vld [vmem:[#allocation9 + $0x230] sm:$0xf]
        %v4948 = vld [vmem:[#allocation9 + $0x234] sm:$0xf]
        %v4949 = vld [vmem:[#allocation9 + $0x238] sm:$0xf]
        %v4950 = vld [vmem:[#allocation9 + $0x23c] sm:$0xf]
        %v4951 = vld [vmem:[#allocation11] sm:$0x1]
        %v4953 = vlaneseq
        %v4954 = vshrl.u32 %v4953, 7
        %v4955 = vsub.s32 0, %v4954
        %v4956 = vrot.slane %v4951, %v4955
        %v5102 = vunpack.c.l.b16 %v4807
        %v5103 = vunpack.c.l.b16 %v4808
        %v5104 = vunpack.c.l.b16 %v4809
        %v5105 = vunpack.c.l.b16 %v4810
        %v5106 = vunpack.c.l.b16 %v4811
        %v5107 = vunpack.c.l.b16 %v4812
        %v5108 = vunpack.c.l.b16 %v4813
        %v5109 = vunpack.c.l.b16 %v4814
        %v5110 = vunpack.c.l.b16 %v4815
        %v5111 = vunpack.c.l.b16 %v4816
        %v5112 = vunpack.c.l.b16 %v4817
        %v5113 = vunpack.c.l.b16 %v4818
        %v5114 = vunpack.c.l.b16 %v4819
        %v5115 = vunpack.c.l.b16 %v4820
        %v5116 = vunpack.c.l.b16 %v4821
        %v5117 = vunpack.c.l.b16 %v4822
        %v5118 = vunpack.c.l.b16 %v4823
        %v5119 = vunpack.c.l.b16 %v4824
        %v5120 = vunpack.c.l.b16 %v4825
        %v5121 = vunpack.c.l.b16 %v4826
        %v5122 = vunpack.c.l.b16 %v4827
        %v5123 = vunpack.c.l.b16 %v4828
        %v5124 = vunpack.c.l.b16 %v4829
        %v5125 = vunpack.c.l.b16 %v4830
        %v5126 = vunpack.c.l.b16 %v4831
        %v5127 = vunpack.c.l.b16 %v4832
        %v5128 = vunpack.c.l.b16 %v4833
        %v5129 = vunpack.c.l.b16 %v4834
        %v5130 = vunpack.c.l.b16 %v4835
        %v5131 = vunpack.c.l.b16 %v4836
        %v5132 = vunpack.c.l.b16 %v4837
        %v5133 = vunpack.c.l.b16 %v4838
        %v5134 = vunpack.c.l.b16 %v4839
        %v5135 = vunpack.c.l.b16 %v4840
        %v5136 = vunpack.c.l.b16 %v4841
        %v5137 = vunpack.c.l.b16 %v4842
        %v5138 = vunpack.c.l.b16 %v4843
        %v5139 = vunpack.c.l.b16 %v4844
        %v5140 = vunpack.c.l.b16 %v4845
        %v5141 = vunpack.c.l.b16 %v4846
        %v5142 = vunpack.c.l.b16 %v4847
        %v5143 = vunpack.c.l.b16 %v4848
        %v5144 = vunpack.c.l.b16 %v4849
        %v5145 = vunpack.c.l.b16 %v4850
        %v5146 = vunpack.c.l.b16 %v4851
        %v5147 = vunpack.c.l.b16 %v4852
        %v5148 = vunpack.c.l.b16 %v4853
        %v5149 = vunpack.c.l.b16 %v4854
        %v5150 = vunpack.c.l.b16 %v4855
        %v5151 = vunpack.c.l.b16 %v4856
        %v5152 = vunpack.c.l.b16 %v4857
        %v5153 = vunpack.c.l.b16 %v4858
        %v5154 = vunpack.c.l.b16 %v4859
        %v5155 = vunpack.c.l.b16 %v4860
        %v5156 = vunpack.c.l.b16 %v4861
        %v5157 = vunpack.c.l.b16 %v4862
        %v5158 = vunpack.c.l.b16 %v4863
        %v5159 = vunpack.c.l.b16 %v4864
        %v5160 = vunpack.c.l.b16 %v4865
        %v5161 = vunpack.c.l.b16 %v4866
        %v5162 = vunpack.c.l.b16 %v4867
        %v5163 = vunpack.c.l.b16 %v4868
        %v5164 = vunpack.c.l.b16 %v4869
        %v5165 = vunpack.c.l.b16 %v4870
        %v5166 = vunpack.c.l.b16 %v4871
        %v5167 = vunpack.c.l.b16 %v4872
        %v5168 = vunpack.c.l.b16 %v4873
        %v5169 = vunpack.c.l.b16 %v4874
        %v5170 = vunpack.c.l.b16 %v4875
        %v5171 = vunpack.c.l.b16 %v4876
        %v5172 = vunpack.c.l.b16 %v4877
        %v5173 = vunpack.c.l.b16 %v4878
        %v5174 = vunpack.c.l.b16 %v4879
        %v5175 = vunpack.c.l.b16 %v4880
        %v5176 = vunpack.c.l.b16 %v4881
        %v5177 = vunpack.c.l.b16 %v4882
        %v5178 = vunpack.c.l.b16 %v4883
        %v5179 = vunpack.c.l.b16 %v4884
        %v5180 = vunpack.c.l.b16 %v4885
        %v5181 = vunpack.c.l.b16 %v4886
        %v5182 = vunpack.c.l.b16 %v4887
        %v5183 = vunpack.c.l.b16 %v4888
        %v5184 = vunpack.c.l.b16 %v4889
        %v5185 = vunpack.c.l.b16 %v4890
        %v5186 = vunpack.c.l.b16 %v4891
        %v5187 = vunpack.c.l.b16 %v4892
        %v5188 = vunpack.c.l.b16 %v4893
        %v5189 = vunpack.c.l.b16 %v4894
        %v5190 = vunpack.c.l.b16 %v4895
        %v5191 = vunpack.c.l.b16 %v4896
        %v5192 = vunpack.c.l.b16 %v4897
        %v5193 = vunpack.c.l.b16 %v4898
        %v5194 = vunpack.c.l.b16 %v4899
        %v5195 = vunpack.c.l.b16 %v4900
        %v5196 = vunpack.c.l.b16 %v4901
        %v5197 = vunpack.c.l.b16 %v4902
        %v5198 = vunpack.c.l.b16 %v4903
        %v5199 = vunpack.c.l.b16 %v4904
        %v5200 = vunpack.c.l.b16 %v4905
        %v5201 = vunpack.c.l.b16 %v4906
        %v5202 = vunpack.c.l.b16 %v4907
        %v5203 = vunpack.c.l.b16 %v4908
        %v5204 = vunpack.c.l.b16 %v4909
        %v5205 = vunpack.c.l.b16 %v4910
        %v5206 = vunpack.c.l.b16 %v4911
        %v5207 = vunpack.c.l.b16 %v4912
        %v5208 = vunpack.c.l.b16 %v4913
        %v5209 = vunpack.c.l.b16 %v4914
        %v5210 = vunpack.c.l.b16 %v4915
        %v5211 = vunpack.c.l.b16 %v4916
        %v5212 = vunpack.c.l.b16 %v4917
        %v5213 = vunpack.c.l.b16 %v4918
        %v5214 = vunpack.c.l.b16 %v4919
        %v5215 = vunpack.c.l.b16 %v4920
        %v5216 = vunpack.c.l.b16 %v4921
        %v5217 = vunpack.c.l.b16 %v4922
        %v5218 = vunpack.c.l.b16 %v4923
        %v5219 = vunpack.c.l.b16 %v4924
        %v5220 = vunpack.c.l.b16 %v4925
        %v5221 = vunpack.c.l.b16 %v4926
        %v5222 = vunpack.c.l.b16 %v4927
        %v5223 = vunpack.c.l.b16 %v4928
        %v5224 = vunpack.c.l.b16 %v4929
        %v5225 = vunpack.c.l.b16 %v4930
        %v5226 = vunpack.c.l.b16 %v4931
        %v5227 = vunpack.c.l.b16 %v4932
        %v5228 = vunpack.c.l.b16 %v4933
        %v5229 = vunpack.c.l.b16 %v4934
        %v5230 = vunpack.c.l.b16 %v4935
        %v5231 = vunpack.c.l.b16 %v4936
        %v5232 = vunpack.c.l.b16 %v4937
        %v5233 = vunpack.c.l.b16 %v4938
        %v5234 = vunpack.c.l.b16 %v4939
        %v5235 = vunpack.c.l.b16 %v4940
        %v5236 = vunpack.c.l.b16 %v4941
        %v5237 = vunpack.c.l.b16 %v4942
        %v5238 = vunpack.c.l.b16 %v4943
        %v5239 = vunpack.c.l.b16 %v4944
        %v5240 = vunpack.c.l.b16 %v4945
        %v5241 = vunpack.c.l.b16 %v4946
        %v5242 = vunpack.c.l.b16 %v4947
        %v5243 = vunpack.c.l.b16 %v4948
        %v5244 = vunpack.c.l.b16 %v4949
        %v5245 = vunpack.c.l.b16 %v4950
        %v5246 = vpack.c.b16 %v5103, %v5102
        %v5247 = vpack.c.b16 %v5105, %v5104
        %v5248 = vpack.c.b16 %v5107, %v5106
        %v5249 = vpack.c.b16 %v5109, %v5108
        %v5250 = vpack.c.b16 %v5111, %v5110
        %v5251 = vpack.c.b16 %v5113, %v5112
        %v5252 = vpack.c.b16 %v5115, %v5114
        %v5253 = vpack.c.b16 %v5117, %v5116
        %v5254 = vpack.c.b16 %v5119, %v5118
        %v5255 = vpack.c.b16 %v5121, %v5120
        %v5256 = vpack.c.b16 %v5123, %v5122
        %v5257 = vpack.c.b16 %v5125, %v5124
        %v5258 = vpack.c.b16 %v5127, %v5126
        %v5259 = vpack.c.b16 %v5129, %v5128
        %v5260 = vpack.c.b16 %v5131, %v5130
        %v5261 = vpack.c.b16 %v5133, %v5132
        %v5262 = vpack.c.b16 %v5135, %v5134
        %v5263 = vpack.c.b16 %v5137, %v5136
        %v5264 = vpack.c.b16 %v5139, %v5138
        %v5265 = vpack.c.b16 %v5141, %v5140
        %v5266 = vpack.c.b16 %v5143, %v5142
        %v5267 = vpack.c.b16 %v5145, %v5144
        %v5268 = vpack.c.b16 %v5147, %v5146
        %v5269 = vpack.c.b16 %v5149, %v5148
        %v5270 = vpack.c.b16 %v5151, %v5150
        %v5271 = vpack.c.b16 %v5153, %v5152
        %v5272 = vpack.c.b16 %v5155, %v5154
        %v5273 = vpack.c.b16 %v5157, %v5156
        %v5274 = vpack.c.b16 %v5159, %v5158
        %v5275 = vpack.c.b16 %v5161, %v5160
        %v5276 = vpack.c.b16 %v5163, %v5162
        %v5277 = vpack.c.b16 %v5165, %v5164
        %v5278 = vpack.c.b16 %v5167, %v5166
        %v5279 = vpack.c.b16 %v5169, %v5168
        %v5280 = vpack.c.b16 %v5171, %v5170
        %v5281 = vpack.c.b16 %v5173, %v5172
        %v5282 = vpack.c.b16 %v5175, %v5174
        %v5283 = vpack.c.b16 %v5177, %v5176
        %v5284 = vpack.c.b16 %v5179, %v5178
        %v5285 = vpack.c.b16 %v5181, %v5180
        %v5286 = vpack.c.b16 %v5183, %v5182
        %v5287 = vpack.c.b16 %v5185, %v5184
        %v5288 = vpack.c.b16 %v5187, %v5186
        %v5289 = vpack.c.b16 %v5189, %v5188
        %v5290 = vpack.c.b16 %v5191, %v5190
        %v5291 = vpack.c.b16 %v5193, %v5192
        %v5292 = vpack.c.b16 %v5195, %v5194
        %v5293 = vpack.c.b16 %v5197, %v5196
        %v5294 = vpack.c.b16 %v5199, %v5198
        %v5295 = vpack.c.b16 %v5201, %v5200
        %v5296 = vpack.c.b16 %v5203, %v5202
        %v5297 = vpack.c.b16 %v5205, %v5204
        %v5298 = vpack.c.b16 %v5207, %v5206
        %v5299 = vpack.c.b16 %v5209, %v5208
        %v5300 = vpack.c.b16 %v5211, %v5210
        %v5301 = vpack.c.b16 %v5213, %v5212
        %v5302 = vpack.c.b16 %v5215, %v5214
        %v5303 = vpack.c.b16 %v5217, %v5216
        %v5304 = vpack.c.b16 %v5219, %v5218
        %v5305 = vpack.c.b16 %v5221, %v5220
        %v5306 = vpack.c.b16 %v5223, %v5222
        %v5307 = vpack.c.b16 %v5225, %v5224
        %v5308 = vpack.c.b16 %v5227, %v5226
        %v5309 = vpack.c.b16 %v5229, %v5228
        %v5310 = vpack.c.b16 %v5231, %v5230
        %v5311 = vpack.c.b16 %v5233, %v5232
        %v5312 = vpack.c.b16 %v5235, %v5234
        %v5313 = vpack.c.b16 %v5237, %v5236
        %v5314 = vpack.c.b16 %v5239, %v5238
        %v5315 = vpack.c.b16 %v5241, %v5240
        %v5316 = vpack.c.b16 %v5243, %v5242
        %v5317 = vpack.c.b16 %v5245, %v5244
        %5390 = vmatprep.subr.bf16.mxu0 0
        %5391 = vmatpush1.bf16.msra.mxu0 %v5246
        %5392 = vmatprep.subr.bf16.mxu0 0
        %5393 = vmatpush1.bf16.msra.mxu0 %v5247
        %5394 = vmatprep.subr.bf16.mxu0 0
        %5395 = vmatpush1.bf16.msra.mxu0 %v5248
        %5396 = vmatprep.subr.bf16.mxu0 0
        %5397 = vmatpush1.bf16.msra.mxu0 %v5249
        %5398 = vmatprep.subr.bf16.mxu0 0
        %5399 = vmatpush1.bf16.msra.mxu0 %v5250
        %5400 = vmatprep.subr.bf16.mxu0 0
        %5401 = vmatpush1.bf16.msra.mxu0 %v5251
        %5402 = vmatprep.subr.bf16.mxu0 0
        %5403 = vmatpush1.bf16.msra.mxu0 %v5252
        %5404 = vmatprep.subr.bf16.mxu0 0
        %5405 = vmatpush1.bf16.msra.mxu0 %v5253
        %5406 = vmatprep.subr.bf16.mxu0 0
        %5407 = vmatpush1.bf16.msra.mxu0 %v5254
        %5408 = vmatprep.subr.bf16.mxu0 0
        %5409 = vmatpush1.bf16.msra.mxu0 %v5255
        %5410 = vmatprep.subr.bf16.mxu0 0
        %5411 = vmatpush1.bf16.msra.mxu0 %v5256
        %5412 = vmatprep.subr.bf16.mxu0 0
        %5413 = vmatpush1.bf16.msra.mxu0 %v5257
        %5414 = vmatprep.subr.bf16.mxu0 0
        %5415 = vmatpush1.bf16.msra.mxu0 %v5258
        %5416 = vmatprep.subr.bf16.mxu0 0
        %5417 = vmatpush1.bf16.msra.mxu0 %v5259
        %5418 = vmatprep.subr.bf16.mxu0 0
        %5419 = vmatpush1.bf16.msra.mxu0 %v5260
        %5420 = vmatprep.subr.bf16.mxu0 0
        %5421 = vmatpush1.bf16.msra.mxu0 %v5261
        %5422 = vmatprep.mubr.bf16.mxu0 %v4625
        %5423 = vmatmul.mubr.bf16.gmra.mrb[0].mxu0 %v4601
        %v5424 = vpop.f32.mrb[0].mxu0
        %v5425 = vadd.f32 %v4956, %v5424
        %v5426 = vpop.f32.mrb[0].mxu0
        %v5427 = vpop.f32.mrb[0].mxu0
        %v5428 = vadd.f32 %v4956, %v5427
        %v5429 = vpop.f32.mrb[0].mxu0
        %5430 = vmatprep.mubr.bf16.mxu0 %v4626
        %5431 = vmatmul.mubr.bf16.gmra.mrb[0].mxu0 %v4602
        %v5432 = vpop.f32.mrb[0].mxu0
        %v5433 = vadd.f32 %v4956, %v5432
        %v5434 = vpop.f32.mrb[0].mxu0
        %v5435 = vpop.f32.mrb[0].mxu0
        %v5436 = vadd.f32 %v4956, %v5435
        %v5437 = vpop.f32.mrb[0].mxu0
        %5438 = vmatprep.mubr.bf16.mxu0 %v4627
        %5439 = vmatmul.mubr.bf16.gmra.mrb[0].mxu0 %v4603
        %v5440 = vpop.f32.mrb[0].mxu0
        %v5441 = vadd.f32 %v4956, %v5440
        %v5442 = vpop.f32.mrb[0].mxu0
        %v5443 = vpop.f32.mrb[0].mxu0
        %v5444 = vadd.f32 %v4956, %v5443
        %v5445 = vpop.f32.mrb[0].mxu0
        %5446 = vmatprep.mubr.bf16.mxu0 %v4628
        %5447 = vmatmul.mubr.bf16.gmra.mrb[0].mxu0 %v4604
        %v5448 = vpop.f32.mrb[0].mxu0
        %v5449 = vadd.f32 %v4956, %v5448
        %v5450 = vpop.f32.mrb[0].mxu0
        %v5451 = vpop.f32.mrb[0].mxu0
        %v5452 = vadd.f32 %v4956, %v5451
        %v5453 = vpop.f32.mrb[0].mxu0
        %5454 = vmatprep.mubr.bf16.mxu0 %v4629
        %5455 = vmatmul.mubr.bf16.gmra.mrb[0].mxu0 %v4605
        %v5456 = vpop.f32.mrb[0].mxu0
        %v5457 = vadd.f32 %v4956, %v5456
        %v5458 = vpop.f32.mrb[0].mxu0
        %v5459 = vpop.f32.mrb[0].mxu0
        %v5460 = vadd.f32 %v4956, %v5459
        %v5461 = vpop.f32.mrb[0].mxu0
        %5462 = vmatprep.mubr.bf16.mxu0 %v4630
        %5463 = vmatmul.mubr.bf16.gmra.mrb[0].mxu0 %v4606
        %v5464 = vpop.f32.mrb[0].mxu0
        %v5465 = vadd.f32 %v4956, %v5464
        %v5466 = vpop.f32.mrb[0].mxu0
        %v5467 = vpop.f32.mrb[0].mxu0
        %v5468 = vadd.f32 %v4956, %v5467
        %v5469 = vpop.f32.mrb[0].mxu0
        %5470 = vmatprep.mubr.bf16.mxu0 %v4631
        %5471 = vmatmul.mubr.bf16.gmra.mrb[0].mxu0 %v4607
        %v5472 = vpop.f32.mrb[0].mxu0
        %v5473 = vadd.f32 %v4956, %v5472
        %v5474 = vpop.f32.mrb[0].mxu0
        %v5475 = vpop.f32.mrb[0].mxu0
        %v5476 = vadd.f32 %v4956, %v5475
        %v5477 = vpop.f32.mrb[0].mxu0
        %5478 = vmatprep.mubr.bf16.mxu0 %v4632
        %5479 = vmatmul.mubr.bf16.gmra.mrb[0].mxu0 %v4608
        %v5480 = vpop.f32.mrb[0].mxu0
        %v5481 = vadd.f32 %v4956, %v5480
        %v5482 = vpop.f32.mrb[0].mxu0
        %v5483 = vpop.f32.mrb[0].mxu0
        %v5484 = vadd.f32 %v4956, %v5483
        %v5485 = vpop.f32.mrb[0].mxu0
        %5486 = vdwg.mxu0
        %5487 = vmatprep.subr.bf16.mxu0 0
        %5488 = vmatpush1.bf16.msra.mxu0 %v5262
        %5489 = vmatprep.subr.bf16.mxu0 0
        %5490 = vmatpush1.bf16.msra.mxu0 %v5263
        %5491 = vmatprep.subr.bf16.mxu0 0
        %5492 = vmatpush1.bf16.msra.mxu0 %v5264
        %5493 = vmatprep.subr.bf16.mxu0 0
        %5494 = vmatpush1.bf16.msra.mxu0 %v5265
        %5495 = vmatprep.subr.bf16.mxu0 0
        %5496 = vmatpush1.bf16.msra.mxu0 %v5266
        %5497 = vmatprep.subr.bf16.mxu0 0
        %5498 = vmatpush1.bf16.msra.mxu0 %v5267
        %5499 = vmatprep.subr.bf16.mxu0 0
        %5500 = vmatpush1.bf16.msra.mxu0 %v5268
        %5501 = vmatprep.subr.bf16.mxu0 0
        %5502 = vmatpush1.bf16.msra.mxu0 %v5269
        %5503 = vmatprep.subr.bf16.mxu0 0
        %5504 = vmatpush1.bf16.msra.mxu0 %v5270
        %5505 = vmatprep.subr.bf16.mxu0 0
        %5506 = vmatpush1.bf16.msra.mxu0 %v5271
        %5507 = vmatprep.subr.bf16.mxu0 0
        %5508 = vmatpush1.bf16.msra.mxu0 %v5272
        %5509 = vmatprep.subr.bf16.mxu0 0
        %5510 = vmatpush1.bf16.msra.mxu0 %v5273
        %5511 = vmatprep.subr.bf16.mxu0 0
        %5512 = vmatpush1.bf16.msra.mxu0 %v5274
        %5513 = vmatprep.subr.bf16.mxu0 0
        %5514 = vmatpush1.bf16.msra.mxu0 %v5275
        %5515 = vmatprep.subr.bf16.mxu0 0
        %5516 = vmatpush1.bf16.msra.mxu0 %v5276
        %5517 = vmatprep.subr.bf16.mxu0 0
        %5518 = vmatpush1.bf16.msra.mxu0 %v5277
        %5519 = vmatprep.mubr.bf16.mxu0 %v4676
        %5520 = vmatmul.mubr.bf16.gmra.mrb[0].mxu0 %v4649
        %v5521 = vpop.f32.mrb[0].mxu0
        %v5522 = vadd.f32 %v5425, %v5521
        %v5523 = vpop.f32.mrb[0].mxu0
        %v5524 = vpop.f32.mrb[0].mxu0
        %v5525 = vadd.f32 %v5428, %v5524
        %v5526 = vpop.f32.mrb[0].mxu0
        %5527 = vmatprep.mubr.bf16.mxu0 %v4677
        %5528 = vmatmul.mubr.bf16.gmra.mrb[0].mxu0 %v4650
        %v5529 = vpop.f32.mrb[0].mxu0
        %v5530 = vadd.f32 %v5433, %v5529
        %v5531 = vpop.f32.mrb[0].mxu0
        %v5532 = vpop.f32.mrb[0].mxu0
        %v5533 = vadd.f32 %v5436, %v5532
        %v5534 = vpop.f32.mrb[0].mxu0
        %5535 = vmatprep.mubr.bf16.mxu0 %v4678
        %5536 = vmatmul.mubr.bf16.gmra.mrb[0].mxu0 %v4651
        %v5537 = vpop.f32.mrb[0].mxu0
        %v5538 = vadd.f32 %v5441, %v5537
        %v5539 = vpop.f32.mrb[0].mxu0
        %v5540 = vpop.f32.mrb[0].mxu0
        %v5541 = vadd.f32 %v5444, %v5540
        %v5542 = vpop.f32.mrb[0].mxu0
        %5543 = vmatprep.mubr.bf16.mxu0 %v4679
        %5544 = vmatmul.mubr.bf16.gmra.mrb[0].mxu0 %v4652
        %v5545 = vpop.f32.mrb[0].mxu0
        %v5546 = vadd.f32 %v5449, %v5545
        %v5547 = vpop.f32.mrb[0].mxu0
        %v5548 = vpop.f32.mrb[0].mxu0
        %v5549 = vadd.f32 %v5452, %v5548
        %v5550 = vpop.f32.mrb[0].mxu0
        %5551 = vmatprep.mubr.bf16.mxu0 %v4680
        %5552 = vmatmul.mubr.bf16.gmra.mrb[0].mxu0 %v4653
        %v5553 = vpop.f32.mrb[0].mxu0
        %v5554 = vadd.f32 %v5457, %v5553
        %v5555 = vpop.f32.mrb[0].mxu0
        %v5556 = vpop.f32.mrb[0].mxu0
        %v5557 = vadd.f32 %v5460, %v5556
        %v5558 = vpop.f32.mrb[0].mxu0
        %5559 = vmatprep.mubr.bf16.mxu0 %v4681
        %5560 = vmatmul.mubr.bf16.gmra.mrb[0].mxu0 %v4654
        %v5561 = vpop.f32.mrb[0].mxu0
        %v5562 = vadd.f32 %v5465, %v5561
        %v5563 = vpop.f32.mrb[0].mxu0
        %v5564 = vpop.f32.mrb[0].mxu0
        %v5565 = vadd.f32 %v5468, %v5564
        %v5566 = vpop.f32.mrb[0].mxu0
        %5567 = vmatprep.mubr.bf16.mxu0 %v4682
        %5568 = vmatmul.mubr.bf16.gmra.mrb[0].mxu0 %v4655
        %v5569 = vpop.f32.mrb[0].mxu0
        %v5570 = vadd.f32 %v5473, %v5569
        %v5571 = vpop.f32.mrb[0].mxu0
        %v5572 = vpop.f32.mrb[0].mxu0
        %v5573 = vadd.f32 %v5476, %v5572
        %v5574 = vpop.f32.mrb[0].mxu0
        %5575 = vmatprep.mubr.bf16.mxu0 %v4683
        %5576 = vmatmul.mubr.bf16.gmra.mrb[0].mxu0 %v4656
        %v5577 = vpop.f32.mrb[0].mxu0
        %v5578 = vadd.f32 %v5481, %v5577
        %v5579 = vpop.f32.mrb[0].mxu0
        %v5580 = vpop.f32.mrb[0].mxu0
        %v5581 = vadd.f32 %v5484, %v5580
        %v5582 = vpop.f32.mrb[0].mxu0
        %5583 = vdwg.mxu0
        %5584 = vmatprep.subr.bf16.mxu0 0
        %5585 = vmatpush1.bf16.msra.mxu0 %v5278
        %5586 = vmatprep.subr.bf16.mxu0 0
        %5587 = vmatpush1.bf16.msra.mxu0 %v5279
        %5588 = vmatprep.subr.bf16.mxu0 0
        %5589 = vmatpush1.bf16.msra.mxu0 %v5280
        %5590 = vmatprep.subr.bf16.mxu0 0
        %5591 = vmatpush1.bf16.msra.mxu0 %v5281
        %5592 = vmatprep.subr.bf16.mxu0 0
        %5593 = vmatpush1.bf16.msra.mxu0 %v5282
        %5594 = vmatprep.subr.bf16.mxu0 0
        %5595 = vmatpush1.bf16.msra.mxu0 %v5283
        %5596 = vmatprep.subr.bf16.mxu0 0
        %5597 = vmatpush1.bf16.msra.mxu0 %v5284
        %5598 = vmatprep.subr.bf16.mxu0 0
        %5599 = vmatpush1.bf16.msra.mxu0 %v5285
        %5600 = vmatprep.subr.bf16.mxu0 0
        %5601 = vmatpush1.bf16.msra.mxu0 %v5286
        %5602 = vmatprep.subr.bf16.mxu0 0
        %5603 = vmatpush1.bf16.msra.mxu0 %v5287
        %5604 = vmatprep.subr.bf16.mxu0 0
        %5605 = vmatpush1.bf16.msra.mxu0 %v5288
        %5606 = vmatprep.subr.bf16.mxu0 0
        %5607 = vmatpush1.bf16.msra.mxu0 %v5289
        %5608 = vmatprep.subr.bf16.mxu0 0
        %5609 = vmatpush1.bf16.msra.mxu0 %v5290
        %5610 = vmatprep.subr.bf16.mxu0 0
        %5611 = vmatpush1.bf16.msra.mxu0 %v5291
        %5612 = vmatprep.subr.bf16.mxu0 0
        %5613 = vmatpush1.bf16.msra.mxu0 %v5292
        %5614 = vmatprep.subr.bf16.mxu0 0
        %5615 = vmatpush1.bf16.msra.mxu0 %v5293
        %5616 = vmatprep.mubr.bf16.mxu0 %v4724
        %5617 = vmatmul.mubr.bf16.gmra.mrb[0].mxu0 %v4700
        %v5618 = vpop.f32.mrb[0].mxu0
        %v5619 = vadd.f32 %v5522, %v5618
        %v5620 = vpop.f32.mrb[0].mxu0
        %v5621 = vpop.f32.mrb[0].mxu0
        %v5622 = vadd.f32 %v5525, %v5621
        %v5623 = vpop.f32.mrb[0].mxu0
        %5624 = vmatprep.mubr.bf16.mxu0 %v4725
        %5625 = vmatmul.mubr.bf16.gmra.mrb[0].mxu0 %v4701
        %v5626 = vpop.f32.mrb[0].mxu0
        %v5627 = vadd.f32 %v5530, %v5626
        %v5628 = vpop.f32.mrb[0].mxu0
        %v5629 = vpop.f32.mrb[0].mxu0
        %v5630 = vadd.f32 %v5533, %v5629
        %v5631 = vpop.f32.mrb[0].mxu0
        %5632 = vmatprep.mubr.bf16.mxu0 %v4726
        %5633 = vmatmul.mubr.bf16.gmra.mrb[0].mxu0 %v4702
        %v5634 = vpop.f32.mrb[0].mxu0
        %v5635 = vadd.f32 %v5538, %v5634
        %v5636 = vpop.f32.mrb[0].mxu0
        %v5637 = vpop.f32.mrb[0].mxu0
        %v5638 = vadd.f32 %v5541, %v5637
        %v5639 = vpop.f32.mrb[0].mxu0
        %5640 = vmatprep.mubr.bf16.mxu0 %v4727
        %5641 = vmatmul.mubr.bf16.gmra.mrb[0].mxu0 %v4703
        %v5642 = vpop.f32.mrb[0].mxu0
        %v5643 = vadd.f32 %v5546, %v5642
        %v5644 = vpop.f32.mrb[0].mxu0
        %v5645 = vpop.f32.mrb[0].mxu0
        %v5646 = vadd.f32 %v5549, %v5645
        %v5647 = vpop.f32.mrb[0].mxu0
        %5648 = vmatprep.mubr.bf16.mxu0 %v4728
        %5649 = vmatmul.mubr.bf16.gmra.mrb[0].mxu0 %v4704
        %v5650 = vpop.f32.mrb[0].mxu0
        %v5651 = vadd.f32 %v5554, %v5650
        %v5652 = vpop.f32.mrb[0].mxu0
        %v5653 = vpop.f32.mrb[0].mxu0
        %v5654 = vadd.f32 %v5557, %v5653
        %v5655 = vpop.f32.mrb[0].mxu0
        %5656 = vmatprep.mubr.bf16.mxu0 %v4729
        %5657 = vmatmul.mubr.bf16.gmra.mrb[0].mxu0 %v4705
        %v5658 = vpop.f32.mrb[0].mxu0
        %v5659 = vadd.f32 %v5562, %v5658
        %v5660 = vpop.f32.mrb[0].mxu0
        %v5661 = vpop.f32.mrb[0].mxu0
        %v5662 = vadd.f32 %v5565, %v5661
        %v5663 = vpop.f32.mrb[0].mxu0
        %5664 = vmatprep.mubr.bf16.mxu0 %v4730
        %5665 = vmatmul.mubr.bf16.gmra.mrb[0].mxu0 %v4706
        %v5666 = vpop.f32.mrb[0].mxu0
        %v5667 = vadd.f32 %v5570, %v5666
        %v5668 = vpop.f32.mrb[0].mxu0
        %v5669 = vpop.f32.mrb[0].mxu0
        %v5670 = vadd.f32 %v5573, %v5669
        %v5671 = vpop.f32.mrb[0].mxu0
        %5672 = vmatprep.mubr.bf16.mxu0 %v4731
        %5673 = vmatmul.mubr.bf16.gmra.mrb[0].mxu0 %v4707
        %v5674 = vpop.f32.mrb[0].mxu0
        %v5675 = vadd.f32 %v5578, %v5674
        %v5676 = vpop.f32.mrb[0].mxu0
        %v5677 = vpop.f32.mrb[0].mxu0
        %v5678 = vadd.f32 %v5581, %v5677
        %v5679 = vpop.f32.mrb[0].mxu0
        %5680 = vdwg.mxu0
        %5681 = vmatprep.subr.bf16.mxu0 0
        %5682 = vmatpush1.bf16.msra.mxu0 %v5294
        %5683 = vmatprep.subr.bf16.mxu0 0
        %5684 = vmatpush1.bf16.msra.mxu0 %v5295
        %5685 = vmatprep.subr.bf16.mxu0 0
        %5686 = vmatpush1.bf16.msra.mxu0 %v5296
        %5687 = vmatprep.subr.bf16.mxu0 0
        %5688 = vmatpush1.bf16.msra.mxu0 %v5297
        %5689 = vmatprep.subr.bf16.mxu0 0
        %5690 = vmatpush1.bf16.msra.mxu0 %v5298
        %5691 = vmatprep.subr.bf16.mxu0 0
        %5692 = vmatpush1.bf16.msra.mxu0 %v5299
        %5693 = vmatprep.subr.bf16.mxu0 0
        %5694 = vmatpush1.bf16.msra.mxu0 %v5300
        %5695 = vmatprep.subr.bf16.mxu0 0
        %5696 = vmatpush1.bf16.msra.mxu0 %v5301
        %5697 = vmatprep.subr.bf16.mxu0 0
        %5698 = vmatpush1.bf16.msra.mxu0 %v5302
        %5699 = vmatprep.subr.bf16.mxu0 0
        %5700 = vmatpush1.bf16.msra.mxu0 %v5303
        %5701 = vmatprep.subr.bf16.mxu0 0
        %5702 = vmatpush1.bf16.msra.mxu0 %v5304
        %5703 = vmatprep.subr.bf16.mxu0 0
        %5704 = vmatpush1.bf16.msra.mxu0 %v5305
        %5705 = vmatprep.subr.bf16.mxu0 0
        %5706 = vmatpush1.bf16.msra.mxu0 %v5306
        %5707 = vmatprep.subr.bf16.mxu0 0
        %5708 = vmatpush1.bf16.msra.mxu0 %v5307
        %5709 = vmatprep.subr.bf16.mxu0 0
        %5710 = vmatpush1.bf16.msra.mxu0 %v5308
        %5711 = vmatprep.subr.bf16.mxu0 0
        %5712 = vmatpush1.bf16.msra.mxu0 %v5309
        %5713 = vmatprep.mubr.bf16.mxu0 %v4775
        %5714 = vmatmul.mubr.bf16.gmra.mrb[0].mxu0 %v4751
        %v5715 = vpop.f32.mrb[0].mxu0
        %v5716 = vadd.f32 %v5619, %v5715
        %v5717 = vpop.f32.mrb[0].mxu0
        %v5718 = vpop.f32.mrb[0].mxu0
        %v5719 = vadd.f32 %v5622, %v5718
        %v5720 = vpop.f32.mrb[0].mxu0
        %5721 = vmatprep.mubr.bf16.mxu0 %v4776
        %5722 = vmatmul.mubr.bf16.gmra.mrb[0].mxu0 %v4752
        %v5723 = vpop.f32.mrb[0].mxu0
        %v5724 = vadd.f32 %v5627, %v5723
        %v5725 = vpop.f32.mrb[0].mxu0
        %v5726 = vpop.f32.mrb[0].mxu0
        %v5727 = vadd.f32 %v5630, %v5726
        %v5728 = vpop.f32.mrb[0].mxu0
        %5729 = vmatprep.mubr.bf16.mxu0 %v4777
        %5730 = vmatmul.mubr.bf16.gmra.mrb[0].mxu0 %v4753
        %v5731 = vpop.f32.mrb[0].mxu0
        %v5732 = vadd.f32 %v5635, %v5731
        %v5733 = vpop.f32.mrb[0].mxu0
        %v5734 = vpop.f32.mrb[0].mxu0
        %v5735 = vadd.f32 %v5638, %v5734
        %v5736 = vpop.f32.mrb[0].mxu0
        %5737 = vmatprep.mubr.bf16.mxu0 %v4778
        %5738 = vmatmul.mubr.bf16.gmra.mrb[0].mxu0 %v4754
        %v5739 = vpop.f32.mrb[0].mxu0
        %v5740 = vadd.f32 %v5643, %v5739
        %v5741 = vpop.f32.mrb[0].mxu0
        %v5742 = vpop.f32.mrb[0].mxu0
        %v5743 = vadd.f32 %v5646, %v5742
        %v5744 = vpop.f32.mrb[0].mxu0
        %5745 = vmatprep.mubr.bf16.mxu0 %v4779
        %5746 = vmatmul.mubr.bf16.gmra.mrb[0].mxu0 %v4755
        %v5747 = vpop.f32.mrb[0].mxu0
        %v5748 = vadd.f32 %v5651, %v5747
        %v5749 = vpop.f32.mrb[0].mxu0
        %v5750 = vpop.f32.mrb[0].mxu0
        %v5751 = vadd.f32 %v5654, %v5750
        %v5752 = vpop.f32.mrb[0].mxu0
        %5753 = vmatprep.mubr.bf16.mxu0 %v4780
        %5754 = vmatmul.mubr.bf16.gmra.mrb[0].mxu0 %v4756
        %v5755 = vpop.f32.mrb[0].mxu0
        %v5756 = vadd.f32 %v5659, %v5755
        %v5757 = vpop.f32.mrb[0].mxu0
        %v5758 = vpop.f32.mrb[0].mxu0
        %v5759 = vadd.f32 %v5662, %v5758
        %v5760 = vpop.f32.mrb[0].mxu0
        %5761 = vmatprep.mubr.bf16.mxu0 %v4781
        %5762 = vmatmul.mubr.bf16.gmra.mrb[0].mxu0 %v4757
        %v5763 = vpop.f32.mrb[0].mxu0
        %v5764 = vadd.f32 %v5667, %v5763
        %v5765 = vpop.f32.mrb[0].mxu0
        %v5766 = vpop.f32.mrb[0].mxu0
        %v5767 = vadd.f32 %v5670, %v5766
        %v5768 = vpop.f32.mrb[0].mxu0
        %5769 = vmatprep.mubr.bf16.mxu0 %v4782
        %5770 = vmatmul.mubr.bf16.gmra.mrb[0].mxu0 %v4758
        %v5771 = vpop.f32.mrb[0].mxu0
        %v5772 = vadd.f32 %v5675, %v5771
        %v5773 = vpop.f32.mrb[0].mxu0
        %v5774 = vpop.f32.mrb[0].mxu0
        %v5775 = vadd.f32 %v5678, %v5774
        %v5776 = vpop.f32.mrb[0].mxu0
        %5777 = vdwg.mxu0
        %5778 = vmatprep.subr.bf16.mxu0 0
        %5779 = vmatpush1.bf16.msra.mxu0 %v5310
        %5780 = vmatprep.subr.bf16.mxu0 0
        %5781 = vmatpush1.bf16.msra.mxu0 %v5311
        %5782 = vmatprep.subr.bf16.mxu0 0
        %5783 = vmatpush1.bf16.msra.mxu0 %v5312
        %5784 = vmatprep.subr.bf16.mxu0 0
        %5785 = vmatpush1.bf16.msra.mxu0 %v5313
        %5786 = vmatprep.subr.bf16.mxu0 0
        %5787 = vmatpush1.bf16.msra.mxu0 %v5314
        %5788 = vmatprep.subr.bf16.mxu0 0
        %5789 = vmatpush1.bf16.msra.mxu0 %v5315
        %5790 = vmatprep.subr.bf16.mxu0 0
        %5791 = vmatpush1.bf16.msra.mxu0 %v5316
        %5792 = vmatprep.subr.bf16.mxu0 0
        %5793 = vmatpush1.bf16.msra.mxu0 %v5317
        %5794 = vmatprep.subr.bf16.mxu0 0
        %5795 = vmatpush1.bf16.msra.mxu0 0
        %5796 = vmatprep.subr.bf16.mxu0 0
        %5797 = vmatpush1.bf16.msra.mxu0 0
        %5798 = vmatprep.subr.bf16.mxu0 0
        %5799 = vmatpush1.bf16.msra.mxu0 0
        %5800 = vmatprep.subr.bf16.mxu0 0
        %5801 = vmatpush1.bf16.msra.mxu0 0
        %5802 = vmatprep.subr.bf16.mxu0 0
        %5803 = vmatpush1.bf16.msra.mxu0 0
        %5804 = vmatprep.subr.bf16.mxu0 0
        %5805 = vmatpush1.bf16.msra.mxu0 0
        %5806 = vmatprep.subr.bf16.mxu0 0
        %5807 = vmatpush1.bf16.msra.mxu0 0
        %5808 = vmatprep.subr.bf16.mxu0 0
        %5809 = vmatpush1.bf16.msra.mxu0 0
        %5810 = vmatprep.mubr.bf16.mxu0 0
        %5811 = vmatmul.mubr.bf16.gmra.mrb[0].mxu0 %v4799
        %v5812 = vpop.f32.mrb[0].mxu0
        %v5813 = vadd.f32 %v5716, %v5812
        %v5814 = vpop.f32.mrb[0].mxu0
        %v5815 = vpop.f32.mrb[0].mxu0
        %v5816 = vadd.f32 %v5719, %v5815
        %v5817 = vpop.f32.mrb[0].mxu0
        %5818 = vmatprep.mubr.bf16.mxu0 0
        %5819 = vmatmul.mubr.bf16.gmra.mrb[0].mxu0 %v4800
        %v5820 = vpop.f32.mrb[0].mxu0
        %v5821 = vadd.f32 %v5724, %v5820
        %v5822 = vpop.f32.mrb[0].mxu0
        %v5823 = vpop.f32.mrb[0].mxu0
        %v5824 = vadd.f32 %v5727, %v5823
        %v5825 = vpop.f32.mrb[0].mxu0
        %5826 = vmatprep.mubr.bf16.mxu0 0
        %5827 = vmatmul.mubr.bf16.gmra.mrb[0].mxu0 %v4801
        %v5828 = vpop.f32.mrb[0].mxu0
        %v5829 = vadd.f32 %v5732, %v5828
        %v5830 = vpop.f32.mrb[0].mxu0
        %v5831 = vpop.f32.mrb[0].mxu0
        %v5832 = vadd.f32 %v5735, %v5831
        %v5833 = vpop.f32.mrb[0].mxu0
        %5834 = vmatprep.mubr.bf16.mxu0 0
        %5835 = vmatmul.mubr.bf16.gmra.mrb[0].mxu0 %v4802
        %v5836 = vpop.f32.mrb[0].mxu0
        %v5837 = vadd.f32 %v5740, %v5836
        %v5838 = vpop.f32.mrb[0].mxu0
        %v5839 = vpop.f32.mrb[0].mxu0
        %v5840 = vadd.f32 %v5743, %v5839
        %v5841 = vpop.f32.mrb[0].mxu0
        %5842 = vmatprep.mubr.bf16.mxu0 0
        %5843 = vmatmul.mubr.bf16.gmra.mrb[0].mxu0 %v4803
        %v5844 = vpop.f32.mrb[0].mxu0
        %v5845 = vadd.f32 %v5748, %v5844
        %v5846 = vpop.f32.mrb[0].mxu0
        %v5847 = vpop.f32.mrb[0].mxu0
        %v5848 = vadd.f32 %v5751, %v5847
        %v5849 = vpop.f32.mrb[0].mxu0
        %5850 = vmatprep.mubr.bf16.mxu0 0
        %5851 = vmatmul.mubr.bf16.gmra.mrb[0].mxu0 %v4804
        %v5852 = vpop.f32.mrb[0].mxu0
        %v5853 = vadd.f32 %v5756, %v5852
        %v5854 = vpop.f32.mrb[0].mxu0
        %v5855 = vpop.f32.mrb[0].mxu0
        %v5856 = vadd.f32 %v5759, %v5855
        %v5857 = vpop.f32.mrb[0].mxu0
        %5858 = vmatprep.mubr.bf16.mxu0 0
        %5859 = vmatmul.mubr.bf16.gmra.mrb[0].mxu0 %v4805
        %v5860 = vpop.f32.mrb[0].mxu0
        %v5861 = vadd.f32 %v5764, %v5860
        %v5862 = vpop.f32.mrb[0].mxu0
        %v5863 = vpop.f32.mrb[0].mxu0
        %v5864 = vadd.f32 %v5767, %v5863
        %v5865 = vpop.f32.mrb[0].mxu0
        %5866 = vmatprep.mubr.bf16.mxu0 0
        %5867 = vmatmul.mubr.bf16.gmra.mrb[0].mxu0 %v4806
        %v5868 = vpop.f32.mrb[0].mxu0
        %v5869 = vadd.f32 %v5772, %v5868
        %v5870 = vpop.f32.mrb[0].mxu0
        %v5871 = vpop.f32.mrb[0].mxu0
        %v5872 = vadd.f32 %v5775, %v5871
        %v5873 = vpop.f32.mrb[0].mxu0
        %5874 = vdwg.mxu0
        %v5875 = vxor.u32 %v5813, 2147483648
        %v5876 = vxor.u32 %v5816, 2147483648
        %v5877 = vxor.u32 %v5821, 2147483648
        %v5878 = vxor.u32 %v5824, 2147483648
        %v5879 = vxor.u32 %v5829, 2147483648
        %v5880 = vxor.u32 %v5832, 2147483648
        %v5881 = vxor.u32 %v5837, 2147483648
        %v5882 = vxor.u32 %v5840, 2147483648
        %v5883 = vxor.u32 %v5845, 2147483648
        %v5884 = vxor.u32 %v5848, 2147483648
        %v5885 = vxor.u32 %v5853, 2147483648
        %v5886 = vxor.u32 %v5856, 2147483648
        %v5887 = vxor.u32 %v5861, 2147483648
        %v5888 = vxor.u32 %v5864, 2147483648
        %v5889 = vxor.u32 %v5869, 2147483648
        %v5890 = vxor.u32 %v5872, 2147483648
        %v5891 = vmul.f32 %v5875, 1.442695
        %v5892 = vpow.pop %v5891
        %v5893 = vmul.f32 %v5876, 1.442695
        %v5894 = vpow.pop %v5893
        %v5895 = vmul.f32 %v5877, 1.442695
        %v5896 = vpow.pop %v5895
        %v5897 = vmul.f32 %v5878, 1.442695
        %v5898 = vpow.pop %v5897
        %v5899 = vmul.f32 %v5879, 1.442695
        %v5900 = vpow.pop %v5899
        %v5901 = vmul.f32 %v5880, 1.442695
        %v5902 = vpow.pop %v5901
        %v5903 = vmul.f32 %v5881, 1.442695
        %v5904 = vpow.pop %v5903
        %v5905 = vmul.f32 %v5882, 1.442695
        %v5906 = vpow.pop %v5905
        %v5907 = vmul.f32 %v5883, 1.442695
        %v5908 = vpow.pop %v5907
        %v5909 = vmul.f32 %v5884, 1.442695
        %v5910 = vpow.pop %v5909
        %v5911 = vmul.f32 %v5885, 1.442695
        %v5912 = vpow.pop %v5911
        %v5913 = vmul.f32 %v5886, 1.442695
        %v5914 = vpow.pop %v5913
        %v5915 = vmul.f32 %v5887, 1.442695
        %v5916 = vpow.pop %v5915
        %v5917 = vmul.f32 %v5888, 1.442695
        %v5918 = vpow.pop %v5917
        %v5919 = vmul.f32 %v5889, 1.442695
        %v5920 = vpow.pop %v5919
        %v5921 = vmul.f32 %v5890, 1.442695
        %v5922 = vpow.pop %v5921
        %v5923 = vadd.f32 %v5892, 1.0
        %v5924 = vadd.f32 %v5894, 1.0
        %v5925 = vadd.f32 %v5896, 1.0
        %v5926 = vadd.f32 %v5898, 1.0
        %v5927 = vadd.f32 %v5900, 1.0
        %v5928 = vadd.f32 %v5902, 1.0
        %v5929 = vadd.f32 %v5904, 1.0
        %v5930 = vadd.f32 %v5906, 1.0
        %v5931 = vadd.f32 %v5908, 1.0
        %v5932 = vadd.f32 %v5910, 1.0
        %v5933 = vadd.f32 %v5912, 1.0
        %v5934 = vadd.f32 %v5914, 1.0
        %v5935 = vadd.f32 %v5916, 1.0
        %v5936 = vadd.f32 %v5918, 1.0
        %v5937 = vadd.f32 %v5920, 1.0
        %v5938 = vadd.f32 %v5922, 1.0
        %v5939 = vrcp.pop %v5923
        %v5940 = vmul.f32 1.0, %v5939
        %v5941 = vrcp.pop %v5924
        %v5942 = vmul.f32 1.0, %v5941
        %v5943 = vrcp.pop %v5925
        %v5944 = vmul.f32 1.0, %v5943
        %v5945 = vrcp.pop %v5926
        %v5946 = vmul.f32 1.0, %v5945
        %v5947 = vrcp.pop %v5927
        %v5948 = vmul.f32 1.0, %v5947
        %v5949 = vrcp.pop %v5928
        %v5950 = vmul.f32 1.0, %v5949
        %v5951 = vrcp.pop %v5929
        %v5952 = vmul.f32 1.0, %v5951
        %v5953 = vrcp.pop %v5930
        %v5954 = vmul.f32 1.0, %v5953
        %v5955 = vrcp.pop %v5931
        %v5956 = vmul.f32 1.0, %v5955
        %v5957 = vrcp.pop %v5932
        %v5958 = vmul.f32 1.0, %v5957
        %v5959 = vrcp.pop %v5933
        %v5960 = vmul.f32 1.0, %v5959
        %v5961 = vrcp.pop %v5934
        %v5962 = vmul.f32 1.0, %v5961
        %v5963 = vrcp.pop %v5935
        %v5964 = vmul.f32 1.0, %v5963
        %v5965 = vrcp.pop %v5936
        %v5966 = vmul.f32 1.0, %v5965
        %v5967 = vrcp.pop %v5937
        %v5968 = vmul.f32 1.0, %v5967
        %v5969 = vrcp.pop %v5938
        %v5970 = vmul.f32 1.0, %v5969
        %v5971 = vpack.c.bf16 %v5942, %v5940
        %v5972 = vpack.c.bf16 %v5946, %v5944
        %v5973 = vpack.c.bf16 %v5950, %v5948
        %v5974 = vpack.c.bf16 %v5954, %v5952
        %v5975 = vpack.c.bf16 %v5958, %v5956
        %v5976 = vpack.c.bf16 %v5962, %v5960
        %v5977 = vpack.c.bf16 %v5966, %v5964
        %v5978 = vpack.c.bf16 %v5970, %v5968
        %v5987 = vunpack.c.l.b16 %v5971
        %v5988 = vunpack.c.h.b16 %v5971
        %v5989 = vunpack.c.l.b16 %v5972
        %v5990 = vunpack.c.h.b16 %v5972
        %v5991 = vunpack.c.l.b16 %v5973
        %v5992 = vunpack.c.h.b16 %v5973
        %v5993 = vunpack.c.l.b16 %v5974
        %v5994 = vunpack.c.h.b16 %v5974
        %v5995 = vunpack.c.l.b16 %v5975
        %v5996 = vunpack.c.h.b16 %v5975
        %v5997 = vunpack.c.l.b16 %v5976
        %v5998 = vunpack.c.h.b16 %v5976
        %v5999 = vunpack.c.l.b16 %v5977
        %v6000 = vunpack.c.h.b16 %v5977
        %v6001 = vunpack.c.l.b16 %v5978
        %v6002 = vunpack.c.h.b16 %v5978
        %v6003 = vpack.c.b16 %v5987, %v5987
        %v6004 = vpack.c.b16 %v5988, %v5988
        %v6005 = vpack.c.b16 %v5989, %v5989
        %v6006 = vpack.c.b16 %v5990, %v5990
        %v6007 = vpack.c.b16 %v5991, %v5991
        %v6008 = vpack.c.b16 %v5992, %v5992
        %v6009 = vpack.c.b16 %v5993, %v5993
        %v6010 = vpack.c.b16 %v5994, %v5994
        %v6011 = vpack.c.b16 %v5995, %v5995
        %v6012 = vpack.c.b16 %v5996, %v5996
        %v6013 = vpack.c.b16 %v5997, %v5997
        %v6014 = vpack.c.b16 %v5998, %v5998
        %v6015 = vpack.c.b16 %v5999, %v5999
        %v6016 = vpack.c.b16 %v6000, %v6000
        %v6017 = vpack.c.b16 %v6001, %v6001
        %v6018 = vpack.c.b16 %v6002, %v6002
        %6035 = vst [vmem:[%s312] sm:$0xf] %v6003
        %6036 = vst [vmem:[%s312 + $0x4] sm:$0xf] %v6004
        %6037 = vst [vmem:[%s312 + $0x8] sm:$0xf] %v6005
        %6038 = vst [vmem:[%s312 + $0xc] sm:$0xf] %v6006
        %6039 = vst [vmem:[%s312 + $0x10] sm:$0xf] %v6007
        %6040 = vst [vmem:[%s312 + $0x14] sm:$0xf] %v6008
        %6041 = vst [vmem:[%s312 + $0x18] sm:$0xf] %v6009
        %6042 = vst [vmem:[%s312 + $0x1c] sm:$0xf] %v6010
        %6043 = vst [vmem:[%s312 + $0x20] sm:$0xf] %v6011
        %6044 = vst [vmem:[%s312 + $0x24] sm:$0xf] %v6012
        %6045 = vst [vmem:[%s312 + $0x28] sm:$0xf] %v6013
        %6046 = vst [vmem:[%s312 + $0x2c] sm:$0xf] %v6014
        %6047 = vst [vmem:[%s312 + $0x30] sm:$0xf] %v6015
        %6048 = vst [vmem:[%s312 + $0x34] sm:$0xf] %v6016
        %6049 = vst [vmem:[%s312 + $0x38] sm:$0xf] %v6017
        %6050 = vst [vmem:[%s312 + $0x3c] sm:$0xf] %v6018
        %s6051 = sand.u32 %s156, 1
        %s6052 = scalar_lea.sflag [#allocation5], %s6051
        %s6053 = sand.u32 %s156, 1
        %s6054 = smul.addr %s6053, 64
        %s6055 = scalar_lea.vmem [#allocation12], %s6054
        // Predicated region
        $region65: #{tpu_custom_call.1} parent=39 // pred_check
          %p6056 = pneg %p166
        $region66: #{tpu_custom_call.1} parent=39 // pred_check_branch
          %6058 = sbr.rel (%p6056) target = $region68
        $region67: #{tpu_custom_call.1} parent=39 // pred_region
          %s6059 = smul.u32 8, %s29
          %s6061 = ssub.s32 1024, 1024
          %6062 = vsyncadd %s6052, %s6061
          %s6063 = smul.addr %s6059, 2
          %s6064 = smul.addr %s28, 32
          %s6065 = sadd.s32 %s6063, %s6064
          %s6066 = smul.addr %s6065, 64
          %s6067 = scalar_lea.hbm %s5, %s6066
          %s6068 = sshll.u32 %s6055, 4
          %s6069 = int_to_ptr.vmem [resolvable:$true] %s6068
          %6074 = dma.vmem_to_hbm [thread:$0]  %s6069, 1024, %s6067, %s6052, 64, 64, 4
        $region68: #{tpu_custom_call.1} parent=39 // pred_fallthru
          _
      $region40: #{tpu_custom_call.1} parent=5 // pred_fallthru
        _
      %p6075 = scmp.le.s32.totalorder 2, %s19
      // Predicated region
      $region69: #{tpu_custom_call.1} parent=5 // pred_check
        %p6076 = pneg %p6075
      $region70: #{tpu_custom_call.1} parent=5 // pred_check_branch
        %6078 = sbr.rel (%p6076) target = $region72
      $region71: #{tpu_custom_call.1} parent=5 // pred_region
        %s6079 = ssub.s32 %s19, 2
        // Predicated region
        $region73: #{tpu_custom_call.1} parent=71 // pred_check
          %p6080 = pneg %p172
        $region74: #{tpu_custom_call.1} parent=71 // pred_check_branch
          %6082 = sbr.rel (%p6080) target = $region76
        $region75: #{tpu_custom_call.1} parent=71 // pred_region
          %s6083 = sand.u32 %s157, 1
          %s6084 = scalar_lea.sflag [#allocation5], %s6083
          %s6085 = sand.u32 %s157, 1
          %s6086 = smul.addr %s6085, 64
          %s6087 = scalar_lea.vmem [#allocation12], %s6086
          %6088 = dma.done %s6084, 1024
        $region76: #{tpu_custom_call.1} parent=71 // pred_fallthru
          _
      $region72: #{tpu_custom_call.1} parent=5 // pred_fallthru
        _
    $region6: #{tpu_custom_call.1} parent=1 // loop_footer
      %s23 = sadd.s32 1, %s19
    $region7: #{tpu_custom_call.1} parent=1 // loop_footer_branch
      %18 = sbr.rel target = $region3
    $region8: #{tpu_custom_call.1} parent=1 // loop_exit
      _
    %6089 = vsyncpa [#allocation4], 1
    %s6090 = scalar_lea.sflag [#allocation4], 1
    %6091 = vsyncpa %s6090, 1
    %6092 = vsyncpa [#allocation7], 1
    %6093 = vsyncpa [#allocation10], 1
    %6094 = vsyncpa [#allocation5], 1
    %s6095 = scalar_lea.sflag [#allocation5], 1
    %6096 = vsyncpa %s6095, 1

</llo_original>
